<compile_context>
chip_gen: v7x
topology: tpu7x:2x2x1
jax: 0.10.0
libtpu: 0.0.40
codegen_flags: <defaults>
</compile_context>

<pallas_src>
import functools

import jax
import jax.numpy as jnp
import numpy as np
from jax.experimental import pallas as pl
from jax.experimental.pallas import tpu as pltpu


def _round_up(x, m):
    return ((x + m - 1) // m) * m


# ---------------------------------------------------------------------------
# Kernel 1: tiled bf16 matmul, f32 accumulate, fused bias + optional LeakyReLU.
# ---------------------------------------------------------------------------
def _mm_kernel(a_ref, w_ref, b_ref, o_ref, acc_ref, *, negative_slope):
    @pl.when(pl.program_id(2) == 0)
    def _init():
        acc_ref[...] = jnp.zeros_like(acc_ref)

    acc_ref[...] += jnp.dot(a_ref[...], w_ref[...],
                            preferred_element_type=jnp.float32)

    @pl.when(pl.program_id(2) == pl.num_programs(2) - 1)
    def _finish():
        z = acc_ref[...] + b_ref[...]
        if negative_slope is not None:
            z = jnp.where(z >= 0, z, z * negative_slope)
        o_ref[...] = z.astype(o_ref.dtype)


def matmul_fused(a, w, bias=None, negative_slope=None, out_dtype=jnp.bfloat16):
    """act((a @ w) + bias). Returns a zero-padded (Mp, Np) array; valid region
    is [:M, :N]. Operands cast to bf16, accumulation f32, channel dim padded to
    a multiple of 128 so stores are lane-dense."""
    M, K = a.shape
    K2, N = w.shape
    assert K == K2
    Kp = _round_up(K, 128)
    Np = _round_up(N, 128)
    TM = min(512, _round_up(M, 8))          # VMEM-bounded row tile (v7x-safe)
    Mp = _round_up(M, TM)
    TK = 512 if Kp % 512 == 0 else (256 if Kp % 256 == 0 else 128)
    TN = 256 if Np % 256 == 0 else 128

    a = a.astype(jnp.bfloat16)
    w = w.astype(jnp.bfloat16)
    if (Mp, Kp) != (M, K):
        a = jnp.pad(a, ((0, Mp - M), (0, Kp - K)))
    if (Kp, Np) != (K, N):
        w = jnp.pad(w, ((0, Kp - K), (0, Np - N)))
    b = jnp.zeros((N,), jnp.float32) if bias is None else bias.astype(jnp.float32)
    if Np != N:
        b = jnp.pad(b, (0, Np - N))
    b = b.reshape(1, Np)

    grid = (Mp // TM, Np // TN, Kp // TK)
    return pl.pallas_call(
        functools.partial(_mm_kernel, negative_slope=negative_slope),
        out_shape=jax.ShapeDtypeStruct((Mp, Np), out_dtype),
        grid=grid,
        in_specs=[
            pl.BlockSpec((TM, TK), lambda i, j, k: (i, k)),
            pl.BlockSpec((TK, TN), lambda i, j, k: (k, j)),
            pl.BlockSpec((1, TN), lambda i, j, k: (0, j)),
        ],
        out_specs=pl.BlockSpec((TM, TN), lambda i, j, k: (i, j)),
        scratch_shapes=[pltpu.VMEM((TM, TN), jnp.float32)],
        compiler_params=pltpu.CompilerParams(
            dimension_semantics=("parallel", "parallel", "arbitrary")),
    )(a, w, b)


# ---------------------------------------------------------------------------
# Kernels 2+3: two-pass tiled BatchNorm (batch statistics) + LeakyReLU.
# ---------------------------------------------------------------------------
def _bn_stats_kernel(z_ref, sum_ref, sq_ref):
    @pl.when(pl.program_id(0) == 0)
    def _init():
        sum_ref[...] = jnp.zeros_like(sum_ref)
        sq_ref[...] = jnp.zeros_like(sq_ref)

    z = z_ref[...].astype(jnp.float32)
    sum_ref[...] += jnp.sum(z, axis=0, keepdims=True)
    sq_ref[...] += jnp.sum(z * z, axis=0, keepdims=True)


def _scale_shift_act_kernel(z_ref, s_ref, t_ref, o_ref, *, negative_slope):
    y = z_ref[...].astype(jnp.float32) * s_ref[...] + t_ref[...]
    if negative_slope is not None:
        y = jnp.where(y >= 0, y, y * negative_slope)
    o_ref[...] = y.astype(o_ref.dtype)


def batchnorm_leaky(z_pad, n_valid_rows, gamma, beta, eps=1e-5,
                    negative_slope=0.2, out_dtype=jnp.bfloat16):
    """z_pad: (Mp, Cp) with zero padding outside the valid (n_valid_rows, C)
    region (padded rows are zero because the preceding conv has no bias)."""
    Mp, Cp = z_pad.shape
    TM = min(512, Mp)
    assert Mp % TM == 0
    C = gamma.shape[0]
    g = jnp.pad(gamma.astype(jnp.float32), (0, Cp - C)).reshape(1, Cp)
    bt = jnp.pad(beta.astype(jnp.float32), (0, Cp - C)).reshape(1, Cp)

    s, sq = pl.pallas_call(
        _bn_stats_kernel,
        out_shape=(jax.ShapeDtypeStruct((1, Cp), jnp.float32),
                   jax.ShapeDtypeStruct((1, Cp), jnp.float32)),
        grid=(Mp // TM,),
        in_specs=[pl.BlockSpec((TM, Cp), lambda i: (i, 0))],
        out_specs=(pl.BlockSpec((1, Cp), lambda i: (0, 0)),
                   pl.BlockSpec((1, Cp), lambda i: (0, 0))),
        compiler_params=pltpu.CompilerParams(
            dimension_semantics=("arbitrary",)),
    )(z_pad)

    count = float(n_valid_rows)
    mean = s / count
    var = jnp.maximum(sq / count - mean * mean, 0.0)     # biased (training mode)
    inv = jax.lax.rsqrt(var + eps)
    scale = g * inv
    shift = bt - mean * scale

    return pl.pallas_call(
        functools.partial(_scale_shift_act_kernel, negative_slope=negative_slope),
        out_shape=jax.ShapeDtypeStruct((Mp, Cp), out_dtype),
        grid=(Mp // TM,),
        in_specs=[
            pl.BlockSpec((TM, Cp), lambda i: (i, 0)),
            pl.BlockSpec((1, Cp), lambda i: (0, 0)),
            pl.BlockSpec((1, Cp), lambda i: (0, 0)),
        ],
        out_specs=pl.BlockSpec((TM, Cp), lambda i: (i, 0)),
        compiler_params=pltpu.CompilerParams(
            dimension_semantics=("parallel",)),
    )(z_pad, scale, shift)


# ---------------------------------------------------------------------------
# Kernel 4: SBA self-attention (per batch element): softmax(Q K^T) V, residual.
# ---------------------------------------------------------------------------
def _sba_attn_kernel(q_ref, k_ref, v_ref, x_ref, g_ref, o_ref):
    q = q_ref[0]                                         # (L, Cq) bf16
    k = k_ref[0]                                         # (L, Cq) bf16
    e = jax.lax.dot_general(q, k, (((1,), (1,)), ((), ())),
                            preferred_element_type=jnp.float32)   # (L, L)
    e = e - jnp.max(e, axis=-1, keepdims=True)
    p = jnp.exp(e)
    p = p / jnp.sum(p, axis=-1, keepdims=True)
    out = jnp.dot(p, v_ref[0].astype(jnp.float32),
                  preferred_element_type=jnp.float32)    # (L, C)
    res = g_ref[...] * out + x_ref[0].astype(jnp.float32)
    o_ref[0] = res.astype(o_ref.dtype)


def sba_block(x_nhwc, p):
    N, H, W, C = x_nhwc.shape
    L = H * W
    Cq = p["q_w"].shape[0]
    x_flat = x_nhwc.reshape(N * L, C)

    # fused 1x1 q/k/v projections as a single tiled matmul
    w_all = jnp.concatenate([p["q_w"].reshape(Cq, C),
                             p["k_w"].reshape(Cq, C),
                             p["v_w"].reshape(C, C)], axis=0).T    # (C, 2Cq+C)
    b_all = jnp.concatenate([p["q_b"], p["k_b"], p["v_b"]])
    proj = matmul_fused(x_flat, w_all, bias=b_all)[:N * L, :2 * Cq + C]
    q = proj[:, :Cq].reshape(N, L, Cq)
    k = proj[:, Cq:2 * Cq].reshape(N, L, Cq)
    v = proj[:, 2 * Cq:].reshape(N, L, C)
    xr = x_flat.reshape(N, L, C)
    gamma = p["gamma"].astype(jnp.float32).reshape(1, 1)

    out = pl.pallas_call(
        _sba_attn_kernel,
        out_shape=jax.ShapeDtypeStruct((N, L, C), jnp.bfloat16),
        grid=(N,),
        in_specs=[
            pl.BlockSpec((1, L, Cq), lambda b: (b, 0, 0)),
            pl.BlockSpec((1, L, Cq), lambda b: (b, 0, 0)),
            pl.BlockSpec((1, L, C), lambda b: (b, 0, 0)),
            pl.BlockSpec((1, L, C), lambda b: (b, 0, 0)),
            pl.BlockSpec((1, 1), lambda b: (0, 0)),
        ],
        out_specs=pl.BlockSpec((1, L, C), lambda b: (b, 0, 0)),
        compiler_params=pltpu.CompilerParams(
            dimension_semantics=("parallel",)),
    )(q, k, v, xr, gamma)
    return out.reshape(N, H, W, C)


# ---------------------------------------------------------------------------
# 4x4 conv (padding 1) lowered to im2col + tiled matmul.
# ---------------------------------------------------------------------------
def conv4x4(x_nhwc, w_oihw, bias, stride, negative_slope=None):
    N, H, W, C = x_nhwc.shape
    Cout = w_oihw.shape[0]
    Ho = (H + 2 - 4) // stride + 1
    Wo = (W + 2 - 4) // stride + 1
    xp = jnp.pad(x_nhwc, ((0, 0), (1, 1), (1, 1), (0, 0)))
    # TODO(synk): stream the 16 taps inside the matmul kernel instead of
    # materialising the im2col matrix in HBM.
    taps = [xp[:, kh:kh + stride * (Ho - 1) + 1:stride,
               kw:kw + stride * (Wo - 1) + 1:stride, :]
            for kh in range(4) for kw in range(4)]
    a = jnp.stack(taps, axis=3).reshape(N * Ho * Wo, 16 * C)
    wmat = jnp.transpose(w_oihw, (2, 3, 1, 0)).reshape(16 * C, Cout)
    z = matmul_fused(a, wmat, bias=bias, negative_slope=negative_slope)
    return z, (N, Ho, Wo, Cout)


# ---------------------------------------------------------------------------
# Full forward pass (model -> model_att1 -> model2).
# ---------------------------------------------------------------------------
def nlayer_discriminator_att_forward(x_nchw, params):
    x = jnp.transpose(x_nchw, (0, 2, 3, 1)).astype(jnp.bfloat16)   # NHWC, bf16

    # layer 1: Conv + LeakyReLU(0.2)  (bias + activation fused in the matmul)
    z, (N, Ho, Wo, C) = conv4x4(x, params["conv1_w"], params["conv1_b"], 2,
                                negative_slope=0.2)
    h = z[:N * Ho * Wo, :C].reshape(N, Ho, Wo, C)

    # layers 2, 3: Conv (no bias) + BatchNorm + LeakyReLU(0.2)
    for name in ("2", "3"):
        z, (N, Ho, Wo, C) = conv4x4(h, params[f"conv{name}_w"], None, 2)
        zb = batchnorm_leaky(z, N * Ho * Wo,
                             params[f"bn{name}_g"], params[f"bn{name}_b"])
        h = zb[:N * Ho * Wo, :C].reshape(N, Ho, Wo, C)

    # SBA self-attention block
    h = sba_block(h, params["sba"])

    # model2: Conv (no bias) + BatchNorm + LeakyReLU(0.2), stride 1
    z, (N, Ho, Wo, C) = conv4x4(h, params["conv4_w"], None, 1)
    zb = batchnorm_leaky(z, N * Ho * Wo, params["bn4_g"], params["bn4_b"])
    h = zb[:N * Ho * Wo, :C].reshape(N, Ho, Wo, C)

    # final Conv to 1 channel (bias, no activation; use_sigmoid=False)
    z, (N, Ho, Wo, C) = conv4x4(h, params["conv5_w"], params["conv5_b"], 1)
    out = z[:N * Ho * Wo, :C].reshape(N, Ho, Wo, C).astype(jnp.float32)
    return jnp.transpose(out, (0, 3, 1, 2))   # NCHW


# ---------------------------------------------------------------------------
# Pure-JAX f32 reference (lax convolutions) for correctness checking.
# ---------------------------------------------------------------------------
def reference_forward(x_nchw, params):
    hi = jax.lax.Precision.HIGHEST
    x = jnp.transpose(x_nchw, (0, 2, 3, 1)).astype(jnp.float32)

    def conv(h, w_oihw, b, stride):
        w_hwio = jnp.transpose(w_oihw, (2, 3, 1, 0))
        z = jax.lax.conv_general_dilated(
            h, w_hwio, (stride, stride), [(1, 1), (1, 1)],
            dimension_numbers=("NHWC", "HWIO", "NHWC"), precision=hi)
        return z if b is None else z + b

    def bn_leaky(z, g, bta):
        mean = jnp.mean(z, axis=(0, 1, 2), keepdims=True)
        var = jnp.mean((z - mean) ** 2, axis=(0, 1, 2), keepdims=True)
        y = (z - mean) * jax.lax.rsqrt(var + 1e-5) * g + bta
        return jnp.where(y >= 0, y, 0.2 * y)

    h = conv(x, params["conv1_w"], params["conv1_b"], 2)
    h = jnp.where(h >= 0, h, 0.2 * h)
    h = bn_leaky(conv(h, params["conv2_w"], None, 2), params["bn2_g"], params["bn2_b"])
    h = bn_leaky(conv(h, params["conv3_w"], None, 2), params["bn3_g"], params["bn3_b"])

    N, H, W, C = h.shape
    L = H * W
    sba = params["sba"]
    Cq = sba["q_w"].shape[0]
    hf = h.reshape(N, L, C)
    q = jnp.einsum("nlc,qc->nlq", hf, sba["q_w"].reshape(Cq, C), precision=hi) + sba["q_b"]
    k = jnp.einsum("nlc,qc->nlq", hf, sba["k_w"].reshape(Cq, C), precision=hi) + sba["k_b"]
    v = jnp.einsum("nlc,oc->nlo", hf, sba["v_w"].reshape(C, C), precision=hi) + sba["v_b"]
    e = jnp.einsum("niq,njq->nij", q, k, precision=hi)
    p = jax.nn.softmax(e, axis=-1)
    att = jnp.einsum("nij,njc->nic", p, v, precision=hi)
    h = (sba["gamma"] * att + hf).reshape(N, H, W, C)

    h = bn_leaky(conv(h, params["conv4_w"], None, 1), params["bn4_g"], params["bn4_b"])
    out = conv(h, params["conv5_w"], params["conv5_b"], 1)
    return jnp.transpose(out, (0, 3, 1, 2))


def init_params(key, input_nc, ndf):
    ks = jax.random.split(key, 20)

    def w(k, shape, scale=0.02):
        return scale * jax.random.normal(k, shape, jnp.float32)

    C3 = ndf * 4
    Cq = C3 // 8
    return {
        "conv1_w": w(ks[0], (ndf, input_nc, 4, 4)),
        "conv1_b": w(ks[1], (ndf,)),
        "conv2_w": w(ks[2], (ndf * 2, ndf, 4, 4)),
        "bn2_g": 1.0 + 0.1 * jax.random.normal(ks[3], (ndf * 2,), jnp.float32),
        "bn2_b": 0.1 * jax.random.normal(ks[4], (ndf * 2,), jnp.float32),
        "conv3_w": w(ks[5], (ndf * 4, ndf * 2, 4, 4)),
        "bn3_g": 1.0 + 0.1 * jax.random.normal(ks[6], (ndf * 4,), jnp.float32),
        "bn3_b": 0.1 * jax.random.normal(ks[7], (ndf * 4,), jnp.float32),
        "sba": {
            "q_w": w(ks[8], (Cq, C3, 1, 1), 0.05),
            "q_b": w(ks[9], (Cq,)),
            "k_w": w(ks[10], (Cq, C3, 1, 1), 0.05),
            "k_b": w(ks[11], (Cq,)),
            "v_w": w(ks[12], (C3, C3, 1, 1), 0.05),
            "v_b": w(ks[13], (C3,)),
            # PyTorch initialises gamma to 0; use a nonzero value here so the
            # attention path is actually exercised numerically.
            "gamma": jnp.asarray([0.5], jnp.float32),
        },
        "conv4_w": w(ks[14], (ndf * 8, ndf * 4, 4, 4)),
        "bn4_g": 1.0 + 0.1 * jax.random.normal(ks[15], (ndf * 8,), jnp.float32),
        "bn4_b": 0.1 * jax.random.normal(ks[16], (ndf * 8,), jnp.float32),
        "conv5_w": w(ks[17], (1, ndf * 8, 4, 4)),
        "conv5_b": w(ks[18], (1,)),
    }


if __name__ == "__main__":
    N, input_nc, H, W, ndf = 2, 3, 32, 32, 16

    key = jax.random.PRNGKey(0)
    kx, kp = jax.random.split(key)
    x = jax.random.normal(kx, (N, input_nc, H, W), jnp.float32)
    params = init_params(kp, input_nc, ndf)

    fwd = jax.jit(nlayer_discriminator_att_forward)
    out = jax.block_until_ready(fwd(x, params))
    ref = jax.block_until_ready(reference_forward(x, params))

    assert out.shape == (N, 1, H // 8 - 2, W // 8 - 2), out.shape
    o = np.asarray(out, dtype=np.float64)
    r = np.asarray(ref, dtype=np.float64)
    rel_err = np.linalg.norm(o - r) / (np.linalg.norm(r) + 1e-12)
    assert rel_err < 0.08, f"relative error too large: {rel_err}"

    print("KERNEL_OK")
</pallas_src>

<mosaic_0001>
module attributes {stable_mosaic.version = 11 : i64} {
  func.func @_mm_kernel(%arg0: i32, %arg1: i32, %arg2: i32, %arg3: memref<512x128xbf16, #tpu.memory_space<vmem>>, %arg4: memref<128x128xbf16, #tpu.memory_space<vmem>>, %arg5: memref<1x128xf32, #tpu.memory_space<vmem>>, %arg6: memref<512x128xbf16, #tpu.memory_space<vmem>>, %arg7: memref<512x128xf32, #tpu.memory_space<vmem>>) attributes {dimension_semantics = [#tpu.dimension_semantics<parallel>, #tpu.dimension_semantics<parallel>, #tpu.dimension_semantics<arbitrary>], iteration_bounds = array<i64: 1, 1, 1>, scalar_prefetch = 0 : i64, scratch_operands = 1 : i64, tpu.core_type = #tpu.core_type<tc>, window_params = [{transform_indices = @transform_0, window_bounds = array<i64: 512, 128>}, {transform_indices = @transform_1, window_bounds = array<i64: 128, 128>}, {transform_indices = @transform_2, window_bounds = array<i64: 1, 128>}, {transform_indices = @transform_3, window_bounds = array<i64: 512, 128>}]} {
    %c0_i32 = arith.constant 0 : i32
    %0 = arith.cmpi eq, %arg2, %c0_i32 : i32
    %1 = arith.extui %0 : i1 to i32
    %c0_i32_0 = arith.constant 0 : i32
    %2 = arith.cmpi ne, %1, %c0_i32_0 : i32
    scf.if %2 {
      %cst_10 = arith.constant 0.000000e+00 : f32
      %12 = vector.broadcast %cst_10 : f32 to vector<512x128xf32>
      %c0_11 = arith.constant 0 : index
      %c0_12 = arith.constant 0 : index
      %13 = vector.load %arg7[%c0_11, %c0_12] : memref<512x128xf32, #tpu.memory_space<vmem>>, vector<512x128xf32>
      tpu.vector_store %arg7[%c0_11, %c0_12], %12 {strides = array<i32>} : memref<512x128xf32, #tpu.memory_space<vmem>>, vector<512x128xf32>,
    } else {
    }
    %c0 = arith.constant 0 : index
    %c0_1 = arith.constant 0 : index
    %3 = vector.load %arg7[%c0, %c0_1] : memref<512x128xf32, #tpu.memory_space<vmem>>, vector<512x128xf32>
    %c0_2 = arith.constant 0 : index
    %c0_3 = arith.constant 0 : index
    %4 = vector.load %arg3[%c0_2, %c0_3] : memref<512x128xbf16, #tpu.memory_space<vmem>>, vector<512x128xbf16>
    %c0_4 = arith.constant 0 : index
    %c0_5 = arith.constant 0 : index
    %5 = vector.load %arg4[%c0_4, %c0_5] : memref<128x128xbf16, #tpu.memory_space<vmem>>, vector<128x128xbf16>
    %cst = arith.constant dense<0.000000e+00> : vector<512x128xf32>
    %6 = tpu.matmul %4, %5, %cst {dimension_numbers = #tpu.dot_dimension_numbers<[1], [0], [0], [1], [0, 0, 1, 1], [], []>} : vector<512x128xbf16>, vector<128x128xbf16>, vector<512x128xf32> -> vector<512x128xf32>
    %7 = arith.addf %3, %6 : vector<512x128xf32>
    %c0_6 = arith.constant 0 : index
    %c0_7 = arith.constant 0 : index
    %8 = vector.load %arg7[%c0_6, %c0_7] : memref<512x128xf32, #tpu.memory_space<vmem>>, vector<512x128xf32>
    tpu.vector_store %arg7[%c0_6, %c0_7], %7 {strides = array<i32>} : memref<512x128xf32, #tpu.memory_space<vmem>>, vector<512x128xf32>,
    %c0_i32_8 = arith.constant 0 : i32
    %9 = arith.cmpi eq, %arg2, %c0_i32_8 : i32
    %10 = arith.extui %9 : i1 to i32
    %c0_i32_9 = arith.constant 0 : i32
    %11 = arith.cmpi ne, %10, %c0_i32_9 : i32
    scf.if %11 {
      %c0_10 = arith.constant 0 : index
      %c0_11 = arith.constant 0 : index
      %12 = vector.load %arg7[%c0_10, %c0_11] : memref<512x128xf32, #tpu.memory_space<vmem>>, vector<512x128xf32>
      %c0_12 = arith.constant 0 : index
      %c0_13 = arith.constant 0 : index
      %13 = vector.load %arg5[%c0_12, %c0_13] : memref<1x128xf32, #tpu.memory_space<vmem>>, vector<1x128xf32>
      %14 = vector.broadcast %13 : vector<1x128xf32> to vector<512x128xf32>
      %15 = arith.addf %12, %14 : vector<512x128xf32>
      %cst_14 = arith.constant 0.000000e+00 : f32
      %16 = vector.broadcast %cst_14 : f32 to vector<512x128xf32>
      %17 = arith.cmpf oge, %15, %16 : vector<512x128xf32>
      %cst_15 = arith.constant 2.000000e-01 : f32
      %18 = vector.broadcast %cst_15 : f32 to vector<512x128xf32>
      %19 = arith.mulf %15, %18 : vector<512x128xf32>
      %20 = arith.select %17, %15, %19 : vector<512x128xi1>, vector<512x128xf32>
      %21 = arith.truncf %20 : vector<512x128xf32> to vector<512x128xbf16>
      %c0_16 = arith.constant 0 : index
      %c0_17 = arith.constant 0 : index
      %22 = vector.load %arg6[%c0_16, %c0_17] : memref<512x128xbf16, #tpu.memory_space<vmem>>, vector<512x128xbf16>
      tpu.vector_store %arg6[%c0_16, %c0_17], %21 {strides = array<i32>} : memref<512x128xbf16, #tpu.memory_space<vmem>>, vector<512x128xbf16>,
    } else {
    }
    return
  }
  func.func @transform_0(%arg0: i32, %arg1: i32, %arg2: i32) -> (i32, i32) {
    %c0_i32 = arith.constant 0 : i32
    return %arg0, %arg2 : i32, i32
  }
  func.func @transform_1(%arg0: i32, %arg1: i32, %arg2: i32) -> (i32, i32) {
    %c0_i32 = arith.constant 0 : i32
    return %arg2, %arg1 : i32, i32
  }
  func.func @transform_2(%arg0: i32, %arg1: i32, %arg2: i32) -> (i32, i32) {
    %c0_i32 = arith.constant 0 : i32
    %c0_i32_0 = arith.constant 0 : i32
    return %c0_i32, %arg1 : i32, i32
  }
  func.func @transform_3(%arg0: i32, %arg1: i32, %arg2: i32) -> (i32, i32) {
    %c0_i32 = arith.constant 0 : i32
    return %arg0, %arg1 : i32, i32
  }
}

module attributes {stable_mosaic.version = 11 : i64} {
  func.func @_mm_kernel(%arg0: i32, %arg1: i32, %arg2: i32, %arg3: memref<128x256xbf16, #tpu.memory_space<vmem>>, %arg4: memref<256x128xbf16, #tpu.memory_space<vmem>>, %arg5: memref<1x128xf32, #tpu.memory_space<vmem>>, %arg6: memref<128x128xbf16, #tpu.memory_space<vmem>>, %arg7: memref<128x128xf32, #tpu.memory_space<vmem>>) attributes {dimension_semantics = [#tpu.dimension_semantics<parallel>, #tpu.dimension_semantics<parallel>, #tpu.dimension_semantics<arbitrary>], iteration_bounds = array<i64: 1, 1, 1>, scalar_prefetch = 0 : i64, scratch_operands = 1 : i64, tpu.core_type = #tpu.core_type<tc>, window_params = [{transform_indices = @transform_0, window_bounds = array<i64: 128, 256>}, {transform_indices = @transform_1, window_bounds = array<i64: 256, 128>}, {transform_indices = @transform_2, window_bounds = array<i64: 1, 128>}, {transform_indices = @transform_3, window_bounds = array<i64: 128, 128>}]} {
    %c0_i32 = arith.constant 0 : i32
    %0 = arith.cmpi eq, %arg2, %c0_i32 : i32
    %1 = arith.extui %0 : i1 to i32
    %c0_i32_0 = arith.constant 0 : i32
    %2 = arith.cmpi ne, %1, %c0_i32_0 : i32
    scf.if %2 {
      %cst_10 = arith.constant 0.000000e+00 : f32
      %12 = vector.broadcast %cst_10 : f32 to vector<128x128xf32>
      %c0_11 = arith.constant 0 : index
      %c0_12 = arith.constant 0 : index
      %13 = vector.load %arg7[%c0_11, %c0_12] : memref<128x128xf32, #tpu.memory_space<vmem>>, vector<128x128xf32>
      tpu.vector_store %arg7[%c0_11, %c0_12], %12 {strides = array<i32>} : memref<128x128xf32, #tpu.memory_space<vmem>>, vector<128x128xf32>,
    } else {
    }
    %c0 = arith.constant 0 : index
    %c0_1 = arith.constant 0 : index
    %3 = vector.load %arg7[%c0, %c0_1] : memref<128x128xf32, #tpu.memory_space<vmem>>, vector<128x128xf32>
    %c0_2 = arith.constant 0 : index
    %c0_3 = arith.constant 0 : index
    %4 = vector.load %arg3[%c0_2, %c0_3] : memref<128x256xbf16, #tpu.memory_space<vmem>>, vector<128x256xbf16>
    %c0_4 = arith.constant 0 : index
    %c0_5 = arith.constant 0 : index
    %5 = vector.load %arg4[%c0_4, %c0_5] : memref<256x128xbf16, #tpu.memory_space<vmem>>, vector<256x128xbf16>
    %cst = arith.constant dense<0.000000e+00> : vector<128x128xf32>
    %6 = tpu.matmul %4, %5, %cst {dimension_numbers = #tpu.dot_dimension_numbers<[1], [0], [0], [1], [0, 0, 1, 1], [], []>} : vector<128x256xbf16>, vector<256x128xbf16>, vector<128x128xf32> -> vector<128x128xf32>
    %7 = arith.addf %3, %6 : vector<128x128xf32>
    %c0_6 = arith.constant 0 : index
    %c0_7 = arith.constant 0 : index
    %8 = vector.load %arg7[%c0_6, %c0_7] : memref<128x128xf32, #tpu.memory_space<vmem>>, vector<128x128xf32>
    tpu.vector_store %arg7[%c0_6, %c0_7], %7 {strides = array<i32>} : memref<128x128xf32, #tpu.memory_space<vmem>>, vector<128x128xf32>,
    %c0_i32_8 = arith.constant 0 : i32
    %9 = arith.cmpi eq, %arg2, %c0_i32_8 : i32
    %10 = arith.extui %9 : i1 to i32
    %c0_i32_9 = arith.constant 0 : i32
    %11 = arith.cmpi ne, %10, %c0_i32_9 : i32
    scf.if %11 {
      %c0_10 = arith.constant 0 : index
      %c0_11 = arith.constant 0 : index
      %12 = vector.load %arg7[%c0_10, %c0_11] : memref<128x128xf32, #tpu.memory_space<vmem>>, vector<128x128xf32>
      %c0_12 = arith.constant 0 : index
      %c0_13 = arith.constant 0 : index
      %13 = vector.load %arg5[%c0_12, %c0_13] : memref<1x128xf32, #tpu.memory_space<vmem>>, vector<1x128xf32>
      %14 = vector.broadcast %13 : vector<1x128xf32> to vector<128x128xf32>
      %15 = arith.addf %12, %14 : vector<128x128xf32>
      %16 = arith.truncf %15 : vector<128x128xf32> to vector<128x128xbf16>
      %c0_14 = arith.constant 0 : index
      %c0_15 = arith.constant 0 : index
      %17 = vector.load %arg6[%c0_14, %c0_15] : memref<128x128xbf16, #tpu.memory_space<vmem>>, vector<128x128xbf16>
      tpu.vector_store %arg6[%c0_14, %c0_15], %16 {strides = array<i32>} : memref<128x128xbf16, #tpu.memory_space<vmem>>, vector<128x128xbf16>,
    } else {
    }
    return
  }
  func.func @transform_0(%arg0: i32, %arg1: i32, %arg2: i32) -> (i32, i32) {
    %c0_i32 = arith.constant 0 : i32
    return %arg0, %arg2 : i32, i32
  }
  func.func @transform_1(%arg0: i32, %arg1: i32, %arg2: i32) -> (i32, i32) {
    %c0_i32 = arith.constant 0 : i32
    return %arg2, %arg1 : i32, i32
  }
  func.func @transform_2(%arg0: i32, %arg1: i32, %arg2: i32) -> (i32, i32) {
    %c0_i32 = arith.constant 0 : i32
    %c0_i32_0 = arith.constant 0 : i32
    return %c0_i32, %arg1 : i32, i32
  }
  func.func @transform_3(%arg0: i32, %arg1: i32, %arg2: i32) -> (i32, i32) {
    %c0_i32 = arith.constant 0 : i32
    return %arg0, %arg1 : i32, i32
  }
}

module attributes {stable_mosaic.version = 11 : i64} {
  func.func @_bn_stats_kernel(%arg0: i32, %arg1: memref<128x128xbf16, #tpu.memory_space<vmem>>, %arg2: memref<1x128xf32, #tpu.memory_space<vmem>>, %arg3: memref<1x128xf32, #tpu.memory_space<vmem>>) attributes {dimension_semantics = [#tpu.dimension_semantics<arbitrary>], iteration_bounds = array<i64: 1>, scalar_prefetch = 0 : i64, scratch_operands = 0 : i64, tpu.core_type = #tpu.core_type<tc>, window_params = [{transform_indices = @transform_0, window_bounds = array<i64: 128, 128>}, {pipeline_mode = #tpu.pipeline_mode<synchronous>, transform_indices = @transform_1, window_bounds = array<i64: 1, 128>}, {pipeline_mode = #tpu.pipeline_mode<synchronous>, transform_indices = @transform_2, window_bounds = array<i64: 1, 128>}]} {
    %c0_i32 = arith.constant 0 : i32
    %0 = arith.cmpi eq, %arg0, %c0_i32 : i32
    %1 = arith.extui %0 : i1 to i32
    %c0_i32_0 = arith.constant 0 : i32
    %2 = arith.cmpi ne, %1, %c0_i32_0 : i32
    scf.if %2 {
      %cst_11 = arith.constant 0.000000e+00 : f32
      %16 = vector.broadcast %cst_11 : f32 to vector<1x128xf32>
      %c0_12 = arith.constant 0 : index
      %c0_13 = arith.constant 0 : index
      %17 = vector.load %arg2[%c0_12, %c0_13] : memref<1x128xf32, #tpu.memory_space<vmem>>, vector<1x128xf32>
      tpu.vector_store %arg2[%c0_12, %c0_13], %16 {strides = array<i32>} : memref<1x128xf32, #tpu.memory_space<vmem>>, vector<1x128xf32>,
      %cst_14 = arith.constant 0.000000e+00 : f32
      %18 = vector.broadcast %cst_14 : f32 to vector<1x128xf32>
      %c0_15 = arith.constant 0 : index
      %c0_16 = arith.constant 0 : index
      %19 = vector.load %arg3[%c0_15, %c0_16] : memref<1x128xf32, #tpu.memory_space<vmem>>, vector<1x128xf32>
      tpu.vector_store %arg3[%c0_15, %c0_16], %18 {strides = array<i32>} : memref<1x128xf32, #tpu.memory_space<vmem>>, vector<1x128xf32>,
    } else {
    }
    %c0 = arith.constant 0 : index
    %c0_1 = arith.constant 0 : index
    %3 = vector.load %arg1[%c0, %c0_1] : memref<128x128xbf16, #tpu.memory_space<vmem>>, vector<128x128xbf16>
    %4 = arith.extf %3 : vector<128x128xbf16> to vector<128x128xf32>
    %c0_2 = arith.constant 0 : index
    %c0_3 = arith.constant 0 : index
    %5 = vector.load %arg2[%c0_2, %c0_3] : memref<1x128xf32, #tpu.memory_space<vmem>>, vector<1x128xf32>
    %cst = arith.constant dense<0.000000e+00> : vector<128xf32>
    %6 = vector.multi_reduction <add>, %4, %cst [0] : vector<128x128xf32> to vector<128xf32>
    %7 = vector.shape_cast %6 : vector<128xf32> to vector<1x128xf32>
    %8 = arith.addf %5, %7 : vector<1x128xf32>
    %c0_4 = arith.constant 0 : index
    %c0_5 = arith.constant 0 : index
    %9 = vector.load %arg2[%c0_4, %c0_5] : memref<1x128xf32, #tpu.memory_space<vmem>>, vector<1x128xf32>
    tpu.vector_store %arg2[%c0_4, %c0_5], %8 {strides = array<i32>} : memref<1x128xf32, #tpu.memory_space<vmem>>, vector<1x128xf32>,
    %c0_6 = arith.constant 0 : index
    %c0_7 = arith.constant 0 : index
    %10 = vector.load %arg3[%c0_6, %c0_7] : memref<1x128xf32, #tpu.memory_space<vmem>>, vector<1x128xf32>
    %11 = arith.mulf %4, %4 : vector<128x128xf32>
    %cst_8 = arith.constant dense<0.000000e+00> : vector<128xf32>
    %12 = vector.multi_reduction <add>, %11, %cst_8 [0] : vector<128x128xf32> to vector<128xf32>
    %13 = vector.shape_cast %12 : vector<128xf32> to vector<1x128xf32>
    %14 = arith.addf %10, %13 : vector<1x128xf32>
    %c0_9 = arith.constant 0 : index
    %c0_10 = arith.constant 0 : index
    %15 = vector.load %arg3[%c0_9, %c0_10] : memref<1x128xf32, #tpu.memory_space<vmem>>, vector<1x128xf32>
    tpu.vector_store %arg3[%c0_9, %c0_10], %14 {strides = array<i32>} : memref<1x128xf32, #tpu.memory_space<vmem>>, vector<1x128xf32>,
    return
  }
  func.func @transform_0(%arg0: i32) -> (i32, i32) {
    %c0_i32 = arith.constant 0 : i32
    %c0_i32_0 = arith.constant 0 : i32
    return %arg0, %c0_i32 : i32, i32
  }
  func.func @transform_1(%arg0: i32) -> (i32, i32) {
    %c0_i32 = arith.constant 0 : i32
    %c0_i32_0 = arith.constant 0 : i32
    %c0_i32_1 = arith.constant 0 : i32
    return %c0_i32, %c0_i32_0 : i32, i32
  }
  func.func @transform_2(%arg0: i32) -> (i32, i32) {
    %c0_i32 = arith.constant 0 : i32
    %c0_i32_0 = arith.constant 0 : i32
    %c0_i32_1 = arith.constant 0 : i32
    return %c0_i32, %c0_i32_0 : i32, i32
  }
}

module attributes {stable_mosaic.version = 11 : i64} {
  func.func @_scale_shift_act_kernel(%arg0: i32, %arg1: memref<128x128xbf16, #tpu.memory_space<vmem>>, %arg2: memref<1x128xf32, #tpu.memory_space<vmem>>, %arg3: memref<1x128xf32, #tpu.memory_space<vmem>>, %arg4: memref<128x128xbf16, #tpu.memory_space<vmem>>) attributes {dimension_semantics = [#tpu.dimension_semantics<parallel>], iteration_bounds = array<i64: 1>, scalar_prefetch = 0 : i64, scratch_operands = 0 : i64, tpu.core_type = #tpu.core_type<tc>, window_params = [{transform_indices = @transform_0, window_bounds = array<i64: 128, 128>}, {pipeline_mode = #tpu.pipeline_mode<synchronous>, transform_indices = @transform_1, window_bounds = array<i64: 1, 128>}, {pipeline_mode = #tpu.pipeline_mode<synchronous>, transform_indices = @transform_2, window_bounds = array<i64: 1, 128>}, {transform_indices = @transform_3, window_bounds = array<i64: 128, 128>}]} {
    %c0 = arith.constant 0 : index
    %c0_0 = arith.constant 0 : index
    %0 = vector.load %arg1[%c0, %c0_0] : memref<128x128xbf16, #tpu.memory_space<vmem>>, vector<128x128xbf16>
    %1 = arith.extf %0 : vector<128x128xbf16> to vector<128x128xf32>
    %c0_1 = arith.constant 0 : index
    %c0_2 = arith.constant 0 : index
    %2 = vector.load %arg2[%c0_1, %c0_2] : memref<1x128xf32, #tpu.memory_space<vmem>>, vector<1x128xf32>
    %3 = vector.broadcast %2 : vector<1x128xf32> to vector<128x128xf32>
    %4 = arith.mulf %1, %3 : vector<128x128xf32>
    %c0_3 = arith.constant 0 : index
    %c0_4 = arith.constant 0 : index
    %5 = vector.load %arg3[%c0_3, %c0_4] : memref<1x128xf32, #tpu.memory_space<vmem>>, vector<1x128xf32>
    %6 = vector.broadcast %5 : vector<1x128xf32> to vector<128x128xf32>
    %7 = arith.addf %4, %6 : vector<128x128xf32>
    %cst = arith.constant 0.000000e+00 : f32
    %8 = vector.broadcast %cst : f32 to vector<128x128xf32>
    %9 = arith.cmpf oge, %7, %8 : vector<128x128xf32>
    %cst_5 = arith.constant 2.000000e-01 : f32
    %10 = vector.broadcast %cst_5 : f32 to vector<128x128xf32>
    %11 = arith.mulf %7, %10 : vector<128x128xf32>
    %12 = arith.select %9, %7, %11 : vector<128x128xi1>, vector<128x128xf32>
    %13 = arith.truncf %12 : vector<128x128xf32> to vector<128x128xbf16>
    %c0_6 = arith.constant 0 : index
    %c0_7 = arith.constant 0 : index
    %14 = vector.load %arg4[%c0_6, %c0_7] : memref<128x128xbf16, #tpu.memory_space<vmem>>, vector<128x128xbf16>
    tpu.vector_store %arg4[%c0_6, %c0_7], %13 {strides = array<i32>} : memref<128x128xbf16, #tpu.memory_space<vmem>>, vector<128x128xbf16>,
    return
  }
  func.func @transform_0(%arg0: i32) -> (i32, i32) {
    %c0_i32 = arith.constant 0 : i32
    %c0_i32_0 = arith.constant 0 : i32
    return %arg0, %c0_i32 : i32, i32
  }
  func.func @transform_1(%arg0: i32) -> (i32, i32) {
    %c0_i32 = arith.constant 0 : i32
    %c0_i32_0 = arith.constant 0 : i32
    %c0_i32_1 = arith.constant 0 : i32
    return %c0_i32, %c0_i32_0 : i32, i32
  }
  func.func @transform_2(%arg0: i32) -> (i32, i32) {
    %c0_i32 = arith.constant 0 : i32
    %c0_i32_0 = arith.constant 0 : i32
    %c0_i32_1 = arith.constant 0 : i32
    return %c0_i32, %c0_i32_0 : i32, i32
  }
  func.func @transform_3(%arg0: i32) -> (i32, i32) {
    %c0_i32 = arith.constant 0 : i32
    %c0_i32_0 = arith.constant 0 : i32
    return %arg0, %c0_i32 : i32, i32
  }
}

module attributes {stable_mosaic.version = 11 : i64} {
  func.func @_mm_kernel(%arg0: i32, %arg1: i32, %arg2: i32, %arg3: memref<32x512xbf16, #tpu.memory_space<vmem>>, %arg4: memref<512x128xbf16, #tpu.memory_space<vmem>>, %arg5: memref<1x128xf32, #tpu.memory_space<vmem>>, %arg6: memref<32x128xbf16, #tpu.memory_space<vmem>>, %arg7: memref<32x128xf32, #tpu.memory_space<vmem>>) attributes {dimension_semantics = [#tpu.dimension_semantics<parallel>, #tpu.dimension_semantics<parallel>, #tpu.dimension_semantics<arbitrary>], iteration_bounds = array<i64: 1, 1, 1>, scalar_prefetch = 0 : i64, scratch_operands = 1 : i64, tpu.core_type = #tpu.core_type<tc>, window_params = [{transform_indices = @transform_0, window_bounds = array<i64: 32, 512>}, {transform_indices = @transform_1, window_bounds = array<i64: 512, 128>}, {transform_indices = @transform_2, window_bounds = array<i64: 1, 128>}, {transform_indices = @transform_3, window_bounds = array<i64: 32, 128>}]} {
    %c0_i32 = arith.constant 0 : i32
    %0 = arith.cmpi eq, %arg2, %c0_i32 : i32
    %1 = arith.extui %0 : i1 to i32
    %c0_i32_0 = arith.constant 0 : i32
    %2 = arith.cmpi ne, %1, %c0_i32_0 : i32
    scf.if %2 {
      %cst_10 = arith.constant 0.000000e+00 : f32
      %12 = vector.broadcast %cst_10 : f32 to vector<32x128xf32>
      %c0_11 = arith.constant 0 : index
      %c0_12 = arith.constant 0 : index
      %13 = vector.load %arg7[%c0_11, %c0_12] : memref<32x128xf32, #tpu.memory_space<vmem>>, vector<32x128xf32>
      tpu.vector_store %arg7[%c0_11, %c0_12], %12 {strides = array<i32>} : memref<32x128xf32, #tpu.memory_space<vmem>>, vector<32x128xf32>,
    } else {
    }
    %c0 = arith.constant 0 : index
    %c0_1 = arith.constant 0 : index
    %3 = vector.load %arg7[%c0, %c0_1] : memref<32x128xf32, #tpu.memory_space<vmem>>, vector<32x128xf32>
    %c0_2 = arith.constant 0 : index
    %c0_3 = arith.constant 0 : index
    %4 = vector.load %arg3[%c0_2, %c0_3] : memref<32x512xbf16, #tpu.memory_space<vmem>>, vector<32x512xbf16>
    %c0_4 = arith.constant 0 : index
    %c0_5 = arith.constant 0 : index
    %5 = vector.load %arg4[%c0_4, %c0_5] : memref<512x128xbf16, #tpu.memory_space<vmem>>, vector<512x128xbf16>
    %cst = arith.constant dense<0.000000e+00> : vector<32x128xf32>
    %6 = tpu.matmul %4, %5, %cst {dimension_numbers = #tpu.dot_dimension_numbers<[1], [0], [0], [1], [0, 0, 1, 1], [], []>} : vector<32x512xbf16>, vector<512x128xbf16>, vector<32x128xf32> -> vector<32x128xf32>
    %7 = arith.addf %3, %6 : vector<32x128xf32>
    %c0_6 = arith.constant 0 : index
    %c0_7 = arith.constant 0 : index
    %8 = vector.load %arg7[%c0_6, %c0_7] : memref<32x128xf32, #tpu.memory_space<vmem>>, vector<32x128xf32>
    tpu.vector_store %arg7[%c0_6, %c0_7], %7 {strides = array<i32>} : memref<32x128xf32, #tpu.memory_space<vmem>>, vector<32x128xf32>,
    %c0_i32_8 = arith.constant 0 : i32
    %9 = arith.cmpi eq, %arg2, %c0_i32_8 : i32
    %10 = arith.extui %9 : i1 to i32
    %c0_i32_9 = arith.constant 0 : i32
    %11 = arith.cmpi ne, %10, %c0_i32_9 : i32
    scf.if %11 {
      %c0_10 = arith.constant 0 : index
      %c0_11 = arith.constant 0 : index
      %12 = vector.load %arg7[%c0_10, %c0_11] : memref<32x128xf32, #tpu.memory_space<vmem>>, vector<32x128xf32>
      %c0_12 = arith.constant 0 : index
      %c0_13 = arith.constant 0 : index
      %13 = vector.load %arg5[%c0_12, %c0_13] : memref<1x128xf32, #tpu.memory_space<vmem>>, vector<1x128xf32>
      %14 = vector.broadcast %13 : vector<1x128xf32> to vector<32x128xf32>
      %15 = arith.addf %12, %14 : vector<32x128xf32>
      %16 = arith.truncf %15 : vector<32x128xf32> to vector<32x128xbf16>
      %c0_14 = arith.constant 0 : index
      %c0_15 = arith.constant 0 : index
      %17 = vector.load %arg6[%c0_14, %c0_15] : memref<32x128xbf16, #tpu.memory_space<vmem>>, vector<32x128xbf16>
      tpu.vector_store %arg6[%c0_14, %c0_15], %16 {strides = array<i32>} : memref<32x128xbf16, #tpu.memory_space<vmem>>, vector<32x128xbf16>,
    } else {
    }
    return
  }
  func.func @transform_0(%arg0: i32, %arg1: i32, %arg2: i32) -> (i32, i32) {
    %c0_i32 = arith.constant 0 : i32
    return %arg0, %arg2 : i32, i32
  }
  func.func @transform_1(%arg0: i32, %arg1: i32, %arg2: i32) -> (i32, i32) {
    %c0_i32 = arith.constant 0 : i32
    return %arg2, %arg1 : i32, i32
  }
  func.func @transform_2(%arg0: i32, %arg1: i32, %arg2: i32) -> (i32, i32) {
    %c0_i32 = arith.constant 0 : i32
    %c0_i32_0 = arith.constant 0 : i32
    return %c0_i32, %arg1 : i32, i32
  }
  func.func @transform_3(%arg0: i32, %arg1: i32, %arg2: i32) -> (i32, i32) {
    %c0_i32 = arith.constant 0 : i32
    return %arg0, %arg1 : i32, i32
  }
}

module attributes {stable_mosaic.version = 11 : i64} {
  func.func @_bn_stats_kernel(%arg0: i32, %arg1: memref<32x128xbf16, #tpu.memory_space<vmem>>, %arg2: memref<1x128xf32, #tpu.memory_space<vmem>>, %arg3: memref<1x128xf32, #tpu.memory_space<vmem>>) attributes {dimension_semantics = [#tpu.dimension_semantics<arbitrary>], iteration_bounds = array<i64: 1>, scalar_prefetch = 0 : i64, scratch_operands = 0 : i64, tpu.core_type = #tpu.core_type<tc>, window_params = [{transform_indices = @transform_0, window_bounds = array<i64: 32, 128>}, {pipeline_mode = #tpu.pipeline_mode<synchronous>, transform_indices = @transform_1, window_bounds = array<i64: 1, 128>}, {pipeline_mode = #tpu.pipeline_mode<synchronous>, transform_indices = @transform_2, window_bounds = array<i64: 1, 128>}]} {
    %c0_i32 = arith.constant 0 : i32
    %0 = arith.cmpi eq, %arg0, %c0_i32 : i32
    %1 = arith.extui %0 : i1 to i32
    %c0_i32_0 = arith.constant 0 : i32
    %2 = arith.cmpi ne, %1, %c0_i32_0 : i32
    scf.if %2 {
      %cst_11 = arith.constant 0.000000e+00 : f32
      %16 = vector.broadcast %cst_11 : f32 to vector<1x128xf32>
      %c0_12 = arith.constant 0 : index
      %c0_13 = arith.constant 0 : index
      %17 = vector.load %arg2[%c0_12, %c0_13] : memref<1x128xf32, #tpu.memory_space<vmem>>, vector<1x128xf32>
      tpu.vector_store %arg2[%c0_12, %c0_13], %16 {strides = array<i32>} : memref<1x128xf32, #tpu.memory_space<vmem>>, vector<1x128xf32>,
      %cst_14 = arith.constant 0.000000e+00 : f32
      %18 = vector.broadcast %cst_14 : f32 to vector<1x128xf32>
      %c0_15 = arith.constant 0 : index
      %c0_16 = arith.constant 0 : index
      %19 = vector.load %arg3[%c0_15, %c0_16] : memref<1x128xf32, #tpu.memory_space<vmem>>, vector<1x128xf32>
      tpu.vector_store %arg3[%c0_15, %c0_16], %18 {strides = array<i32>} : memref<1x128xf32, #tpu.memory_space<vmem>>, vector<1x128xf32>,
    } else {
    }
    %c0 = arith.constant 0 : index
    %c0_1 = arith.constant 0 : index
    %3 = vector.load %arg1[%c0, %c0_1] : memref<32x128xbf16, #tpu.memory_space<vmem>>, vector<32x128xbf16>
    %4 = arith.extf %3 : vector<32x128xbf16> to vector<32x128xf32>
    %c0_2 = arith.constant 0 : index
    %c0_3 = arith.constant 0 : index
    %5 = vector.load %arg2[%c0_2, %c0_3] : memref<1x128xf32, #tpu.memory_space<vmem>>, vector<1x128xf32>
    %cst = arith.constant dense<0.000000e+00> : vector<128xf32>
    %6 = vector.multi_reduction <add>, %4, %cst [0] : vector<32x128xf32> to vector<128xf32>
    %7 = vector.shape_cast %6 : vector<128xf32> to vector<1x128xf32>
    %8 = arith.addf %5, %7 : vector<1x128xf32>
    %c0_4 = arith.constant 0 : index
    %c0_5 = arith.constant 0 : index
    %9 = vector.load %arg2[%c0_4, %c0_5] : memref<1x128xf32, #tpu.memory_space<vmem>>, vector<1x128xf32>
    tpu.vector_store %arg2[%c0_4, %c0_5], %8 {strides = array<i32>} : memref<1x128xf32, #tpu.memory_space<vmem>>, vector<1x128xf32>,
    %c0_6 = arith.constant 0 : index
    %c0_7 = arith.constant 0 : index
    %10 = vector.load %arg3[%c0_6, %c0_7] : memref<1x128xf32, #tpu.memory_space<vmem>>, vector<1x128xf32>
    %11 = arith.mulf %4, %4 : vector<32x128xf32>
    %cst_8 = arith.constant dense<0.000000e+00> : vector<128xf32>
    %12 = vector.multi_reduction <add>, %11, %cst_8 [0] : vector<32x128xf32> to vector<128xf32>
    %13 = vector.shape_cast %12 : vector<128xf32> to vector<1x128xf32>
    %14 = arith.addf %10, %13 : vector<1x128xf32>
    %c0_9 = arith.constant 0 : index
    %c0_10 = arith.constant 0 : index
    %15 = vector.load %arg3[%c0_9, %c0_10] : memref<1x128xf32, #tpu.memory_space<vmem>>, vector<1x128xf32>
    tpu.vector_store %arg3[%c0_9, %c0_10], %14 {strides = array<i32>} : memref<1x128xf32, #tpu.memory_space<vmem>>, vector<1x128xf32>,
    return
  }
  func.func @transform_0(%arg0: i32) -> (i32, i32) {
    %c0_i32 = arith.constant 0 : i32
    %c0_i32_0 = arith.constant 0 : i32
    return %arg0, %c0_i32 : i32, i32
  }
  func.func @transform_1(%arg0: i32) -> (i32, i32) {
    %c0_i32 = arith.constant 0 : i32
    %c0_i32_0 = arith.constant 0 : i32
    %c0_i32_1 = arith.constant 0 : i32
    return %c0_i32, %c0_i32_0 : i32, i32
  }
  func.func @transform_2(%arg0: i32) -> (i32, i32) {
    %c0_i32 = arith.constant 0 : i32
    %c0_i32_0 = arith.constant 0 : i32
    %c0_i32_1 = arith.constant 0 : i32
    return %c0_i32, %c0_i32_0 : i32, i32
  }
}

module attributes {stable_mosaic.version = 11 : i64} {
  func.func @_scale_shift_act_kernel(%arg0: i32, %arg1: memref<32x128xbf16, #tpu.memory_space<vmem>>, %arg2: memref<1x128xf32, #tpu.memory_space<vmem>>, %arg3: memref<1x128xf32, #tpu.memory_space<vmem>>, %arg4: memref<32x128xbf16, #tpu.memory_space<vmem>>) attributes {dimension_semantics = [#tpu.dimension_semantics<parallel>], iteration_bounds = array<i64: 1>, scalar_prefetch = 0 : i64, scratch_operands = 0 : i64, tpu.core_type = #tpu.core_type<tc>, window_params = [{transform_indices = @transform_0, window_bounds = array<i64: 32, 128>}, {pipeline_mode = #tpu.pipeline_mode<synchronous>, transform_indices = @transform_1, window_bounds = array<i64: 1, 128>}, {pipeline_mode = #tpu.pipeline_mode<synchronous>, transform_indices = @transform_2, window_bounds = array<i64: 1, 128>}, {transform_indices = @transform_3, window_bounds = array<i64: 32, 128>}]} {
    %c0 = arith.constant 0 : index
    %c0_0 = arith.constant 0 : index
    %0 = vector.load %arg1[%c0, %c0_0] : memref<32x128xbf16, #tpu.memory_space<vmem>>, vector<32x128xbf16>
    %1 = arith.extf %0 : vector<32x128xbf16> to vector<32x128xf32>
    %c0_1 = arith.constant 0 : index
    %c0_2 = arith.constant 0 : index
    %2 = vector.load %arg2[%c0_1, %c0_2] : memref<1x128xf32, #tpu.memory_space<vmem>>, vector<1x128xf32>
    %3 = vector.broadcast %2 : vector<1x128xf32> to vector<32x128xf32>
    %4 = arith.mulf %1, %3 : vector<32x128xf32>
    %c0_3 = arith.constant 0 : index
    %c0_4 = arith.constant 0 : index
    %5 = vector.load %arg3[%c0_3, %c0_4] : memref<1x128xf32, #tpu.memory_space<vmem>>, vector<1x128xf32>
    %6 = vector.broadcast %5 : vector<1x128xf32> to vector<32x128xf32>
    %7 = arith.addf %4, %6 : vector<32x128xf32>
    %cst = arith.constant 0.000000e+00 : f32
    %8 = vector.broadcast %cst : f32 to vector<32x128xf32>
    %9 = arith.cmpf oge, %7, %8 : vector<32x128xf32>
    %cst_5 = arith.constant 2.000000e-01 : f32
    %10 = vector.broadcast %cst_5 : f32 to vector<32x128xf32>
    %11 = arith.mulf %7, %10 : vector<32x128xf32>
    %12 = arith.select %9, %7, %11 : vector<32x128xi1>, vector<32x128xf32>
    %13 = arith.truncf %12 : vector<32x128xf32> to vector<32x128xbf16>
    %c0_6 = arith.constant 0 : index
    %c0_7 = arith.constant 0 : index
    %14 = vector.load %arg4[%c0_6, %c0_7] : memref<32x128xbf16, #tpu.memory_space<vmem>>, vector<32x128xbf16>
    tpu.vector_store %arg4[%c0_6, %c0_7], %13 {strides = array<i32>} : memref<32x128xbf16, #tpu.memory_space<vmem>>, vector<32x128xbf16>,
    return
  }
  func.func @transform_0(%arg0: i32) -> (i32, i32) {
    %c0_i32 = arith.constant 0 : i32
    %c0_i32_0 = arith.constant 0 : i32
    return %arg0, %c0_i32 : i32, i32
  }
  func.func @transform_1(%arg0: i32) -> (i32, i32) {
    %c0_i32 = arith.constant 0 : i32
    %c0_i32_0 = arith.constant 0 : i32
    %c0_i32_1 = arith.constant 0 : i32
    return %c0_i32, %c0_i32_0 : i32, i32
  }
  func.func @transform_2(%arg0: i32) -> (i32, i32) {
    %c0_i32 = arith.constant 0 : i32
    %c0_i32_0 = arith.constant 0 : i32
    %c0_i32_1 = arith.constant 0 : i32
    return %c0_i32, %c0_i32_0 : i32, i32
  }
  func.func @transform_3(%arg0: i32) -> (i32, i32) {
    %c0_i32 = arith.constant 0 : i32
    %c0_i32_0 = arith.constant 0 : i32
    return %arg0, %c0_i32 : i32, i32
  }
}

module attributes {stable_mosaic.version = 11 : i64} {
  func.func @_mm_kernel(%arg0: i32, %arg1: i32, %arg2: i32, %arg3: memref<32x128xbf16, #tpu.memory_space<vmem>>, %arg4: memref<128x128xbf16, #tpu.memory_space<vmem>>, %arg5: memref<1x128xf32, #tpu.memory_space<vmem>>, %arg6: memref<32x128xbf16, #tpu.memory_space<vmem>>, %arg7: memref<32x128xf32, #tpu.memory_space<vmem>>) attributes {dimension_semantics = [#tpu.dimension_semantics<parallel>, #tpu.dimension_semantics<parallel>, #tpu.dimension_semantics<arbitrary>], iteration_bounds = array<i64: 1, 1, 1>, scalar_prefetch = 0 : i64, scratch_operands = 1 : i64, tpu.core_type = #tpu.core_type<tc>, window_params = [{transform_indices = @transform_0, window_bounds = array<i64: 32, 128>}, {transform_indices = @transform_1, window_bounds = array<i64: 128, 128>}, {transform_indices = @transform_2, window_bounds = array<i64: 1, 128>}, {transform_indices = @transform_3, window_bounds = array<i64: 32, 128>}]} {
    %c0_i32 = arith.constant 0 : i32
    %0 = arith.cmpi eq, %arg2, %c0_i32 : i32
    %1 = arith.extui %0 : i1 to i32
    %c0_i32_0 = arith.constant 0 : i32
    %2 = arith.cmpi ne, %1, %c0_i32_0 : i32
    scf.if %2 {
      %cst_10 = arith.constant 0.000000e+00 : f32
      %12 = vector.broadcast %cst_10 : f32 to vector<32x128xf32>
      %c0_11 = arith.constant 0 : index
      %c0_12 = arith.constant 0 : index
      %13 = vector.load %arg7[%c0_11, %c0_12] : memref<32x128xf32, #tpu.memory_space<vmem>>, vector<32x128xf32>
      tpu.vector_store %arg7[%c0_11, %c0_12], %12 {strides = array<i32>} : memref<32x128xf32, #tpu.memory_space<vmem>>, vector<32x128xf32>,
    } else {
    }
    %c0 = arith.constant 0 : index
    %c0_1 = arith.constant 0 : index
    %3 = vector.load %arg7[%c0, %c0_1] : memref<32x128xf32, #tpu.memory_space<vmem>>, vector<32x128xf32>
    %c0_2 = arith.constant 0 : index
    %c0_3 = arith.constant 0 : index
    %4 = vector.load %arg3[%c0_2, %c0_3] : memref<32x128xbf16, #tpu.memory_space<vmem>>, vector<32x128xbf16>
    %c0_4 = arith.constant 0 : index
    %c0_5 = arith.constant 0 : index
    %5 = vector.load %arg4[%c0_4, %c0_5] : memref<128x128xbf16, #tpu.memory_space<vmem>>, vector<128x128xbf16>
    %cst = arith.constant dense<0.000000e+00> : vector<32x128xf32>
    %6 = tpu.matmul %4, %5, %cst {dimension_numbers = #tpu.dot_dimension_numbers<[1], [0], [0], [1], [0, 0, 1, 1], [], []>} : vector<32x128xbf16>, vector<128x128xbf16>, vector<32x128xf32> -> vector<32x128xf32>
    %7 = arith.addf %3, %6 : vector<32x128xf32>
    %c0_6 = arith.constant 0 : index
    %c0_7 = arith.constant 0 : index
    %8 = vector.load %arg7[%c0_6, %c0_7] : memref<32x128xf32, #tpu.memory_space<vmem>>, vector<32x128xf32>
    tpu.vector_store %arg7[%c0_6, %c0_7], %7 {strides = array<i32>} : memref<32x128xf32, #tpu.memory_space<vmem>>, vector<32x128xf32>,
    %c0_i32_8 = arith.constant 0 : i32
    %9 = arith.cmpi eq, %arg2, %c0_i32_8 : i32
    %10 = arith.extui %9 : i1 to i32
    %c0_i32_9 = arith.constant 0 : i32
    %11 = arith.cmpi ne, %10, %c0_i32_9 : i32
    scf.if %11 {
      %c0_10 = arith.constant 0 : index
      %c0_11 = arith.constant 0 : index
      %12 = vector.load %arg7[%c0_10, %c0_11] : memref<32x128xf32, #tpu.memory_space<vmem>>, vector<32x128xf32>
      %c0_12 = arith.constant 0 : index
      %c0_13 = arith.constant 0 : index
      %13 = vector.load %arg5[%c0_12, %c0_13] : memref<1x128xf32, #tpu.memory_space<vmem>>, vector<1x128xf32>
      %14 = vector.broadcast %13 : vector<1x128xf32> to vector<32x128xf32>
      %15 = arith.addf %12, %14 : vector<32x128xf32>
      %16 = arith.truncf %15 : vector<32x128xf32> to vector<32x128xbf16>
      %c0_14 = arith.constant 0 : index
      %c0_15 = arith.constant 0 : index
      %17 = vector.load %arg6[%c0_14, %c0_15] : memref<32x128xbf16, #tpu.memory_space<vmem>>, vector<32x128xbf16>
      tpu.vector_store %arg6[%c0_14, %c0_15], %16 {strides = array<i32>} : memref<32x128xbf16, #tpu.memory_space<vmem>>, vector<32x128xbf16>,
    } else {
    }
    return
  }
  func.func @transform_0(%arg0: i32, %arg1: i32, %arg2: i32) -> (i32, i32) {
    %c0_i32 = arith.constant 0 : i32
    return %arg0, %arg2 : i32, i32
  }
  func.func @transform_1(%arg0: i32, %arg1: i32, %arg2: i32) -> (i32, i32) {
    %c0_i32 = arith.constant 0 : i32
    return %arg2, %arg1 : i32, i32
  }
  func.func @transform_2(%arg0: i32, %arg1: i32, %arg2: i32) -> (i32, i32) {
    %c0_i32 = arith.constant 0 : i32
    %c0_i32_0 = arith.constant 0 : i32
    return %c0_i32, %arg1 : i32, i32
  }
  func.func @transform_3(%arg0: i32, %arg1: i32, %arg2: i32) -> (i32, i32) {
    %c0_i32 = arith.constant 0 : i32
    return %arg0, %arg1 : i32, i32
  }
}

module attributes {stable_mosaic.version = 11 : i64} {
  func.func @_sba_attn_kernel(%arg0: i32, %arg1: memref<1x16x8xbf16, #tpu.memory_space<vmem>>, %arg2: memref<1x16x8xbf16, #tpu.memory_space<vmem>>, %arg3: memref<1x16x64xbf16, #tpu.memory_space<vmem>>, %arg4: memref<1x16x64xbf16, #tpu.memory_space<vmem>>, %arg5: memref<1x1xf32, #tpu.memory_space<vmem>>, %arg6: memref<1x16x64xbf16, #tpu.memory_space<vmem>>) attributes {dimension_semantics = [#tpu.dimension_semantics<parallel>], iteration_bounds = array<i64: 2>, scalar_prefetch = 0 : i64, scratch_operands = 0 : i64, tpu.core_type = #tpu.core_type<tc>, window_params = [{transform_indices = @transform_0, window_bounds = array<i64: 1, 16, 8>}, {transform_indices = @transform_1, window_bounds = array<i64: 1, 16, 8>}, {transform_indices = @transform_2, window_bounds = array<i64: 1, 16, 64>}, {transform_indices = @transform_3, window_bounds = array<i64: 1, 16, 64>}, {pipeline_mode = #tpu.pipeline_mode<synchronous>, transform_indices = @transform_4, window_bounds = array<i64: 1, 1>}, {transform_indices = @transform_5, window_bounds = array<i64: 1, 16, 64>}]} {
    %c0 = arith.constant 0 : index
    %c0_0 = arith.constant 0 : index
    %c0_1 = arith.constant 0 : index
    %0 = vector.load %arg1[%c0, %c0_0, %c0_1] : memref<1x16x8xbf16, #tpu.memory_space<vmem>>, vector<1x16x8xbf16>
    %1 = vector.shape_cast %0 : vector<1x16x8xbf16> to vector<16x8xbf16>
    %c0_2 = arith.constant 0 : index
    %c0_3 = arith.constant 0 : index
    %c0_4 = arith.constant 0 : index
    %2 = vector.load %arg2[%c0_2, %c0_3, %c0_4] : memref<1x16x8xbf16, #tpu.memory_space<vmem>>, vector<1x16x8xbf16>
    %3 = vector.shape_cast %2 : vector<1x16x8xbf16> to vector<16x8xbf16>
    %cst = arith.constant dense<0.000000e+00> : vector<16x16xf32>
    %4 = tpu.matmul %1, %3, %cst {dimension_numbers = #tpu.dot_dimension_numbers<[1], [1], [0], [0], [0, 0, 1, 0], [], []>} : vector<16x8xbf16>, vector<16x8xbf16>, vector<16x16xf32> -> vector<16x16xf32>
    %cst_5 = arith.constant dense<0xFF800000> : vector<16xf32>
    %5 = vector.multi_reduction <maximumf>, %4, %cst_5 [1] : vector<16x16xf32> to vector<16xf32>
    %6 = vector.shape_cast %5 : vector<16xf32> to vector<16x1xf32>
    %7 = vector.broadcast %6 : vector<16x1xf32> to vector<16x16xf32>
    %8 = arith.subf %4, %7 : vector<16x16xf32>
    %9 = math.exp %8 : vector<16x16xf32>
    %cst_6 = arith.constant dense<0.000000e+00> : vector<16xf32>
    %10 = vector.multi_reduction <add>, %9, %cst_6 [1] : vector<16x16xf32> to vector<16xf32>
    %11 = vector.shape_cast %10 : vector<16xf32> to vector<16x1xf32>
    %12 = vector.broadcast %11 : vector<16x1xf32> to vector<16x16xf32>
    %13 = arith.divf %9, %12 : vector<16x16xf32>
    %c0_7 = arith.constant 0 : index
    %c0_8 = arith.constant 0 : index
    %c0_9 = arith.constant 0 : index
    %14 = vector.load %arg3[%c0_7, %c0_8, %c0_9] : memref<1x16x64xbf16, #tpu.memory_space<vmem>>, vector<1x16x64xbf16>
    %15 = vector.shape_cast %14 : vector<1x16x64xbf16> to vector<16x64xbf16>
    %16 = arith.extf %15 : vector<16x64xbf16> to vector<16x64xf32>
    %cst_10 = arith.constant dense<0.000000e+00> : vector<16x64xf32>
    %17 = tpu.matmul %13, %16, %cst_10 {dimension_numbers = #tpu.dot_dimension_numbers<[1], [0], [0], [1], [0, 0, 1, 1], [], []>} : vector<16x16xf32>, vector<16x64xf32>, vector<16x64xf32> -> vector<16x64xf32>
    %c0_11 = arith.constant 0 : index
    %c0_12 = arith.constant 0 : index
    %18 = vector.load %arg5[%c0_11, %c0_12] : memref<1x1xf32, #tpu.memory_space<vmem>>, vector<1x1xf32>
    %19 = vector.broadcast %18 : vector<1x1xf32> to vector<16x64xf32>
    %20 = arith.mulf %19, %17 : vector<16x64xf32>
    %c0_13 = arith.constant 0 : index
    %c0_14 = arith.constant 0 : index
    %c0_15 = arith.constant 0 : index
    %21 = vector.load %arg4[%c0_13, %c0_14, %c0_15] : memref<1x16x64xbf16, #tpu.memory_space<vmem>>, vector<1x16x64xbf16>
    %22 = vector.shape_cast %21 : vector<1x16x64xbf16> to vector<16x64xbf16>
    %23 = arith.extf %22 : vector<16x64xbf16> to vector<16x64xf32>
    %24 = arith.addf %20, %23 : vector<16x64xf32>
    %25 = arith.truncf %24 : vector<16x64xf32> to vector<16x64xbf16>
    %c0_16 = arith.constant 0 : index
    %c0_17 = arith.constant 0 : index
    %c0_18 = arith.constant 0 : index
    %26 = vector.load %arg6[%c0_16, %c0_17, %c0_18] : memref<1x16x64xbf16, #tpu.memory_space<vmem>>, vector<1x16x64xbf16>
    %27 = vector.shape_cast %26 : vector<1x16x64xbf16> to vector<16x64xbf16>
    %28 = vector.shape_cast %25 : vector<16x64xbf16> to vector<1x16x64xbf16>
    tpu.vector_store %arg6[%c0_16, %c0_17, %c0_18], %28 {strides = array<i32>} : memref<1x16x64xbf16, #tpu.memory_space<vmem>>, vector<1x16x64xbf16>,
    return
  }
  func.func @transform_0(%arg0: i32) -> (i32, i32, i32) {
    %c0_i32 = arith.constant 0 : i32
    %c0_i32_0 = arith.constant 0 : i32
    %c0_i32_1 = arith.constant 0 : i32
    return %arg0, %c0_i32, %c0_i32_0 : i32, i32, i32
  }
  func.func @transform_1(%arg0: i32) -> (i32, i32, i32) {
    %c0_i32 = arith.constant 0 : i32
    %c0_i32_0 = arith.constant 0 : i32
    %c0_i32_1 = arith.constant 0 : i32
    return %arg0, %c0_i32, %c0_i32_0 : i32, i32, i32
  }
  func.func @transform_2(%arg0: i32) -> (i32, i32, i32) {
    %c0_i32 = arith.constant 0 : i32
    %c0_i32_0 = arith.constant 0 : i32
    %c0_i32_1 = arith.constant 0 : i32
    return %arg0, %c0_i32, %c0_i32_0 : i32, i32, i32
  }
  func.func @transform_3(%arg0: i32) -> (i32, i32, i32) {
    %c0_i32 = arith.constant 0 : i32
    %c0_i32_0 = arith.constant 0 : i32
    %c0_i32_1 = arith.constant 0 : i32
    return %arg0, %c0_i32, %c0_i32_0 : i32, i32, i32
  }
  func.func @transform_4(%arg0: i32) -> (i32, i32) {
    %c0_i32 = arith.constant 0 : i32
    %c0_i32_0 = arith.constant 0 : i32
    %c0_i32_1 = arith.constant 0 : i32
    return %c0_i32, %c0_i32_0 : i32, i32
  }
  func.func @transform_5(%arg0: i32) -> (i32, i32, i32) {
    %c0_i32 = arith.constant 0 : i32
    %c0_i32_0 = arith.constant 0 : i32
    %c0_i32_1 = arith.constant 0 : i32
    return %arg0, %c0_i32, %c0_i32_0 : i32, i32, i32
  }
}

module attributes {stable_mosaic.version = 11 : i64} {
  func.func @_mm_kernel(%arg0: i32, %arg1: i32, %arg2: i32, %arg3: memref<24x512xbf16, #tpu.memory_space<vmem>>, %arg4: memref<512x128xbf16, #tpu.memory_space<vmem>>, %arg5: memref<1x128xf32, #tpu.memory_space<vmem>>, %arg6: memref<24x128xbf16, #tpu.memory_space<vmem>>, %arg7: memref<24x128xf32, #tpu.memory_space<vmem>>) attributes {dimension_semantics = [#tpu.dimension_semantics<parallel>, #tpu.dimension_semantics<parallel>, #tpu.dimension_semantics<arbitrary>], iteration_bounds = array<i64: 1, 1, 2>, scalar_prefetch = 0 : i64, scratch_operands = 1 : i64, tpu.core_type = #tpu.core_type<tc>, window_params = [{transform_indices = @transform_0, window_bounds = array<i64: 24, 512>}, {transform_indices = @transform_1, window_bounds = array<i64: 512, 128>}, {transform_indices = @transform_2, window_bounds = array<i64: 1, 128>}, {transform_indices = @transform_3, window_bounds = array<i64: 24, 128>}]} {
    %c0_i32 = arith.constant 0 : i32
    %0 = arith.cmpi eq, %arg2, %c0_i32 : i32
    %1 = arith.extui %0 : i1 to i32
    %c0_i32_0 = arith.constant 0 : i32
    %2 = arith.cmpi ne, %1, %c0_i32_0 : i32
    scf.if %2 {
      %cst_9 = arith.constant 0.000000e+00 : f32
      %12 = vector.broadcast %cst_9 : f32 to vector<24x128xf32>
      %c0_10 = arith.constant 0 : index
      %c0_11 = arith.constant 0 : index
      %13 = vector.load %arg7[%c0_10, %c0_11] : memref<24x128xf32, #tpu.memory_space<vmem>>, vector<24x128xf32>
      tpu.vector_store %arg7[%c0_10, %c0_11], %12 {strides = array<i32>} : memref<24x128xf32, #tpu.memory_space<vmem>>, vector<24x128xf32>,
    } else {
    }
    %c0 = arith.constant 0 : index
    %c0_1 = arith.constant 0 : index
    %3 = vector.load %arg7[%c0, %c0_1] : memref<24x128xf32, #tpu.memory_space<vmem>>, vector<24x128xf32>
    %c0_2 = arith.constant 0 : index
    %c0_3 = arith.constant 0 : index
    %4 = vector.load %arg3[%c0_2, %c0_3] : memref<24x512xbf16, #tpu.memory_space<vmem>>, vector<24x512xbf16>
    %c0_4 = arith.constant 0 : index
    %c0_5 = arith.constant 0 : index
    %5 = vector.load %arg4[%c0_4, %c0_5] : memref<512x128xbf16, #tpu.memory_space<vmem>>, vector<512x128xbf16>
    %cst = arith.constant dense<0.000000e+00> : vector<24x128xf32>
    %6 = tpu.matmul %4, %5, %cst {dimension_numbers = #tpu.dot_dimension_numbers<[1], [0], [0], [1], [0, 0, 1, 1], [], []>} : vector<24x512xbf16>, vector<512x128xbf16>, vector<24x128xf32> -> vector<24x128xf32>
    %7 = arith.addf %3, %6 : vector<24x128xf32>
    %c0_6 = arith.constant 0 : index
    %c0_7 = arith.constant 0 : index
    %8 = vector.load %arg7[%c0_6, %c0_7] : memref<24x128xf32, #tpu.memory_space<vmem>>, vector<24x128xf32>
    tpu.vector_store %arg7[%c0_6, %c0_7], %7 {strides = array<i32>} : memref<24x128xf32, #tpu.memory_space<vmem>>, vector<24x128xf32>,
    %c1_i32 = arith.constant 1 : i32
    %9 = arith.cmpi eq, %arg2, %c1_i32 : i32
    %10 = arith.extui %9 : i1 to i32
    %c0_i32_8 = arith.constant 0 : i32
    %11 = arith.cmpi ne, %10, %c0_i32_8 : i32
    scf.if %11 {
      %c0_9 = arith.constant 0 : index
      %c0_10 = arith.constant 0 : index
      %12 = vector.load %arg7[%c0_9, %c0_10] : memref<24x128xf32, #tpu.memory_space<vmem>>, vector<24x128xf32>
      %c0_11 = arith.constant 0 : index
      %c0_12 = arith.constant 0 : index
      %13 = vector.load %arg5[%c0_11, %c0_12] : memref<1x128xf32, #tpu.memory_space<vmem>>, vector<1x128xf32>
      %14 = vector.broadcast %13 : vector<1x128xf32> to vector<24x128xf32>
      %15 = arith.addf %12, %14 : vector<24x128xf32>
      %16 = arith.truncf %15 : vector<24x128xf32> to vector<24x128xbf16>
      %c0_13 = arith.constant 0 : index
      %c0_14 = arith.constant 0 : index
      %17 = vector.load %arg6[%c0_13, %c0_14] : memref<24x128xbf16, #tpu.memory_space<vmem>>, vector<24x128xbf16>
      tpu.vector_store %arg6[%c0_13, %c0_14], %16 {strides = array<i32>} : memref<24x128xbf16, #tpu.memory_space<vmem>>, vector<24x128xbf16>,
    } else {
    }
    return
  }
  func.func @transform_0(%arg0: i32, %arg1: i32, %arg2: i32) -> (i32, i32) {
    %c0_i32 = arith.constant 0 : i32
    return %arg0, %arg2 : i32, i32
  }
  func.func @transform_1(%arg0: i32, %arg1: i32, %arg2: i32) -> (i32, i32) {
    %c0_i32 = arith.constant 0 : i32
    return %arg2, %arg1 : i32, i32
  }
  func.func @transform_2(%arg0: i32, %arg1: i32, %arg2: i32) -> (i32, i32) {
    %c0_i32 = arith.constant 0 : i32
    %c0_i32_0 = arith.constant 0 : i32
    return %c0_i32, %arg1 : i32, i32
  }
  func.func @transform_3(%arg0: i32, %arg1: i32, %arg2: i32) -> (i32, i32) {
    %c0_i32 = arith.constant 0 : i32
    return %arg0, %arg1 : i32, i32
  }
}

module attributes {stable_mosaic.version = 11 : i64} {
  func.func @_bn_stats_kernel(%arg0: i32, %arg1: memref<24x128xbf16, #tpu.memory_space<vmem>>, %arg2: memref<1x128xf32, #tpu.memory_space<vmem>>, %arg3: memref<1x128xf32, #tpu.memory_space<vmem>>) attributes {dimension_semantics = [#tpu.dimension_semantics<arbitrary>], iteration_bounds = array<i64: 1>, scalar_prefetch = 0 : i64, scratch_operands = 0 : i64, tpu.core_type = #tpu.core_type<tc>, window_params = [{transform_indices = @transform_0, window_bounds = array<i64: 24, 128>}, {pipeline_mode = #tpu.pipeline_mode<synchronous>, transform_indices = @transform_1, window_bounds = array<i64: 1, 128>}, {pipeline_mode = #tpu.pipeline_mode<synchronous>, transform_indices = @transform_2, window_bounds = array<i64: 1, 128>}]} {
    %c0_i32 = arith.constant 0 : i32
    %0 = arith.cmpi eq, %arg0, %c0_i32 : i32
    %1 = arith.extui %0 : i1 to i32
    %c0_i32_0 = arith.constant 0 : i32
    %2 = arith.cmpi ne, %1, %c0_i32_0 : i32
    scf.if %2 {
      %cst_11 = arith.constant 0.000000e+00 : f32
      %16 = vector.broadcast %cst_11 : f32 to vector<1x128xf32>
      %c0_12 = arith.constant 0 : index
      %c0_13 = arith.constant 0 : index
      %17 = vector.load %arg2[%c0_12, %c0_13] : memref<1x128xf32, #tpu.memory_space<vmem>>, vector<1x128xf32>
      tpu.vector_store %arg2[%c0_12, %c0_13], %16 {strides = array<i32>} : memref<1x128xf32, #tpu.memory_space<vmem>>, vector<1x128xf32>,
      %cst_14 = arith.constant 0.000000e+00 : f32
      %18 = vector.broadcast %cst_14 : f32 to vector<1x128xf32>
      %c0_15 = arith.constant 0 : index
      %c0_16 = arith.constant 0 : index
      %19 = vector.load %arg3[%c0_15, %c0_16] : memref<1x128xf32, #tpu.memory_space<vmem>>, vector<1x128xf32>
      tpu.vector_store %arg3[%c0_15, %c0_16], %18 {strides = array<i32>} : memref<1x128xf32, #tpu.memory_space<vmem>>, vector<1x128xf32>,
    } else {
    }
    %c0 = arith.constant 0 : index
    %c0_1 = arith.constant 0 : index
    %3 = vector.load %arg1[%c0, %c0_1] : memref<24x128xbf16, #tpu.memory_space<vmem>>, vector<24x128xbf16>
    %4 = arith.extf %3 : vector<24x128xbf16> to vector<24x128xf32>
    %c0_2 = arith.constant 0 : index
    %c0_3 = arith.constant 0 : index
    %5 = vector.load %arg2[%c0_2, %c0_3] : memref<1x128xf32, #tpu.memory_space<vmem>>, vector<1x128xf32>
    %cst = arith.constant dense<0.000000e+00> : vector<128xf32>
    %6 = vector.multi_reduction <add>, %4, %cst [0] : vector<24x128xf32> to vector<128xf32>
    %7 = vector.shape_cast %6 : vector<128xf32> to vector<1x128xf32>
    %8 = arith.addf %5, %7 : vector<1x128xf32>
    %c0_4 = arith.constant 0 : index
    %c0_5 = arith.constant 0 : index
    %9 = vector.load %arg2[%c0_4, %c0_5] : memref<1x128xf32, #tpu.memory_space<vmem>>, vector<1x128xf32>
    tpu.vector_store %arg2[%c0_4, %c0_5], %8 {strides = array<i32>} : memref<1x128xf32, #tpu.memory_space<vmem>>, vector<1x128xf32>,
    %c0_6 = arith.constant 0 : index
    %c0_7 = arith.constant 0 : index
    %10 = vector.load %arg3[%c0_6, %c0_7] : memref<1x128xf32, #tpu.memory_space<vmem>>, vector<1x128xf32>
    %11 = arith.mulf %4, %4 : vector<24x128xf32>
    %cst_8 = arith.constant dense<0.000000e+00> : vector<128xf32>
    %12 = vector.multi_reduction <add>, %11, %cst_8 [0] : vector<24x128xf32> to vector<128xf32>
    %13 = vector.shape_cast %12 : vector<128xf32> to vector<1x128xf32>
    %14 = arith.addf %10, %13 : vector<1x128xf32>
    %c0_9 = arith.constant 0 : index
    %c0_10 = arith.constant 0 : index
    %15 = vector.load %arg3[%c0_9, %c0_10] : memref<1x128xf32, #tpu.memory_space<vmem>>, vector<1x128xf32>
    tpu.vector_store %arg3[%c0_9, %c0_10], %14 {strides = array<i32>} : memref<1x128xf32, #tpu.memory_space<vmem>>, vector<1x128xf32>,
    return
  }
  func.func @transform_0(%arg0: i32) -> (i32, i32) {
    %c0_i32 = arith.constant 0 : i32
    %c0_i32_0 = arith.constant 0 : i32
    return %arg0, %c0_i32 : i32, i32
  }
  func.func @transform_1(%arg0: i32) -> (i32, i32) {
    %c0_i32 = arith.constant 0 : i32
    %c0_i32_0 = arith.constant 0 : i32
    %c0_i32_1 = arith.constant 0 : i32
    return %c0_i32, %c0_i32_0 : i32, i32
  }
  func.func @transform_2(%arg0: i32) -> (i32, i32) {
    %c0_i32 = arith.constant 0 : i32
    %c0_i32_0 = arith.constant 0 : i32
    %c0_i32_1 = arith.constant 0 : i32
    return %c0_i32, %c0_i32_0 : i32, i32
  }
}

module attributes {stable_mosaic.version = 11 : i64} {
  func.func @_scale_shift_act_kernel(%arg0: i32, %arg1: memref<24x128xbf16, #tpu.memory_space<vmem>>, %arg2: memref<1x128xf32, #tpu.memory_space<vmem>>, %arg3: memref<1x128xf32, #tpu.memory_space<vmem>>, %arg4: memref<24x128xbf16, #tpu.memory_space<vmem>>) attributes {dimension_semantics = [#tpu.dimension_semantics<parallel>], iteration_bounds = array<i64: 1>, scalar_prefetch = 0 : i64, scratch_operands = 0 : i64, tpu.core_type = #tpu.core_type<tc>, window_params = [{transform_indices = @transform_0, window_bounds = array<i64: 24, 128>}, {pipeline_mode = #tpu.pipeline_mode<synchronous>, transform_indices = @transform_1, window_bounds = array<i64: 1, 128>}, {pipeline_mode = #tpu.pipeline_mode<synchronous>, transform_indices = @transform_2, window_bounds = array<i64: 1, 128>}, {transform_indices = @transform_3, window_bounds = array<i64: 24, 128>}]} {
    %c0 = arith.constant 0 : index
    %c0_0 = arith.constant 0 : index
    %0 = vector.load %arg1[%c0, %c0_0] : memref<24x128xbf16, #tpu.memory_space<vmem>>, vector<24x128xbf16>
    %1 = arith.extf %0 : vector<24x128xbf16> to vector<24x128xf32>
    %c0_1 = arith.constant 0 : index
    %c0_2 = arith.constant 0 : index
    %2 = vector.load %arg2[%c0_1, %c0_2] : memref<1x128xf32, #tpu.memory_space<vmem>>, vector<1x128xf32>
    %3 = vector.broadcast %2 : vector<1x128xf32> to vector<24x128xf32>
    %4 = arith.mulf %1, %3 : vector<24x128xf32>
    %c0_3 = arith.constant 0 : index
    %c0_4 = arith.constant 0 : index
    %5 = vector.load %arg3[%c0_3, %c0_4] : memref<1x128xf32, #tpu.memory_space<vmem>>, vector<1x128xf32>
    %6 = vector.broadcast %5 : vector<1x128xf32> to vector<24x128xf32>
    %7 = arith.addf %4, %6 : vector<24x128xf32>
    %cst = arith.constant 0.000000e+00 : f32
    %8 = vector.broadcast %cst : f32 to vector<24x128xf32>
    %9 = arith.cmpf oge, %7, %8 : vector<24x128xf32>
    %cst_5 = arith.constant 2.000000e-01 : f32
    %10 = vector.broadcast %cst_5 : f32 to vector<24x128xf32>
    %11 = arith.mulf %7, %10 : vector<24x128xf32>
    %12 = arith.select %9, %7, %11 : vector<24x128xi1>, vector<24x128xf32>
    %13 = arith.truncf %12 : vector<24x128xf32> to vector<24x128xbf16>
    %c0_6 = arith.constant 0 : index
    %c0_7 = arith.constant 0 : index
    %14 = vector.load %arg4[%c0_6, %c0_7] : memref<24x128xbf16, #tpu.memory_space<vmem>>, vector<24x128xbf16>
    tpu.vector_store %arg4[%c0_6, %c0_7], %13 {strides = array<i32>} : memref<24x128xbf16, #tpu.memory_space<vmem>>, vector<24x128xbf16>,
    return
  }
  func.func @transform_0(%arg0: i32) -> (i32, i32) {
    %c0_i32 = arith.constant 0 : i32
    %c0_i32_0 = arith.constant 0 : i32
    return %arg0, %c0_i32 : i32, i32
  }
  func.func @transform_1(%arg0: i32) -> (i32, i32) {
    %c0_i32 = arith.constant 0 : i32
    %c0_i32_0 = arith.constant 0 : i32
    %c0_i32_1 = arith.constant 0 : i32
    return %c0_i32, %c0_i32_0 : i32, i32
  }
  func.func @transform_2(%arg0: i32) -> (i32, i32) {
    %c0_i32 = arith.constant 0 : i32
    %c0_i32_0 = arith.constant 0 : i32
    %c0_i32_1 = arith.constant 0 : i32
    return %c0_i32, %c0_i32_0 : i32, i32
  }
  func.func @transform_3(%arg0: i32) -> (i32, i32) {
    %c0_i32 = arith.constant 0 : i32
    %c0_i32_0 = arith.constant 0 : i32
    return %arg0, %c0_i32 : i32, i32
  }
}

module attributes {stable_mosaic.version = 11 : i64} {
  func.func @_mm_kernel(%arg0: i32, %arg1: i32, %arg2: i32, %arg3: memref<8x512xbf16, #tpu.memory_space<vmem>>, %arg4: memref<512x128xbf16, #tpu.memory_space<vmem>>, %arg5: memref<1x128xf32, #tpu.memory_space<vmem>>, %arg6: memref<8x128xbf16, #tpu.memory_space<vmem>>, %arg7: memref<8x128xf32, #tpu.memory_space<vmem>>) attributes {dimension_semantics = [#tpu.dimension_semantics<parallel>, #tpu.dimension_semantics<parallel>, #tpu.dimension_semantics<arbitrary>], iteration_bounds = array<i64: 1, 1, 4>, scalar_prefetch = 0 : i64, scratch_operands = 1 : i64, tpu.core_type = #tpu.core_type<tc>, window_params = [{transform_indices = @transform_0, window_bounds = array<i64: 8, 512>}, {transform_indices = @transform_1, window_bounds = array<i64: 512, 128>}, {transform_indices = @transform_2, window_bounds = array<i64: 1, 128>}, {transform_indices = @transform_3, window_bounds = array<i64: 8, 128>}]} {
    %c0_i32 = arith.constant 0 : i32
    %0 = arith.cmpi eq, %arg2, %c0_i32 : i32
    %1 = arith.extui %0 : i1 to i32
    %c0_i32_0 = arith.constant 0 : i32
    %2 = arith.cmpi ne, %1, %c0_i32_0 : i32
    scf.if %2 {
      %cst_9 = arith.constant 0.000000e+00 : f32
      %12 = vector.broadcast %cst_9 : f32 to vector<8x128xf32>
      %c0_10 = arith.constant 0 : index
      %c0_11 = arith.constant 0 : index
      %13 = vector.load %arg7[%c0_10, %c0_11] : memref<8x128xf32, #tpu.memory_space<vmem>>, vector<8x128xf32>
      tpu.vector_store %arg7[%c0_10, %c0_11], %12 {strides = array<i32>} : memref<8x128xf32, #tpu.memory_space<vmem>>, vector<8x128xf32>,
    } else {
    }
    %c0 = arith.constant 0 : index
    %c0_1 = arith.constant 0 : index
    %3 = vector.load %arg7[%c0, %c0_1] : memref<8x128xf32, #tpu.memory_space<vmem>>, vector<8x128xf32>
    %c0_2 = arith.constant 0 : index
    %c0_3 = arith.constant 0 : index
    %4 = vector.load %arg3[%c0_2, %c0_3] : memref<8x512xbf16, #tpu.memory_space<vmem>>, vector<8x512xbf16>
    %c0_4 = arith.constant 0 : index
    %c0_5 = arith.constant 0 : index
    %5 = vector.load %arg4[%c0_4, %c0_5] : memref<512x128xbf16, #tpu.memory_space<vmem>>, vector<512x128xbf16>
    %cst = arith.constant dense<0.000000e+00> : vector<8x128xf32>
    %6 = tpu.matmul %4, %5, %cst {dimension_numbers = #tpu.dot_dimension_numbers<[1], [0], [0], [1], [0, 0, 1, 1], [], []>} : vector<8x512xbf16>, vector<512x128xbf16>, vector<8x128xf32> -> vector<8x128xf32>
    %7 = arith.addf %3, %6 : vector<8x128xf32>
    %c0_6 = arith.constant 0 : index
    %c0_7 = arith.constant 0 : index
    %8 = vector.load %arg7[%c0_6, %c0_7] : memref<8x128xf32, #tpu.memory_space<vmem>>, vector<8x128xf32>
    tpu.vector_store %arg7[%c0_6, %c0_7], %7 {strides = array<i32>} : memref<8x128xf32, #tpu.memory_space<vmem>>, vector<8x128xf32>,
    %c3_i32 = arith.constant 3 : i32
    %9 = arith.cmpi eq, %arg2, %c3_i32 : i32
    %10 = arith.extui %9 : i1 to i32
    %c0_i32_8 = arith.constant 0 : i32
    %11 = arith.cmpi ne, %10, %c0_i32_8 : i32
    scf.if %11 {
      %c0_9 = arith.constant 0 : index
      %c0_10 = arith.constant 0 : index
      %12 = vector.load %arg7[%c0_9, %c0_10] : memref<8x128xf32, #tpu.memory_space<vmem>>, vector<8x128xf32>
      %c0_11 = arith.constant 0 : index
      %c0_12 = arith.constant 0 : index
      %13 = vector.load %arg5[%c0_11, %c0_12] : memref<1x128xf32, #tpu.memory_space<vmem>>, vector<1x128xf32>
      %14 = vector.broadcast %13 : vector<1x128xf32> to vector<8x128xf32>
      %15 = arith.addf %12, %14 : vector<8x128xf32>
      %16 = arith.truncf %15 : vector<8x128xf32> to vector<8x128xbf16>
      %c0_13 = arith.constant 0 : index
      %c0_14 = arith.constant 0 : index
      %17 = vector.load %arg6[%c0_13, %c0_14] : memref<8x128xbf16, #tpu.memory_space<vmem>>, vector<8x128xbf16>
      tpu.vector_store %arg6[%c0_13, %c0_14], %16 {strides = array<i32>} : memref<8x128xbf16, #tpu.memory_space<vmem>>, vector<8x128xbf16>,
    } else {
    }
    return
  }
  func.func @transform_0(%arg0: i32, %arg1: i32, %arg2: i32) -> (i32, i32) {
    %c0_i32 = arith.constant 0 : i32
    return %arg0, %arg2 : i32, i32
  }
  func.func @transform_1(%arg0: i32, %arg1: i32, %arg2: i32) -> (i32, i32) {
    %c0_i32 = arith.constant 0 : i32
    return %arg2, %arg1 : i32, i32
  }
  func.func @transform_2(%arg0: i32, %arg1: i32, %arg2: i32) -> (i32, i32) {
    %c0_i32 = arith.constant 0 : i32
    %c0_i32_0 = arith.constant 0 : i32
    return %c0_i32, %arg1 : i32, i32
  }
  func.func @transform_3(%arg0: i32, %arg1: i32, %arg2: i32) -> (i32, i32) {
    %c0_i32 = arith.constant 0 : i32
    return %arg0, %arg1 : i32, i32
  }
}

</mosaic_0001>

<llo_original>
// kernel: nlayer_discriminator_att_forward.13
$region0: #{nlayer_discriminator_att_forward.13}
  #allocation0 [shape = 'u32[]', space=smem, size = 0x4, offset = 0x4, fixed_abs, tag = 'smem constant byte address 0x4 - core index']
  #allocation1 [shape = 'u32[144,128]{1,0:T(1,128)}', space=vmem, size = 0x12000, scoped, tag = 'internal scratch']
  #allocation2 [shape = 'f32[512,128]{1,0:T(8,128)}', space=vmem, size = 0x40000, scoped, tag = 'scratch operand']
  %s0 = inlined_call_operand.vmem [shape: bf16[512,128], index: 0, kind: input, shape index: {}]
  %s1 = inlined_call_operand.vmem [shape: bf16[128,128], index: 1, kind: input, shape index: {}]
  %s2 = inlined_call_operand.vmem [shape: f32[1,128], index: 2, kind: input, shape index: {}]
  %s3 = inlined_call_operand.vmem [shape: bf16[512,128], index: 3, kind: output, shape index: {}]
  %s4 = sld [smem:[#allocation0]]
  $region30: #{nlayer_discriminator_att_forward.13} parent=0
    _
  %s6 = ssub.s32 1, %s4
  %s7 = scalar_select 0, %s6, %s4
  // Predicated region
  $region2: #{nlayer_discriminator_att_forward.13} parent=0 // pred_check
    _
  $region3: #{nlayer_discriminator_att_forward.13} parent=0 // pred_check_branch
    %9 = sbr.rel (0) target = $region5
  $region4: #{nlayer_discriminator_att_forward.13} parent=0 // pred_region
    _
  $region5: #{nlayer_discriminator_att_forward.13} parent=0 // pred_fallthru
    _
  // Predicated region
  $region6: #{nlayer_discriminator_att_forward.13} parent=0 // pred_check
    _
  $region7: #{nlayer_discriminator_att_forward.13} parent=0 // pred_check_branch
    %11 = sbr.rel (0) target = $region9
  $region8: #{nlayer_discriminator_att_forward.13} parent=0 // pred_region
    _
  $region9: #{nlayer_discriminator_att_forward.13} parent=0 // pred_fallthru
    _
  // Predicated region
  $region10: #{nlayer_discriminator_att_forward.13} parent=0 // pred_check
    _
  $region11: #{nlayer_discriminator_att_forward.13} parent=0 // pred_check_branch
    %13 = sbr.rel (0) target = $region13
  $region12: #{nlayer_discriminator_att_forward.13} parent=0 // pred_region
    _
  $region13: #{nlayer_discriminator_att_forward.13} parent=0 // pred_fallthru
    _
  %p15 = scmp.eq.s32.totalorder 0, 0
  // Predicated region
  $region14: #{nlayer_discriminator_att_forward.13} parent=0 // pred_check
    %p16 = pneg %p15
  $region15: #{nlayer_discriminator_att_forward.13} parent=0 // pred_check_branch
    %18 = sbr.rel (%p16) target = $region17
  $region16: #{nlayer_discriminator_att_forward.13} parent=0 // pred_region
    %19 = vst [vmem:[#allocation2] sm:$0xff] 0.0
    %20 = vst [vmem:[#allocation2 + $0x8] sm:$0xff] 0.0
    %21 = vst [vmem:[#allocation2 + $0x10] sm:$0xff] 0.0
    %22 = vst [vmem:[#allocation2 + $0x18] sm:$0xff] 0.0
    %23 = vst [vmem:[#allocation2 + $0x20] sm:$0xff] 0.0
    %24 = vst [vmem:[#allocation2 + $0x28] sm:$0xff] 0.0
    %25 = vst [vmem:[#allocation2 + $0x30] sm:$0xff] 0.0
    %26 = vst [vmem:[#allocation2 + $0x38] sm:$0xff] 0.0
    %27 = vst [vmem:[#allocation2 + $0x40] sm:$0xff] 0.0
    %28 = vst [vmem:[#allocation2 + $0x48] sm:$0xff] 0.0
    %29 = vst [vmem:[#allocation2 + $0x50] sm:$0xff] 0.0
    %30 = vst [vmem:[#allocation2 + $0x58] sm:$0xff] 0.0
    %31 = vst [vmem:[#allocation2 + $0x60] sm:$0xff] 0.0
    %32 = vst [vmem:[#allocation2 + $0x68] sm:$0xff] 0.0
    %33 = vst [vmem:[#allocation2 + $0x70] sm:$0xff] 0.0
    %34 = vst [vmem:[#allocation2 + $0x78] sm:$0xff] 0.0
    %35 = vst [vmem:[#allocation2 + $0x80] sm:$0xff] 0.0
    %36 = vst [vmem:[#allocation2 + $0x88] sm:$0xff] 0.0
    %37 = vst [vmem:[#allocation2 + $0x90] sm:$0xff] 0.0
    %38 = vst [vmem:[#allocation2 + $0x98] sm:$0xff] 0.0
    %39 = vst [vmem:[#allocation2 + $0xa0] sm:$0xff] 0.0
    %40 = vst [vmem:[#allocation2 + $0xa8] sm:$0xff] 0.0
    %41 = vst [vmem:[#allocation2 + $0xb0] sm:$0xff] 0.0
    %42 = vst [vmem:[#allocation2 + $0xb8] sm:$0xff] 0.0
    %43 = vst [vmem:[#allocation2 + $0xc0] sm:$0xff] 0.0
    %44 = vst [vmem:[#allocation2 + $0xc8] sm:$0xff] 0.0
    %45 = vst [vmem:[#allocation2 + $0xd0] sm:$0xff] 0.0
    %46 = vst [vmem:[#allocation2 + $0xd8] sm:$0xff] 0.0
    %47 = vst [vmem:[#allocation2 + $0xe0] sm:$0xff] 0.0
    %48 = vst [vmem:[#allocation2 + $0xe8] sm:$0xff] 0.0
    %49 = vst [vmem:[#allocation2 + $0xf0] sm:$0xff] 0.0
    %50 = vst [vmem:[#allocation2 + $0xf8] sm:$0xff] 0.0
    %51 = vst [vmem:[#allocation2 + $0x100] sm:$0xff] 0.0
    %52 = vst [vmem:[#allocation2 + $0x108] sm:$0xff] 0.0
    %53 = vst [vmem:[#allocation2 + $0x110] sm:$0xff] 0.0
    %54 = vst [vmem:[#allocation2 + $0x118] sm:$0xff] 0.0
    %55 = vst [vmem:[#allocation2 + $0x120] sm:$0xff] 0.0
    %56 = vst [vmem:[#allocation2 + $0x128] sm:$0xff] 0.0
    %57 = vst [vmem:[#allocation2 + $0x130] sm:$0xff] 0.0
    %58 = vst [vmem:[#allocation2 + $0x138] sm:$0xff] 0.0
    %59 = vst [vmem:[#allocation2 + $0x140] sm:$0xff] 0.0
    %60 = vst [vmem:[#allocation2 + $0x148] sm:$0xff] 0.0
    %61 = vst [vmem:[#allocation2 + $0x150] sm:$0xff] 0.0
    %62 = vst [vmem:[#allocation2 + $0x158] sm:$0xff] 0.0
    %63 = vst [vmem:[#allocation2 + $0x160] sm:$0xff] 0.0
    %64 = vst [vmem:[#allocation2 + $0x168] sm:$0xff] 0.0
    %65 = vst [vmem:[#allocation2 + $0x170] sm:$0xff] 0.0
    %66 = vst [vmem:[#allocation2 + $0x178] sm:$0xff] 0.0
    %67 = vst [vmem:[#allocation2 + $0x180] sm:$0xff] 0.0
    %68 = vst [vmem:[#allocation2 + $0x188] sm:$0xff] 0.0
    %69 = vst [vmem:[#allocation2 + $0x190] sm:$0xff] 0.0
    %70 = vst [vmem:[#allocation2 + $0x198] sm:$0xff] 0.0
    %71 = vst [vmem:[#allocation2 + $0x1a0] sm:$0xff] 0.0
    %72 = vst [vmem:[#allocation2 + $0x1a8] sm:$0xff] 0.0
    %73 = vst [vmem:[#allocation2 + $0x1b0] sm:$0xff] 0.0
    %74 = vst [vmem:[#allocation2 + $0x1b8] sm:$0xff] 0.0
    %75 = vst [vmem:[#allocation2 + $0x1c0] sm:$0xff] 0.0
    %76 = vst [vmem:[#allocation2 + $0x1c8] sm:$0xff] 0.0
    %77 = vst [vmem:[#allocation2 + $0x1d0] sm:$0xff] 0.0
    %78 = vst [vmem:[#allocation2 + $0x1d8] sm:$0xff] 0.0
    %79 = vst [vmem:[#allocation2 + $0x1e0] sm:$0xff] 0.0
    %80 = vst [vmem:[#allocation2 + $0x1e8] sm:$0xff] 0.0
    %81 = vst [vmem:[#allocation2 + $0x1f0] sm:$0xff] 0.0
    %82 = vst [vmem:[#allocation2 + $0x1f8] sm:$0xff] 0.0
  $region17: #{nlayer_discriminator_att_forward.13} parent=0 // pred_fallthru
    _
  %v83 = vld [vmem:[#allocation2] sm:$0xff]
  %v84 = vld [vmem:[#allocation2 + $0x8] sm:$0xff]
  %v85 = vld [vmem:[#allocation2 + $0x10] sm:$0xff]
  %v86 = vld [vmem:[#allocation2 + $0x18] sm:$0xff]
  %v87 = vld [vmem:[#allocation2 + $0x20] sm:$0xff]
  %v88 = vld [vmem:[#allocation2 + $0x28] sm:$0xff]
  %v89 = vld [vmem:[#allocation2 + $0x30] sm:$0xff]
  %v90 = vld [vmem:[#allocation2 + $0x38] sm:$0xff]
  %v91 = vld [vmem:[#allocation2 + $0x40] sm:$0xff]
  %v92 = vld [vmem:[#allocation2 + $0x48] sm:$0xff]
  %v93 = vld [vmem:[#allocation2 + $0x50] sm:$0xff]
  %v94 = vld [vmem:[#allocation2 + $0x58] sm:$0xff]
  %v95 = vld [vmem:[#allocation2 + $0x60] sm:$0xff]
  %v96 = vld [vmem:[#allocation2 + $0x68] sm:$0xff]
  %v97 = vld [vmem:[#allocation2 + $0x70] sm:$0xff]
  %v98 = vld [vmem:[#allocation2 + $0x78] sm:$0xff]
  %v99 = vld [vmem:[#allocation2 + $0x80] sm:$0xff]
  %v100 = vld [vmem:[#allocation2 + $0x88] sm:$0xff]
  %v101 = vld [vmem:[#allocation2 + $0x90] sm:$0xff]
  %v102 = vld [vmem:[#allocation2 + $0x98] sm:$0xff]
  %v103 = vld [vmem:[#allocation2 + $0xa0] sm:$0xff]
  %v104 = vld [vmem:[#allocation2 + $0xa8] sm:$0xff]
  %v105 = vld [vmem:[#allocation2 + $0xb0] sm:$0xff]
  %v106 = vld [vmem:[#allocation2 + $0xb8] sm:$0xff]
  %v107 = vld [vmem:[#allocation2 + $0xc0] sm:$0xff]
  %v108 = vld [vmem:[#allocation2 + $0xc8] sm:$0xff]
  %v109 = vld [vmem:[#allocation2 + $0xd0] sm:$0xff]
  %v110 = vld [vmem:[#allocation2 + $0xd8] sm:$0xff]
  %v111 = vld [vmem:[#allocation2 + $0xe0] sm:$0xff]
  %v112 = vld [vmem:[#allocation2 + $0xe8] sm:$0xff]
  %v113 = vld [vmem:[#allocation2 + $0xf0] sm:$0xff]
  %v114 = vld [vmem:[#allocation2 + $0xf8] sm:$0xff]
  %v115 = vld [vmem:[#allocation2 + $0x100] sm:$0xff]
  %v116 = vld [vmem:[#allocation2 + $0x108] sm:$0xff]
  %v117 = vld [vmem:[#allocation2 + $0x110] sm:$0xff]
  %v118 = vld [vmem:[#allocation2 + $0x118] sm:$0xff]
  %v119 = vld [vmem:[#allocation2 + $0x120] sm:$0xff]
  %v120 = vld [vmem:[#allocation2 + $0x128] sm:$0xff]
  %v121 = vld [vmem:[#allocation2 + $0x130] sm:$0xff]
  %v122 = vld [vmem:[#allocation2 + $0x138] sm:$0xff]
  %v123 = vld [vmem:[#allocation2 + $0x140] sm:$0xff]
  %v124 = vld [vmem:[#allocation2 + $0x148] sm:$0xff]
  %v125 = vld [vmem:[#allocation2 + $0x150] sm:$0xff]
  %v126 = vld [vmem:[#allocation2 + $0x158] sm:$0xff]
  %v127 = vld [vmem:[#allocation2 + $0x160] sm:$0xff]
  %v128 = vld [vmem:[#allocation2 + $0x168] sm:$0xff]
  %v129 = vld [vmem:[#allocation2 + $0x170] sm:$0xff]
  %v130 = vld [vmem:[#allocation2 + $0x178] sm:$0xff]
  %v131 = vld [vmem:[#allocation2 + $0x180] sm:$0xff]
  %v132 = vld [vmem:[#allocation2 + $0x188] sm:$0xff]
  %v133 = vld [vmem:[#allocation2 + $0x190] sm:$0xff]
  %v134 = vld [vmem:[#allocation2 + $0x198] sm:$0xff]
  %v135 = vld [vmem:[#allocation2 + $0x1a0] sm:$0xff]
  %v136 = vld [vmem:[#allocation2 + $0x1a8] sm:$0xff]
  %v137 = vld [vmem:[#allocation2 + $0x1b0] sm:$0xff]
  %v138 = vld [vmem:[#allocation2 + $0x1b8] sm:$0xff]
  %v139 = vld [vmem:[#allocation2 + $0x1c0] sm:$0xff]
  %v140 = vld [vmem:[#allocation2 + $0x1c8] sm:$0xff]
  %v141 = vld [vmem:[#allocation2 + $0x1d0] sm:$0xff]
  %v142 = vld [vmem:[#allocation2 + $0x1d8] sm:$0xff]
  %v143 = vld [vmem:[#allocation2 + $0x1e0] sm:$0xff]
  %v144 = vld [vmem:[#allocation2 + $0x1e8] sm:$0xff]
  %v145 = vld [vmem:[#allocation2 + $0x1f0] sm:$0xff]
  %v146 = vld [vmem:[#allocation2 + $0x1f8] sm:$0xff]
  %v147 = vld [vmem:[%s0] sm:$0xf]
  %v148 = vld [vmem:[%s0 + $0x4] sm:$0xf]
  %v149 = vld [vmem:[%s0 + $0x8] sm:$0xf]
  %v150 = vld [vmem:[%s0 + $0xc] sm:$0xf]
  %v151 = vld [vmem:[%s0 + $0x10] sm:$0xf]
  %v152 = vld [vmem:[%s0 + $0x14] sm:$0xf]
  %v153 = vld [vmem:[%s0 + $0x18] sm:$0xf]
  %v154 = vld [vmem:[%s0 + $0x1c] sm:$0xf]
  %v155 = vld [vmem:[%s0 + $0x20] sm:$0xf]
  %v156 = vld [vmem:[%s0 + $0x24] sm:$0xf]
  %v157 = vld [vmem:[%s0 + $0x28] sm:$0xf]
  %v158 = vld [vmem:[%s0 + $0x2c] sm:$0xf]
  %v159 = vld [vmem:[%s0 + $0x30] sm:$0xf]
  %v160 = vld [vmem:[%s0 + $0x34] sm:$0xf]
  %v161 = vld [vmem:[%s0 + $0x38] sm:$0xf]
  %v162 = vld [vmem:[%s0 + $0x3c] sm:$0xf]
  %v163 = vld [vmem:[%s0 + $0x40] sm:$0xf]
  %v164 = vld [vmem:[%s0 + $0x44] sm:$0xf]
  %v165 = vld [vmem:[%s0 + $0x48] sm:$0xf]
  %v166 = vld [vmem:[%s0 + $0x4c] sm:$0xf]
  %v167 = vld [vmem:[%s0 + $0x50] sm:$0xf]
  %v168 = vld [vmem:[%s0 + $0x54] sm:$0xf]
  %v169 = vld [vmem:[%s0 + $0x58] sm:$0xf]
  %v170 = vld [vmem:[%s0 + $0x5c] sm:$0xf]
  %v171 = vld [vmem:[%s0 + $0x60] sm:$0xf]
  %v172 = vld [vmem:[%s0 + $0x64] sm:$0xf]
  %v173 = vld [vmem:[%s0 + $0x68] sm:$0xf]
  %v174 = vld [vmem:[%s0 + $0x6c] sm:$0xf]
  %v175 = vld [vmem:[%s0 + $0x70] sm:$0xf]
  %v176 = vld [vmem:[%s0 + $0x74] sm:$0xf]
  %v177 = vld [vmem:[%s0 + $0x78] sm:$0xf]
  %v178 = vld [vmem:[%s0 + $0x7c] sm:$0xf]
  %v179 = vld [vmem:[%s0 + $0x80] sm:$0xf]
  %v180 = vld [vmem:[%s0 + $0x84] sm:$0xf]
  %v181 = vld [vmem:[%s0 + $0x88] sm:$0xf]
  %v182 = vld [vmem:[%s0 + $0x8c] sm:$0xf]
  %v183 = vld [vmem:[%s0 + $0x90] sm:$0xf]
  %v184 = vld [vmem:[%s0 + $0x94] sm:$0xf]
  %v185 = vld [vmem:[%s0 + $0x98] sm:$0xf]
  %v186 = vld [vmem:[%s0 + $0x9c] sm:$0xf]
  %v187 = vld [vmem:[%s0 + $0xa0] sm:$0xf]
  %v188 = vld [vmem:[%s0 + $0xa4] sm:$0xf]
  %v189 = vld [vmem:[%s0 + $0xa8] sm:$0xf]
  %v190 = vld [vmem:[%s0 + $0xac] sm:$0xf]
  %v191 = vld [vmem:[%s0 + $0xb0] sm:$0xf]
  %v192 = vld [vmem:[%s0 + $0xb4] sm:$0xf]
  %v193 = vld [vmem:[%s0 + $0xb8] sm:$0xf]
  %v194 = vld [vmem:[%s0 + $0xbc] sm:$0xf]
  %v195 = vld [vmem:[%s0 + $0xc0] sm:$0xf]
  %v196 = vld [vmem:[%s0 + $0xc4] sm:$0xf]
  %v197 = vld [vmem:[%s0 + $0xc8] sm:$0xf]
  %v198 = vld [vmem:[%s0 + $0xcc] sm:$0xf]
  %v199 = vld [vmem:[%s0 + $0xd0] sm:$0xf]
  %v200 = vld [vmem:[%s0 + $0xd4] sm:$0xf]
  %v201 = vld [vmem:[%s0 + $0xd8] sm:$0xf]
  %v202 = vld [vmem:[%s0 + $0xdc] sm:$0xf]
  %v203 = vld [vmem:[%s0 + $0xe0] sm:$0xf]
  %v204 = vld [vmem:[%s0 + $0xe4] sm:$0xf]
  %v205 = vld [vmem:[%s0 + $0xe8] sm:$0xf]
  %v206 = vld [vmem:[%s0 + $0xec] sm:$0xf]
  %v207 = vld [vmem:[%s0 + $0xf0] sm:$0xf]
  %v208 = vld [vmem:[%s0 + $0xf4] sm:$0xf]
  %v209 = vld [vmem:[%s0 + $0xf8] sm:$0xf]
  %v210 = vld [vmem:[%s0 + $0xfc] sm:$0xf]
  %v211 = vld [vmem:[%s1] sm:$0xf]
  %v212 = vld [vmem:[%s1 + $0x4] sm:$0xf]
  %v213 = vld [vmem:[%s1 + $0x8] sm:$0xf]
  %v214 = vld [vmem:[%s1 + $0xc] sm:$0xf]
  %v215 = vld [vmem:[%s1 + $0x10] sm:$0xf]
  %v216 = vld [vmem:[%s1 + $0x14] sm:$0xf]
  %v217 = vld [vmem:[%s1 + $0x18] sm:$0xf]
  %v218 = vld [vmem:[%s1 + $0x1c] sm:$0xf]
  %v219 = vld [vmem:[%s1 + $0x20] sm:$0xf]
  %v220 = vld [vmem:[%s1 + $0x24] sm:$0xf]
  %v221 = vld [vmem:[%s1 + $0x28] sm:$0xf]
  %v222 = vld [vmem:[%s1 + $0x2c] sm:$0xf]
  %v223 = vld [vmem:[%s1 + $0x30] sm:$0xf]
  %v224 = vld [vmem:[%s1 + $0x34] sm:$0xf]
  %v225 = vld [vmem:[%s1 + $0x38] sm:$0xf]
  %v226 = vld [vmem:[%s1 + $0x3c] sm:$0xf]
  %v291 = vunpack.c.l.b16 %v147
  %v292 = vunpack.c.l.b16 %v148
  %v293 = vunpack.c.l.b16 %v149
  %v294 = vunpack.c.l.b16 %v150
  %v295 = vunpack.c.l.b16 %v151
  %v296 = vunpack.c.l.b16 %v152
  %v297 = vunpack.c.l.b16 %v153
  %v298 = vunpack.c.l.b16 %v154
  %v299 = vunpack.c.l.b16 %v155
  %v300 = vunpack.c.l.b16 %v156
  %v301 = vunpack.c.l.b16 %v157
  %v302 = vunpack.c.l.b16 %v158
  %v303 = vunpack.c.l.b16 %v159
  %v304 = vunpack.c.l.b16 %v160
  %v305 = vunpack.c.l.b16 %v161
  %v306 = vunpack.c.l.b16 %v162
  %v307 = vunpack.c.l.b16 %v163
  %v308 = vunpack.c.l.b16 %v164
  %v309 = vunpack.c.l.b16 %v165
  %v310 = vunpack.c.l.b16 %v166
  %v311 = vunpack.c.l.b16 %v167
  %v312 = vunpack.c.l.b16 %v168
  %v313 = vunpack.c.l.b16 %v169
  %v314 = vunpack.c.l.b16 %v170
  %v315 = vunpack.c.l.b16 %v171
  %v316 = vunpack.c.l.b16 %v172
  %v317 = vunpack.c.l.b16 %v173
  %v318 = vunpack.c.l.b16 %v174
  %v319 = vunpack.c.l.b16 %v175
  %v320 = vunpack.c.l.b16 %v176
  %v321 = vunpack.c.l.b16 %v177
  %v322 = vunpack.c.l.b16 %v178
  %v323 = vunpack.c.l.b16 %v179
  %v324 = vunpack.c.l.b16 %v180
  %v325 = vunpack.c.l.b16 %v181
  %v326 = vunpack.c.l.b16 %v182
  %v327 = vunpack.c.l.b16 %v183
  %v328 = vunpack.c.l.b16 %v184
  %v329 = vunpack.c.l.b16 %v185
  %v330 = vunpack.c.l.b16 %v186
  %v331 = vunpack.c.l.b16 %v187
  %v332 = vunpack.c.l.b16 %v188
  %v333 = vunpack.c.l.b16 %v189
  %v334 = vunpack.c.l.b16 %v190
  %v335 = vunpack.c.l.b16 %v191
  %v336 = vunpack.c.l.b16 %v192
  %v337 = vunpack.c.l.b16 %v193
  %v338 = vunpack.c.l.b16 %v194
  %v339 = vunpack.c.l.b16 %v195
  %v340 = vunpack.c.l.b16 %v196
  %v341 = vunpack.c.l.b16 %v197
  %v342 = vunpack.c.l.b16 %v198
  %v343 = vunpack.c.l.b16 %v199
  %v344 = vunpack.c.l.b16 %v200
  %v345 = vunpack.c.l.b16 %v201
  %v346 = vunpack.c.l.b16 %v202
  %v347 = vunpack.c.l.b16 %v203
  %v348 = vunpack.c.l.b16 %v204
  %v349 = vunpack.c.l.b16 %v205
  %v350 = vunpack.c.l.b16 %v206
  %v351 = vunpack.c.l.b16 %v207
  %v352 = vunpack.c.l.b16 %v208
  %v353 = vunpack.c.l.b16 %v209
  %v354 = vunpack.c.l.b16 %v210
  %v355 = vpack.c.b16 %v292, %v291
  %v356 = vpack.c.b16 %v294, %v293
  %v357 = vpack.c.b16 %v296, %v295
  %v358 = vpack.c.b16 %v298, %v297
  %v359 = vpack.c.b16 %v300, %v299
  %v360 = vpack.c.b16 %v302, %v301
  %v361 = vpack.c.b16 %v304, %v303
  %v362 = vpack.c.b16 %v306, %v305
  %v363 = vpack.c.b16 %v308, %v307
  %v364 = vpack.c.b16 %v310, %v309
  %v365 = vpack.c.b16 %v312, %v311
  %v366 = vpack.c.b16 %v314, %v313
  %v367 = vpack.c.b16 %v316, %v315
  %v368 = vpack.c.b16 %v318, %v317
  %v369 = vpack.c.b16 %v320, %v319
  %v370 = vpack.c.b16 %v322, %v321
  %v371 = vpack.c.b16 %v324, %v323
  %v372 = vpack.c.b16 %v326, %v325
  %v373 = vpack.c.b16 %v328, %v327
  %v374 = vpack.c.b16 %v330, %v329
  %v375 = vpack.c.b16 %v332, %v331
  %v376 = vpack.c.b16 %v334, %v333
  %v377 = vpack.c.b16 %v336, %v335
  %v378 = vpack.c.b16 %v338, %v337
  %v379 = vpack.c.b16 %v340, %v339
  %v380 = vpack.c.b16 %v342, %v341
  %v381 = vpack.c.b16 %v344, %v343
  %v382 = vpack.c.b16 %v346, %v345
  %v383 = vpack.c.b16 %v348, %v347
  %v384 = vpack.c.b16 %v350, %v349
  %v385 = vpack.c.b16 %v352, %v351
  %v386 = vpack.c.b16 %v354, %v353
  %v435 = vunpack.c.l.b16 %v211
  %v436 = vunpack.c.l.b16 %v212
  %v437 = vunpack.c.l.b16 %v213
  %v438 = vunpack.c.l.b16 %v214
  %v439 = vunpack.c.l.b16 %v215
  %v440 = vunpack.c.l.b16 %v216
  %v441 = vunpack.c.l.b16 %v217
  %v442 = vunpack.c.l.b16 %v218
  %v443 = vunpack.c.l.b16 %v219
  %v444 = vunpack.c.l.b16 %v220
  %v445 = vunpack.c.l.b16 %v221
  %v446 = vunpack.c.l.b16 %v222
  %v447 = vunpack.c.l.b16 %v223
  %v448 = vunpack.c.l.b16 %v224
  %v449 = vunpack.c.l.b16 %v225
  %v450 = vunpack.c.l.b16 %v226
  %v451 = vpack.c.b16 %v436, %v435
  %v452 = vpack.c.b16 %v438, %v437
  %v453 = vpack.c.b16 %v440, %v439
  %v454 = vpack.c.b16 %v442, %v441
  %v455 = vpack.c.b16 %v444, %v443
  %v456 = vpack.c.b16 %v446, %v445
  %v457 = vpack.c.b16 %v448, %v447
  %v458 = vpack.c.b16 %v450, %v449
  %467 = vmatprep.subr.bf16.mxu0 0
  %468 = vmatpush1.bf16.msra.mxu0 %v451
  %469 = vmatprep.subr.bf16.mxu0 0
  %470 = vmatpush1.bf16.msra.mxu0 %v452
  %471 = vmatprep.subr.bf16.mxu0 0
  %472 = vmatpush1.bf16.msra.mxu0 %v453
  %473 = vmatprep.subr.bf16.mxu0 0
  %474 = vmatpush1.bf16.msra.mxu0 %v454
  %475 = vmatprep.subr.bf16.mxu0 0
  %476 = vmatpush1.bf16.msra.mxu0 %v455
  %477 = vmatprep.subr.bf16.mxu0 0
  %478 = vmatpush1.bf16.msra.mxu0 %v456
  %479 = vmatprep.subr.bf16.mxu0 0
  %480 = vmatpush1.bf16.msra.mxu0 %v457
  %481 = vmatprep.subr.bf16.mxu0 0
  %482 = vmatpush1.bf16.msra.mxu0 %v458
  %483 = vmatprep.subr.bf16.mxu0 0
  %484 = vmatpush1.bf16.msra.mxu0 0
  %485 = vmatprep.subr.bf16.mxu0 0
  %486 = vmatpush1.bf16.msra.mxu0 0
  %487 = vmatprep.subr.bf16.mxu0 0
  %488 = vmatpush1.bf16.msra.mxu0 0
  %489 = vmatprep.subr.bf16.mxu0 0
  %490 = vmatpush1.bf16.msra.mxu0 0
  %491 = vmatprep.subr.bf16.mxu0 0
  %492 = vmatpush1.bf16.msra.mxu0 0
  %493 = vmatprep.subr.bf16.mxu0 0
  %494 = vmatpush1.bf16.msra.mxu0 0
  %495 = vmatprep.subr.bf16.mxu0 0
  %496 = vmatpush1.bf16.msra.mxu0 0
  %497 = vmatprep.subr.bf16.mxu0 0
  %498 = vmatpush1.bf16.msra.mxu0 0
  %499 = vmatprep.mubr.bf16.mxu0 0
  %500 = vmatmul.mubr.bf16.gmra.mrb[0].mxu0 %v355
  %v501 = vpop.f32.mrb[0].mxu0
  %v502 = vadd.f32 0.0, %v501
  %v503 = vpop.f32.mrb[0].mxu0
  %v504 = vpop.f32.mrb[0].mxu0
  %v505 = vadd.f32 0.0, %v504
  %v506 = vpop.f32.mrb[0].mxu0
  %507 = vmatprep.mubr.bf16.mxu0 0
  %508 = vmatmul.mubr.bf16.gmra.mrb[0].mxu0 %v356
  %v509 = vpop.f32.mrb[0].mxu0
  %v510 = vadd.f32 0.0, %v509
  %v511 = vpop.f32.mrb[0].mxu0
  %v512 = vpop.f32.mrb[0].mxu0
  %v513 = vadd.f32 0.0, %v512
  %v514 = vpop.f32.mrb[0].mxu0
  %515 = vmatprep.mubr.bf16.mxu0 0
  %516 = vmatmul.mubr.bf16.gmra.mrb[0].mxu0 %v357
  %v517 = vpop.f32.mrb[0].mxu0
  %v518 = vadd.f32 0.0, %v517
  %v519 = vpop.f32.mrb[0].mxu0
  %v520 = vpop.f32.mrb[0].mxu0
  %v521 = vadd.f32 0.0, %v520
  %v522 = vpop.f32.mrb[0].mxu0
  %523 = vmatprep.mubr.bf16.mxu0 0
  %524 = vmatmul.mubr.bf16.gmra.mrb[0].mxu0 %v358
  %v525 = vpop.f32.mrb[0].mxu0
  %v526 = vadd.f32 0.0, %v525
  %v527 = vpop.f32.mrb[0].mxu0
  %v528 = vpop.f32.mrb[0].mxu0
  %v529 = vadd.f32 0.0, %v528
  %v530 = vpop.f32.mrb[0].mxu0
  %531 = vmatprep.mubr.bf16.mxu0 0
  %532 = vmatmul.mubr.bf16.gmra.mrb[0].mxu0 %v359
  %v533 = vpop.f32.mrb[0].mxu0
  %v534 = vadd.f32 0.0, %v533
  %v535 = vpop.f32.mrb[0].mxu0
  %v536 = vpop.f32.mrb[0].mxu0
  %v537 = vadd.f32 0.0, %v536
  %v538 = vpop.f32.mrb[0].mxu0
  %539 = vmatprep.mubr.bf16.mxu0 0
  %540 = vmatmul.mubr.bf16.gmra.mrb[0].mxu0 %v360
  %v541 = vpop.f32.mrb[0].mxu0
  %v542 = vadd.f32 0.0, %v541
  %v543 = vpop.f32.mrb[0].mxu0
  %v544 = vpop.f32.mrb[0].mxu0
  %v545 = vadd.f32 0.0, %v544
  %v546 = vpop.f32.mrb[0].mxu0
  %547 = vmatprep.mubr.bf16.mxu0 0
  %548 = vmatmul.mubr.bf16.gmra.mrb[0].mxu0 %v361
  %v549 = vpop.f32.mrb[0].mxu0
  %v550 = vadd.f32 0.0, %v549
  %v551 = vpop.f32.mrb[0].mxu0
  %v552 = vpop.f32.mrb[0].mxu0
  %v553 = vadd.f32 0.0, %v552
  %v554 = vpop.f32.mrb[0].mxu0
  %555 = vmatprep.mubr.bf16.mxu0 0
  %556 = vmatmul.mubr.bf16.gmra.mrb[0].mxu0 %v362
  %v557 = vpop.f32.mrb[0].mxu0
  %v558 = vadd.f32 0.0, %v557
  %v559 = vpop.f32.mrb[0].mxu0
  %v560 = vpop.f32.mrb[0].mxu0
  %v561 = vadd.f32 0.0, %v560
  %v562 = vpop.f32.mrb[0].mxu0
  %563 = vmatprep.mubr.bf16.mxu0 0
  %564 = vmatmul.mubr.bf16.gmra.mrb[0].mxu0 %v363
  %v565 = vpop.f32.mrb[0].mxu0
  %v566 = vadd.f32 0.0, %v565
  %v567 = vpop.f32.mrb[0].mxu0
  %v568 = vpop.f32.mrb[0].mxu0
  %v569 = vadd.f32 0.0, %v568
  %v570 = vpop.f32.mrb[0].mxu0
  %571 = vmatprep.mubr.bf16.mxu0 0
  %572 = vmatmul.mubr.bf16.gmra.mrb[0].mxu0 %v364
  %v573 = vpop.f32.mrb[0].mxu0
  %v574 = vadd.f32 0.0, %v573
  %v575 = vpop.f32.mrb[0].mxu0
  %v576 = vpop.f32.mrb[0].mxu0
  %v577 = vadd.f32 0.0, %v576
  %v578 = vpop.f32.mrb[0].mxu0
  %579 = vmatprep.mubr.bf16.mxu0 0
  %580 = vmatmul.mubr.bf16.gmra.mrb[0].mxu0 %v365
  %v581 = vpop.f32.mrb[0].mxu0
  %v582 = vadd.f32 0.0, %v581
  %v583 = vpop.f32.mrb[0].mxu0
  %v584 = vpop.f32.mrb[0].mxu0
  %v585 = vadd.f32 0.0, %v584
  %v586 = vpop.f32.mrb[0].mxu0
  %587 = vmatprep.mubr.bf16.mxu0 0
  %588 = vmatmul.mubr.bf16.gmra.mrb[0].mxu0 %v366
  %v589 = vpop.f32.mrb[0].mxu0
  %v590 = vadd.f32 0.0, %v589
  %v591 = vpop.f32.mrb[0].mxu0
  %v592 = vpop.f32.mrb[0].mxu0
  %v593 = vadd.f32 0.0, %v592
  %v594 = vpop.f32.mrb[0].mxu0
  %595 = vmatprep.mubr.bf16.mxu0 0
  %596 = vmatmul.mubr.bf16.gmra.mrb[0].mxu0 %v367
  %v597 = vpop.f32.mrb[0].mxu0
  %v598 = vadd.f32 0.0, %v597
  %v599 = vpop.f32.mrb[0].mxu0
  %v600 = vpop.f32.mrb[0].mxu0
  %v601 = vadd.f32 0.0, %v600
  %v602 = vpop.f32.mrb[0].mxu0
  %603 = vmatprep.mubr.bf16.mxu0 0
  %604 = vmatmul.mubr.bf16.gmra.mrb[0].mxu0 %v368
  %v605 = vpop.f32.mrb[0].mxu0
  %v606 = vadd.f32 0.0, %v605
  %v607 = vpop.f32.mrb[0].mxu0
  %v608 = vpop.f32.mrb[0].mxu0
  %v609 = vadd.f32 0.0, %v608
  %v610 = vpop.f32.mrb[0].mxu0
  %611 = vmatprep.mubr.bf16.mxu0 0
  %612 = vmatmul.mubr.bf16.gmra.mrb[0].mxu0 %v369
  %v613 = vpop.f32.mrb[0].mxu0
  %v614 = vadd.f32 0.0, %v613
  %v615 = vpop.f32.mrb[0].mxu0
  %v616 = vpop.f32.mrb[0].mxu0
  %v617 = vadd.f32 0.0, %v616
  %v618 = vpop.f32.mrb[0].mxu0
  %619 = vmatprep.mubr.bf16.mxu0 0
  %620 = vmatmul.mubr.bf16.gmra.mrb[0].mxu0 %v370
  %v621 = vpop.f32.mrb[0].mxu0
  %v622 = vadd.f32 0.0, %v621
  %v623 = vpop.f32.mrb[0].mxu0
  %v624 = vpop.f32.mrb[0].mxu0
  %v625 = vadd.f32 0.0, %v624
  %v626 = vpop.f32.mrb[0].mxu0
  %627 = vmatprep.mubr.bf16.mxu0 0
  %628 = vmatmul.mubr.bf16.gmra.mrb[0].mxu0 %v371
  %v629 = vpop.f32.mrb[0].mxu0
  %v630 = vadd.f32 0.0, %v629
  %v631 = vpop.f32.mrb[0].mxu0
  %v632 = vpop.f32.mrb[0].mxu0
  %v633 = vadd.f32 0.0, %v632
  %v634 = vpop.f32.mrb[0].mxu0
  %635 = vmatprep.mubr.bf16.mxu0 0
  %636 = vmatmul.mubr.bf16.gmra.mrb[0].mxu0 %v372
  %v637 = vpop.f32.mrb[0].mxu0
  %v638 = vadd.f32 0.0, %v637
  %v639 = vpop.f32.mrb[0].mxu0
  %v640 = vpop.f32.mrb[0].mxu0
  %v641 = vadd.f32 0.0, %v640
  %v642 = vpop.f32.mrb[0].mxu0
  %643 = vmatprep.mubr.bf16.mxu0 0
  %644 = vmatmul.mubr.bf16.gmra.mrb[0].mxu0 %v373
  %v645 = vpop.f32.mrb[0].mxu0
  %v646 = vadd.f32 0.0, %v645
  %v647 = vpop.f32.mrb[0].mxu0
  %v648 = vpop.f32.mrb[0].mxu0
  %v649 = vadd.f32 0.0, %v648
  %v650 = vpop.f32.mrb[0].mxu0
  %651 = vmatprep.mubr.bf16.mxu0 0
  %652 = vmatmul.mubr.bf16.gmra.mrb[0].mxu0 %v374
  %v653 = vpop.f32.mrb[0].mxu0
  %v654 = vadd.f32 0.0, %v653
  %v655 = vpop.f32.mrb[0].mxu0
  %v656 = vpop.f32.mrb[0].mxu0
  %v657 = vadd.f32 0.0, %v656
  %v658 = vpop.f32.mrb[0].mxu0
  %659 = vmatprep.mubr.bf16.mxu0 0
  %660 = vmatmul.mubr.bf16.gmra.mrb[0].mxu0 %v375
  %v661 = vpop.f32.mrb[0].mxu0
  %v662 = vadd.f32 0.0, %v661
  %v663 = vpop.f32.mrb[0].mxu0
  %v664 = vpop.f32.mrb[0].mxu0
  %v665 = vadd.f32 0.0, %v664
  %v666 = vpop.f32.mrb[0].mxu0
  %667 = vmatprep.mubr.bf16.mxu0 0
  %668 = vmatmul.mubr.bf16.gmra.mrb[0].mxu0 %v376
  %v669 = vpop.f32.mrb[0].mxu0
  %v670 = vadd.f32 0.0, %v669
  %v671 = vpop.f32.mrb[0].mxu0
  %v672 = vpop.f32.mrb[0].mxu0
  %v673 = vadd.f32 0.0, %v672
  %v674 = vpop.f32.mrb[0].mxu0
  %675 = vmatprep.mubr.bf16.mxu0 0
  %676 = vmatmul.mubr.bf16.gmra.mrb[0].mxu0 %v377
  %v677 = vpop.f32.mrb[0].mxu0
  %v678 = vadd.f32 0.0, %v677
  %v679 = vpop.f32.mrb[0].mxu0
  %v680 = vpop.f32.mrb[0].mxu0
  %v681 = vadd.f32 0.0, %v680
  %v682 = vpop.f32.mrb[0].mxu0
  %683 = vmatprep.mubr.bf16.mxu0 0
  %684 = vmatmul.mubr.bf16.gmra.mrb[0].mxu0 %v378
  %v685 = vpop.f32.mrb[0].mxu0
  %v686 = vadd.f32 0.0, %v685
  %v687 = vpop.f32.mrb[0].mxu0
  %v688 = vpop.f32.mrb[0].mxu0
  %v689 = vadd.f32 0.0, %v688
  %v690 = vpop.f32.mrb[0].mxu0
  %691 = vmatprep.mubr.bf16.mxu0 0
  %692 = vmatmul.mubr.bf16.gmra.mrb[0].mxu0 %v379
  %v693 = vpop.f32.mrb[0].mxu0
  %v694 = vadd.f32 0.0, %v693
  %v695 = vpop.f32.mrb[0].mxu0
  %v696 = vpop.f32.mrb[0].mxu0
  %v697 = vadd.f32 0.0, %v696
  %v698 = vpop.f32.mrb[0].mxu0
  %699 = vmatprep.mubr.bf16.mxu0 0
  %700 = vmatmul.mubr.bf16.gmra.mrb[0].mxu0 %v380
  %v701 = vpop.f32.mrb[0].mxu0
  %v702 = vadd.f32 0.0, %v701
  %v703 = vpop.f32.mrb[0].mxu0
  %v704 = vpop.f32.mrb[0].mxu0
  %v705 = vadd.f32 0.0, %v704
  %v706 = vpop.f32.mrb[0].mxu0
  %707 = vmatprep.mubr.bf16.mxu0 0
  %708 = vmatmul.mubr.bf16.gmra.mrb[0].mxu0 %v381
  %v709 = vpop.f32.mrb[0].mxu0
  %v710 = vadd.f32 0.0, %v709
  %v711 = vpop.f32.mrb[0].mxu0
  %v712 = vpop.f32.mrb[0].mxu0
  %v713 = vadd.f32 0.0, %v712
  %v714 = vpop.f32.mrb[0].mxu0
  %715 = vmatprep.mubr.bf16.mxu0 0
  %716 = vmatmul.mubr.bf16.gmra.mrb[0].mxu0 %v382
  %v717 = vpop.f32.mrb[0].mxu0
  %v718 = vadd.f32 0.0, %v717
  %v719 = vpop.f32.mrb[0].mxu0
  %v720 = vpop.f32.mrb[0].mxu0
  %v721 = vadd.f32 0.0, %v720
  %v722 = vpop.f32.mrb[0].mxu0
  %723 = vmatprep.mubr.bf16.mxu0 0
  %724 = vmatmul.mubr.bf16.gmra.mrb[0].mxu0 %v383
  %v725 = vpop.f32.mrb[0].mxu0
  %v726 = vadd.f32 0.0, %v725
  %v727 = vpop.f32.mrb[0].mxu0
  %v728 = vpop.f32.mrb[0].mxu0
  %v729 = vadd.f32 0.0, %v728
  %v730 = vpop.f32.mrb[0].mxu0
  %731 = vmatprep.mubr.bf16.mxu0 0
  %732 = vmatmul.mubr.bf16.gmra.mrb[0].mxu0 %v384
  %v733 = vpop.f32.mrb[0].mxu0
  %v734 = vadd.f32 0.0, %v733
  %v735 = vpop.f32.mrb[0].mxu0
  %v736 = vpop.f32.mrb[0].mxu0
  %v737 = vadd.f32 0.0, %v736
  %v738 = vpop.f32.mrb[0].mxu0
  %739 = vmatprep.mubr.bf16.mxu0 0
  %740 = vmatmul.mubr.bf16.gmra.mrb[0].mxu0 %v385
  %v741 = vpop.f32.mrb[0].mxu0
  %v742 = vadd.f32 0.0, %v741
  %v743 = vpop.f32.mrb[0].mxu0
  %v744 = vpop.f32.mrb[0].mxu0
  %v745 = vadd.f32 0.0, %v744
  %v746 = vpop.f32.mrb[0].mxu0
  %747 = vmatprep.mubr.bf16.mxu0 0
  %748 = vmatmul.mubr.bf16.gmra.mrb[0].mxu0 %v386
  %v749 = vpop.f32.mrb[0].mxu0
  %v750 = vadd.f32 0.0, %v749
  %v751 = vpop.f32.mrb[0].mxu0
  %v752 = vpop.f32.mrb[0].mxu0
  %v753 = vadd.f32 0.0, %v752
  %v754 = vpop.f32.mrb[0].mxu0
  %755 = vdwg.mxu0
  %v756 = vadd.f32 %v83, %v502
  %v757 = vadd.f32 %v84, %v505
  %v758 = vadd.f32 %v85, %v510
  %v759 = vadd.f32 %v86, %v513
  %v760 = vadd.f32 %v87, %v518
  %v761 = vadd.f32 %v88, %v521
  %v762 = vadd.f32 %v89, %v526
  %v763 = vadd.f32 %v90, %v529
  %v764 = vadd.f32 %v91, %v534
  %v765 = vadd.f32 %v92, %v537
  %v766 = vadd.f32 %v93, %v542
  %v767 = vadd.f32 %v94, %v545
  %v768 = vadd.f32 %v95, %v550
  %v769 = vadd.f32 %v96, %v553
  %v770 = vadd.f32 %v97, %v558
  %v771 = vadd.f32 %v98, %v561
  %v772 = vadd.f32 %v99, %v566
  %v773 = vadd.f32 %v100, %v569
  %v774 = vadd.f32 %v101, %v574
  %v775 = vadd.f32 %v102, %v577
  %v776 = vadd.f32 %v103, %v582
  %v777 = vadd.f32 %v104, %v585
  %v778 = vadd.f32 %v105, %v590
  %v779 = vadd.f32 %v106, %v593
  %v780 = vadd.f32 %v107, %v598
  %v781 = vadd.f32 %v108, %v601
  %v782 = vadd.f32 %v109, %v606
  %v783 = vadd.f32 %v110, %v609
  %v784 = vadd.f32 %v111, %v614
  %v785 = vadd.f32 %v112, %v617
  %v786 = vadd.f32 %v113, %v622
  %v787 = vadd.f32 %v114, %v625
  %v788 = vadd.f32 %v115, %v630
  %v789 = vadd.f32 %v116, %v633
  %v790 = vadd.f32 %v117, %v638
  %v791 = vadd.f32 %v118, %v641
  %v792 = vadd.f32 %v119, %v646
  %v793 = vadd.f32 %v120, %v649
  %v794 = vadd.f32 %v121, %v654
  %v795 = vadd.f32 %v122, %v657
  %v796 = vadd.f32 %v123, %v662
  %v797 = vadd.f32 %v124, %v665
  %v798 = vadd.f32 %v125, %v670
  %v799 = vadd.f32 %v126, %v673
  %v800 = vadd.f32 %v127, %v678
  %v801 = vadd.f32 %v128, %v681
  %v802 = vadd.f32 %v129, %v686
  %v803 = vadd.f32 %v130, %v689
  %v804 = vadd.f32 %v131, %v694
  %v805 = vadd.f32 %v132, %v697
  %v806 = vadd.f32 %v133, %v702
  %v807 = vadd.f32 %v134, %v705
  %v808 = vadd.f32 %v135, %v710
  %v809 = vadd.f32 %v136, %v713
  %v810 = vadd.f32 %v137, %v718
  %v811 = vadd.f32 %v138, %v721
  %v812 = vadd.f32 %v139, %v726
  %v813 = vadd.f32 %v140, %v729
  %v814 = vadd.f32 %v141, %v734
  %v815 = vadd.f32 %v142, %v737
  %v816 = vadd.f32 %v143, %v742
  %v817 = vadd.f32 %v144, %v745
  %v818 = vadd.f32 %v145, %v750
  %v819 = vadd.f32 %v146, %v753
  %820 = vst [vmem:[#allocation2] sm:$0xff] %v756
  %821 = vst [vmem:[#allocation2 + $0x8] sm:$0xff] %v757
  %822 = vst [vmem:[#allocation2 + $0x10] sm:$0xff] %v758
  %823 = vst [vmem:[#allocation2 + $0x18] sm:$0xff] %v759
  %824 = vst [vmem:[#allocation2 + $0x20] sm:$0xff] %v760
  %825 = vst [vmem:[#allocation2 + $0x28] sm:$0xff] %v761
  %826 = vst [vmem:[#allocation2 + $0x30] sm:$0xff] %v762
  %827 = vst [vmem:[#allocation2 + $0x38] sm:$0xff] %v763
  %828 = vst [vmem:[#allocation2 + $0x40] sm:$0xff] %v764
  %829 = vst [vmem:[#allocation2 + $0x48] sm:$0xff] %v765
  %830 = vst [vmem:[#allocation2 + $0x50] sm:$0xff] %v766
  %831 = vst [vmem:[#allocation2 + $0x58] sm:$0xff] %v767
  %832 = vst [vmem:[#allocation2 + $0x60] sm:$0xff] %v768
  %833 = vst [vmem:[#allocation2 + $0x68] sm:$0xff] %v769
  %834 = vst [vmem:[#allocation2 + $0x70] sm:$0xff] %v770
  %835 = vst [vmem:[#allocation2 + $0x78] sm:$0xff] %v771
  %836 = vst [vmem:[#allocation2 + $0x80] sm:$0xff] %v772
  %837 = vst [vmem:[#allocation2 + $0x88] sm:$0xff] %v773
  %838 = vst [vmem:[#allocation2 + $0x90] sm:$0xff] %v774
  %839 = vst [vmem:[#allocation2 + $0x98] sm:$0xff] %v775
  %840 = vst [vmem:[#allocation2 + $0xa0] sm:$0xff] %v776
  %841 = vst [vmem:[#allocation2 + $0xa8] sm:$0xff] %v777
  %842 = vst [vmem:[#allocation2 + $0xb0] sm:$0xff] %v778
  %843 = vst [vmem:[#allocation2 + $0xb8] sm:$0xff] %v779
  %844 = vst [vmem:[#allocation2 + $0xc0] sm:$0xff] %v780
  %845 = vst [vmem:[#allocation2 + $0xc8] sm:$0xff] %v781
  %846 = vst [vmem:[#allocation2 + $0xd0] sm:$0xff] %v782
  %847 = vst [vmem:[#allocation2 + $0xd8] sm:$0xff] %v783
  %848 = vst [vmem:[#allocation2 + $0xe0] sm:$0xff] %v784
  %849 = vst [vmem:[#allocation2 + $0xe8] sm:$0xff] %v785
  %850 = vst [vmem:[#allocation2 + $0xf0] sm:$0xff] %v786
  %851 = vst [vmem:[#allocation2 + $0xf8] sm:$0xff] %v787
  %852 = vst [vmem:[#allocation2 + $0x100] sm:$0xff] %v788
  %853 = vst [vmem:[#allocation2 + $0x108] sm:$0xff] %v789
  %854 = vst [vmem:[#allocation2 + $0x110] sm:$0xff] %v790
  %855 = vst [vmem:[#allocation2 + $0x118] sm:$0xff] %v791
  %856 = vst [vmem:[#allocation2 + $0x120] sm:$0xff] %v792
  %857 = vst [vmem:[#allocation2 + $0x128] sm:$0xff] %v793
  %858 = vst [vmem:[#allocation2 + $0x130] sm:$0xff] %v794
  %859 = vst [vmem:[#allocation2 + $0x138] sm:$0xff] %v795
  %860 = vst [vmem:[#allocation2 + $0x140] sm:$0xff] %v796
  %861 = vst [vmem:[#allocation2 + $0x148] sm:$0xff] %v797
  %862 = vst [vmem:[#allocation2 + $0x150] sm:$0xff] %v798
  %863 = vst [vmem:[#allocation2 + $0x158] sm:$0xff] %v799
  %864 = vst [vmem:[#allocation2 + $0x160] sm:$0xff] %v800
  %865 = vst [vmem:[#allocation2 + $0x168] sm:$0xff] %v801
  %866 = vst [vmem:[#allocation2 + $0x170] sm:$0xff] %v802
  %867 = vst [vmem:[#allocation2 + $0x178] sm:$0xff] %v803
  %868 = vst [vmem:[#allocation2 + $0x180] sm:$0xff] %v804
  %869 = vst [vmem:[#allocation2 + $0x188] sm:$0xff] %v805
  %870 = vst [vmem:[#allocation2 + $0x190] sm:$0xff] %v806
  %871 = vst [vmem:[#allocation2 + $0x198] sm:$0xff] %v807
  %872 = vst [vmem:[#allocation2 + $0x1a0] sm:$0xff] %v808
  %873 = vst [vmem:[#allocation2 + $0x1a8] sm:$0xff] %v809
  %874 = vst [vmem:[#allocation2 + $0x1b0] sm:$0xff] %v810
  %875 = vst [vmem:[#allocation2 + $0x1b8] sm:$0xff] %v811
  %876 = vst [vmem:[#allocation2 + $0x1c0] sm:$0xff] %v812
  %877 = vst [vmem:[#allocation2 + $0x1c8] sm:$0xff] %v813
  %878 = vst [vmem:[#allocation2 + $0x1d0] sm:$0xff] %v814
  %879 = vst [vmem:[#allocation2 + $0x1d8] sm:$0xff] %v815
  %880 = vst [vmem:[#allocation2 + $0x1e0] sm:$0xff] %v816
  %881 = vst [vmem:[#allocation2 + $0x1e8] sm:$0xff] %v817
  %882 = vst [vmem:[#allocation2 + $0x1f0] sm:$0xff] %v818
  %883 = vst [vmem:[#allocation2 + $0x1f8] sm:$0xff] %v819
  // Predicated region
  $region18: #{nlayer_discriminator_att_forward.13} parent=0 // pred_check
    %p884 = pneg %p15
  $region19: #{nlayer_discriminator_att_forward.13} parent=0 // pred_check_branch
    %886 = sbr.rel (%p884) target = $region21
  $region20: #{nlayer_discriminator_att_forward.13} parent=0 // pred_region
    %v887 = vld [vmem:[#allocation2] sm:$0xff]
    %v888 = vld [vmem:[#allocation2 + $0x8] sm:$0xff]
    %v889 = vld [vmem:[#allocation2 + $0x10] sm:$0xff]
    %v890 = vld [vmem:[#allocation2 + $0x18] sm:$0xff]
    %v891 = vld [vmem:[#allocation2 + $0x20] sm:$0xff]
    %v892 = vld [vmem:[#allocation2 + $0x28] sm:$0xff]
    %v893 = vld [vmem:[#allocation2 + $0x30] sm:$0xff]
    %v894 = vld [vmem:[#allocation2 + $0x38] sm:$0xff]
    %v895 = vld [vmem:[#allocation2 + $0x40] sm:$0xff]
    %v896 = vld [vmem:[#allocation2 + $0x48] sm:$0xff]
    %v897 = vld [vmem:[#allocation2 + $0x50] sm:$0xff]
    %v898 = vld [vmem:[#allocation2 + $0x58] sm:$0xff]
    %v899 = vld [vmem:[#allocation2 + $0x60] sm:$0xff]
    %v900 = vld [vmem:[#allocation2 + $0x68] sm:$0xff]
    %v901 = vld [vmem:[#allocation2 + $0x70] sm:$0xff]
    %v902 = vld [vmem:[#allocation2 + $0x78] sm:$0xff]
    %v903 = vld [vmem:[#allocation2 + $0x80] sm:$0xff]
    %v904 = vld [vmem:[#allocation2 + $0x88] sm:$0xff]
    %v905 = vld [vmem:[#allocation2 + $0x90] sm:$0xff]
    %v906 = vld [vmem:[#allocation2 + $0x98] sm:$0xff]
    %v907 = vld [vmem:[#allocation2 + $0xa0] sm:$0xff]
    %v908 = vld [vmem:[#allocation2 + $0xa8] sm:$0xff]
    %v909 = vld [vmem:[#allocation2 + $0xb0] sm:$0xff]
    %v910 = vld [vmem:[#allocation2 + $0xb8] sm:$0xff]
    %v911 = vld [vmem:[#allocation2 + $0xc0] sm:$0xff]
    %v912 = vld [vmem:[#allocation2 + $0xc8] sm:$0xff]
    %v913 = vld [vmem:[#allocation2 + $0xd0] sm:$0xff]
    %v914 = vld [vmem:[#allocation2 + $0xd8] sm:$0xff]
    %v915 = vld [vmem:[#allocation2 + $0xe0] sm:$0xff]
    %v916 = vld [vmem:[#allocation2 + $0xe8] sm:$0xff]
    %v917 = vld [vmem:[#allocation2 + $0xf0] sm:$0xff]
    %v918 = vld [vmem:[#allocation2 + $0xf8] sm:$0xff]
    %v919 = vld [vmem:[#allocation2 + $0x100] sm:$0xff]
    %v920 = vld [vmem:[#allocation2 + $0x108] sm:$0xff]
    %v921 = vld [vmem:[#allocation2 + $0x110] sm:$0xff]
    %v922 = vld [vmem:[#allocation2 + $0x118] sm:$0xff]
    %v923 = vld [vmem:[#allocation2 + $0x120] sm:$0xff]
    %v924 = vld [vmem:[#allocation2 + $0x128] sm:$0xff]
    %v925 = vld [vmem:[#allocation2 + $0x130] sm:$0xff]
    %v926 = vld [vmem:[#allocation2 + $0x138] sm:$0xff]
    %v927 = vld [vmem:[#allocation2 + $0x140] sm:$0xff]
    %v928 = vld [vmem:[#allocation2 + $0x148] sm:$0xff]
    %v929 = vld [vmem:[#allocation2 + $0x150] sm:$0xff]
    %v930 = vld [vmem:[#allocation2 + $0x158] sm:$0xff]
    %v931 = vld [vmem:[#allocation2 + $0x160] sm:$0xff]
    %v932 = vld [vmem:[#allocation2 + $0x168] sm:$0xff]
    %v933 = vld [vmem:[#allocation2 + $0x170] sm:$0xff]
    %v934 = vld [vmem:[#allocation2 + $0x178] sm:$0xff]
    %v935 = vld [vmem:[#allocation2 + $0x180] sm:$0xff]
    %v936 = vld [vmem:[#allocation2 + $0x188] sm:$0xff]
    %v937 = vld [vmem:[#allocation2 + $0x190] sm:$0xff]
    %v938 = vld [vmem:[#allocation2 + $0x198] sm:$0xff]
    %v939 = vld [vmem:[#allocation2 + $0x1a0] sm:$0xff]
    %v940 = vld [vmem:[#allocation2 + $0x1a8] sm:$0xff]
    %v941 = vld [vmem:[#allocation2 + $0x1b0] sm:$0xff]
    %v942 = vld [vmem:[#allocation2 + $0x1b8] sm:$0xff]
    %v943 = vld [vmem:[#allocation2 + $0x1c0] sm:$0xff]
    %v944 = vld [vmem:[#allocation2 + $0x1c8] sm:$0xff]
    %v945 = vld [vmem:[#allocation2 + $0x1d0] sm:$0xff]
    %v946 = vld [vmem:[#allocation2 + $0x1d8] sm:$0xff]
    %v947 = vld [vmem:[#allocation2 + $0x1e0] sm:$0xff]
    %v948 = vld [vmem:[#allocation2 + $0x1e8] sm:$0xff]
    %v949 = vld [vmem:[#allocation2 + $0x1f0] sm:$0xff]
    %v950 = vld [vmem:[#allocation2 + $0x1f8] sm:$0xff]
    %v951 = vld [vmem:[%s2] sm:$0x1]
    %v953 = vlaneseq
    %v954 = vshrl.u32 %v953, 7
    %v955 = vsub.s32 0, %v954
    %v956 = vrot.slane %v951, %v955
    %v958 = vadd.f32 %v887, %v956
    %v959 = vadd.f32 %v888, %v956
    %v960 = vadd.f32 %v889, %v956
    %v961 = vadd.f32 %v890, %v956
    %v962 = vadd.f32 %v891, %v956
    %v963 = vadd.f32 %v892, %v956
    %v964 = vadd.f32 %v893, %v956
    %v965 = vadd.f32 %v894, %v956
    %v966 = vadd.f32 %v895, %v956
    %v967 = vadd.f32 %v896, %v956
    %v968 = vadd.f32 %v897, %v956
    %v969 = vadd.f32 %v898, %v956
    %v970 = vadd.f32 %v899, %v956
    %v971 = vadd.f32 %v900, %v956
    %v972 = vadd.f32 %v901, %v956
    %v973 = vadd.f32 %v902, %v956
    %v974 = vadd.f32 %v903, %v956
    %v975 = vadd.f32 %v904, %v956
    %v976 = vadd.f32 %v905, %v956
    %v977 = vadd.f32 %v906, %v956
    %v978 = vadd.f32 %v907, %v956
    %v979 = vadd.f32 %v908, %v956
    %v980 = vadd.f32 %v909, %v956
    %v981 = vadd.f32 %v910, %v956
    %v982 = vadd.f32 %v911, %v956
    %v983 = vadd.f32 %v912, %v956
    %v984 = vadd.f32 %v913, %v956
    %v985 = vadd.f32 %v914, %v956
    %v986 = vadd.f32 %v915, %v956
    %v987 = vadd.f32 %v916, %v956
    %v988 = vadd.f32 %v917, %v956
    %v989 = vadd.f32 %v918, %v956
    %v990 = vadd.f32 %v919, %v956
    %v991 = vadd.f32 %v920, %v956
    %v992 = vadd.f32 %v921, %v956
    %v993 = vadd.f32 %v922, %v956
    %v994 = vadd.f32 %v923, %v956
    %v995 = vadd.f32 %v924, %v956
    %v996 = vadd.f32 %v925, %v956
    %v997 = vadd.f32 %v926, %v956
    %v998 = vadd.f32 %v927, %v956
    %v999 = vadd.f32 %v928, %v956
    %v1000 = vadd.f32 %v929, %v956
    %v1001 = vadd.f32 %v930, %v956
    %v1002 = vadd.f32 %v931, %v956
    %v1003 = vadd.f32 %v932, %v956
    %v1004 = vadd.f32 %v933, %v956
    %v1005 = vadd.f32 %v934, %v956
    %v1006 = vadd.f32 %v935, %v956
    %v1007 = vadd.f32 %v936, %v956
    %v1008 = vadd.f32 %v937, %v956
    %v1009 = vadd.f32 %v938, %v956
    %v1010 = vadd.f32 %v939, %v956
    %v1011 = vadd.f32 %v940, %v956
    %v1012 = vadd.f32 %v941, %v956
    %v1013 = vadd.f32 %v942, %v956
    %v1014 = vadd.f32 %v943, %v956
    %v1015 = vadd.f32 %v944, %v956
    %v1016 = vadd.f32 %v945, %v956
    %v1017 = vadd.f32 %v946, %v956
    %v1018 = vadd.f32 %v947, %v956
    %v1019 = vadd.f32 %v948, %v956
    %v1020 = vadd.f32 %v949, %v956
    %v1021 = vadd.f32 %v950, %v956
    %vm1022 = vcmp.ge.f32.partialorder %v958, 0.0
    %vm1023 = vcmp.ge.f32.partialorder %v959, 0.0
    %vm1024 = vcmp.ge.f32.partialorder %v960, 0.0
    %vm1025 = vcmp.ge.f32.partialorder %v961, 0.0
    %vm1026 = vcmp.ge.f32.partialorder %v962, 0.0
    %vm1027 = vcmp.ge.f32.partialorder %v963, 0.0
    %vm1028 = vcmp.ge.f32.partialorder %v964, 0.0
    %vm1029 = vcmp.ge.f32.partialorder %v965, 0.0
    %vm1030 = vcmp.ge.f32.partialorder %v966, 0.0
    %vm1031 = vcmp.ge.f32.partialorder %v967, 0.0
    %vm1032 = vcmp.ge.f32.partialorder %v968, 0.0
    %vm1033 = vcmp.ge.f32.partialorder %v969, 0.0
    %vm1034 = vcmp.ge.f32.partialorder %v970, 0.0
    %vm1035 = vcmp.ge.f32.partialorder %v971, 0.0
    %vm1036 = vcmp.ge.f32.partialorder %v972, 0.0
    %vm1037 = vcmp.ge.f32.partialorder %v973, 0.0
    %vm1038 = vcmp.ge.f32.partialorder %v974, 0.0
    %vm1039 = vcmp.ge.f32.partialorder %v975, 0.0
    %vm1040 = vcmp.ge.f32.partialorder %v976, 0.0
    %vm1041 = vcmp.ge.f32.partialorder %v977, 0.0
    %vm1042 = vcmp.ge.f32.partialorder %v978, 0.0
    %vm1043 = vcmp.ge.f32.partialorder %v979, 0.0
    %vm1044 = vcmp.ge.f32.partialorder %v980, 0.0
    %vm1045 = vcmp.ge.f32.partialorder %v981, 0.0
    %vm1046 = vcmp.ge.f32.partialorder %v982, 0.0
    %vm1047 = vcmp.ge.f32.partialorder %v983, 0.0
    %vm1048 = vcmp.ge.f32.partialorder %v984, 0.0
    %vm1049 = vcmp.ge.f32.partialorder %v985, 0.0
    %vm1050 = vcmp.ge.f32.partialorder %v986, 0.0
    %vm1051 = vcmp.ge.f32.partialorder %v987, 0.0
    %vm1052 = vcmp.ge.f32.partialorder %v988, 0.0
    %vm1053 = vcmp.ge.f32.partialorder %v989, 0.0
    %vm1054 = vcmp.ge.f32.partialorder %v990, 0.0
    %vm1055 = vcmp.ge.f32.partialorder %v991, 0.0
    %vm1056 = vcmp.ge.f32.partialorder %v992, 0.0
    %vm1057 = vcmp.ge.f32.partialorder %v993, 0.0
    %vm1058 = vcmp.ge.f32.partialorder %v994, 0.0
    %vm1059 = vcmp.ge.f32.partialorder %v995, 0.0
    %vm1060 = vcmp.ge.f32.partialorder %v996, 0.0
    %vm1061 = vcmp.ge.f32.partialorder %v997, 0.0
    %vm1062 = vcmp.ge.f32.partialorder %v998, 0.0
    %vm1063 = vcmp.ge.f32.partialorder %v999, 0.0
    %vm1064 = vcmp.ge.f32.partialorder %v1000, 0.0
    %vm1065 = vcmp.ge.f32.partialorder %v1001, 0.0
    %vm1066 = vcmp.ge.f32.partialorder %v1002, 0.0
    %vm1067 = vcmp.ge.f32.partialorder %v1003, 0.0
    %vm1068 = vcmp.ge.f32.partialorder %v1004, 0.0
    %vm1069 = vcmp.ge.f32.partialorder %v1005, 0.0
    %vm1070 = vcmp.ge.f32.partialorder %v1006, 0.0
    %vm1071 = vcmp.ge.f32.partialorder %v1007, 0.0
    %vm1072 = vcmp.ge.f32.partialorder %v1008, 0.0
    %vm1073 = vcmp.ge.f32.partialorder %v1009, 0.0
    %vm1074 = vcmp.ge.f32.partialorder %v1010, 0.0
    %vm1075 = vcmp.ge.f32.partialorder %v1011, 0.0
    %vm1076 = vcmp.ge.f32.partialorder %v1012, 0.0
    %vm1077 = vcmp.ge.f32.partialorder %v1013, 0.0
    %vm1078 = vcmp.ge.f32.partialorder %v1014, 0.0
    %vm1079 = vcmp.ge.f32.partialorder %v1015, 0.0
    %vm1080 = vcmp.ge.f32.partialorder %v1016, 0.0
    %vm1081 = vcmp.ge.f32.partialorder %v1017, 0.0
    %vm1082 = vcmp.ge.f32.partialorder %v1018, 0.0
    %vm1083 = vcmp.ge.f32.partialorder %v1019, 0.0
    %vm1084 = vcmp.ge.f32.partialorder %v1020, 0.0
    %vm1085 = vcmp.ge.f32.partialorder %v1021, 0.0
    %v1086 = vmul.f32 %v958, 0.2
    %v1087 = vmul.f32 %v959, 0.2
    %v1088 = vmul.f32 %v960, 0.2
    %v1089 = vmul.f32 %v961, 0.2
    %v1090 = vmul.f32 %v962, 0.2
    %v1091 = vmul.f32 %v963, 0.2
    %v1092 = vmul.f32 %v964, 0.2
    %v1093 = vmul.f32 %v965, 0.2
    %v1094 = vmul.f32 %v966, 0.2
    %v1095 = vmul.f32 %v967, 0.2
    %v1096 = vmul.f32 %v968, 0.2
    %v1097 = vmul.f32 %v969, 0.2
    %v1098 = vmul.f32 %v970, 0.2
    %v1099 = vmul.f32 %v971, 0.2
    %v1100 = vmul.f32 %v972, 0.2
    %v1101 = vmul.f32 %v973, 0.2
    %v1102 = vmul.f32 %v974, 0.2
    %v1103 = vmul.f32 %v975, 0.2
    %v1104 = vmul.f32 %v976, 0.2
    %v1105 = vmul.f32 %v977, 0.2
    %v1106 = vmul.f32 %v978, 0.2
    %v1107 = vmul.f32 %v979, 0.2
    %v1108 = vmul.f32 %v980, 0.2
    %v1109 = vmul.f32 %v981, 0.2
    %v1110 = vmul.f32 %v982, 0.2
    %v1111 = vmul.f32 %v983, 0.2
    %v1112 = vmul.f32 %v984, 0.2
    %v1113 = vmul.f32 %v985, 0.2
    %v1114 = vmul.f32 %v986, 0.2
    %v1115 = vmul.f32 %v987, 0.2
    %v1116 = vmul.f32 %v988, 0.2
    %v1117 = vmul.f32 %v989, 0.2
    %v1118 = vmul.f32 %v990, 0.2
    %v1119 = vmul.f32 %v991, 0.2
    %v1120 = vmul.f32 %v992, 0.2
    %v1121 = vmul.f32 %v993, 0.2
    %v1122 = vmul.f32 %v994, 0.2
    %v1123 = vmul.f32 %v995, 0.2
    %v1124 = vmul.f32 %v996, 0.2
    %v1125 = vmul.f32 %v997, 0.2
    %v1126 = vmul.f32 %v998, 0.2
    %v1127 = vmul.f32 %v999, 0.2
    %v1128 = vmul.f32 %v1000, 0.2
    %v1129 = vmul.f32 %v1001, 0.2
    %v1130 = vmul.f32 %v1002, 0.2
    %v1131 = vmul.f32 %v1003, 0.2
    %v1132 = vmul.f32 %v1004, 0.2
    %v1133 = vmul.f32 %v1005, 0.2
    %v1134 = vmul.f32 %v1006, 0.2
    %v1135 = vmul.f32 %v1007, 0.2
    %v1136 = vmul.f32 %v1008, 0.2
    %v1137 = vmul.f32 %v1009, 0.2
    %v1138 = vmul.f32 %v1010, 0.2
    %v1139 = vmul.f32 %v1011, 0.2
    %v1140 = vmul.f32 %v1012, 0.2
    %v1141 = vmul.f32 %v1013, 0.2
    %v1142 = vmul.f32 %v1014, 0.2
    %v1143 = vmul.f32 %v1015, 0.2
    %v1144 = vmul.f32 %v1016, 0.2
    %v1145 = vmul.f32 %v1017, 0.2
    %v1146 = vmul.f32 %v1018, 0.2
    %v1147 = vmul.f32 %v1019, 0.2
    %v1148 = vmul.f32 %v1020, 0.2
    %v1149 = vmul.f32 %v1021, 0.2
    %v1150 = vsel %vm1022, %v958, %v1086
    %v1151 = vsel %vm1023, %v959, %v1087
    %v1152 = vsel %vm1024, %v960, %v1088
    %v1153 = vsel %vm1025, %v961, %v1089
    %v1154 = vsel %vm1026, %v962, %v1090
    %v1155 = vsel %vm1027, %v963, %v1091
    %v1156 = vsel %vm1028, %v964, %v1092
    %v1157 = vsel %vm1029, %v965, %v1093
    %v1158 = vsel %vm1030, %v966, %v1094
    %v1159 = vsel %vm1031, %v967, %v1095
    %v1160 = vsel %vm1032, %v968, %v1096
    %v1161 = vsel %vm1033, %v969, %v1097
    %v1162 = vsel %vm1034, %v970, %v1098
    %v1163 = vsel %vm1035, %v971, %v1099
    %v1164 = vsel %vm1036, %v972, %v1100
    %v1165 = vsel %vm1037, %v973, %v1101
    %v1166 = vsel %vm1038, %v974, %v1102
    %v1167 = vsel %vm1039, %v975, %v1103
    %v1168 = vsel %vm1040, %v976, %v1104
    %v1169 = vsel %vm1041, %v977, %v1105
    %v1170 = vsel %vm1042, %v978, %v1106
    %v1171 = vsel %vm1043, %v979, %v1107
    %v1172 = vsel %vm1044, %v980, %v1108
    %v1173 = vsel %vm1045, %v981, %v1109
    %v1174 = vsel %vm1046, %v982, %v1110
    %v1175 = vsel %vm1047, %v983, %v1111
    %v1176 = vsel %vm1048, %v984, %v1112
    %v1177 = vsel %vm1049, %v985, %v1113
    %v1178 = vsel %vm1050, %v986, %v1114
    %v1179 = vsel %vm1051, %v987, %v1115
    %v1180 = vsel %vm1052, %v988, %v1116
    %v1181 = vsel %vm1053, %v989, %v1117
    %v1182 = vsel %vm1054, %v990, %v1118
    %v1183 = vsel %vm1055, %v991, %v1119
    %v1184 = vsel %vm1056, %v992, %v1120
    %v1185 = vsel %vm1057, %v993, %v1121
    %v1186 = vsel %vm1058, %v994, %v1122
    %v1187 = vsel %vm1059, %v995, %v1123
    %v1188 = vsel %vm1060, %v996, %v1124
    %v1189 = vsel %vm1061, %v997, %v1125
    %v1190 = vsel %vm1062, %v998, %v1126
    %v1191 = vsel %vm1063, %v999, %v1127
    %v1192 = vsel %vm1064, %v1000, %v1128
    %v1193 = vsel %vm1065, %v1001, %v1129
    %v1194 = vsel %vm1066, %v1002, %v1130
    %v1195 = vsel %vm1067, %v1003, %v1131
    %v1196 = vsel %vm1068, %v1004, %v1132
    %v1197 = vsel %vm1069, %v1005, %v1133
    %v1198 = vsel %vm1070, %v1006, %v1134
    %v1199 = vsel %vm1071, %v1007, %v1135
    %v1200 = vsel %vm1072, %v1008, %v1136
    %v1201 = vsel %vm1073, %v1009, %v1137
    %v1202 = vsel %vm1074, %v1010, %v1138
    %v1203 = vsel %vm1075, %v1011, %v1139
    %v1204 = vsel %vm1076, %v1012, %v1140
    %v1205 = vsel %vm1077, %v1013, %v1141
    %v1206 = vsel %vm1078, %v1014, %v1142
    %v1207 = vsel %vm1079, %v1015, %v1143
    %v1208 = vsel %vm1080, %v1016, %v1144
    %v1209 = vsel %vm1081, %v1017, %v1145
    %v1210 = vsel %vm1082, %v1018, %v1146
    %v1211 = vsel %vm1083, %v1019, %v1147
    %v1212 = vsel %vm1084, %v1020, %v1148
    %v1213 = vsel %vm1085, %v1021, %v1149
    %v1214 = vpack.c.bf16 %v1151, %v1150
    %v1215 = vpack.c.bf16 %v1153, %v1152
    %v1216 = vpack.c.bf16 %v1155, %v1154
    %v1217 = vpack.c.bf16 %v1157, %v1156
    %v1218 = vpack.c.bf16 %v1159, %v1158
    %v1219 = vpack.c.bf16 %v1161, %v1160
    %v1220 = vpack.c.bf16 %v1163, %v1162
    %v1221 = vpack.c.bf16 %v1165, %v1164
    %v1222 = vpack.c.bf16 %v1167, %v1166
    %v1223 = vpack.c.bf16 %v1169, %v1168
    %v1224 = vpack.c.bf16 %v1171, %v1170
    %v1225 = vpack.c.bf16 %v1173, %v1172
    %v1226 = vpack.c.bf16 %v1175, %v1174
    %v1227 = vpack.c.bf16 %v1177, %v1176
    %v1228 = vpack.c.bf16 %v1179, %v1178
    %v1229 = vpack.c.bf16 %v1181, %v1180
    %v1230 = vpack.c.bf16 %v1183, %v1182
    %v1231 = vpack.c.bf16 %v1185, %v1184
    %v1232 = vpack.c.bf16 %v1187, %v1186
    %v1233 = vpack.c.bf16 %v1189, %v1188
    %v1234 = vpack.c.bf16 %v1191, %v1190
    %v1235 = vpack.c.bf16 %v1193, %v1192
    %v1236 = vpack.c.bf16 %v1195, %v1194
    %v1237 = vpack.c.bf16 %v1197, %v1196
    %v1238 = vpack.c.bf16 %v1199, %v1198
    %v1239 = vpack.c.bf16 %v1201, %v1200
    %v1240 = vpack.c.bf16 %v1203, %v1202
    %v1241 = vpack.c.bf16 %v1205, %v1204
    %v1242 = vpack.c.bf16 %v1207, %v1206
    %v1243 = vpack.c.bf16 %v1209, %v1208
    %v1244 = vpack.c.bf16 %v1211, %v1210
    %v1245 = vpack.c.bf16 %v1213, %v1212
    %v1278 = vunpack.c.l.b16 %v1214
    %v1279 = vunpack.c.h.b16 %v1214
    %v1280 = vunpack.c.l.b16 %v1215
    %v1281 = vunpack.c.h.b16 %v1215
    %v1282 = vunpack.c.l.b16 %v1216
    %v1283 = vunpack.c.h.b16 %v1216
    %v1284 = vunpack.c.l.b16 %v1217
    %v1285 = vunpack.c.h.b16 %v1217
    %v1286 = vunpack.c.l.b16 %v1218
    %v1287 = vunpack.c.h.b16 %v1218
    %v1288 = vunpack.c.l.b16 %v1219
    %v1289 = vunpack.c.h.b16 %v1219
    %v1290 = vunpack.c.l.b16 %v1220
    %v1291 = vunpack.c.h.b16 %v1220
    %v1292 = vunpack.c.l.b16 %v1221
    %v1293 = vunpack.c.h.b16 %v1221
    %v1294 = vunpack.c.l.b16 %v1222
    %v1295 = vunpack.c.h.b16 %v1222
    %v1296 = vunpack.c.l.b16 %v1223
    %v1297 = vunpack.c.h.b16 %v1223
    %v1298 = vunpack.c.l.b16 %v1224
    %v1299 = vunpack.c.h.b16 %v1224
    %v1300 = vunpack.c.l.b16 %v1225
    %v1301 = vunpack.c.h.b16 %v1225
    %v1302 = vunpack.c.l.b16 %v1226
    %v1303 = vunpack.c.h.b16 %v1226
    %v1304 = vunpack.c.l.b16 %v1227
    %v1305 = vunpack.c.h.b16 %v1227
    %v1306 = vunpack.c.l.b16 %v1228
    %v1307 = vunpack.c.h.b16 %v1228
    %v1308 = vunpack.c.l.b16 %v1229
    %v1309 = vunpack.c.h.b16 %v1229
    %v1310 = vunpack.c.l.b16 %v1230
    %v1311 = vunpack.c.h.b16 %v1230
    %v1312 = vunpack.c.l.b16 %v1231
    %v1313 = vunpack.c.h.b16 %v1231
    %v1314 = vunpack.c.l.b16 %v1232
    %v1315 = vunpack.c.h.b16 %v1232
    %v1316 = vunpack.c.l.b16 %v1233
    %v1317 = vunpack.c.h.b16 %v1233
    %v1318 = vunpack.c.l.b16 %v1234
    %v1319 = vunpack.c.h.b16 %v1234
    %v1320 = vunpack.c.l.b16 %v1235
    %v1321 = vunpack.c.h.b16 %v1235
    %v1322 = vunpack.c.l.b16 %v1236
    %v1323 = vunpack.c.h.b16 %v1236
    %v1324 = vunpack.c.l.b16 %v1237
    %v1325 = vunpack.c.h.b16 %v1237
    %v1326 = vunpack.c.l.b16 %v1238
    %v1327 = vunpack.c.h.b16 %v1238
    %v1328 = vunpack.c.l.b16 %v1239
    %v1329 = vunpack.c.h.b16 %v1239
    %v1330 = vunpack.c.l.b16 %v1240
    %v1331 = vunpack.c.h.b16 %v1240
    %v1332 = vunpack.c.l.b16 %v1241
    %v1333 = vunpack.c.h.b16 %v1241
    %v1334 = vunpack.c.l.b16 %v1242
    %v1335 = vunpack.c.h.b16 %v1242
    %v1336 = vunpack.c.l.b16 %v1243
    %v1337 = vunpack.c.h.b16 %v1243
    %v1338 = vunpack.c.l.b16 %v1244
    %v1339 = vunpack.c.h.b16 %v1244
    %v1340 = vunpack.c.l.b16 %v1245
    %v1341 = vunpack.c.h.b16 %v1245
    %v1342 = vpack.c.b16 %v1278, %v1278
    %v1343 = vpack.c.b16 %v1279, %v1279
    %v1344 = vpack.c.b16 %v1280, %v1280
    %v1345 = vpack.c.b16 %v1281, %v1281
    %v1346 = vpack.c.b16 %v1282, %v1282
    %v1347 = vpack.c.b16 %v1283, %v1283
    %v1348 = vpack.c.b16 %v1284, %v1284
    %v1349 = vpack.c.b16 %v1285, %v1285
    %v1350 = vpack.c.b16 %v1286, %v1286
    %v1351 = vpack.c.b16 %v1287, %v1287
    %v1352 = vpack.c.b16 %v1288, %v1288
    %v1353 = vpack.c.b16 %v1289, %v1289
    %v1354 = vpack.c.b16 %v1290, %v1290
    %v1355 = vpack.c.b16 %v1291, %v1291
    %v1356 = vpack.c.b16 %v1292, %v1292
    %v1357 = vpack.c.b16 %v1293, %v1293
    %v1358 = vpack.c.b16 %v1294, %v1294
    %v1359 = vpack.c.b16 %v1295, %v1295
    %v1360 = vpack.c.b16 %v1296, %v1296
    %v1361 = vpack.c.b16 %v1297, %v1297
    %v1362 = vpack.c.b16 %v1298, %v1298
    %v1363 = vpack.c.b16 %v1299, %v1299
    %v1364 = vpack.c.b16 %v1300, %v1300
    %v1365 = vpack.c.b16 %v1301, %v1301
    %v1366 = vpack.c.b16 %v1302, %v1302
    %v1367 = vpack.c.b16 %v1303, %v1303
    %v1368 = vpack.c.b16 %v1304, %v1304
    %v1369 = vpack.c.b16 %v1305, %v1305
    %v1370 = vpack.c.b16 %v1306, %v1306
    %v1371 = vpack.c.b16 %v1307, %v1307
    %v1372 = vpack.c.b16 %v1308, %v1308
    %v1373 = vpack.c.b16 %v1309, %v1309
    %v1374 = vpack.c.b16 %v1310, %v1310
    %v1375 = vpack.c.b16 %v1311, %v1311
    %v1376 = vpack.c.b16 %v1312, %v1312
    %v1377 = vpack.c.b16 %v1313, %v1313
    %v1378 = vpack.c.b16 %v1314, %v1314
    %v1379 = vpack.c.b16 %v1315, %v1315
    %v1380 = vpack.c.b16 %v1316, %v1316
    %v1381 = vpack.c.b16 %v1317, %v1317
    %v1382 = vpack.c.b16 %v1318, %v1318
    %v1383 = vpack.c.b16 %v1319, %v1319
    %v1384 = vpack.c.b16 %v1320, %v1320
    %v1385 = vpack.c.b16 %v1321, %v1321
    %v1386 = vpack.c.b16 %v1322, %v1322
    %v1387 = vpack.c.b16 %v1323, %v1323
    %v1388 = vpack.c.b16 %v1324, %v1324
    %v1389 = vpack.c.b16 %v1325, %v1325
    %v1390 = vpack.c.b16 %v1326, %v1326
    %v1391 = vpack.c.b16 %v1327, %v1327
    %v1392 = vpack.c.b16 %v1328, %v1328
    %v1393 = vpack.c.b16 %v1329, %v1329
    %v1394 = vpack.c.b16 %v1330, %v1330
    %v1395 = vpack.c.b16 %v1331, %v1331
    %v1396 = vpack.c.b16 %v1332, %v1332
    %v1397 = vpack.c.b16 %v1333, %v1333
    %v1398 = vpack.c.b16 %v1334, %v1334
    %v1399 = vpack.c.b16 %v1335, %v1335
    %v1400 = vpack.c.b16 %v1336, %v1336
    %v1401 = vpack.c.b16 %v1337, %v1337
    %v1402 = vpack.c.b16 %v1338, %v1338
    %v1403 = vpack.c.b16 %v1339, %v1339
    %v1404 = vpack.c.b16 %v1340, %v1340
    %v1405 = vpack.c.b16 %v1341, %v1341
    %1470 = vst [vmem:[%s3] sm:$0xf] %v1342
    %1471 = vst [vmem:[%s3 + $0x4] sm:$0xf] %v1343
    %1472 = vst [vmem:[%s3 + $0x8] sm:$0xf] %v1344
    %1473 = vst [vmem:[%s3 + $0xc] sm:$0xf] %v1345
    %1474 = vst [vmem:[%s3 + $0x10] sm:$0xf] %v1346
    %1475 = vst [vmem:[%s3 + $0x14] sm:$0xf] %v1347
    %1476 = vst [vmem:[%s3 + $0x18] sm:$0xf] %v1348
    %1477 = vst [vmem:[%s3 + $0x1c] sm:$0xf] %v1349
    %1478 = vst [vmem:[%s3 + $0x20] sm:$0xf] %v1350
    %1479 = vst [vmem:[%s3 + $0x24] sm:$0xf] %v1351
    %1480 = vst [vmem:[%s3 + $0x28] sm:$0xf] %v1352
    %1481 = vst [vmem:[%s3 + $0x2c] sm:$0xf] %v1353
    %1482 = vst [vmem:[%s3 + $0x30] sm:$0xf] %v1354
    %1483 = vst [vmem:[%s3 + $0x34] sm:$0xf] %v1355
    %1484 = vst [vmem:[%s3 + $0x38] sm:$0xf] %v1356
    %1485 = vst [vmem:[%s3 + $0x3c] sm:$0xf] %v1357
    %1486 = vst [vmem:[%s3 + $0x40] sm:$0xf] %v1358
    %1487 = vst [vmem:[%s3 + $0x44] sm:$0xf] %v1359
    %1488 = vst [vmem:[%s3 + $0x48] sm:$0xf] %v1360
    %1489 = vst [vmem:[%s3 + $0x4c] sm:$0xf] %v1361
    %1490 = vst [vmem:[%s3 + $0x50] sm:$0xf] %v1362
    %1491 = vst [vmem:[%s3 + $0x54] sm:$0xf] %v1363
    %1492 = vst [vmem:[%s3 + $0x58] sm:$0xf] %v1364
    %1493 = vst [vmem:[%s3 + $0x5c] sm:$0xf] %v1365
    %1494 = vst [vmem:[%s3 + $0x60] sm:$0xf] %v1366
    %1495 = vst [vmem:[%s3 + $0x64] sm:$0xf] %v1367
    %1496 = vst [vmem:[%s3 + $0x68] sm:$0xf] %v1368
    %1497 = vst [vmem:[%s3 + $0x6c] sm:$0xf] %v1369
    %1498 = vst [vmem:[%s3 + $0x70] sm:$0xf] %v1370
    %1499 = vst [vmem:[%s3 + $0x74] sm:$0xf] %v1371
    %1500 = vst [vmem:[%s3 + $0x78] sm:$0xf] %v1372
    %1501 = vst [vmem:[%s3 + $0x7c] sm:$0xf] %v1373
    %1502 = vst [vmem:[%s3 + $0x80] sm:$0xf] %v1374
    %1503 = vst [vmem:[%s3 + $0x84] sm:$0xf] %v1375
    %1504 = vst [vmem:[%s3 + $0x88] sm:$0xf] %v1376
    %1505 = vst [vmem:[%s3 + $0x8c] sm:$0xf] %v1377
    %1506 = vst [vmem:[%s3 + $0x90] sm:$0xf] %v1378
    %1507 = vst [vmem:[%s3 + $0x94] sm:$0xf] %v1379
    %1508 = vst [vmem:[%s3 + $0x98] sm:$0xf] %v1380
    %1509 = vst [vmem:[%s3 + $0x9c] sm:$0xf] %v1381
    %1510 = vst [vmem:[%s3 + $0xa0] sm:$0xf] %v1382
    %1511 = vst [vmem:[%s3 + $0xa4] sm:$0xf] %v1383
    %1512 = vst [vmem:[%s3 + $0xa8] sm:$0xf] %v1384
    %1513 = vst [vmem:[%s3 + $0xac] sm:$0xf] %v1385
    %1514 = vst [vmem:[%s3 + $0xb0] sm:$0xf] %v1386
    %1515 = vst [vmem:[%s3 + $0xb4] sm:$0xf] %v1387
    %1516 = vst [vmem:[%s3 + $0xb8] sm:$0xf] %v1388
    %1517 = vst [vmem:[%s3 + $0xbc] sm:$0xf] %v1389
    %1518 = vst [vmem:[%s3 + $0xc0] sm:$0xf] %v1390
    %1519 = vst [vmem:[%s3 + $0xc4] sm:$0xf] %v1391
    %1520 = vst [vmem:[%s3 + $0xc8] sm:$0xf] %v1392
    %1521 = vst [vmem:[%s3 + $0xcc] sm:$0xf] %v1393
    %1522 = vst [vmem:[%s3 + $0xd0] sm:$0xf] %v1394
    %1523 = vst [vmem:[%s3 + $0xd4] sm:$0xf] %v1395
    %1524 = vst [vmem:[%s3 + $0xd8] sm:$0xf] %v1396
    %1525 = vst [vmem:[%s3 + $0xdc] sm:$0xf] %v1397
    %1526 = vst [vmem:[%s3 + $0xe0] sm:$0xf] %v1398
    %1527 = vst [vmem:[%s3 + $0xe4] sm:$0xf] %v1399
    %1528 = vst [vmem:[%s3 + $0xe8] sm:$0xf] %v1400
    %1529 = vst [vmem:[%s3 + $0xec] sm:$0xf] %v1401
    %1530 = vst [vmem:[%s3 + $0xf0] sm:$0xf] %v1402
    %1531 = vst [vmem:[%s3 + $0xf4] sm:$0xf] %v1403
    %1532 = vst [vmem:[%s3 + $0xf8] sm:$0xf] %v1404
    %1533 = vst [vmem:[%s3 + $0xfc] sm:$0xf] %v1405
  $region21: #{nlayer_discriminator_att_forward.13} parent=0 // pred_fallthru
    _
  // Predicated region
  $region22: #{nlayer_discriminator_att_forward.13} parent=0 // pred_check
    _
  $region23: #{nlayer_discriminator_att_forward.13} parent=0 // pred_check_branch
    %1535 = sbr.rel (0) target = $region25
  $region24: #{nlayer_discriminator_att_forward.13} parent=0 // pred_region
    _
  $region25: #{nlayer_discriminator_att_forward.13} parent=0 // pred_fallthru
    _
  // Predicated region
  $region26: #{nlayer_discriminator_att_forward.13} parent=0 // pred_check
    _
  $region27: #{nlayer_discriminator_att_forward.13} parent=0 // pred_check_branch
    %1537 = sbr.rel (0) target = $region29
  $region28: #{nlayer_discriminator_att_forward.13} parent=0 // pred_region
    _
  $region29: #{nlayer_discriminator_att_forward.13} parent=0 // pred_fallthru
    _

// kernel: nlayer_discriminator_att_forward.14
$region0: #{nlayer_discriminator_att_forward.14}
  #allocation0 [shape = 'u32[]', space=smem, size = 0x4, offset = 0x4, fixed_abs, tag = 'smem constant byte address 0x4 - core index']
  #allocation1 [shape = 'u32[144,128]{1,0:T(1,128)}', space=vmem, size = 0x12000, scoped, tag = 'internal scratch']
  #allocation2 [shape = 'f32[128,128]{1,0:T(8,128)}', space=vmem, size = 0x10000, scoped, tag = 'scratch operand']
  %s0 = inlined_call_operand.vmem [shape: bf16[128,256], index: 0, kind: input, shape index: {}]
  %s1 = inlined_call_operand.vmem [shape: bf16[256,128], index: 1, kind: input, shape index: {}]
  %s2 = inlined_call_operand.vmem [shape: f32[1,128], index: 2, kind: input, shape index: {}]
  %s3 = inlined_call_operand.vmem [shape: bf16[128,128], index: 3, kind: output, shape index: {}]
  %s4 = sld [smem:[#allocation0]]
  $region30: #{nlayer_discriminator_att_forward.14} parent=0
    _
  %s6 = ssub.s32 1, %s4
  %s7 = scalar_select 0, %s6, %s4
  // Predicated region
  $region2: #{nlayer_discriminator_att_forward.14} parent=0 // pred_check
    _
  $region3: #{nlayer_discriminator_att_forward.14} parent=0 // pred_check_branch
    %9 = sbr.rel (0) target = $region5
  $region4: #{nlayer_discriminator_att_forward.14} parent=0 // pred_region
    _
  $region5: #{nlayer_discriminator_att_forward.14} parent=0 // pred_fallthru
    _
  // Predicated region
  $region6: #{nlayer_discriminator_att_forward.14} parent=0 // pred_check
    _
  $region7: #{nlayer_discriminator_att_forward.14} parent=0 // pred_check_branch
    %11 = sbr.rel (0) target = $region9
  $region8: #{nlayer_discriminator_att_forward.14} parent=0 // pred_region
    _
  $region9: #{nlayer_discriminator_att_forward.14} parent=0 // pred_fallthru
    _
  // Predicated region
  $region10: #{nlayer_discriminator_att_forward.14} parent=0 // pred_check
    _
  $region11: #{nlayer_discriminator_att_forward.14} parent=0 // pred_check_branch
    %13 = sbr.rel (0) target = $region13
  $region12: #{nlayer_discriminator_att_forward.14} parent=0 // pred_region
    _
  $region13: #{nlayer_discriminator_att_forward.14} parent=0 // pred_fallthru
    _
  %p15 = scmp.eq.s32.totalorder 0, 0
  // Predicated region
  $region14: #{nlayer_discriminator_att_forward.14} parent=0 // pred_check
    %p16 = pneg %p15
  $region15: #{nlayer_discriminator_att_forward.14} parent=0 // pred_check_branch
    %18 = sbr.rel (%p16) target = $region17
  $region16: #{nlayer_discriminator_att_forward.14} parent=0 // pred_region
    %19 = vst [vmem:[#allocation2] sm:$0xff] 0.0
    %20 = vst [vmem:[#allocation2 + $0x8] sm:$0xff] 0.0
    %21 = vst [vmem:[#allocation2 + $0x10] sm:$0xff] 0.0
    %22 = vst [vmem:[#allocation2 + $0x18] sm:$0xff] 0.0
    %23 = vst [vmem:[#allocation2 + $0x20] sm:$0xff] 0.0
    %24 = vst [vmem:[#allocation2 + $0x28] sm:$0xff] 0.0
    %25 = vst [vmem:[#allocation2 + $0x30] sm:$0xff] 0.0
    %26 = vst [vmem:[#allocation2 + $0x38] sm:$0xff] 0.0
    %27 = vst [vmem:[#allocation2 + $0x40] sm:$0xff] 0.0
    %28 = vst [vmem:[#allocation2 + $0x48] sm:$0xff] 0.0
    %29 = vst [vmem:[#allocation2 + $0x50] sm:$0xff] 0.0
    %30 = vst [vmem:[#allocation2 + $0x58] sm:$0xff] 0.0
    %31 = vst [vmem:[#allocation2 + $0x60] sm:$0xff] 0.0
    %32 = vst [vmem:[#allocation2 + $0x68] sm:$0xff] 0.0
    %33 = vst [vmem:[#allocation2 + $0x70] sm:$0xff] 0.0
    %34 = vst [vmem:[#allocation2 + $0x78] sm:$0xff] 0.0
  $region17: #{nlayer_discriminator_att_forward.14} parent=0 // pred_fallthru
    _
  %v35 = vld [vmem:[#allocation2] sm:$0xff]
  %v36 = vld [vmem:[#allocation2 + $0x8] sm:$0xff]
  %v37 = vld [vmem:[#allocation2 + $0x10] sm:$0xff]
  %v38 = vld [vmem:[#allocation2 + $0x18] sm:$0xff]
  %v39 = vld [vmem:[#allocation2 + $0x20] sm:$0xff]
  %v40 = vld [vmem:[#allocation2 + $0x28] sm:$0xff]
  %v41 = vld [vmem:[#allocation2 + $0x30] sm:$0xff]
  %v42 = vld [vmem:[#allocation2 + $0x38] sm:$0xff]
  %v43 = vld [vmem:[#allocation2 + $0x40] sm:$0xff]
  %v44 = vld [vmem:[#allocation2 + $0x48] sm:$0xff]
  %v45 = vld [vmem:[#allocation2 + $0x50] sm:$0xff]
  %v46 = vld [vmem:[#allocation2 + $0x58] sm:$0xff]
  %v47 = vld [vmem:[#allocation2 + $0x60] sm:$0xff]
  %v48 = vld [vmem:[#allocation2 + $0x68] sm:$0xff]
  %v49 = vld [vmem:[#allocation2 + $0x70] sm:$0xff]
  %v50 = vld [vmem:[#allocation2 + $0x78] sm:$0xff]
  %v51 = vld [vmem:[%s0] sm:$0xff]
  %v52 = vld [vmem:[%s0 + $0x8] sm:$0xff]
  %v53 = vld [vmem:[%s0 + $0x10] sm:$0xff]
  %v54 = vld [vmem:[%s0 + $0x18] sm:$0xff]
  %v55 = vld [vmem:[%s0 + $0x20] sm:$0xff]
  %v56 = vld [vmem:[%s0 + $0x28] sm:$0xff]
  %v57 = vld [vmem:[%s0 + $0x30] sm:$0xff]
  %v58 = vld [vmem:[%s0 + $0x38] sm:$0xff]
  %v59 = vld [vmem:[%s0 + $0x40] sm:$0xff]
  %v60 = vld [vmem:[%s0 + $0x48] sm:$0xff]
  %v61 = vld [vmem:[%s0 + $0x50] sm:$0xff]
  %v62 = vld [vmem:[%s0 + $0x58] sm:$0xff]
  %v63 = vld [vmem:[%s0 + $0x60] sm:$0xff]
  %v64 = vld [vmem:[%s0 + $0x68] sm:$0xff]
  %v65 = vld [vmem:[%s0 + $0x70] sm:$0xff]
  %v66 = vld [vmem:[%s0 + $0x78] sm:$0xff]
  %v67 = vld [vmem:[%s1] sm:$0xf]
  %v68 = vld [vmem:[%s1 + $0x4] sm:$0xf]
  %v69 = vld [vmem:[%s1 + $0x8] sm:$0xf]
  %v70 = vld [vmem:[%s1 + $0xc] sm:$0xf]
  %v71 = vld [vmem:[%s1 + $0x10] sm:$0xf]
  %v72 = vld [vmem:[%s1 + $0x14] sm:$0xf]
  %v73 = vld [vmem:[%s1 + $0x18] sm:$0xf]
  %v74 = vld [vmem:[%s1 + $0x1c] sm:$0xf]
  %v75 = vld [vmem:[%s1 + $0x20] sm:$0xf]
  %v76 = vld [vmem:[%s1 + $0x24] sm:$0xf]
  %v77 = vld [vmem:[%s1 + $0x28] sm:$0xf]
  %v78 = vld [vmem:[%s1 + $0x2c] sm:$0xf]
  %v79 = vld [vmem:[%s1 + $0x30] sm:$0xf]
  %v80 = vld [vmem:[%s1 + $0x34] sm:$0xf]
  %v81 = vld [vmem:[%s1 + $0x38] sm:$0xf]
  %v82 = vld [vmem:[%s1 + $0x3c] sm:$0xf]
  %v83 = vld [vmem:[%s1 + $0x40] sm:$0xf]
  %v84 = vld [vmem:[%s1 + $0x44] sm:$0xf]
  %v85 = vld [vmem:[%s1 + $0x48] sm:$0xf]
  %v86 = vld [vmem:[%s1 + $0x4c] sm:$0xf]
  %v87 = vld [vmem:[%s1 + $0x50] sm:$0xf]
  %v88 = vld [vmem:[%s1 + $0x54] sm:$0xf]
  %v89 = vld [vmem:[%s1 + $0x58] sm:$0xf]
  %v90 = vld [vmem:[%s1 + $0x5c] sm:$0xf]
  %v91 = vld [vmem:[%s1 + $0x60] sm:$0xf]
  %v92 = vld [vmem:[%s1 + $0x64] sm:$0xf]
  %v93 = vld [vmem:[%s1 + $0x68] sm:$0xf]
  %v94 = vld [vmem:[%s1 + $0x6c] sm:$0xf]
  %v95 = vld [vmem:[%s1 + $0x70] sm:$0xf]
  %v96 = vld [vmem:[%s1 + $0x74] sm:$0xf]
  %v97 = vld [vmem:[%s1 + $0x78] sm:$0xf]
  %v98 = vld [vmem:[%s1 + $0x7c] sm:$0xf]
  %v115 = vunpack.c.l.b16 %v51
  %v116 = vunpack.c.h.b16 %v51
  %v117 = vunpack.c.l.b16 %v52
  %v118 = vunpack.c.h.b16 %v52
  %v119 = vunpack.c.l.b16 %v53
  %v120 = vunpack.c.h.b16 %v53
  %v121 = vunpack.c.l.b16 %v54
  %v122 = vunpack.c.h.b16 %v54
  %v123 = vunpack.c.l.b16 %v55
  %v124 = vunpack.c.h.b16 %v55
  %v125 = vunpack.c.l.b16 %v56
  %v126 = vunpack.c.h.b16 %v56
  %v127 = vunpack.c.l.b16 %v57
  %v128 = vunpack.c.h.b16 %v57
  %v129 = vunpack.c.l.b16 %v58
  %v130 = vunpack.c.h.b16 %v58
  %v131 = vunpack.c.l.b16 %v59
  %v132 = vunpack.c.h.b16 %v59
  %v133 = vunpack.c.l.b16 %v60
  %v134 = vunpack.c.h.b16 %v60
  %v135 = vunpack.c.l.b16 %v61
  %v136 = vunpack.c.h.b16 %v61
  %v137 = vunpack.c.l.b16 %v62
  %v138 = vunpack.c.h.b16 %v62
  %v139 = vunpack.c.l.b16 %v63
  %v140 = vunpack.c.h.b16 %v63
  %v141 = vunpack.c.l.b16 %v64
  %v142 = vunpack.c.h.b16 %v64
  %v143 = vunpack.c.l.b16 %v65
  %v144 = vunpack.c.h.b16 %v65
  %v145 = vunpack.c.l.b16 %v66
  %v146 = vunpack.c.h.b16 %v66
  %v147 = vpack.c.b16 %v117, %v115
  %v148 = vpack.c.b16 %v118, %v116
  %v149 = vpack.c.b16 %v121, %v119
  %v150 = vpack.c.b16 %v122, %v120
  %v151 = vpack.c.b16 %v125, %v123
  %v152 = vpack.c.b16 %v126, %v124
  %v153 = vpack.c.b16 %v129, %v127
  %v154 = vpack.c.b16 %v130, %v128
  %v155 = vpack.c.b16 %v133, %v131
  %v156 = vpack.c.b16 %v134, %v132
  %v157 = vpack.c.b16 %v137, %v135
  %v158 = vpack.c.b16 %v138, %v136
  %v159 = vpack.c.b16 %v141, %v139
  %v160 = vpack.c.b16 %v142, %v140
  %v161 = vpack.c.b16 %v145, %v143
  %v162 = vpack.c.b16 %v146, %v144
  %v211 = vunpack.c.l.b16 %v67
  %v212 = vunpack.c.l.b16 %v68
  %v213 = vunpack.c.l.b16 %v69
  %v214 = vunpack.c.l.b16 %v70
  %v215 = vunpack.c.l.b16 %v71
  %v216 = vunpack.c.l.b16 %v72
  %v217 = vunpack.c.l.b16 %v73
  %v218 = vunpack.c.l.b16 %v74
  %v219 = vunpack.c.l.b16 %v75
  %v220 = vunpack.c.l.b16 %v76
  %v221 = vunpack.c.l.b16 %v77
  %v222 = vunpack.c.l.b16 %v78
  %v223 = vunpack.c.l.b16 %v79
  %v224 = vunpack.c.l.b16 %v80
  %v225 = vunpack.c.l.b16 %v81
  %v226 = vunpack.c.l.b16 %v82
  %v227 = vunpack.c.l.b16 %v83
  %v228 = vunpack.c.l.b16 %v84
  %v229 = vunpack.c.l.b16 %v85
  %v230 = vunpack.c.l.b16 %v86
  %v231 = vunpack.c.l.b16 %v87
  %v232 = vunpack.c.l.b16 %v88
  %v233 = vunpack.c.l.b16 %v89
  %v234 = vunpack.c.l.b16 %v90
  %v235 = vunpack.c.l.b16 %v91
  %v236 = vunpack.c.l.b16 %v92
  %v237 = vunpack.c.l.b16 %v93
  %v238 = vunpack.c.l.b16 %v94
  %v239 = vunpack.c.l.b16 %v95
  %v240 = vunpack.c.l.b16 %v96
  %v241 = vunpack.c.l.b16 %v97
  %v242 = vunpack.c.l.b16 %v98
  %v243 = vpack.c.b16 %v212, %v211
  %v244 = vpack.c.b16 %v214, %v213
  %v245 = vpack.c.b16 %v216, %v215
  %v246 = vpack.c.b16 %v218, %v217
  %v247 = vpack.c.b16 %v220, %v219
  %v248 = vpack.c.b16 %v222, %v221
  %v249 = vpack.c.b16 %v224, %v223
  %v250 = vpack.c.b16 %v226, %v225
  %v251 = vpack.c.b16 %v228, %v227
  %v252 = vpack.c.b16 %v230, %v229
  %v253 = vpack.c.b16 %v232, %v231
  %v254 = vpack.c.b16 %v234, %v233
  %v255 = vpack.c.b16 %v236, %v235
  %v256 = vpack.c.b16 %v238, %v237
  %v257 = vpack.c.b16 %v240, %v239
  %v258 = vpack.c.b16 %v242, %v241
  %275 = vmatprep.subr.bf16.mxu0 0
  %276 = vmatpush1.bf16.msra.mxu0 %v243
  %277 = vmatprep.subr.bf16.mxu0 0
  %278 = vmatpush1.bf16.msra.mxu0 %v244
  %279 = vmatprep.subr.bf16.mxu0 0
  %280 = vmatpush1.bf16.msra.mxu0 %v245
  %281 = vmatprep.subr.bf16.mxu0 0
  %282 = vmatpush1.bf16.msra.mxu0 %v246
  %283 = vmatprep.subr.bf16.mxu0 0
  %284 = vmatpush1.bf16.msra.mxu0 %v247
  %285 = vmatprep.subr.bf16.mxu0 0
  %286 = vmatpush1.bf16.msra.mxu0 %v248
  %287 = vmatprep.subr.bf16.mxu0 0
  %288 = vmatpush1.bf16.msra.mxu0 %v249
  %289 = vmatprep.subr.bf16.mxu0 0
  %290 = vmatpush1.bf16.msra.mxu0 %v250
  %291 = vmatprep.subr.bf16.mxu0 0
  %292 = vmatpush1.bf16.msra.mxu0 %v251
  %293 = vmatprep.subr.bf16.mxu0 0
  %294 = vmatpush1.bf16.msra.mxu0 %v252
  %295 = vmatprep.subr.bf16.mxu0 0
  %296 = vmatpush1.bf16.msra.mxu0 %v253
  %297 = vmatprep.subr.bf16.mxu0 0
  %298 = vmatpush1.bf16.msra.mxu0 %v254
  %299 = vmatprep.subr.bf16.mxu0 0
  %300 = vmatpush1.bf16.msra.mxu0 %v255
  %301 = vmatprep.subr.bf16.mxu0 0
  %302 = vmatpush1.bf16.msra.mxu0 %v256
  %303 = vmatprep.subr.bf16.mxu0 0
  %304 = vmatpush1.bf16.msra.mxu0 %v257
  %305 = vmatprep.subr.bf16.mxu0 0
  %306 = vmatpush1.bf16.msra.mxu0 %v258
  %307 = vmatprep.mubr.bf16.mxu0 %v148
  %308 = vmatmul.mubr.bf16.gmra.mrb[0].mxu0 %v147
  %v309 = vpop.f32.mrb[0].mxu0
  %v310 = vadd.f32 0.0, %v309
  %v311 = vpop.f32.mrb[0].mxu0
  %v312 = vpop.f32.mrb[0].mxu0
  %v313 = vadd.f32 0.0, %v312
  %v314 = vpop.f32.mrb[0].mxu0
  %315 = vmatprep.mubr.bf16.mxu0 %v150
  %316 = vmatmul.mubr.bf16.gmra.mrb[0].mxu0 %v149
  %v317 = vpop.f32.mrb[0].mxu0
  %v318 = vadd.f32 0.0, %v317
  %v319 = vpop.f32.mrb[0].mxu0
  %v320 = vpop.f32.mrb[0].mxu0
  %v321 = vadd.f32 0.0, %v320
  %v322 = vpop.f32.mrb[0].mxu0
  %323 = vmatprep.mubr.bf16.mxu0 %v152
  %324 = vmatmul.mubr.bf16.gmra.mrb[0].mxu0 %v151
  %v325 = vpop.f32.mrb[0].mxu0
  %v326 = vadd.f32 0.0, %v325
  %v327 = vpop.f32.mrb[0].mxu0
  %v328 = vpop.f32.mrb[0].mxu0
  %v329 = vadd.f32 0.0, %v328
  %v330 = vpop.f32.mrb[0].mxu0
  %331 = vmatprep.mubr.bf16.mxu0 %v154
  %332 = vmatmul.mubr.bf16.gmra.mrb[0].mxu0 %v153
  %v333 = vpop.f32.mrb[0].mxu0
  %v334 = vadd.f32 0.0, %v333
  %v335 = vpop.f32.mrb[0].mxu0
  %v336 = vpop.f32.mrb[0].mxu0
  %v337 = vadd.f32 0.0, %v336
  %v338 = vpop.f32.mrb[0].mxu0
  %339 = vmatprep.mubr.bf16.mxu0 %v156
  %340 = vmatmul.mubr.bf16.gmra.mrb[0].mxu0 %v155
  %v341 = vpop.f32.mrb[0].mxu0
  %v342 = vadd.f32 0.0, %v341
  %v343 = vpop.f32.mrb[0].mxu0
  %v344 = vpop.f32.mrb[0].mxu0
  %v345 = vadd.f32 0.0, %v344
  %v346 = vpop.f32.mrb[0].mxu0
  %347 = vmatprep.mubr.bf16.mxu0 %v158
  %348 = vmatmul.mubr.bf16.gmra.mrb[0].mxu0 %v157
  %v349 = vpop.f32.mrb[0].mxu0
  %v350 = vadd.f32 0.0, %v349
  %v351 = vpop.f32.mrb[0].mxu0
  %v352 = vpop.f32.mrb[0].mxu0
  %v353 = vadd.f32 0.0, %v352
  %v354 = vpop.f32.mrb[0].mxu0
  %355 = vmatprep.mubr.bf16.mxu0 %v160
  %356 = vmatmul.mubr.bf16.gmra.mrb[0].mxu0 %v159
  %v357 = vpop.f32.mrb[0].mxu0
  %v358 = vadd.f32 0.0, %v357
  %v359 = vpop.f32.mrb[0].mxu0
  %v360 = vpop.f32.mrb[0].mxu0
  %v361 = vadd.f32 0.0, %v360
  %v362 = vpop.f32.mrb[0].mxu0
  %363 = vmatprep.mubr.bf16.mxu0 %v162
  %364 = vmatmul.mubr.bf16.gmra.mrb[0].mxu0 %v161
  %v365 = vpop.f32.mrb[0].mxu0
  %v366 = vadd.f32 0.0, %v365
  %v367 = vpop.f32.mrb[0].mxu0
  %v368 = vpop.f32.mrb[0].mxu0
  %v369 = vadd.f32 0.0, %v368
  %v370 = vpop.f32.mrb[0].mxu0
  %371 = vdwg.mxu0
  %v372 = vadd.f32 %v35, %v310
  %v373 = vadd.f32 %v36, %v313
  %v374 = vadd.f32 %v37, %v318
  %v375 = vadd.f32 %v38, %v321
  %v376 = vadd.f32 %v39, %v326
  %v377 = vadd.f32 %v40, %v329
  %v378 = vadd.f32 %v41, %v334
  %v379 = vadd.f32 %v42, %v337
  %v380 = vadd.f32 %v43, %v342
  %v381 = vadd.f32 %v44, %v345
  %v382 = vadd.f32 %v45, %v350
  %v383 = vadd.f32 %v46, %v353
  %v384 = vadd.f32 %v47, %v358
  %v385 = vadd.f32 %v48, %v361
  %v386 = vadd.f32 %v49, %v366
  %v387 = vadd.f32 %v50, %v369
  %388 = vst [vmem:[#allocation2] sm:$0xff] %v372
  %389 = vst [vmem:[#allocation2 + $0x8] sm:$0xff] %v373
  %390 = vst [vmem:[#allocation2 + $0x10] sm:$0xff] %v374
  %391 = vst [vmem:[#allocation2 + $0x18] sm:$0xff] %v375
  %392 = vst [vmem:[#allocation2 + $0x20] sm:$0xff] %v376
  %393 = vst [vmem:[#allocation2 + $0x28] sm:$0xff] %v377
  %394 = vst [vmem:[#allocation2 + $0x30] sm:$0xff] %v378
  %395 = vst [vmem:[#allocation2 + $0x38] sm:$0xff] %v379
  %396 = vst [vmem:[#allocation2 + $0x40] sm:$0xff] %v380
  %397 = vst [vmem:[#allocation2 + $0x48] sm:$0xff] %v381
  %398 = vst [vmem:[#allocation2 + $0x50] sm:$0xff] %v382
  %399 = vst [vmem:[#allocation2 + $0x58] sm:$0xff] %v383
  %400 = vst [vmem:[#allocation2 + $0x60] sm:$0xff] %v384
  %401 = vst [vmem:[#allocation2 + $0x68] sm:$0xff] %v385
  %402 = vst [vmem:[#allocation2 + $0x70] sm:$0xff] %v386
  %403 = vst [vmem:[#allocation2 + $0x78] sm:$0xff] %v387
  // Predicated region
  $region18: #{nlayer_discriminator_att_forward.14} parent=0 // pred_check
    %p404 = pneg %p15
  $region19: #{nlayer_discriminator_att_forward.14} parent=0 // pred_check_branch
    %406 = sbr.rel (%p404) target = $region21
  $region20: #{nlayer_discriminator_att_forward.14} parent=0 // pred_region
    %v407 = vld [vmem:[#allocation2] sm:$0xff]
    %v408 = vld [vmem:[#allocation2 + $0x8] sm:$0xff]
    %v409 = vld [vmem:[#allocation2 + $0x10] sm:$0xff]
    %v410 = vld [vmem:[#allocation2 + $0x18] sm:$0xff]
    %v411 = vld [vmem:[#allocation2 + $0x20] sm:$0xff]
    %v412 = vld [vmem:[#allocation2 + $0x28] sm:$0xff]
    %v413 = vld [vmem:[#allocation2 + $0x30] sm:$0xff]
    %v414 = vld [vmem:[#allocation2 + $0x38] sm:$0xff]
    %v415 = vld [vmem:[#allocation2 + $0x40] sm:$0xff]
    %v416 = vld [vmem:[#allocation2 + $0x48] sm:$0xff]
    %v417 = vld [vmem:[#allocation2 + $0x50] sm:$0xff]
    %v418 = vld [vmem:[#allocation2 + $0x58] sm:$0xff]
    %v419 = vld [vmem:[#allocation2 + $0x60] sm:$0xff]
    %v420 = vld [vmem:[#allocation2 + $0x68] sm:$0xff]
    %v421 = vld [vmem:[#allocation2 + $0x70] sm:$0xff]
    %v422 = vld [vmem:[#allocation2 + $0x78] sm:$0xff]
    %v423 = vld [vmem:[%s2] sm:$0x1]
    %v425 = vlaneseq
    %v426 = vshrl.u32 %v425, 7
    %v427 = vsub.s32 0, %v426
    %v428 = vrot.slane %v423, %v427
    %v430 = vadd.f32 %v407, %v428
    %v431 = vadd.f32 %v408, %v428
    %v432 = vadd.f32 %v409, %v428
    %v433 = vadd.f32 %v410, %v428
    %v434 = vadd.f32 %v411, %v428
    %v435 = vadd.f32 %v412, %v428
    %v436 = vadd.f32 %v413, %v428
    %v437 = vadd.f32 %v414, %v428
    %v438 = vadd.f32 %v415, %v428
    %v439 = vadd.f32 %v416, %v428
    %v440 = vadd.f32 %v417, %v428
    %v441 = vadd.f32 %v418, %v428
    %v442 = vadd.f32 %v419, %v428
    %v443 = vadd.f32 %v420, %v428
    %v444 = vadd.f32 %v421, %v428
    %v445 = vadd.f32 %v422, %v428
    %v446 = vpack.c.bf16 %v431, %v430
    %v447 = vpack.c.bf16 %v433, %v432
    %v448 = vpack.c.bf16 %v435, %v434
    %v449 = vpack.c.bf16 %v437, %v436
    %v450 = vpack.c.bf16 %v439, %v438
    %v451 = vpack.c.bf16 %v441, %v440
    %v452 = vpack.c.bf16 %v443, %v442
    %v453 = vpack.c.bf16 %v445, %v444
    %v462 = vunpack.c.l.b16 %v446
    %v463 = vunpack.c.h.b16 %v446
    %v464 = vunpack.c.l.b16 %v447
    %v465 = vunpack.c.h.b16 %v447
    %v466 = vunpack.c.l.b16 %v448
    %v467 = vunpack.c.h.b16 %v448
    %v468 = vunpack.c.l.b16 %v449
    %v469 = vunpack.c.h.b16 %v449
    %v470 = vunpack.c.l.b16 %v450
    %v471 = vunpack.c.h.b16 %v450
    %v472 = vunpack.c.l.b16 %v451
    %v473 = vunpack.c.h.b16 %v451
    %v474 = vunpack.c.l.b16 %v452
    %v475 = vunpack.c.h.b16 %v452
    %v476 = vunpack.c.l.b16 %v453
    %v477 = vunpack.c.h.b16 %v453
    %v478 = vpack.c.b16 %v462, %v462
    %v479 = vpack.c.b16 %v463, %v463
    %v480 = vpack.c.b16 %v464, %v464
    %v481 = vpack.c.b16 %v465, %v465
    %v482 = vpack.c.b16 %v466, %v466
    %v483 = vpack.c.b16 %v467, %v467
    %v484 = vpack.c.b16 %v468, %v468
    %v485 = vpack.c.b16 %v469, %v469
    %v486 = vpack.c.b16 %v470, %v470
    %v487 = vpack.c.b16 %v471, %v471
    %v488 = vpack.c.b16 %v472, %v472
    %v489 = vpack.c.b16 %v473, %v473
    %v490 = vpack.c.b16 %v474, %v474
    %v491 = vpack.c.b16 %v475, %v475
    %v492 = vpack.c.b16 %v476, %v476
    %v493 = vpack.c.b16 %v477, %v477
    %510 = vst [vmem:[%s3] sm:$0xf] %v478
    %511 = vst [vmem:[%s3 + $0x4] sm:$0xf] %v479
    %512 = vst [vmem:[%s3 + $0x8] sm:$0xf] %v480
    %513 = vst [vmem:[%s3 + $0xc] sm:$0xf] %v481
    %514 = vst [vmem:[%s3 + $0x10] sm:$0xf] %v482
    %515 = vst [vmem:[%s3 + $0x14] sm:$0xf] %v483
    %516 = vst [vmem:[%s3 + $0x18] sm:$0xf] %v484
    %517 = vst [vmem:[%s3 + $0x1c] sm:$0xf] %v485
    %518 = vst [vmem:[%s3 + $0x20] sm:$0xf] %v486
    %519 = vst [vmem:[%s3 + $0x24] sm:$0xf] %v487
    %520 = vst [vmem:[%s3 + $0x28] sm:$0xf] %v488
    %521 = vst [vmem:[%s3 + $0x2c] sm:$0xf] %v489
    %522 = vst [vmem:[%s3 + $0x30] sm:$0xf] %v490
    %523 = vst [vmem:[%s3 + $0x34] sm:$0xf] %v491
    %524 = vst [vmem:[%s3 + $0x38] sm:$0xf] %v492
    %525 = vst [vmem:[%s3 + $0x3c] sm:$0xf] %v493
  $region21: #{nlayer_discriminator_att_forward.14} parent=0 // pred_fallthru
    _
  // Predicated region
  $region22: #{nlayer_discriminator_att_forward.14} parent=0 // pred_check
    _
  $region23: #{nlayer_discriminator_att_forward.14} parent=0 // pred_check_branch
    %527 = sbr.rel (0) target = $region25
  $region24: #{nlayer_discriminator_att_forward.14} parent=0 // pred_region
    _
  $region25: #{nlayer_discriminator_att_forward.14} parent=0 // pred_fallthru
    _
  // Predicated region
  $region26: #{nlayer_discriminator_att_forward.14} parent=0 // pred_check
    _
  $region27: #{nlayer_discriminator_att_forward.14} parent=0 // pred_check_branch
    %529 = sbr.rel (0) target = $region29
  $region28: #{nlayer_discriminator_att_forward.14} parent=0 // pred_region
    _
  $region29: #{nlayer_discriminator_att_forward.14} parent=0 // pred_fallthru
    _

// kernel: nlayer_discriminator_att_forward.15
$region0: #{nlayer_discriminator_att_forward.15}
  #allocation0 [shape = 'u32[]', space=smem, size = 0x4, offset = 0x4, fixed_abs, tag = 'smem constant byte address 0x4 - core index']
  #allocation1 [shape = 'u32[144,128]{1,0:T(1,128)}', space=vmem, size = 0x12000, scoped, tag = 'internal scratch']
  %s0 = inlined_call_operand.vmem [shape: bf16[128,128], index: 0, kind: input, shape index: {}]
  %s1 = inlined_call_operand.vmem [shape: f32[1,128], index: 1, kind: output, shape index: {0}]
  %s2 = inlined_call_operand.vmem [shape: f32[1,128], index: 2, kind: output, shape index: {1}]
  %3 = xla_tuple %s1, %s2
  %s4 = sld [smem:[#allocation0]]
  $region26: #{nlayer_discriminator_att_forward.15} parent=0
    _
  %s6 = ssub.s32 1, %s4
  %s7 = scalar_select 0, %s6, %s4
  // Predicated region
  $region2: #{nlayer_discriminator_att_forward.15} parent=0 // pred_check
    _
  $region3: #{nlayer_discriminator_att_forward.15} parent=0 // pred_check_branch
    %9 = sbr.rel (0) target = $region5
  $region4: #{nlayer_discriminator_att_forward.15} parent=0 // pred_region
    _
  $region5: #{nlayer_discriminator_att_forward.15} parent=0 // pred_fallthru
    _
  %p10 = scmp.eq.s32.totalorder 0, 0
  // Predicated region
  $region6: #{nlayer_discriminator_att_forward.15} parent=0 // pred_check
    %p11 = pneg %p10
  $region7: #{nlayer_discriminator_att_forward.15} parent=0 // pred_check_branch
    %13 = sbr.rel (%p11) target = $region9
  $region8: #{nlayer_discriminator_att_forward.15} parent=0 // pred_region
    %14 = vst [vmem:[%s1] sm:$0x1] 0.0
    %15 = vst [vmem:[%s2] sm:$0x1] 0.0
  $region9: #{nlayer_discriminator_att_forward.15} parent=0 // pred_fallthru
    _
  %v16 = vld [vmem:[%s0] sm:$0xf]
  %v17 = vld [vmem:[%s0 + $0x4] sm:$0xf]
  %v18 = vld [vmem:[%s0 + $0x8] sm:$0xf]
  %v19 = vld [vmem:[%s0 + $0xc] sm:$0xf]
  %v20 = vld [vmem:[%s0 + $0x10] sm:$0xf]
  %v21 = vld [vmem:[%s0 + $0x14] sm:$0xf]
  %v22 = vld [vmem:[%s0 + $0x18] sm:$0xf]
  %v23 = vld [vmem:[%s0 + $0x1c] sm:$0xf]
  %v24 = vld [vmem:[%s0 + $0x20] sm:$0xf]
  %v25 = vld [vmem:[%s0 + $0x24] sm:$0xf]
  %v26 = vld [vmem:[%s0 + $0x28] sm:$0xf]
  %v27 = vld [vmem:[%s0 + $0x2c] sm:$0xf]
  %v28 = vld [vmem:[%s0 + $0x30] sm:$0xf]
  %v29 = vld [vmem:[%s0 + $0x34] sm:$0xf]
  %v30 = vld [vmem:[%s0 + $0x38] sm:$0xf]
  %v31 = vld [vmem:[%s0 + $0x3c] sm:$0xf]
  %v32 = vunpack.c.l.bf16 %v16
  %v33 = vunpack.c.l.bf16 %v17
  %v34 = vunpack.c.l.bf16 %v18
  %v35 = vunpack.c.l.bf16 %v19
  %v36 = vunpack.c.l.bf16 %v20
  %v37 = vunpack.c.l.bf16 %v21
  %v38 = vunpack.c.l.bf16 %v22
  %v39 = vunpack.c.l.bf16 %v23
  %v40 = vunpack.c.l.bf16 %v24
  %v41 = vunpack.c.l.bf16 %v25
  %v42 = vunpack.c.l.bf16 %v26
  %v43 = vunpack.c.l.bf16 %v27
  %v44 = vunpack.c.l.bf16 %v28
  %v45 = vunpack.c.l.bf16 %v29
  %v46 = vunpack.c.l.bf16 %v30
  %v47 = vunpack.c.l.bf16 %v31
  %v48 = vld [vmem:[%s1] sm:$0x1]
  %v49 = vadd.f32 %v32, %v33
  %v50 = vadd.f32 %v49, %v34
  %v51 = vadd.f32 %v50, %v35
  %v52 = vadd.f32 %v51, %v36
  %v53 = vadd.f32 %v52, %v37
  %v54 = vadd.f32 %v53, %v38
  %v55 = vadd.f32 %v54, %v39
  %v56 = vadd.f32 %v55, %v40
  %v57 = vadd.f32 %v56, %v41
  %v58 = vadd.f32 %v57, %v42
  %v59 = vadd.f32 %v58, %v43
  %v60 = vadd.f32 %v59, %v44
  %v61 = vadd.f32 %v60, %v45
  %v62 = vadd.f32 %v61, %v46
  %v63 = vadd.f32 %v62, %v47
  %v64 = vrot.slane %v63, 4
  %v65 = vadd.f32 %v63, %v64
  %v66 = vrot.slane %v65, 2
  %v67 = vadd.f32 %v65, %v66
  %v68 = vrot.slane %v67, 1
  %v69 = vadd.f32 %v67, %v68
  %v70 = vadd.f32 %v48, %v69
  %71 = vst [vmem:[%s1] sm:$0x1] %v70
  %v72 = vld [vmem:[%s2] sm:$0x1]
  %v73 = vmul.f32 %v32, %v32
  %v74 = vmul.f32 %v33, %v33
  %v75 = vmul.f32 %v34, %v34
  %v76 = vmul.f32 %v35, %v35
  %v77 = vmul.f32 %v36, %v36
  %v78 = vmul.f32 %v37, %v37
  %v79 = vmul.f32 %v38, %v38
  %v80 = vmul.f32 %v39, %v39
  %v81 = vmul.f32 %v40, %v40
  %v82 = vmul.f32 %v41, %v41
  %v83 = vmul.f32 %v42, %v42
  %v84 = vmul.f32 %v43, %v43
  %v85 = vmul.f32 %v44, %v44
  %v86 = vmul.f32 %v45, %v45
  %v87 = vmul.f32 %v46, %v46
  %v88 = vmul.f32 %v47, %v47
  %v89 = vadd.f32 %v73, %v74
  %v90 = vadd.f32 %v89, %v75
  %v91 = vadd.f32 %v90, %v76
  %v92 = vadd.f32 %v91, %v77
  %v93 = vadd.f32 %v92, %v78
  %v94 = vadd.f32 %v93, %v79
  %v95 = vadd.f32 %v94, %v80
  %v96 = vadd.f32 %v95, %v81
  %v97 = vadd.f32 %v96, %v82
  %v98 = vadd.f32 %v97, %v83
  %v99 = vadd.f32 %v98, %v84
  %v100 = vadd.f32 %v99, %v85
  %v101 = vadd.f32 %v100, %v86
  %v102 = vadd.f32 %v101, %v87
  %v103 = vadd.f32 %v102, %v88
  %v104 = vrot.slane %v103, 4
  %v105 = vadd.f32 %v103, %v104
  %v106 = vrot.slane %v105, 2
  %v107 = vadd.f32 %v105, %v106
  %v108 = vrot.slane %v107, 1
  %v109 = vadd.f32 %v107, %v108
  %v110 = vadd.f32 %v72, %v109
  %111 = vst [vmem:[%s2] sm:$0x1] %v110
  // Predicated region
  $region10: #{nlayer_discriminator_att_forward.15} parent=0 // pred_check
    _
  $region11: #{nlayer_discriminator_att_forward.15} parent=0 // pred_check_branch
    %113 = sbr.rel (0) target = $region13
  $region12: #{nlayer_discriminator_att_forward.15} parent=0 // pred_region
    _
  $region13: #{nlayer_discriminator_att_forward.15} parent=0 // pred_fallthru
    _
  // Predicated region
  $region14: #{nlayer_discriminator_att_forward.15} parent=0 // pred_check
    _
  $region15: #{nlayer_discriminator_att_forward.15} parent=0 // pred_check_branch
    %115 = sbr.rel (0) target = $region17
  $region16: #{nlayer_discriminator_att_forward.15} parent=0 // pred_region
    _
  $region17: #{nlayer_discriminator_att_forward.15} parent=0 // pred_fallthru
    _
  // Predicated region
  $region18: #{nlayer_discriminator_att_forward.15} parent=0 // pred_check
    _
  $region19: #{nlayer_discriminator_att_forward.15} parent=0 // pred_check_branch
    %117 = sbr.rel (0) target = $region21
  $region20: #{nlayer_discriminator_att_forward.15} parent=0 // pred_region
    _
  $region21: #{nlayer_discriminator_att_forward.15} parent=0 // pred_fallthru
    _
  // Predicated region
  $region22: #{nlayer_discriminator_att_forward.15} parent=0 // pred_check
    _
  $region23: #{nlayer_discriminator_att_forward.15} parent=0 // pred_check_branch
    %119 = sbr.rel (0) target = $region25
  $region24: #{nlayer_discriminator_att_forward.15} parent=0 // pred_region
    _
  $region25: #{nlayer_discriminator_att_forward.15} parent=0 // pred_fallthru
    _

// kernel: nlayer_discriminator_att_forward.16
$region0: #{nlayer_discriminator_att_forward.16}
  #allocation0 [shape = 'u32[]', space=smem, size = 0x4, offset = 0x4, fixed_abs, tag = 'smem constant byte address 0x4 - core index']
  #allocation1 [shape = 'u32[144,128]{1,0:T(1,128)}', space=vmem, size = 0x12000, scoped, tag = 'internal scratch']
  %s0 = inlined_call_operand.vmem [shape: bf16[128,128], index: 0, kind: input, shape index: {}]
  %s1 = inlined_call_operand.vmem [shape: f32[1,128], index: 1, kind: input, shape index: {}]
  %s2 = inlined_call_operand.vmem [shape: f32[1,128], index: 2, kind: input, shape index: {}]
  %s3 = inlined_call_operand.vmem [shape: bf16[128,128], index: 3, kind: output, shape index: {}]
  %s4 = sld [smem:[#allocation0]]
  $region22: #{nlayer_discriminator_att_forward.16} parent=0
    _
  %s6 = ssub.s32 1, %s4
  %s7 = scalar_select 0, %s6, %s4
  // Predicated region
  $region2: #{nlayer_discriminator_att_forward.16} parent=0 // pred_check
    _
  $region3: #{nlayer_discriminator_att_forward.16} parent=0 // pred_check_branch
    %9 = sbr.rel (0) target = $region5
  $region4: #{nlayer_discriminator_att_forward.16} parent=0 // pred_region
    _
  $region5: #{nlayer_discriminator_att_forward.16} parent=0 // pred_fallthru
    _
  // Predicated region
  $region6: #{nlayer_discriminator_att_forward.16} parent=0 // pred_check
    _
  $region7: #{nlayer_discriminator_att_forward.16} parent=0 // pred_check_branch
    %11 = sbr.rel (0) target = $region9
  $region8: #{nlayer_discriminator_att_forward.16} parent=0 // pred_region
    _
  $region9: #{nlayer_discriminator_att_forward.16} parent=0 // pred_fallthru
    _
  // Predicated region
  $region10: #{nlayer_discriminator_att_forward.16} parent=0 // pred_check
    _
  $region11: #{nlayer_discriminator_att_forward.16} parent=0 // pred_check_branch
    %13 = sbr.rel (0) target = $region13
  $region12: #{nlayer_discriminator_att_forward.16} parent=0 // pred_region
    _
  $region13: #{nlayer_discriminator_att_forward.16} parent=0 // pred_fallthru
    _
  %v14 = vld [vmem:[%s0] sm:$0xf]
  %v15 = vld [vmem:[%s0 + $0x4] sm:$0xf]
  %v16 = vld [vmem:[%s0 + $0x8] sm:$0xf]
  %v17 = vld [vmem:[%s0 + $0xc] sm:$0xf]
  %v18 = vld [vmem:[%s0 + $0x10] sm:$0xf]
  %v19 = vld [vmem:[%s0 + $0x14] sm:$0xf]
  %v20 = vld [vmem:[%s0 + $0x18] sm:$0xf]
  %v21 = vld [vmem:[%s0 + $0x1c] sm:$0xf]
  %v22 = vld [vmem:[%s0 + $0x20] sm:$0xf]
  %v23 = vld [vmem:[%s0 + $0x24] sm:$0xf]
  %v24 = vld [vmem:[%s0 + $0x28] sm:$0xf]
  %v25 = vld [vmem:[%s0 + $0x2c] sm:$0xf]
  %v26 = vld [vmem:[%s0 + $0x30] sm:$0xf]
  %v27 = vld [vmem:[%s0 + $0x34] sm:$0xf]
  %v28 = vld [vmem:[%s0 + $0x38] sm:$0xf]
  %v29 = vld [vmem:[%s0 + $0x3c] sm:$0xf]
  %v30 = vunpack.c.l.bf16 %v14
  %v31 = vunpack.c.l.bf16 %v15
  %v32 = vunpack.c.l.bf16 %v16
  %v33 = vunpack.c.l.bf16 %v17
  %v34 = vunpack.c.l.bf16 %v18
  %v35 = vunpack.c.l.bf16 %v19
  %v36 = vunpack.c.l.bf16 %v20
  %v37 = vunpack.c.l.bf16 %v21
  %v38 = vunpack.c.l.bf16 %v22
  %v39 = vunpack.c.l.bf16 %v23
  %v40 = vunpack.c.l.bf16 %v24
  %v41 = vunpack.c.l.bf16 %v25
  %v42 = vunpack.c.l.bf16 %v26
  %v43 = vunpack.c.l.bf16 %v27
  %v44 = vunpack.c.l.bf16 %v28
  %v45 = vunpack.c.l.bf16 %v29
  %v46 = vld [vmem:[%s1] sm:$0x1]
  %v48 = vlaneseq
  %v49 = vshrl.u32 %v48, 7
  %v50 = vsub.s32 0, %v49
  %v51 = vrot.slane %v46, %v50
  %v53 = vmul.f32 %v30, %v51
  %v54 = vmul.f32 %v31, %v51
  %v55 = vmul.f32 %v32, %v51
  %v56 = vmul.f32 %v33, %v51
  %v57 = vmul.f32 %v34, %v51
  %v58 = vmul.f32 %v35, %v51
  %v59 = vmul.f32 %v36, %v51
  %v60 = vmul.f32 %v37, %v51
  %v61 = vmul.f32 %v38, %v51
  %v62 = vmul.f32 %v39, %v51
  %v63 = vmul.f32 %v40, %v51
  %v64 = vmul.f32 %v41, %v51
  %v65 = vmul.f32 %v42, %v51
  %v66 = vmul.f32 %v43, %v51
  %v67 = vmul.f32 %v44, %v51
  %v68 = vmul.f32 %v45, %v51
  %v69 = vld [vmem:[%s2] sm:$0x1]
  %v71 = vlaneseq
  %v72 = vshrl.u32 %v71, 7
  %v73 = vsub.s32 0, %v72
  %v74 = vrot.slane %v69, %v73
  %v76 = vadd.f32 %v53, %v74
  %v77 = vadd.f32 %v54, %v74
  %v78 = vadd.f32 %v55, %v74
  %v79 = vadd.f32 %v56, %v74
  %v80 = vadd.f32 %v57, %v74
  %v81 = vadd.f32 %v58, %v74
  %v82 = vadd.f32 %v59, %v74
  %v83 = vadd.f32 %v60, %v74
  %v84 = vadd.f32 %v61, %v74
  %v85 = vadd.f32 %v62, %v74
  %v86 = vadd.f32 %v63, %v74
  %v87 = vadd.f32 %v64, %v74
  %v88 = vadd.f32 %v65, %v74
  %v89 = vadd.f32 %v66, %v74
  %v90 = vadd.f32 %v67, %v74
  %v91 = vadd.f32 %v68, %v74
  %vm92 = vcmp.ge.f32.partialorder %v76, 0.0
  %vm93 = vcmp.ge.f32.partialorder %v77, 0.0
  %vm94 = vcmp.ge.f32.partialorder %v78, 0.0
  %vm95 = vcmp.ge.f32.partialorder %v79, 0.0
  %vm96 = vcmp.ge.f32.partialorder %v80, 0.0
  %vm97 = vcmp.ge.f32.partialorder %v81, 0.0
  %vm98 = vcmp.ge.f32.partialorder %v82, 0.0
  %vm99 = vcmp.ge.f32.partialorder %v83, 0.0
  %vm100 = vcmp.ge.f32.partialorder %v84, 0.0
  %vm101 = vcmp.ge.f32.partialorder %v85, 0.0
  %vm102 = vcmp.ge.f32.partialorder %v86, 0.0
  %vm103 = vcmp.ge.f32.partialorder %v87, 0.0
  %vm104 = vcmp.ge.f32.partialorder %v88, 0.0
  %vm105 = vcmp.ge.f32.partialorder %v89, 0.0
  %vm106 = vcmp.ge.f32.partialorder %v90, 0.0
  %vm107 = vcmp.ge.f32.partialorder %v91, 0.0
  %v108 = vmul.f32 %v76, 0.2
  %v109 = vmul.f32 %v77, 0.2
  %v110 = vmul.f32 %v78, 0.2
  %v111 = vmul.f32 %v79, 0.2
  %v112 = vmul.f32 %v80, 0.2
  %v113 = vmul.f32 %v81, 0.2
  %v114 = vmul.f32 %v82, 0.2
  %v115 = vmul.f32 %v83, 0.2
  %v116 = vmul.f32 %v84, 0.2
  %v117 = vmul.f32 %v85, 0.2
  %v118 = vmul.f32 %v86, 0.2
  %v119 = vmul.f32 %v87, 0.2
  %v120 = vmul.f32 %v88, 0.2
  %v121 = vmul.f32 %v89, 0.2
  %v122 = vmul.f32 %v90, 0.2
  %v123 = vmul.f32 %v91, 0.2
  %v124 = vsel %vm92, %v76, %v108
  %v125 = vsel %vm93, %v77, %v109
  %v126 = vsel %vm94, %v78, %v110
  %v127 = vsel %vm95, %v79, %v111
  %v128 = vsel %vm96, %v80, %v112
  %v129 = vsel %vm97, %v81, %v113
  %v130 = vsel %vm98, %v82, %v114
  %v131 = vsel %vm99, %v83, %v115
  %v132 = vsel %vm100, %v84, %v116
  %v133 = vsel %vm101, %v85, %v117
  %v134 = vsel %vm102, %v86, %v118
  %v135 = vsel %vm103, %v87, %v119
  %v136 = vsel %vm104, %v88, %v120
  %v137 = vsel %vm105, %v89, %v121
  %v138 = vsel %vm106, %v90, %v122
  %v139 = vsel %vm107, %v91, %v123
  %v140 = vpack.c.bf16 %v125, %v124
  %v141 = vpack.c.bf16 %v127, %v126
  %v142 = vpack.c.bf16 %v129, %v128
  %v143 = vpack.c.bf16 %v131, %v130
  %v144 = vpack.c.bf16 %v133, %v132
  %v145 = vpack.c.bf16 %v135, %v134
  %v146 = vpack.c.bf16 %v137, %v136
  %v147 = vpack.c.bf16 %v139, %v138
  %v156 = vunpack.c.l.b16 %v140
  %v157 = vunpack.c.h.b16 %v140
  %v158 = vunpack.c.l.b16 %v141
  %v159 = vunpack.c.h.b16 %v141
  %v160 = vunpack.c.l.b16 %v142
  %v161 = vunpack.c.h.b16 %v142
  %v162 = vunpack.c.l.b16 %v143
  %v163 = vunpack.c.h.b16 %v143
  %v164 = vunpack.c.l.b16 %v144
  %v165 = vunpack.c.h.b16 %v144
  %v166 = vunpack.c.l.b16 %v145
  %v167 = vunpack.c.h.b16 %v145
  %v168 = vunpack.c.l.b16 %v146
  %v169 = vunpack.c.h.b16 %v146
  %v170 = vunpack.c.l.b16 %v147
  %v171 = vunpack.c.h.b16 %v147
  %v172 = vpack.c.b16 %v156, %v156
  %v173 = vpack.c.b16 %v157, %v157
  %v174 = vpack.c.b16 %v158, %v158
  %v175 = vpack.c.b16 %v159, %v159
  %v176 = vpack.c.b16 %v160, %v160
  %v177 = vpack.c.b16 %v161, %v161
  %v178 = vpack.c.b16 %v162, %v162
  %v179 = vpack.c.b16 %v163, %v163
  %v180 = vpack.c.b16 %v164, %v164
  %v181 = vpack.c.b16 %v165, %v165
  %v182 = vpack.c.b16 %v166, %v166
  %v183 = vpack.c.b16 %v167, %v167
  %v184 = vpack.c.b16 %v168, %v168
  %v185 = vpack.c.b16 %v169, %v169
  %v186 = vpack.c.b16 %v170, %v170
  %v187 = vpack.c.b16 %v171, %v171
  %204 = vst [vmem:[%s3] sm:$0xf] %v172
  %205 = vst [vmem:[%s3 + $0x4] sm:$0xf] %v173
  %206 = vst [vmem:[%s3 + $0x8] sm:$0xf] %v174
  %207 = vst [vmem:[%s3 + $0xc] sm:$0xf] %v175
  %208 = vst [vmem:[%s3 + $0x10] sm:$0xf] %v176
  %209 = vst [vmem:[%s3 + $0x14] sm:$0xf] %v177
  %210 = vst [vmem:[%s3 + $0x18] sm:$0xf] %v178
  %211 = vst [vmem:[%s3 + $0x1c] sm:$0xf] %v179
  %212 = vst [vmem:[%s3 + $0x20] sm:$0xf] %v180
  %213 = vst [vmem:[%s3 + $0x24] sm:$0xf] %v181
  %214 = vst [vmem:[%s3 + $0x28] sm:$0xf] %v182
  %215 = vst [vmem:[%s3 + $0x2c] sm:$0xf] %v183
  %216 = vst [vmem:[%s3 + $0x30] sm:$0xf] %v184
  %217 = vst [vmem:[%s3 + $0x34] sm:$0xf] %v185
  %218 = vst [vmem:[%s3 + $0x38] sm:$0xf] %v186
  %219 = vst [vmem:[%s3 + $0x3c] sm:$0xf] %v187
  // Predicated region
  $region14: #{nlayer_discriminator_att_forward.16} parent=0 // pred_check
    _
  $region15: #{nlayer_discriminator_att_forward.16} parent=0 // pred_check_branch
    %221 = sbr.rel (0) target = $region17
  $region16: #{nlayer_discriminator_att_forward.16} parent=0 // pred_region
    _
  $region17: #{nlayer_discriminator_att_forward.16} parent=0 // pred_fallthru
    _
  // Predicated region
  $region18: #{nlayer_discriminator_att_forward.16} parent=0 // pred_check
    _
  $region19: #{nlayer_discriminator_att_forward.16} parent=0 // pred_check_branch
    %223 = sbr.rel (0) target = $region21
  $region20: #{nlayer_discriminator_att_forward.16} parent=0 // pred_region
    _
  $region21: #{nlayer_discriminator_att_forward.16} parent=0 // pred_fallthru
    _

// kernel: nlayer_discriminator_att_forward.18
$region0: #{nlayer_discriminator_att_forward.18}
  #allocation0 [shape = 'u32[]', space=smem, size = 0x4, offset = 0x4, fixed_abs, tag = 'smem constant byte address 0x4 - core index']
  #allocation1 [shape = 'u32[144,128]{1,0:T(1,128)}', space=vmem, size = 0x12000, scoped, tag = 'internal scratch']
  %s0 = inlined_call_operand.vmem [shape: bf16[32,128], index: 0, kind: input, shape index: {}]
  %s1 = inlined_call_operand.vmem [shape: f32[1,128], index: 1, kind: output, shape index: {0}]
  %s2 = inlined_call_operand.vmem [shape: f32[1,128], index: 2, kind: output, shape index: {1}]
  %3 = xla_tuple %s1, %s2
  %s4 = sld [smem:[#allocation0]]
  $region26: #{nlayer_discriminator_att_forward.18} parent=0
    _
  %s6 = ssub.s32 1, %s4
  %s7 = scalar_select 0, %s6, %s4
  // Predicated region
  $region2: #{nlayer_discriminator_att_forward.18} parent=0 // pred_check
    _
  $region3: #{nlayer_discriminator_att_forward.18} parent=0 // pred_check_branch
    %9 = sbr.rel (0) target = $region5
  $region4: #{nlayer_discriminator_att_forward.18} parent=0 // pred_region
    _
  $region5: #{nlayer_discriminator_att_forward.18} parent=0 // pred_fallthru
    _
  %p10 = scmp.eq.s32.totalorder 0, 0
  // Predicated region
  $region6: #{nlayer_discriminator_att_forward.18} parent=0 // pred_check
    %p11 = pneg %p10
  $region7: #{nlayer_discriminator_att_forward.18} parent=0 // pred_check_branch
    %13 = sbr.rel (%p11) target = $region9
  $region8: #{nlayer_discriminator_att_forward.18} parent=0 // pred_region
    %14 = vst [vmem:[%s1] sm:$0x1] 0.0
    %15 = vst [vmem:[%s2] sm:$0x1] 0.0
  $region9: #{nlayer_discriminator_att_forward.18} parent=0 // pred_fallthru
    _
  %v16 = vld [vmem:[%s0] sm:$0xf]
  %v17 = vld [vmem:[%s0 + $0x4] sm:$0xf]
  %v18 = vld [vmem:[%s0 + $0x8] sm:$0xf]
  %v19 = vld [vmem:[%s0 + $0xc] sm:$0xf]
  %v20 = vunpack.c.l.bf16 %v16
  %v21 = vunpack.c.l.bf16 %v17
  %v22 = vunpack.c.l.bf16 %v18
  %v23 = vunpack.c.l.bf16 %v19
  %v24 = vld [vmem:[%s1] sm:$0x1]
  %v25 = vadd.f32 %v20, %v21
  %v26 = vadd.f32 %v25, %v22
  %v27 = vadd.f32 %v26, %v23
  %v28 = vrot.slane %v27, 4
  %v29 = vadd.f32 %v27, %v28
  %v30 = vrot.slane %v29, 2
  %v31 = vadd.f32 %v29, %v30
  %v32 = vrot.slane %v31, 1
  %v33 = vadd.f32 %v31, %v32
  %v34 = vadd.f32 %v24, %v33
  %35 = vst [vmem:[%s1] sm:$0x1] %v34
  %v36 = vld [vmem:[%s2] sm:$0x1]
  %v37 = vmul.f32 %v20, %v20
  %v38 = vmul.f32 %v21, %v21
  %v39 = vmul.f32 %v22, %v22
  %v40 = vmul.f32 %v23, %v23
  %v41 = vadd.f32 %v37, %v38
  %v42 = vadd.f32 %v41, %v39
  %v43 = vadd.f32 %v42, %v40
  %v44 = vrot.slane %v43, 4
  %v45 = vadd.f32 %v43, %v44
  %v46 = vrot.slane %v45, 2
  %v47 = vadd.f32 %v45, %v46
  %v48 = vrot.slane %v47, 1
  %v49 = vadd.f32 %v47, %v48
  %v50 = vadd.f32 %v36, %v49
  %51 = vst [vmem:[%s2] sm:$0x1] %v50
  // Predicated region
  $region10: #{nlayer_discriminator_att_forward.18} parent=0 // pred_check
    _
  $region11: #{nlayer_discriminator_att_forward.18} parent=0 // pred_check_branch
    %53 = sbr.rel (0) target = $region13
  $region12: #{nlayer_discriminator_att_forward.18} parent=0 // pred_region
    _
  $region13: #{nlayer_discriminator_att_forward.18} parent=0 // pred_fallthru
    _
  // Predicated region
  $region14: #{nlayer_discriminator_att_forward.18} parent=0 // pred_check
    _
  $region15: #{nlayer_discriminator_att_forward.18} parent=0 // pred_check_branch
    %55 = sbr.rel (0) target = $region17
  $region16: #{nlayer_discriminator_att_forward.18} parent=0 // pred_region
    _
  $region17: #{nlayer_discriminator_att_forward.18} parent=0 // pred_fallthru
    _
  // Predicated region
  $region18: #{nlayer_discriminator_att_forward.18} parent=0 // pred_check
    _
  $region19: #{nlayer_discriminator_att_forward.18} parent=0 // pred_check_branch
    %57 = sbr.rel (0) target = $region21
  $region20: #{nlayer_discriminator_att_forward.18} parent=0 // pred_region
    _
  $region21: #{nlayer_discriminator_att_forward.18} parent=0 // pred_fallthru
    _
  // Predicated region
  $region22: #{nlayer_discriminator_att_forward.18} parent=0 // pred_check
    _
  $region23: #{nlayer_discriminator_att_forward.18} parent=0 // pred_check_branch
    %59 = sbr.rel (0) target = $region25
  $region24: #{nlayer_discriminator_att_forward.18} parent=0 // pred_region
    _
  $region25: #{nlayer_discriminator_att_forward.18} parent=0 // pred_fallthru
    _

// kernel: nlayer_discriminator_att_forward.17
$region0: #{nlayer_discriminator_att_forward.17}
  #allocation0 [shape = 'u32[]', space=smem, size = 0x4, offset = 0x4, fixed_abs, tag = 'smem constant byte address 0x4 - core index']
  #allocation1 [shape = 'u32[144,128]{1,0:T(1,128)}', space=vmem, size = 0x12000, scoped, tag = 'internal scratch']
  #allocation2 [shape = 'f32[32,128]{1,0:T(8,128)}', space=vmem, size = 0x4000, scoped, tag = 'scratch operand']
  %s0 = inlined_call_operand.vmem [shape: bf16[32,512], index: 0, kind: input, shape index: {}]
  %s1 = inlined_call_operand.vmem [shape: bf16[512,128], index: 1, kind: input, shape index: {}]
  %s2 = inlined_call_operand.vmem [shape: f32[1,128], index: 2, kind: input, shape index: {}]
  %s3 = inlined_call_operand.vmem [shape: bf16[32,128], index: 3, kind: output, shape index: {}]
  %s4 = sld [smem:[#allocation0]]
  $region30: #{nlayer_discriminator_att_forward.17} parent=0
    _
  %s6 = ssub.s32 1, %s4
  %s7 = scalar_select 0, %s6, %s4
  // Predicated region
  $region2: #{nlayer_discriminator_att_forward.17} parent=0 // pred_check
    _
  $region3: #{nlayer_discriminator_att_forward.17} parent=0 // pred_check_branch
    %9 = sbr.rel (0) target = $region5
  $region4: #{nlayer_discriminator_att_forward.17} parent=0 // pred_region
    _
  $region5: #{nlayer_discriminator_att_forward.17} parent=0 // pred_fallthru
    _
  // Predicated region
  $region6: #{nlayer_discriminator_att_forward.17} parent=0 // pred_check
    _
  $region7: #{nlayer_discriminator_att_forward.17} parent=0 // pred_check_branch
    %11 = sbr.rel (0) target = $region9
  $region8: #{nlayer_discriminator_att_forward.17} parent=0 // pred_region
    _
  $region9: #{nlayer_discriminator_att_forward.17} parent=0 // pred_fallthru
    _
  // Predicated region
  $region10: #{nlayer_discriminator_att_forward.17} parent=0 // pred_check
    _
  $region11: #{nlayer_discriminator_att_forward.17} parent=0 // pred_check_branch
    %13 = sbr.rel (0) target = $region13
  $region12: #{nlayer_discriminator_att_forward.17} parent=0 // pred_region
    _
  $region13: #{nlayer_discriminator_att_forward.17} parent=0 // pred_fallthru
    _
  %p15 = scmp.eq.s32.totalorder 0, 0
  // Predicated region
  $region14: #{nlayer_discriminator_att_forward.17} parent=0 // pred_check
    %p16 = pneg %p15
  $region15: #{nlayer_discriminator_att_forward.17} parent=0 // pred_check_branch
    %18 = sbr.rel (%p16) target = $region17
  $region16: #{nlayer_discriminator_att_forward.17} parent=0 // pred_region
    %19 = vst [vmem:[#allocation2] sm:$0xff] 0.0
    %20 = vst [vmem:[#allocation2 + $0x8] sm:$0xff] 0.0
    %21 = vst [vmem:[#allocation2 + $0x10] sm:$0xff] 0.0
    %22 = vst [vmem:[#allocation2 + $0x18] sm:$0xff] 0.0
  $region17: #{nlayer_discriminator_att_forward.17} parent=0 // pred_fallthru
    _
  %v23 = vld [vmem:[#allocation2] sm:$0xff]
  %v24 = vld [vmem:[#allocation2 + $0x8] sm:$0xff]
  %v25 = vld [vmem:[#allocation2 + $0x10] sm:$0xff]
  %v26 = vld [vmem:[#allocation2 + $0x18] sm:$0xff]
  %v27 = vld [vmem:[%s0] sm:$0xff]
  %v28 = vld [vmem:[%s0 + $0x8] sm:$0xff]
  %v29 = vld [vmem:[%s0 + $0x10] sm:$0xff]
  %v30 = vld [vmem:[%s0 + $0x18] sm:$0xff]
  %v31 = vld [vmem:[%s0 + $0x20] sm:$0xff]
  %v32 = vld [vmem:[%s0 + $0x28] sm:$0xff]
  %v33 = vld [vmem:[%s0 + $0x30] sm:$0xff]
  %v34 = vld [vmem:[%s0 + $0x38] sm:$0xff]
  %v35 = vld [vmem:[%s1] sm:$0xf]
  %v36 = vld [vmem:[%s1 + $0x4] sm:$0xf]
  %v37 = vld [vmem:[%s1 + $0x8] sm:$0xf]
  %v38 = vld [vmem:[%s1 + $0xc] sm:$0xf]
  %v39 = vld [vmem:[%s1 + $0x10] sm:$0xf]
  %v40 = vld [vmem:[%s1 + $0x14] sm:$0xf]
  %v41 = vld [vmem:[%s1 + $0x18] sm:$0xf]
  %v42 = vld [vmem:[%s1 + $0x1c] sm:$0xf]
  %v43 = vld [vmem:[%s1 + $0x20] sm:$0xf]
  %v44 = vld [vmem:[%s1 + $0x24] sm:$0xf]
  %v45 = vld [vmem:[%s1 + $0x28] sm:$0xf]
  %v46 = vld [vmem:[%s1 + $0x2c] sm:$0xf]
  %v47 = vld [vmem:[%s1 + $0x30] sm:$0xf]
  %v48 = vld [vmem:[%s1 + $0x34] sm:$0xf]
  %v49 = vld [vmem:[%s1 + $0x38] sm:$0xf]
  %v50 = vld [vmem:[%s1 + $0x3c] sm:$0xf]
  %v51 = vld [vmem:[%s1 + $0x40] sm:$0xf]
  %v52 = vld [vmem:[%s1 + $0x44] sm:$0xf]
  %v53 = vld [vmem:[%s1 + $0x48] sm:$0xf]
  %v54 = vld [vmem:[%s1 + $0x4c] sm:$0xf]
  %v55 = vld [vmem:[%s1 + $0x50] sm:$0xf]
  %v56 = vld [vmem:[%s1 + $0x54] sm:$0xf]
  %v57 = vld [vmem:[%s1 + $0x58] sm:$0xf]
  %v58 = vld [vmem:[%s1 + $0x5c] sm:$0xf]
  %v59 = vld [vmem:[%s1 + $0x60] sm:$0xf]
  %v60 = vld [vmem:[%s1 + $0x64] sm:$0xf]
  %v61 = vld [vmem:[%s1 + $0x68] sm:$0xf]
  %v62 = vld [vmem:[%s1 + $0x6c] sm:$0xf]
  %v63 = vld [vmem:[%s1 + $0x70] sm:$0xf]
  %v64 = vld [vmem:[%s1 + $0x74] sm:$0xf]
  %v65 = vld [vmem:[%s1 + $0x78] sm:$0xf]
  %v66 = vld [vmem:[%s1 + $0x7c] sm:$0xf]
  %v67 = vld [vmem:[%s1 + $0x80] sm:$0xf]
  %v68 = vld [vmem:[%s1 + $0x84] sm:$0xf]
  %v69 = vld [vmem:[%s1 + $0x88] sm:$0xf]
  %v70 = vld [vmem:[%s1 + $0x8c] sm:$0xf]
  %v71 = vld [vmem:[%s1 + $0x90] sm:$0xf]
  %v72 = vld [vmem:[%s1 + $0x94] sm:$0xf]
  %v73 = vld [vmem:[%s1 + $0x98] sm:$0xf]
  %v74 = vld [vmem:[%s1 + $0x9c] sm:$0xf]
  %v75 = vld [vmem:[%s1 + $0xa0] sm:$0xf]
  %v76 = vld [vmem:[%s1 + $0xa4] sm:$0xf]
  %v77 = vld [vmem:[%s1 + $0xa8] sm:$0xf]
  %v78 = vld [vmem:[%s1 + $0xac] sm:$0xf]
  %v79 = vld [vmem:[%s1 + $0xb0] sm:$0xf]
  %v80 = vld [vmem:[%s1 + $0xb4] sm:$0xf]
  %v81 = vld [vmem:[%s1 + $0xb8] sm:$0xf]
  %v82 = vld [vmem:[%s1 + $0xbc] sm:$0xf]
  %v83 = vld [vmem:[%s1 + $0xc0] sm:$0xf]
  %v84 = vld [vmem:[%s1 + $0xc4] sm:$0xf]
  %v85 = vld [vmem:[%s1 + $0xc8] sm:$0xf]
  %v86 = vld [vmem:[%s1 + $0xcc] sm:$0xf]
  %v87 = vld [vmem:[%s1 + $0xd0] sm:$0xf]
  %v88 = vld [vmem:[%s1 + $0xd4] sm:$0xf]
  %v89 = vld [vmem:[%s1 + $0xd8] sm:$0xf]
  %v90 = vld [vmem:[%s1 + $0xdc] sm:$0xf]
  %v91 = vld [vmem:[%s1 + $0xe0] sm:$0xf]
  %v92 = vld [vmem:[%s1 + $0xe4] sm:$0xf]
  %v93 = vld [vmem:[%s1 + $0xe8] sm:$0xf]
  %v94 = vld [vmem:[%s1 + $0xec] sm:$0xf]
  %v95 = vld [vmem:[%s1 + $0xf0] sm:$0xf]
  %v96 = vld [vmem:[%s1 + $0xf4] sm:$0xf]
  %v97 = vld [vmem:[%s1 + $0xf8] sm:$0xf]
  %v98 = vld [vmem:[%s1 + $0xfc] sm:$0xf]
  %v107 = vunpack.c.l.b16 %v27
  %v108 = vunpack.c.h.b16 %v27
  %v109 = vunpack.c.l.b16 %v28
  %v110 = vunpack.c.h.b16 %v28
  %v111 = vunpack.c.l.b16 %v29
  %v112 = vunpack.c.h.b16 %v29
  %v113 = vunpack.c.l.b16 %v30
  %v114 = vunpack.c.h.b16 %v30
  %v115 = vunpack.c.l.b16 %v31
  %v116 = vunpack.c.h.b16 %v31
  %v117 = vunpack.c.l.b16 %v32
  %v118 = vunpack.c.h.b16 %v32
  %v119 = vunpack.c.l.b16 %v33
  %v120 = vunpack.c.h.b16 %v33
  %v121 = vunpack.c.l.b16 %v34
  %v122 = vunpack.c.h.b16 %v34
  %v123 = vpack.c.b16 %v111, %v107
  %v124 = vpack.c.b16 %v112, %v108
  %v125 = vpack.c.b16 %v113, %v109
  %v126 = vpack.c.b16 %v114, %v110
  %v127 = vpack.c.b16 %v119, %v115
  %v128 = vpack.c.b16 %v120, %v116
  %v129 = vpack.c.b16 %v121, %v117
  %v130 = vpack.c.b16 %v122, %v118
  %v203 = vunpack.c.l.b16 %v35
  %v204 = vunpack.c.l.b16 %v36
  %v205 = vunpack.c.l.b16 %v37
  %v206 = vunpack.c.l.b16 %v38
  %v207 = vunpack.c.l.b16 %v39
  %v208 = vunpack.c.l.b16 %v40
  %v209 = vunpack.c.l.b16 %v41
  %v210 = vunpack.c.l.b16 %v42
  %v211 = vunpack.c.l.b16 %v43
  %v212 = vunpack.c.l.b16 %v44
  %v213 = vunpack.c.l.b16 %v45
  %v214 = vunpack.c.l.b16 %v46
  %v215 = vunpack.c.l.b16 %v47
  %v216 = vunpack.c.l.b16 %v48
  %v217 = vunpack.c.l.b16 %v49
  %v218 = vunpack.c.l.b16 %v50
  %v219 = vunpack.c.l.b16 %v51
  %v220 = vunpack.c.l.b16 %v52
  %v221 = vunpack.c.l.b16 %v53
  %v222 = vunpack.c.l.b16 %v54
  %v223 = vunpack.c.l.b16 %v55
  %v224 = vunpack.c.l.b16 %v56
  %v225 = vunpack.c.l.b16 %v57
  %v226 = vunpack.c.l.b16 %v58
  %v227 = vunpack.c.l.b16 %v59
  %v228 = vunpack.c.l.b16 %v60
  %v229 = vunpack.c.l.b16 %v61
  %v230 = vunpack.c.l.b16 %v62
  %v231 = vunpack.c.l.b16 %v63
  %v232 = vunpack.c.l.b16 %v64
  %v233 = vunpack.c.l.b16 %v65
  %v234 = vunpack.c.l.b16 %v66
  %v235 = vunpack.c.l.b16 %v67
  %v236 = vunpack.c.l.b16 %v68
  %v237 = vunpack.c.l.b16 %v69
  %v238 = vunpack.c.l.b16 %v70
  %v239 = vunpack.c.l.b16 %v71
  %v240 = vunpack.c.l.b16 %v72
  %v241 = vunpack.c.l.b16 %v73
  %v242 = vunpack.c.l.b16 %v74
  %v243 = vunpack.c.l.b16 %v75
  %v244 = vunpack.c.l.b16 %v76
  %v245 = vunpack.c.l.b16 %v77
  %v246 = vunpack.c.l.b16 %v78
  %v247 = vunpack.c.l.b16 %v79
  %v248 = vunpack.c.l.b16 %v80
  %v249 = vunpack.c.l.b16 %v81
  %v250 = vunpack.c.l.b16 %v82
  %v251 = vunpack.c.l.b16 %v83
  %v252 = vunpack.c.l.b16 %v84
  %v253 = vunpack.c.l.b16 %v85
  %v254 = vunpack.c.l.b16 %v86
  %v255 = vunpack.c.l.b16 %v87
  %v256 = vunpack.c.l.b16 %v88
  %v257 = vunpack.c.l.b16 %v89
  %v258 = vunpack.c.l.b16 %v90
  %v259 = vunpack.c.l.b16 %v91
  %v260 = vunpack.c.l.b16 %v92
  %v261 = vunpack.c.l.b16 %v93
  %v262 = vunpack.c.l.b16 %v94
  %v263 = vunpack.c.l.b16 %v95
  %v264 = vunpack.c.l.b16 %v96
  %v265 = vunpack.c.l.b16 %v97
  %v266 = vunpack.c.l.b16 %v98
  %v267 = vpack.c.b16 %v204, %v203
  %v268 = vpack.c.b16 %v206, %v205
  %v269 = vpack.c.b16 %v208, %v207
  %v270 = vpack.c.b16 %v210, %v209
  %v271 = vpack.c.b16 %v212, %v211
  %v272 = vpack.c.b16 %v214, %v213
  %v273 = vpack.c.b16 %v216, %v215
  %v274 = vpack.c.b16 %v218, %v217
  %v275 = vpack.c.b16 %v220, %v219
  %v276 = vpack.c.b16 %v222, %v221
  %v277 = vpack.c.b16 %v224, %v223
  %v278 = vpack.c.b16 %v226, %v225
  %v279 = vpack.c.b16 %v228, %v227
  %v280 = vpack.c.b16 %v230, %v229
  %v281 = vpack.c.b16 %v232, %v231
  %v282 = vpack.c.b16 %v234, %v233
  %v283 = vpack.c.b16 %v236, %v235
  %v284 = vpack.c.b16 %v238, %v237
  %v285 = vpack.c.b16 %v240, %v239
  %v286 = vpack.c.b16 %v242, %v241
  %v287 = vpack.c.b16 %v244, %v243
  %v288 = vpack.c.b16 %v246, %v245
  %v289 = vpack.c.b16 %v248, %v247
  %v290 = vpack.c.b16 %v250, %v249
  %v291 = vpack.c.b16 %v252, %v251
  %v292 = vpack.c.b16 %v254, %v253
  %v293 = vpack.c.b16 %v256, %v255
  %v294 = vpack.c.b16 %v258, %v257
  %v295 = vpack.c.b16 %v260, %v259
  %v296 = vpack.c.b16 %v262, %v261
  %v297 = vpack.c.b16 %v264, %v263
  %v298 = vpack.c.b16 %v266, %v265
  %331 = vmatprep.subr.bf16.mxu0 0
  %332 = vmatpush1.bf16.msra.mxu0 %v267
  %333 = vmatprep.subr.bf16.mxu0 0
  %334 = vmatpush1.bf16.msra.mxu0 %v268
  %335 = vmatprep.subr.bf16.mxu0 0
  %336 = vmatpush1.bf16.msra.mxu0 %v269
  %337 = vmatprep.subr.bf16.mxu0 0
  %338 = vmatpush1.bf16.msra.mxu0 %v270
  %339 = vmatprep.subr.bf16.mxu0 0
  %340 = vmatpush1.bf16.msra.mxu0 %v271
  %341 = vmatprep.subr.bf16.mxu0 0
  %342 = vmatpush1.bf16.msra.mxu0 %v272
  %343 = vmatprep.subr.bf16.mxu0 0
  %344 = vmatpush1.bf16.msra.mxu0 %v273
  %345 = vmatprep.subr.bf16.mxu0 0
  %346 = vmatpush1.bf16.msra.mxu0 %v274
  %347 = vmatprep.subr.bf16.mxu0 0
  %348 = vmatpush1.bf16.msra.mxu0 %v275
  %349 = vmatprep.subr.bf16.mxu0 0
  %350 = vmatpush1.bf16.msra.mxu0 %v276
  %351 = vmatprep.subr.bf16.mxu0 0
  %352 = vmatpush1.bf16.msra.mxu0 %v277
  %353 = vmatprep.subr.bf16.mxu0 0
  %354 = vmatpush1.bf16.msra.mxu0 %v278
  %355 = vmatprep.subr.bf16.mxu0 0
  %356 = vmatpush1.bf16.msra.mxu0 %v279
  %357 = vmatprep.subr.bf16.mxu0 0
  %358 = vmatpush1.bf16.msra.mxu0 %v280
  %359 = vmatprep.subr.bf16.mxu0 0
  %360 = vmatpush1.bf16.msra.mxu0 %v281
  %361 = vmatprep.subr.bf16.mxu0 0
  %362 = vmatpush1.bf16.msra.mxu0 %v282
  %363 = vmatprep.mubr.bf16.mxu0 %v124
  %364 = vmatmul.mubr.bf16.gmra.mrb[0].mxu0 %v123
  %v365 = vpop.f32.mrb[0].mxu0
  %v366 = vadd.f32 0.0, %v365
  %v367 = vpop.f32.mrb[0].mxu0
  %v368 = vpop.f32.mrb[0].mxu0
  %v369 = vadd.f32 0.0, %v368
  %v370 = vpop.f32.mrb[0].mxu0
  %371 = vmatprep.mubr.bf16.mxu0 %v128
  %372 = vmatmul.mubr.bf16.gmra.mrb[0].mxu0 %v127
  %v373 = vpop.f32.mrb[0].mxu0
  %v374 = vadd.f32 0.0, %v373
  %v375 = vpop.f32.mrb[0].mxu0
  %v376 = vpop.f32.mrb[0].mxu0
  %v377 = vadd.f32 0.0, %v376
  %v378 = vpop.f32.mrb[0].mxu0
  %379 = vdwg.mxu0
  %380 = vmatprep.subr.bf16.mxu0 0
  %381 = vmatpush1.bf16.msra.mxu0 %v283
  %382 = vmatprep.subr.bf16.mxu0 0
  %383 = vmatpush1.bf16.msra.mxu0 %v284
  %384 = vmatprep.subr.bf16.mxu0 0
  %385 = vmatpush1.bf16.msra.mxu0 %v285
  %386 = vmatprep.subr.bf16.mxu0 0
  %387 = vmatpush1.bf16.msra.mxu0 %v286
  %388 = vmatprep.subr.bf16.mxu0 0
  %389 = vmatpush1.bf16.msra.mxu0 %v287
  %390 = vmatprep.subr.bf16.mxu0 0
  %391 = vmatpush1.bf16.msra.mxu0 %v288
  %392 = vmatprep.subr.bf16.mxu0 0
  %393 = vmatpush1.bf16.msra.mxu0 %v289
  %394 = vmatprep.subr.bf16.mxu0 0
  %395 = vmatpush1.bf16.msra.mxu0 %v290
  %396 = vmatprep.subr.bf16.mxu0 0
  %397 = vmatpush1.bf16.msra.mxu0 %v291
  %398 = vmatprep.subr.bf16.mxu0 0
  %399 = vmatpush1.bf16.msra.mxu0 %v292
  %400 = vmatprep.subr.bf16.mxu0 0
  %401 = vmatpush1.bf16.msra.mxu0 %v293
  %402 = vmatprep.subr.bf16.mxu0 0
  %403 = vmatpush1.bf16.msra.mxu0 %v294
  %404 = vmatprep.subr.bf16.mxu0 0
  %405 = vmatpush1.bf16.msra.mxu0 %v295
  %406 = vmatprep.subr.bf16.mxu0 0
  %407 = vmatpush1.bf16.msra.mxu0 %v296
  %408 = vmatprep.subr.bf16.mxu0 0
  %409 = vmatpush1.bf16.msra.mxu0 %v297
  %410 = vmatprep.subr.bf16.mxu0 0
  %411 = vmatpush1.bf16.msra.mxu0 %v298
  %412 = vmatprep.mubr.bf16.mxu0 %v126
  %413 = vmatmul.mubr.bf16.gmra.mrb[0].mxu0 %v125
  %v414 = vpop.f32.mrb[0].mxu0
  %v415 = vadd.f32 %v366, %v414
  %v416 = vpop.f32.mrb[0].mxu0
  %v417 = vpop.f32.mrb[0].mxu0
  %v418 = vadd.f32 %v369, %v417
  %v419 = vpop.f32.mrb[0].mxu0
  %420 = vmatprep.mubr.bf16.mxu0 %v130
  %421 = vmatmul.mubr.bf16.gmra.mrb[0].mxu0 %v129
  %v422 = vpop.f32.mrb[0].mxu0
  %v423 = vadd.f32 %v374, %v422
  %v424 = vpop.f32.mrb[0].mxu0
  %v425 = vpop.f32.mrb[0].mxu0
  %v426 = vadd.f32 %v377, %v425
  %v427 = vpop.f32.mrb[0].mxu0
  %428 = vdwg.mxu0
  %v429 = vadd.f32 %v23, %v415
  %v430 = vadd.f32 %v24, %v418
  %v431 = vadd.f32 %v25, %v423
  %v432 = vadd.f32 %v26, %v426
  %433 = vst [vmem:[#allocation2] sm:$0xff] %v429
  %434 = vst [vmem:[#allocation2 + $0x8] sm:$0xff] %v430
  %435 = vst [vmem:[#allocation2 + $0x10] sm:$0xff] %v431
  %436 = vst [vmem:[#allocation2 + $0x18] sm:$0xff] %v432
  // Predicated region
  $region18: #{nlayer_discriminator_att_forward.17} parent=0 // pred_check
    %p437 = pneg %p15
  $region19: #{nlayer_discriminator_att_forward.17} parent=0 // pred_check_branch
    %439 = sbr.rel (%p437) target = $region21
  $region20: #{nlayer_discriminator_att_forward.17} parent=0 // pred_region
    %v440 = vld [vmem:[#allocation2] sm:$0xff]
    %v441 = vld [vmem:[#allocation2 + $0x8] sm:$0xff]
    %v442 = vld [vmem:[#allocation2 + $0x10] sm:$0xff]
    %v443 = vld [vmem:[#allocation2 + $0x18] sm:$0xff]
    %v444 = vld [vmem:[%s2] sm:$0x1]
    %v446 = vlaneseq
    %v447 = vshrl.u32 %v446, 7
    %v448 = vsub.s32 0, %v447
    %v449 = vrot.slane %v444, %v448
    %v451 = vadd.f32 %v440, %v449
    %v452 = vadd.f32 %v441, %v449
    %v453 = vadd.f32 %v442, %v449
    %v454 = vadd.f32 %v443, %v449
    %v455 = vpack.c.bf16 %v452, %v451
    %v456 = vpack.c.bf16 %v454, %v453
    %v459 = vunpack.c.l.b16 %v455
    %v460 = vunpack.c.h.b16 %v455
    %v461 = vunpack.c.l.b16 %v456
    %v462 = vunpack.c.h.b16 %v456
    %v463 = vpack.c.b16 %v459, %v459
    %v464 = vpack.c.b16 %v460, %v460
    %v465 = vpack.c.b16 %v461, %v461
    %v466 = vpack.c.b16 %v462, %v462
    %471 = vst [vmem:[%s3] sm:$0xf] %v463
    %472 = vst [vmem:[%s3 + $0x4] sm:$0xf] %v464
    %473 = vst [vmem:[%s3 + $0x8] sm:$0xf] %v465
    %474 = vst [vmem:[%s3 + $0xc] sm:$0xf] %v466
  $region21: #{nlayer_discriminator_att_forward.17} parent=0 // pred_fallthru
    _
  // Predicated region
  $region22: #{nlayer_discriminator_att_forward.17} parent=0 // pred_check
    _
  $region23: #{nlayer_discriminator_att_forward.17} parent=0 // pred_check_branch
    %476 = sbr.rel (0) target = $region25
  $region24: #{nlayer_discriminator_att_forward.17} parent=0 // pred_region
    _
  $region25: #{nlayer_discriminator_att_forward.17} parent=0 // pred_fallthru
    _
  // Predicated region
  $region26: #{nlayer_discriminator_att_forward.17} parent=0 // pred_check
    _
  $region27: #{nlayer_discriminator_att_forward.17} parent=0 // pred_check_branch
    %478 = sbr.rel (0) target = $region29
  $region28: #{nlayer_discriminator_att_forward.17} parent=0 // pred_region
    _
  $region29: #{nlayer_discriminator_att_forward.17} parent=0 // pred_fallthru
    _

// kernel: nlayer_discriminator_att_forward.19
$region0: #{nlayer_discriminator_att_forward.19}
  #allocation0 [shape = 'u32[]', space=smem, size = 0x4, offset = 0x4, fixed_abs, tag = 'smem constant byte address 0x4 - core index']
  #allocation1 [shape = 'u32[144,128]{1,0:T(1,128)}', space=vmem, size = 0x12000, scoped, tag = 'internal scratch']
  %s0 = inlined_call_operand.vmem [shape: bf16[32,128], index: 0, kind: input, shape index: {}]
  %s1 = inlined_call_operand.vmem [shape: f32[1,128], index: 1, kind: input, shape index: {}]
  %s2 = inlined_call_operand.vmem [shape: f32[1,128], index: 2, kind: input, shape index: {}]
  %s3 = inlined_call_operand.vmem [shape: bf16[32,128], index: 3, kind: output, shape index: {}]
  %s4 = sld [smem:[#allocation0]]
  $region22: #{nlayer_discriminator_att_forward.19} parent=0
    _
  %s6 = ssub.s32 1, %s4
  %s7 = scalar_select 0, %s6, %s4
  // Predicated region
  $region2: #{nlayer_discriminator_att_forward.19} parent=0 // pred_check
    _
  $region3: #{nlayer_discriminator_att_forward.19} parent=0 // pred_check_branch
    %9 = sbr.rel (0) target = $region5
  $region4: #{nlayer_discriminator_att_forward.19} parent=0 // pred_region
    _
  $region5: #{nlayer_discriminator_att_forward.19} parent=0 // pred_fallthru
    _
  // Predicated region
  $region6: #{nlayer_discriminator_att_forward.19} parent=0 // pred_check
    _
  $region7: #{nlayer_discriminator_att_forward.19} parent=0 // pred_check_branch
    %11 = sbr.rel (0) target = $region9
  $region8: #{nlayer_discriminator_att_forward.19} parent=0 // pred_region
    _
  $region9: #{nlayer_discriminator_att_forward.19} parent=0 // pred_fallthru
    _
  // Predicated region
  $region10: #{nlayer_discriminator_att_forward.19} parent=0 // pred_check
    _
  $region11: #{nlayer_discriminator_att_forward.19} parent=0 // pred_check_branch
    %13 = sbr.rel (0) target = $region13
  $region12: #{nlayer_discriminator_att_forward.19} parent=0 // pred_region
    _
  $region13: #{nlayer_discriminator_att_forward.19} parent=0 // pred_fallthru
    _
  %v14 = vld [vmem:[%s0] sm:$0xf]
  %v15 = vld [vmem:[%s0 + $0x4] sm:$0xf]
  %v16 = vld [vmem:[%s0 + $0x8] sm:$0xf]
  %v17 = vld [vmem:[%s0 + $0xc] sm:$0xf]
  %v18 = vunpack.c.l.bf16 %v14
  %v19 = vunpack.c.l.bf16 %v15
  %v20 = vunpack.c.l.bf16 %v16
  %v21 = vunpack.c.l.bf16 %v17
  %v22 = vld [vmem:[%s1] sm:$0x1]
  %v24 = vlaneseq
  %v25 = vshrl.u32 %v24, 7
  %v26 = vsub.s32 0, %v25
  %v27 = vrot.slane %v22, %v26
  %v29 = vmul.f32 %v18, %v27
  %v30 = vmul.f32 %v19, %v27
  %v31 = vmul.f32 %v20, %v27
  %v32 = vmul.f32 %v21, %v27
  %v33 = vld [vmem:[%s2] sm:$0x1]
  %v35 = vlaneseq
  %v36 = vshrl.u32 %v35, 7
  %v37 = vsub.s32 0, %v36
  %v38 = vrot.slane %v33, %v37
  %v40 = vadd.f32 %v29, %v38
  %v41 = vadd.f32 %v30, %v38
  %v42 = vadd.f32 %v31, %v38
  %v43 = vadd.f32 %v32, %v38
  %vm44 = vcmp.ge.f32.partialorder %v40, 0.0
  %vm45 = vcmp.ge.f32.partialorder %v41, 0.0
  %vm46 = vcmp.ge.f32.partialorder %v42, 0.0
  %vm47 = vcmp.ge.f32.partialorder %v43, 0.0
  %v48 = vmul.f32 %v40, 0.2
  %v49 = vmul.f32 %v41, 0.2
  %v50 = vmul.f32 %v42, 0.2
  %v51 = vmul.f32 %v43, 0.2
  %v52 = vsel %vm44, %v40, %v48
  %v53 = vsel %vm45, %v41, %v49
  %v54 = vsel %vm46, %v42, %v50
  %v55 = vsel %vm47, %v43, %v51
  %v56 = vpack.c.bf16 %v53, %v52
  %v57 = vpack.c.bf16 %v55, %v54
  %v60 = vunpack.c.l.b16 %v56
  %v61 = vunpack.c.h.b16 %v56
  %v62 = vunpack.c.l.b16 %v57
  %v63 = vunpack.c.h.b16 %v57
  %v64 = vpack.c.b16 %v60, %v60
  %v65 = vpack.c.b16 %v61, %v61
  %v66 = vpack.c.b16 %v62, %v62
  %v67 = vpack.c.b16 %v63, %v63
  %72 = vst [vmem:[%s3] sm:$0xf] %v64
  %73 = vst [vmem:[%s3 + $0x4] sm:$0xf] %v65
  %74 = vst [vmem:[%s3 + $0x8] sm:$0xf] %v66
  %75 = vst [vmem:[%s3 + $0xc] sm:$0xf] %v67
  // Predicated region
  $region14: #{nlayer_discriminator_att_forward.19} parent=0 // pred_check
    _
  $region15: #{nlayer_discriminator_att_forward.19} parent=0 // pred_check_branch
    %77 = sbr.rel (0) target = $region17
  $region16: #{nlayer_discriminator_att_forward.19} parent=0 // pred_region
    _
  $region17: #{nlayer_discriminator_att_forward.19} parent=0 // pred_fallthru
    _
  // Predicated region
  $region18: #{nlayer_discriminator_att_forward.19} parent=0 // pred_check
    _
  $region19: #{nlayer_discriminator_att_forward.19} parent=0 // pred_check_branch
    %79 = sbr.rel (0) target = $region21
  $region20: #{nlayer_discriminator_att_forward.19} parent=0 // pred_region
    _
  $region21: #{nlayer_discriminator_att_forward.19} parent=0 // pred_fallthru
    _

// kernel: nlayer_discriminator_att_forward.20
$region0: #{nlayer_discriminator_att_forward.20}
  #allocation0 [shape = 'u32[]', space=smem, size = 0x4, offset = 0x4, fixed_abs, tag = 'smem constant byte address 0x4 - core index']
  #allocation1 [shape = 'u32[144,128]{1,0:T(1,128)}', space=vmem, size = 0x12000, scoped, tag = 'internal scratch']
  #allocation2 [shape = 'f32[32,128]{1,0:T(8,128)}', space=vmem, size = 0x4000, scoped, tag = 'scratch operand']
  %s0 = inlined_call_operand.vmem [shape: bf16[32,128], index: 0, kind: input, shape index: {}]
  %s1 = inlined_call_operand.vmem [shape: bf16[128,128], index: 1, kind: input, shape index: {}]
  %s2 = inlined_call_operand.vmem [shape: f32[1,128], index: 2, kind: input, shape index: {}]
  %s3 = inlined_call_operand.vmem [shape: bf16[32,128], index: 3, kind: output, shape index: {}]
  %s4 = sld [smem:[#allocation0]]
  $region30: #{nlayer_discriminator_att_forward.20} parent=0
    _
  %s6 = ssub.s32 1, %s4
  %s7 = scalar_select 0, %s6, %s4
  // Predicated region
  $region2: #{nlayer_discriminator_att_forward.20} parent=0 // pred_check
    _
  $region3: #{nlayer_discriminator_att_forward.20} parent=0 // pred_check_branch
    %9 = sbr.rel (0) target = $region5
  $region4: #{nlayer_discriminator_att_forward.20} parent=0 // pred_region
    _
  $region5: #{nlayer_discriminator_att_forward.20} parent=0 // pred_fallthru
    _
  // Predicated region
  $region6: #{nlayer_discriminator_att_forward.20} parent=0 // pred_check
    _
  $region7: #{nlayer_discriminator_att_forward.20} parent=0 // pred_check_branch
    %11 = sbr.rel (0) target = $region9
  $region8: #{nlayer_discriminator_att_forward.20} parent=0 // pred_region
    _
  $region9: #{nlayer_discriminator_att_forward.20} parent=0 // pred_fallthru
    _
  // Predicated region
  $region10: #{nlayer_discriminator_att_forward.20} parent=0 // pred_check
    _
  $region11: #{nlayer_discriminator_att_forward.20} parent=0 // pred_check_branch
    %13 = sbr.rel (0) target = $region13
  $region12: #{nlayer_discriminator_att_forward.20} parent=0 // pred_region
    _
  $region13: #{nlayer_discriminator_att_forward.20} parent=0 // pred_fallthru
    _
  %p15 = scmp.eq.s32.totalorder 0, 0
  // Predicated region
  $region14: #{nlayer_discriminator_att_forward.20} parent=0 // pred_check
    %p16 = pneg %p15
  $region15: #{nlayer_discriminator_att_forward.20} parent=0 // pred_check_branch
    %18 = sbr.rel (%p16) target = $region17
  $region16: #{nlayer_discriminator_att_forward.20} parent=0 // pred_region
    %19 = vst [vmem:[#allocation2] sm:$0xff] 0.0
    %20 = vst [vmem:[#allocation2 + $0x8] sm:$0xff] 0.0
    %21 = vst [vmem:[#allocation2 + $0x10] sm:$0xff] 0.0
    %22 = vst [vmem:[#allocation2 + $0x18] sm:$0xff] 0.0
  $region17: #{nlayer_discriminator_att_forward.20} parent=0 // pred_fallthru
    _
  %v23 = vld [vmem:[#allocation2] sm:$0xff]
  %v24 = vld [vmem:[#allocation2 + $0x8] sm:$0xff]
  %v25 = vld [vmem:[#allocation2 + $0x10] sm:$0xff]
  %v26 = vld [vmem:[#allocation2 + $0x18] sm:$0xff]
  %v27 = vld [vmem:[%s0] sm:$0xf]
  %v28 = vld [vmem:[%s0 + $0x4] sm:$0xf]
  %v29 = vld [vmem:[%s0 + $0x8] sm:$0xf]
  %v30 = vld [vmem:[%s0 + $0xc] sm:$0xf]
  %v31 = vld [vmem:[%s1] sm:$0xf]
  %v32 = vld [vmem:[%s1 + $0x4] sm:$0xf]
  %v33 = vld [vmem:[%s1 + $0x8] sm:$0xf]
  %v34 = vld [vmem:[%s1 + $0xc] sm:$0xf]
  %v35 = vld [vmem:[%s1 + $0x10] sm:$0xf]
  %v36 = vld [vmem:[%s1 + $0x14] sm:$0xf]
  %v37 = vld [vmem:[%s1 + $0x18] sm:$0xf]
  %v38 = vld [vmem:[%s1 + $0x1c] sm:$0xf]
  %v39 = vld [vmem:[%s1 + $0x20] sm:$0xf]
  %v40 = vld [vmem:[%s1 + $0x24] sm:$0xf]
  %v41 = vld [vmem:[%s1 + $0x28] sm:$0xf]
  %v42 = vld [vmem:[%s1 + $0x2c] sm:$0xf]
  %v43 = vld [vmem:[%s1 + $0x30] sm:$0xf]
  %v44 = vld [vmem:[%s1 + $0x34] sm:$0xf]
  %v45 = vld [vmem:[%s1 + $0x38] sm:$0xf]
  %v46 = vld [vmem:[%s1 + $0x3c] sm:$0xf]
  %v51 = vunpack.c.l.b16 %v27
  %v52 = vunpack.c.l.b16 %v28
  %v53 = vunpack.c.l.b16 %v29
  %v54 = vunpack.c.l.b16 %v30
  %v55 = vpack.c.b16 %v52, %v51
  %v56 = vpack.c.b16 %v54, %v53
  %v75 = vunpack.c.l.b16 %v31
  %v76 = vunpack.c.l.b16 %v32
  %v77 = vunpack.c.l.b16 %v33
  %v78 = vunpack.c.l.b16 %v34
  %v79 = vunpack.c.l.b16 %v35
  %v80 = vunpack.c.l.b16 %v36
  %v81 = vunpack.c.l.b16 %v37
  %v82 = vunpack.c.l.b16 %v38
  %v83 = vunpack.c.l.b16 %v39
  %v84 = vunpack.c.l.b16 %v40
  %v85 = vunpack.c.l.b16 %v41
  %v86 = vunpack.c.l.b16 %v42
  %v87 = vunpack.c.l.b16 %v43
  %v88 = vunpack.c.l.b16 %v44
  %v89 = vunpack.c.l.b16 %v45
  %v90 = vunpack.c.l.b16 %v46
  %v91 = vpack.c.b16 %v76, %v75
  %v92 = vpack.c.b16 %v78, %v77
  %v93 = vpack.c.b16 %v80, %v79
  %v94 = vpack.c.b16 %v82, %v81
  %v95 = vpack.c.b16 %v84, %v83
  %v96 = vpack.c.b16 %v86, %v85
  %v97 = vpack.c.b16 %v88, %v87
  %v98 = vpack.c.b16 %v90, %v89
  %107 = vmatprep.subr.bf16.mxu0 0
  %108 = vmatpush1.bf16.msra.mxu0 %v91
  %109 = vmatprep.subr.bf16.mxu0 0
  %110 = vmatpush1.bf16.msra.mxu0 %v92
  %111 = vmatprep.subr.bf16.mxu0 0
  %112 = vmatpush1.bf16.msra.mxu0 %v93
  %113 = vmatprep.subr.bf16.mxu0 0
  %114 = vmatpush1.bf16.msra.mxu0 %v94
  %115 = vmatprep.subr.bf16.mxu0 0
  %116 = vmatpush1.bf16.msra.mxu0 %v95
  %117 = vmatprep.subr.bf16.mxu0 0
  %118 = vmatpush1.bf16.msra.mxu0 %v96
  %119 = vmatprep.subr.bf16.mxu0 0
  %120 = vmatpush1.bf16.msra.mxu0 %v97
  %121 = vmatprep.subr.bf16.mxu0 0
  %122 = vmatpush1.bf16.msra.mxu0 %v98
  %123 = vmatprep.subr.bf16.mxu0 0
  %124 = vmatpush1.bf16.msra.mxu0 0
  %125 = vmatprep.subr.bf16.mxu0 0
  %126 = vmatpush1.bf16.msra.mxu0 0
  %127 = vmatprep.subr.bf16.mxu0 0
  %128 = vmatpush1.bf16.msra.mxu0 0
  %129 = vmatprep.subr.bf16.mxu0 0
  %130 = vmatpush1.bf16.msra.mxu0 0
  %131 = vmatprep.subr.bf16.mxu0 0
  %132 = vmatpush1.bf16.msra.mxu0 0
  %133 = vmatprep.subr.bf16.mxu0 0
  %134 = vmatpush1.bf16.msra.mxu0 0
  %135 = vmatprep.subr.bf16.mxu0 0
  %136 = vmatpush1.bf16.msra.mxu0 0
  %137 = vmatprep.subr.bf16.mxu0 0
  %138 = vmatpush1.bf16.msra.mxu0 0
  %139 = vmatprep.mubr.bf16.mxu0 0
  %140 = vmatmul.mubr.bf16.gmra.mrb[0].mxu0 %v55
  %v141 = vpop.f32.mrb[0].mxu0
  %v142 = vadd.f32 0.0, %v141
  %v143 = vpop.f32.mrb[0].mxu0
  %v144 = vpop.f32.mrb[0].mxu0
  %v145 = vadd.f32 0.0, %v144
  %v146 = vpop.f32.mrb[0].mxu0
  %147 = vmatprep.mubr.bf16.mxu0 0
  %148 = vmatmul.mubr.bf16.gmra.mrb[0].mxu0 %v56
  %v149 = vpop.f32.mrb[0].mxu0
  %v150 = vadd.f32 0.0, %v149
  %v151 = vpop.f32.mrb[0].mxu0
  %v152 = vpop.f32.mrb[0].mxu0
  %v153 = vadd.f32 0.0, %v152
  %v154 = vpop.f32.mrb[0].mxu0
  %155 = vdwg.mxu0
  %v156 = vadd.f32 %v23, %v142
  %v157 = vadd.f32 %v24, %v145
  %v158 = vadd.f32 %v25, %v150
  %v159 = vadd.f32 %v26, %v153
  %160 = vst [vmem:[#allocation2] sm:$0xff] %v156
  %161 = vst [vmem:[#allocation2 + $0x8] sm:$0xff] %v157
  %162 = vst [vmem:[#allocation2 + $0x10] sm:$0xff] %v158
  %163 = vst [vmem:[#allocation2 + $0x18] sm:$0xff] %v159
  // Predicated region
  $region18: #{nlayer_discriminator_att_forward.20} parent=0 // pred_check
    %p164 = pneg %p15
  $region19: #{nlayer_discriminator_att_forward.20} parent=0 // pred_check_branch
    %166 = sbr.rel (%p164) target = $region21
  $region20: #{nlayer_discriminator_att_forward.20} parent=0 // pred_region
    %v167 = vld [vmem:[#allocation2] sm:$0xff]
    %v168 = vld [vmem:[#allocation2 + $0x8] sm:$0xff]
    %v169 = vld [vmem:[#allocation2 + $0x10] sm:$0xff]
    %v170 = vld [vmem:[#allocation2 + $0x18] sm:$0xff]
    %v171 = vld [vmem:[%s2] sm:$0x1]
    %v173 = vlaneseq
    %v174 = vshrl.u32 %v173, 7
    %v175 = vsub.s32 0, %v174
    %v176 = vrot.slane %v171, %v175
    %v178 = vadd.f32 %v167, %v176
    %v179 = vadd.f32 %v168, %v176
    %v180 = vadd.f32 %v169, %v176
    %v181 = vadd.f32 %v170, %v176
    %v182 = vpack.c.bf16 %v179, %v178
    %v183 = vpack.c.bf16 %v181, %v180
    %v186 = vunpack.c.l.b16 %v182
    %v187 = vunpack.c.h.b16 %v182
    %v188 = vunpack.c.l.b16 %v183
    %v189 = vunpack.c.h.b16 %v183
    %v190 = vpack.c.b16 %v186, %v186
    %v191 = vpack.c.b16 %v187, %v187
    %v192 = vpack.c.b16 %v188, %v188
    %v193 = vpack.c.b16 %v189, %v189
    %198 = vst [vmem:[%s3] sm:$0xf] %v190
    %199 = vst [vmem:[%s3 + $0x4] sm:$0xf] %v191
    %200 = vst [vmem:[%s3 + $0x8] sm:$0xf] %v192
    %201 = vst [vmem:[%s3 + $0xc] sm:$0xf] %v193
  $region21: #{nlayer_discriminator_att_forward.20} parent=0 // pred_fallthru
    _
  // Predicated region
  $region22: #{nlayer_discriminator_att_forward.20} parent=0 // pred_check
    _
  $region23: #{nlayer_discriminator_att_forward.20} parent=0 // pred_check_branch
    %203 = sbr.rel (0) target = $region25
  $region24: #{nlayer_discriminator_att_forward.20} parent=0 // pred_region
    _
  $region25: #{nlayer_discriminator_att_forward.20} parent=0 // pred_fallthru
    _
  // Predicated region
  $region26: #{nlayer_discriminator_att_forward.20} parent=0 // pred_check
    _
  $region27: #{nlayer_discriminator_att_forward.20} parent=0 // pred_check_branch
    %205 = sbr.rel (0) target = $region29
  $region28: #{nlayer_discriminator_att_forward.20} parent=0 // pred_region
    _
  $region29: #{nlayer_discriminator_att_forward.20} parent=0 // pred_fallthru
    _

// kernel: nlayer_discriminator_att_forward.21
$region0: #{nlayer_discriminator_att_forward.21}
  #allocation0 [shape = 'u32[]', space=smem, size = 0x4, offset = 0x4, fixed_abs, tag = 'smem constant byte address 0x4 - core index']
  #allocation1 [shape = 'u32[144,128]{1,0:T(1,128)}', space=vmem, size = 0x12000, scoped, tag = 'internal scratch']
  #allocation2 [shape = 'f32[1,1]{1,0:T(1,128)S(1)}', space=vmem, size = 0x200, scoped, tag = 'scoped memory for nlayer_discriminator_att_forward.21']
  %s0 = inlined_call_operand.vmem [shape: bf16[2,16,8], index: 0, kind: input, shape index: {}]
  %s1 = inlined_call_operand.vmem [shape: bf16[2,16,8], index: 1, kind: input, shape index: {}]
  %s2 = inlined_call_operand.vmem [shape: bf16[2,16,64], index: 2, kind: input, shape index: {}]
  %s3 = inlined_call_operand.vmem [shape: bf16[2,16,64], index: 3, kind: input, shape index: {}]
  %s4 = inlined_call_operand.<no memory space> [shape: f32[1,1], index: 4, kind: input, shape index: {}]
  %s5 = inlined_call_operand.vmem [shape: bf16[2,16,64], index: 5, kind: output, shape index: {}]
  %s6 = sld [smem:[#allocation0]]
  $region53: #{nlayer_discriminator_att_forward.21} parent=0
    _
  %s8 = ssub.s32 1, %s6
  %s9 = scalar_select 0, %s8, %s6
  %v10 = vstv %s4
  %11 = vst [vmem:[#allocation2] sm:$0x1] %v10
  loop: start=0, step=1, limit=4
  $region2: #{nlayer_discriminator_att_forward.21} parent=0 // loop_pre_header
    _
  $region3: #{nlayer_discriminator_att_forward.21} parent=0 // loop_header
    %s13 = sphi 0, %s17
    %p14 = scmp.ge.s32.totalorder %s13, 4
    %s23 = sphi 0, %s25
    %s26 = sphi 0, %s23
    %s27 = sphi 0, %s26
    %s43 = sphi 0, %s27
    %s49 = sphi 0, %s51
    %s52 = sphi 0, %s49
    %s53 = sphi 0, %s52
    %s69 = sphi 0, %s53
    %s75 = sphi 0, %s77
    %s78 = sphi 0, %s75
    %s79 = sphi 0, %s78
    %s95 = sphi 0, %s79
    %s101 = sphi 0, %s103
    %s104 = sphi 0, %s101
    %s105 = sphi 0, %s104
    %s121 = sphi 0, %s105
    %s125 = sphi 0, %s125
    %s127 = sphi 0, %s125
    %s128 = sphi 0, %s127
    %s142 = sphi 0, %s128
    %s148 = sphi 0, %s150
    %s151 = sphi 0, %s148
    %s152 = sphi 0, %s151
    %s168 = sphi 0, %s152
  $region4: #{nlayer_discriminator_att_forward.21} parent=0 // loop_header_branch
    %16 = sbr.rel (%p14) target = $region8
  $region5: #{nlayer_discriminator_att_forward.21} parent=0 // loop_body
    %s18 = ssub.s32 %s13, 1
    %s19 = ssub.s32 %s13, 2
    %s20 = sadd.s32 %s13, 1
    %s21 = ssub.s32 %s13, %s20
    %p22 = scmp.eq.s32.totalorder %s21, 0
    %s24 = sadd.s32 %s23, 1
    %s25 = scalar_select %p22, %s23, %s24
    %p28 = pneg %p22
    %p29 = scmp.eq.s32.totalorder %s13, 1
    %p30 = por %p28, %p29
    %p31 = scmp.ne.s32.totalorder %s23, %s26
    %p32 = scmp.eq.s32.totalorder %s13, 0
    %p33 = por %p31, %p32
    %p34 = scmp.ne.s32.totalorder %s23, %s26
    %p35 = scmp.eq.s32.totalorder %s18, 1
    %p36 = por %p34, %p35
    %p37 = scmp.ne.s32.totalorder %s26, %s27
    %p38 = scmp.eq.s32.totalorder %s18, 0
    %p39 = por %p37, %p38
    %p40 = scmp.ne.s32.totalorder %s26, %s27
    %p41 = scmp.eq.s32.totalorder %s19, 1
    %p42 = por %p40, %p41
    %p44 = scmp.ne.s32.totalorder %s27, %s43
    %p45 = scmp.eq.s32.totalorder %s19, 0
    %p46 = por %p44, %p45
    %s47 = ssub.s32 %s13, %s20
    %p48 = scmp.eq.s32.totalorder %s47, 0
    %s50 = sadd.s32 %s49, 1
    %s51 = scalar_select %p48, %s49, %s50
    %p54 = pneg %p48
    %p55 = scmp.eq.s32.totalorder %s13, 1
    %p56 = por %p54, %p55
    %p57 = scmp.ne.s32.totalorder %s49, %s52
    %p58 = scmp.eq.s32.totalorder %s13, 0
    %p59 = por %p57, %p58
    %p60 = scmp.ne.s32.totalorder %s49, %s52
    %p61 = scmp.eq.s32.totalorder %s18, 1
    %p62 = por %p60, %p61
    %p63 = scmp.ne.s32.totalorder %s52, %s53
    %p64 = scmp.eq.s32.totalorder %s18, 0
    %p65 = por %p63, %p64
    %p66 = scmp.ne.s32.totalorder %s52, %s53
    %p67 = scmp.eq.s32.totalorder %s19, 1
    %p68 = por %p66, %p67
    %p70 = scmp.ne.s32.totalorder %s53, %s69
    %p71 = scmp.eq.s32.totalorder %s19, 0
    %p72 = por %p70, %p71
    %s73 = ssub.s32 %s13, %s20
    %p74 = scmp.eq.s32.totalorder %s73, 0
    %s76 = sadd.s32 %s75, 1
    %s77 = scalar_select %p74, %s75, %s76
    %p80 = pneg %p74
    %p81 = scmp.eq.s32.totalorder %s13, 1
    %p82 = por %p80, %p81
    %p83 = scmp.ne.s32.totalorder %s75, %s78
    %p84 = scmp.eq.s32.totalorder %s13, 0
    %p85 = por %p83, %p84
    %p86 = scmp.ne.s32.totalorder %s75, %s78
    %p87 = scmp.eq.s32.totalorder %s18, 1
    %p88 = por %p86, %p87
    %p89 = scmp.ne.s32.totalorder %s78, %s79
    %p90 = scmp.eq.s32.totalorder %s18, 0
    %p91 = por %p89, %p90
    %p92 = scmp.ne.s32.totalorder %s78, %s79
    %p93 = scmp.eq.s32.totalorder %s19, 1
    %p94 = por %p92, %p93
    %p96 = scmp.ne.s32.totalorder %s79, %s95
    %p97 = scmp.eq.s32.totalorder %s19, 0
    %p98 = por %p96, %p97
    %s99 = ssub.s32 %s13, %s20
    %p100 = scmp.eq.s32.totalorder %s99, 0
    %s102 = sadd.s32 %s101, 1
    %s103 = scalar_select %p100, %s101, %s102
    %p106 = pneg %p100
    %p107 = scmp.eq.s32.totalorder %s13, 1
    %p108 = por %p106, %p107
    %p109 = scmp.ne.s32.totalorder %s101, %s104
    %p110 = scmp.eq.s32.totalorder %s13, 0
    %p111 = por %p109, %p110
    %p112 = scmp.ne.s32.totalorder %s101, %s104
    %p113 = scmp.eq.s32.totalorder %s18, 1
    %p114 = por %p112, %p113
    %p115 = scmp.ne.s32.totalorder %s104, %s105
    %p116 = scmp.eq.s32.totalorder %s18, 0
    %p117 = por %p115, %p116
    %p118 = scmp.ne.s32.totalorder %s104, %s105
    %p119 = scmp.eq.s32.totalorder %s19, 1
    %p120 = por %p118, %p119
    %p122 = scmp.ne.s32.totalorder %s105, %s121
    %p123 = scmp.eq.s32.totalorder %s19, 0
    %p124 = por %p122, %p123
    %s126 = sadd.s32 %s125, 1
    %p129 = scmp.eq.s32.totalorder %s13, 1
    %p130 = scmp.ne.s32.totalorder %s125, %s127
    %p131 = scmp.eq.s32.totalorder %s13, 0
    %p132 = por %p130, %p131
    %p133 = scmp.ne.s32.totalorder %s125, %s127
    %p134 = scmp.eq.s32.totalorder %s18, 1
    %p135 = por %p133, %p134
    %p136 = scmp.ne.s32.totalorder %s127, %s128
    %p137 = scmp.eq.s32.totalorder %s18, 0
    %p138 = por %p136, %p137
    %p139 = scmp.ne.s32.totalorder %s127, %s128
    %p140 = scmp.eq.s32.totalorder %s19, 1
    %p141 = por %p139, %p140
    %p143 = scmp.ne.s32.totalorder %s128, %s142
    %p144 = scmp.eq.s32.totalorder %s19, 0
    %p145 = por %p143, %p144
    %s146 = ssub.s32 %s13, %s20
    %p147 = scmp.eq.s32.totalorder %s146, 0
    %s149 = sadd.s32 %s148, 1
    %s150 = scalar_select %p147, %s148, %s149
    %p153 = pneg %p147
    %p154 = scmp.eq.s32.totalorder %s13, 1
    %p155 = por %p153, %p154
    %p156 = scmp.ne.s32.totalorder %s148, %s151
    %p157 = scmp.eq.s32.totalorder %s13, 0
    %p158 = por %p156, %p157
    %p159 = scmp.ne.s32.totalorder %s148, %s151
    %p160 = scmp.eq.s32.totalorder %s18, 1
    %p161 = por %p159, %p160
    %p162 = scmp.ne.s32.totalorder %s151, %s152
    %p163 = scmp.eq.s32.totalorder %s18, 0
    %p164 = por %p162, %p163
    %p165 = scmp.ne.s32.totalorder %s151, %s152
    %p166 = scmp.eq.s32.totalorder %s19, 1
    %p167 = por %p165, %p166
    %p169 = scmp.ne.s32.totalorder %s152, %s168
    %p170 = scmp.eq.s32.totalorder %s19, 0
    %p171 = por %p169, %p170
    %p172 = scmp.le.s32.totalorder 1, %s13
    %p173 = scmp.lt.s32.totalorder %s13, 3
    %p174 = pnand %p172, %p173
    %p175 = pneg %p174
    // Predicated region
    $region9: #{nlayer_discriminator_att_forward.21} parent=5 // pred_check
      _
    $region10: #{nlayer_discriminator_att_forward.21} parent=5 // pred_check_branch
      %177 = sbr.rel (%p174) target = $region12
    $region11: #{nlayer_discriminator_att_forward.21} parent=5 // pred_region
      %s178 = ssub.s32 %s13, 1
      // Predicated region
      $region13: #{nlayer_discriminator_att_forward.21} parent=11 // pred_check
        %p179 = pneg %p138
      $region14: #{nlayer_discriminator_att_forward.21} parent=11 // pred_check_branch
        %181 = sbr.rel (%p179) target = $region16
      $region15: #{nlayer_discriminator_att_forward.21} parent=11 // pred_region
        _
      $region16: #{nlayer_discriminator_att_forward.21} parent=11 // pred_fallthru
        _
    $region12: #{nlayer_discriminator_att_forward.21} parent=5 // pred_fallthru
      _
    %p182 = scmp.lt.s32.totalorder %s13, 2
    // Predicated region
    $region17: #{nlayer_discriminator_att_forward.21} parent=5 // pred_check
      %p183 = pneg %p182
    $region18: #{nlayer_discriminator_att_forward.21} parent=5 // pred_check_branch
      %185 = sbr.rel (%p183) target = $region20
    $region19: #{nlayer_discriminator_att_forward.21} parent=5 // pred_region
      // Predicated region
      $region21: #{nlayer_discriminator_att_forward.21} parent=19 // pred_check
        %p186 = pneg %p33
      $region22: #{nlayer_discriminator_att_forward.21} parent=19 // pred_check_branch
        %188 = sbr.rel (%p186) target = $region24
      $region23: #{nlayer_discriminator_att_forward.21} parent=19 // pred_region
        %p189 = scmp.lt.s32.totalorder %s13, 1
        %s190 = scalar_select %p189, %s13, 1
        %s191 = smul.addr %s190, 2
        %s192 = smul.addr %s191, 4
        %s193 = scalar_lea.vmem %s0, %s192
      $region24: #{nlayer_discriminator_att_forward.21} parent=19 // pred_fallthru
        _
      // Predicated region
      $region25: #{nlayer_discriminator_att_forward.21} parent=19 // pred_check
        %p194 = pneg %p59
      $region26: #{nlayer_discriminator_att_forward.21} parent=19 // pred_check_branch
        %196 = sbr.rel (%p194) target = $region28
      $region27: #{nlayer_discriminator_att_forward.21} parent=19 // pred_region
        %p197 = scmp.lt.s32.totalorder %s13, 1
        %s198 = scalar_select %p197, %s13, 1
        %s199 = smul.addr %s198, 2
        %s200 = smul.addr %s199, 4
        %s201 = scalar_lea.vmem %s1, %s200
      $region28: #{nlayer_discriminator_att_forward.21} parent=19 // pred_fallthru
        _
      // Predicated region
      $region29: #{nlayer_discriminator_att_forward.21} parent=19 // pred_check
        %p202 = pneg %p85
      $region30: #{nlayer_discriminator_att_forward.21} parent=19 // pred_check_branch
        %204 = sbr.rel (%p202) target = $region32
      $region31: #{nlayer_discriminator_att_forward.21} parent=19 // pred_region
        %p205 = scmp.lt.s32.totalorder %s13, 1
        %s206 = scalar_select %p205, %s13, 1
        %s207 = smul.addr %s206, 2
        %s208 = smul.addr %s207, 4
        %s209 = scalar_lea.vmem %s2, %s208
      $region32: #{nlayer_discriminator_att_forward.21} parent=19 // pred_fallthru
        _
      // Predicated region
      $region33: #{nlayer_discriminator_att_forward.21} parent=19 // pred_check
        %p210 = pneg %p111
      $region34: #{nlayer_discriminator_att_forward.21} parent=19 // pred_check_branch
        %212 = sbr.rel (%p210) target = $region36
      $region35: #{nlayer_discriminator_att_forward.21} parent=19 // pred_region
        %p213 = scmp.lt.s32.totalorder %s13, 1
        %s214 = scalar_select %p213, %s13, 1
        %s215 = smul.addr %s214, 2
        %s216 = smul.addr %s215, 4
        %s217 = scalar_lea.vmem %s3, %s216
      $region36: #{nlayer_discriminator_att_forward.21} parent=19 // pred_fallthru
        _
    $region20: #{nlayer_discriminator_att_forward.21} parent=5 // pred_fallthru
      _
    %p218 = scmp.le.s32.totalorder 1, %s13
    %p219 = scmp.lt.s32.totalorder %s13, 3
    %p220 = pnand %p218, %p219
    %p221 = pneg %p220
    // Predicated region
    $region37: #{nlayer_discriminator_att_forward.21} parent=5 // pred_check
      _
    $region38: #{nlayer_discriminator_att_forward.21} parent=5 // pred_check_branch
      %223 = sbr.rel (%p220) target = $region40
    $region39: #{nlayer_discriminator_att_forward.21} parent=5 // pred_region
      %s224 = ssub.s32 %s13, 1
      %p225 = scmp.lt.s32.totalorder %s18, 1
      %s226 = scalar_select %p225, %s18, 1
      %s227 = smul.addr %s226, 2
      %s228 = smul.addr %s227, 4
      %s229 = scalar_lea.vmem %s0, %s228
      %p230 = pneg %p39
      %p231 = pneg %p36
      %p232 = scmp.lt.s32.totalorder %s18, 1
      %s233 = scalar_select %p232, %s18, 1
      %s234 = smul.addr %s233, 2
      %s235 = smul.addr %s234, 4
      %s236 = scalar_lea.vmem %s1, %s235
      %p237 = pneg %p65
      %p238 = pneg %p62
      %p239 = scmp.lt.s32.totalorder %s18, 1
      %s240 = scalar_select %p239, %s18, 1
      %s241 = smul.addr %s240, 2
      %s242 = smul.addr %s241, 4
      %s243 = scalar_lea.vmem %s2, %s242
      %p244 = pneg %p91
      %p245 = pneg %p88
      %p246 = scmp.lt.s32.totalorder %s18, 1
      %s247 = scalar_select %p246, %s18, 1
      %s248 = smul.addr %s247, 2
      %s249 = smul.addr %s248, 4
      %s250 = scalar_lea.vmem %s3, %s249
      %p251 = pneg %p117
      %p252 = pneg %p114
      %p253 = pneg %p138
      %p254 = pneg %p135
      %p255 = pneg %p164
      %p256 = pneg %p161
      %p257 = scmp.lt.s32.totalorder %s18, 1
      %s258 = scalar_select %p257, %s18, 1
      %s259 = smul.addr %s258, 2
      %s260 = smul.addr %s259, 4
      %s261 = scalar_lea.vmem %s5, %s260
      %p262 = scmp.lt.s32.totalorder %s18, 1
      %s263 = scalar_select %p262, %s18, 1
      %s264 = smul.addr %s263, 2
      %s265 = smul.addr %s264, 4
      %s266 = scalar_lea.vmem %s0, %s265
      %p267 = scmp.lt.s32.totalorder %s18, 1
      %s268 = scalar_select %p267, %s18, 1
      %s269 = smul.addr %s268, 2
      %s270 = smul.addr %s269, 4
      %s271 = scalar_lea.vmem %s1, %s270
      %p272 = scmp.lt.s32.totalorder %s18, 1
      %s273 = scalar_select %p272, %s18, 1
      %s274 = smul.addr %s273, 2
      %s275 = smul.addr %s274, 4
      %s276 = scalar_lea.vmem %s2, %s275
      %p277 = scmp.lt.s32.totalorder %s18, 1
      %s278 = scalar_select %p277, %s18, 1
      %s279 = smul.addr %s278, 2
      %s280 = smul.addr %s279, 4
      %s281 = scalar_lea.vmem %s3, %s280
      %p282 = scmp.lt.s32.totalorder %s18, 1
      %s283 = scalar_select %p282, %s18, 1
      %s284 = smul.addr %s283, 2
      %s285 = smul.addr %s284, 4
      %s286 = scalar_lea.vmem %s5, %s285
      %v288 = vld [vmem:[%s266] sm:$0xf]
      %v289 = vld [vmem:[%s266 + $0x4] sm:$0xf]
      %v290 = vld [vmem:[%s271] sm:$0xf]
      %v291 = vld [vmem:[%s271 + $0x4] sm:$0xf]
      %v294 = vunpack.c.l.b16 %v288
      %v295 = vunpack.c.l.b16 %v289
      %v296 = vpack.c.b16 %v295, %v294
      %v299 = vunpack.c.l.b16 %v290
      %v300 = vunpack.c.l.b16 %v291
      %v301 = vpack.c.b16 %v300, %v299
      %vm302 = vcmask 64512
      %v304 = vsel %vm302, %v296, 0
      %v307 = vsel %vm302, %v301, 0
      %309 = vmatprep.subr.bf16.mxu0 0
      %310 = vmatpush1.bf16.xpose.msra.mxu0 %v307
      %311 = vmatprep.subr.bf16.mxu0 0
      %312 = vmatpush1.bf16.xpose.msra.mxu0 0
      %313 = vmatprep.subr.bf16.mxu0 0
      %314 = vmatpush1.bf16.xpose.msra.mxu0 0
      %315 = vmatprep.subr.bf16.mxu0 0
      %316 = vmatpush1.bf16.xpose.msra.mxu0 0
      %317 = vmatprep.subr.bf16.mxu0 0
      %318 = vmatpush1.bf16.xpose.msra.mxu0 0
      %319 = vmatprep.subr.bf16.mxu0 0
      %320 = vmatpush1.bf16.xpose.msra.mxu0 0
      %321 = vmatprep.subr.bf16.mxu0 0
      %322 = vmatpush1.bf16.xpose.msra.mxu0 0
      %323 = vmatprep.subr.bf16.mxu0 0
      %324 = vmatpush1.bf16.xpose.msra.mxu0 0
      %325 = vmatprep.subr.bf16.mxu0 0
      %326 = vmatpush1.bf16.xpose.msra.mxu0 0
      %327 = vmatprep.subr.bf16.mxu0 0
      %328 = vmatpush1.bf16.xpose.msra.mxu0 0
      %329 = vmatprep.subr.bf16.mxu0 0
      %330 = vmatpush1.bf16.xpose.msra.mxu0 0
      %331 = vmatprep.subr.bf16.mxu0 0
      %332 = vmatpush1.bf16.xpose.msra.mxu0 0
      %333 = vmatprep.subr.bf16.mxu0 0
      %334 = vmatpush1.bf16.xpose.msra.mxu0 0
      %335 = vmatprep.subr.bf16.mxu0 0
      %336 = vmatpush1.bf16.xpose.msra.mxu0 0
      %337 = vmatprep.subr.bf16.mxu0 0
      %338 = vmatpush1.bf16.xpose.msra.mxu0 0
      %339 = vmatprep.subr.bf16.mxu0 0
      %340 = vmatpush1.bf16.xpose.msra.mxu0 0
      %341 = vmatprep.mubr.bf16.mxu0 0
      %342 = vmatmul.mubr.bf16.gmra.mrb[0].mxu0 %v304
      %v343 = vpop.f32.mrb[0].mxu0
      %v344 = vadd.f32 0.0, %v343
      %v345 = vpop.f32.mrb[0].mxu0
      %v346 = vpop.f32.mrb[0].mxu0
      %v347 = vadd.f32 0.0, %v346
      %v348 = vpop.f32.mrb[0].mxu0
      %349 = vdwg.mxu0
      %vm350 = vcmask 130048
      %v351 = vsel %vm350, %v344, -inf
      %352 = vmax.xlane.f32.xlu0 %v351
      %v353 = vpop.xlane.xlu0 %352
      %v354 = vsel %vm350, %v347, -inf
      %355 = vmax.xlane.f32.xlu0 %v354
      %v356 = vpop.xlane.xlu0 %355
      %v357 = vsub.f32 %v344, %v353
      %v358 = vsub.f32 %v347, %v356
      %v359 = vmul.f32 %v357, 1.442695
      %v360 = vpow.pop %v359
      %v361 = vmul.f32 %v358, 1.442695
      %v362 = vpow.pop %v361
      %v363 = vsel %vm350, %v360, 0.0
      %364 = vadd.xlane.f32.xlu0 %v363
      %v365 = vpop.xlane.xlu0 %364
      %v366 = vsel %vm350, %v362, 0.0
      %367 = vadd.xlane.f32.xlu0 %v366
      %v368 = vpop.xlane.xlu0 %367
      %v369 = vrcp.pop %v365
      %v370 = vmul.f32 %v360, %v369
      %v371 = vrcp.pop %v368
      %v372 = vmul.f32 %v362, %v371
      %v373 = vld [vmem:[%s276] sm:$0xf]
      %v374 = vld [vmem:[%s276 + $0x4] sm:$0xf]
      %v375 = vunpack.c.l.bf16 %v373
      %v376 = vunpack.c.l.bf16 %v374
      %v378 = vsel %vm350, %v370, 0
      %v381 = vsel %vm350, %v372, 0
      %383 = vmatprep.subr.mxu0 0.0
      %384 = vmatpush1.msra.mxu0 %v375
      %385 = vmatprep.subr.mxu0 0.0
      %386 = vmatpush1.msra.mxu0 %v376
      %387 = vmatprep.subr.mxu0 0.0
      %388 = vmatpush1.msra.mxu0 0.0
      %389 = vmatprep.subr.mxu0 0.0
      %390 = vmatpush1.msra.mxu0 0.0
      %391 = vmatprep.subr.mxu0 0.0
      %392 = vmatpush1.msra.mxu0 0.0
      %393 = vmatprep.subr.mxu0 0.0
      %394 = vmatpush1.msra.mxu0 0.0
      %395 = vmatprep.subr.mxu0 0.0
      %396 = vmatpush1.msra.mxu0 0.0
      %397 = vmatprep.subr.mxu0 0.0
      %398 = vmatpush1.msra.mxu0 0.0
      %399 = vmatprep.subr.mxu0 0.0
      %400 = vmatpush1.msra.mxu0 0.0
      %401 = vmatprep.subr.mxu0 0.0
      %402 = vmatpush1.msra.mxu0 0.0
      %403 = vmatprep.subr.mxu0 0.0
      %404 = vmatpush1.msra.mxu0 0.0
      %405 = vmatprep.subr.mxu0 0.0
      %406 = vmatpush1.msra.mxu0 0.0
      %407 = vmatprep.subr.mxu0 0.0
      %408 = vmatpush1.msra.mxu0 0.0
      %409 = vmatprep.subr.mxu0 0.0
      %410 = vmatpush1.msra.mxu0 0.0
      %411 = vmatprep.subr.mxu0 0.0
      %412 = vmatpush1.msra.mxu0 0.0
      %413 = vmatprep.subr.mxu0 0.0
      %414 = vmatpush1.msra.mxu0 0.0
      %415 = vmatprep.subr.mxu0 0.0
      %416 = vmatpush1.msra.mxu0 0.0
      %417 = vmatprep.subr.mxu0 0.0
      %418 = vmatpush1.msra.mxu0 0.0
      %419 = vmatprep.subr.mxu0 0.0
      %420 = vmatpush1.msra.mxu0 0.0
      %421 = vmatprep.subr.mxu0 0.0
      %422 = vmatpush1.msra.mxu0 0.0
      %423 = vmatprep.subr.mxu0 0.0
      %424 = vmatpush1.msra.mxu0 0.0
      %425 = vmatprep.subr.mxu0 0.0
      %426 = vmatpush1.msra.mxu0 0.0
      %427 = vmatprep.subr.mxu0 0.0
      %428 = vmatpush1.msra.mxu0 0.0
      %429 = vmatprep.subr.mxu0 0.0
      %430 = vmatpush1.msra.mxu0 0.0
      %431 = vmatprep.subr.mxu0 0.0
      %432 = vmatpush1.msra.mxu0 0.0
      %433 = vmatprep.subr.mxu0 0.0
      %434 = vmatpush1.msra.mxu0 0.0
      %435 = vmatprep.subr.mxu0 0.0
      %436 = vmatpush1.msra.mxu0 0.0
      %437 = vmatprep.subr.mxu0 0.0
      %438 = vmatpush1.msra.mxu0 0.0
      %439 = vmatprep.subr.mxu0 0.0
      %440 = vmatpush1.msra.mxu0 0.0
      %441 = vmatprep.subr.mxu0 0.0
      %442 = vmatpush1.msra.mxu0 0.0
      %443 = vmatprep.subr.mxu0 0.0
      %444 = vmatpush1.msra.mxu0 0.0
      %445 = vmatprep.subr.mxu0 0.0
      %446 = vmatpush1.msra.mxu0 0.0
      %447 = vmatprep.mubr.f32.mxu0 0.0
      %448 = vmatmul.mubr.f32.gmra.mrb[0].mxu0 %v378
      %v449 = vpop.f32.mrb[0].mxu0
      %v450 = vadd.f32 0.0, %v449
      %v451 = vpop.f32.mrb[0].mxu0
      %452 = vmatprep.mubr.f32.mxu0 0.0
      %453 = vmatmul.mubr.f32.gmra.mrb[0].mxu0 %v381
      %v454 = vpop.f32.mrb[0].mxu0
      %v455 = vadd.f32 0.0, %v454
      %v456 = vpop.f32.mrb[0].mxu0
      %457 = vdwg.mxu0
      %v458 = vld [vmem:[#allocation2] sm:$0x1]
      %v460 = vlaneseq
      %v461 = vshrl.u32 %v460, 7
      %v462 = vsub.s32 0, %v461
      %v463 = vrot.slane %v458, %v462
      %464 = vset.pattern.permute.xlu0 0
      %465 = vperm.xlu0 %464, %v463
      %v466 = vpop.permute.xlu0 %465
      %v468 = vmul.f32 %v466, %v450
      %v469 = vmul.f32 %v466, %v455
      %v470 = vld [vmem:[%s281] sm:$0xf]
      %v471 = vld [vmem:[%s281 + $0x4] sm:$0xf]
      %v472 = vunpack.c.l.bf16 %v470
      %v473 = vunpack.c.l.bf16 %v471
      %v474 = vadd.f32 %v468, %v472
      %v475 = vadd.f32 %v469, %v473
      %v476 = vpack.c.bf16 %v475, %v474
      %v478 = vunpack.c.l.b16 %v476
      %v479 = vunpack.c.h.b16 %v476
      %v480 = vpack.c.b16 %v478, %v478
      %v481 = vpack.c.b16 %v479, %v479
      %vm484 = vcmask 519168
      %485 = vst.msk [vmem:[%s286] sm:$0xf] %vm484, %v480
      %486 = vst.msk [vmem:[%s286 + $0x4] sm:$0xf] %vm484, %v481
      %p487 = scmp.lt.s32.totalorder %s18, 1
      %s488 = scalar_select %p487, %s18, 1
      %s489 = smul.addr %s488, 2
      %s490 = smul.addr %s489, 4
      %s491 = scalar_lea.vmem %s5, %s490
      // Predicated region
      $region41: #{nlayer_discriminator_att_forward.21} parent=39 // pred_check
        %p492 = pneg %p161
      $region42: #{nlayer_discriminator_att_forward.21} parent=39 // pred_check_branch
        %494 = sbr.rel (%p492) target = $region44
      $region43: #{nlayer_discriminator_att_forward.21} parent=39 // pred_region
        _
      $region44: #{nlayer_discriminator_att_forward.21} parent=39 // pred_fallthru
        _
    $region40: #{nlayer_discriminator_att_forward.21} parent=5 // pred_fallthru
      _
    %p495 = scmp.le.s32.totalorder 2, %s13
    // Predicated region
    $region45: #{nlayer_discriminator_att_forward.21} parent=5 // pred_check
      %p496 = pneg %p495
    $region46: #{nlayer_discriminator_att_forward.21} parent=5 // pred_check_branch
      %498 = sbr.rel (%p496) target = $region48
    $region47: #{nlayer_discriminator_att_forward.21} parent=5 // pred_region
      %s499 = ssub.s32 %s13, 2
      // Predicated region
      $region49: #{nlayer_discriminator_att_forward.21} parent=47 // pred_check
        %p500 = pneg %p167
      $region50: #{nlayer_discriminator_att_forward.21} parent=47 // pred_check_branch
        %502 = sbr.rel (%p500) target = $region52
      $region51: #{nlayer_discriminator_att_forward.21} parent=47 // pred_region
        %p503 = scmp.lt.s32.totalorder %s19, 1
        %s504 = scalar_select %p503, %s19, 1
        %s505 = smul.addr %s504, 2
        %s506 = smul.addr %s505, 4
        %s507 = scalar_lea.vmem %s5, %s506
      $region52: #{nlayer_discriminator_att_forward.21} parent=47 // pred_fallthru
        _
    $region48: #{nlayer_discriminator_att_forward.21} parent=5 // pred_fallthru
      _
  $region6: #{nlayer_discriminator_att_forward.21} parent=0 // loop_footer
    %s17 = sadd.s32 1, %s13
  $region7: #{nlayer_discriminator_att_forward.21} parent=0 // loop_footer_branch
    %12 = sbr.rel target = $region3
  $region8: #{nlayer_discriminator_att_forward.21} parent=0 // loop_exit
    _

// kernel: nlayer_discriminator_att_forward.23
$region0: #{nlayer_discriminator_att_forward.23}
  #allocation0 [shape = 'u32[]', space=smem, size = 0x4, offset = 0x4, fixed_abs, tag = 'smem constant byte address 0x4 - core index']
  #allocation1 [shape = 'u32[144,128]{1,0:T(1,128)}', space=vmem, size = 0x12000, scoped, tag = 'internal scratch']
  %s0 = inlined_call_operand.vmem [shape: bf16[24,128], index: 0, kind: input, shape index: {}]
  %s1 = inlined_call_operand.vmem [shape: f32[1,128], index: 1, kind: output, shape index: {0}]
  %s2 = inlined_call_operand.vmem [shape: f32[1,128], index: 2, kind: output, shape index: {1}]
  %3 = xla_tuple %s1, %s2
  %s4 = sld [smem:[#allocation0]]
  $region26: #{nlayer_discriminator_att_forward.23} parent=0
    _
  %s6 = ssub.s32 1, %s4
  %s7 = scalar_select 0, %s6, %s4
  // Predicated region
  $region2: #{nlayer_discriminator_att_forward.23} parent=0 // pred_check
    _
  $region3: #{nlayer_discriminator_att_forward.23} parent=0 // pred_check_branch
    %9 = sbr.rel (0) target = $region5
  $region4: #{nlayer_discriminator_att_forward.23} parent=0 // pred_region
    _
  $region5: #{nlayer_discriminator_att_forward.23} parent=0 // pred_fallthru
    _
  %p10 = scmp.eq.s32.totalorder 0, 0
  // Predicated region
  $region6: #{nlayer_discriminator_att_forward.23} parent=0 // pred_check
    %p11 = pneg %p10
  $region7: #{nlayer_discriminator_att_forward.23} parent=0 // pred_check_branch
    %13 = sbr.rel (%p11) target = $region9
  $region8: #{nlayer_discriminator_att_forward.23} parent=0 // pred_region
    %14 = vst [vmem:[%s1] sm:$0x1] 0.0
    %15 = vst [vmem:[%s2] sm:$0x1] 0.0
  $region9: #{nlayer_discriminator_att_forward.23} parent=0 // pred_fallthru
    _
  %v16 = vld [vmem:[%s0] sm:$0xf]
  %v17 = vld [vmem:[%s0 + $0x4] sm:$0xf]
  %v18 = vld [vmem:[%s0 + $0x8] sm:$0xf]
  %v19 = vunpack.c.l.bf16 %v16
  %v20 = vunpack.c.l.bf16 %v17
  %v21 = vunpack.c.l.bf16 %v18
  %v22 = vld [vmem:[%s1] sm:$0x1]
  %v23 = vadd.f32 %v19, %v20
  %v24 = vadd.f32 %v23, %v21
  %v25 = vrot.slane %v24, 4
  %v26 = vadd.f32 %v24, %v25
  %v27 = vrot.slane %v26, 2
  %v28 = vadd.f32 %v26, %v27
  %v29 = vrot.slane %v28, 1
  %v30 = vadd.f32 %v28, %v29
  %v31 = vadd.f32 %v22, %v30
  %32 = vst [vmem:[%s1] sm:$0x1] %v31
  %v33 = vld [vmem:[%s2] sm:$0x1]
  %v34 = vmul.f32 %v19, %v19
  %v35 = vmul.f32 %v20, %v20
  %v36 = vmul.f32 %v21, %v21
  %v37 = vadd.f32 %v34, %v35
  %v38 = vadd.f32 %v37, %v36
  %v39 = vrot.slane %v38, 4
  %v40 = vadd.f32 %v38, %v39
  %v41 = vrot.slane %v40, 2
  %v42 = vadd.f32 %v40, %v41
  %v43 = vrot.slane %v42, 1
  %v44 = vadd.f32 %v42, %v43
  %v45 = vadd.f32 %v33, %v44
  %46 = vst [vmem:[%s2] sm:$0x1] %v45
  // Predicated region
  $region10: #{nlayer_discriminator_att_forward.23} parent=0 // pred_check
    _
  $region11: #{nlayer_discriminator_att_forward.23} parent=0 // pred_check_branch
    %48 = sbr.rel (0) target = $region13
  $region12: #{nlayer_discriminator_att_forward.23} parent=0 // pred_region
    _
  $region13: #{nlayer_discriminator_att_forward.23} parent=0 // pred_fallthru
    _
  // Predicated region
  $region14: #{nlayer_discriminator_att_forward.23} parent=0 // pred_check
    _
  $region15: #{nlayer_discriminator_att_forward.23} parent=0 // pred_check_branch
    %50 = sbr.rel (0) target = $region17
  $region16: #{nlayer_discriminator_att_forward.23} parent=0 // pred_region
    _
  $region17: #{nlayer_discriminator_att_forward.23} parent=0 // pred_fallthru
    _
  // Predicated region
  $region18: #{nlayer_discriminator_att_forward.23} parent=0 // pred_check
    _
  $region19: #{nlayer_discriminator_att_forward.23} parent=0 // pred_check_branch
    %52 = sbr.rel (0) target = $region21
  $region20: #{nlayer_discriminator_att_forward.23} parent=0 // pred_region
    _
  $region21: #{nlayer_discriminator_att_forward.23} parent=0 // pred_fallthru
    _
  // Predicated region
  $region22: #{nlayer_discriminator_att_forward.23} parent=0 // pred_check
    _
  $region23: #{nlayer_discriminator_att_forward.23} parent=0 // pred_check_branch
    %54 = sbr.rel (0) target = $region25
  $region24: #{nlayer_discriminator_att_forward.23} parent=0 // pred_region
    _
  $region25: #{nlayer_discriminator_att_forward.23} parent=0 // pred_fallthru
    _

// kernel: nlayer_discriminator_att_forward.22
$region0: #{nlayer_discriminator_att_forward.22}
  #allocation0 [shape = 'u32[]', space=smem, size = 0x4, offset = 0x4, fixed_abs, tag = 'smem constant byte address 0x4 - core index']
  #allocation1 [shape = 'u32[144,128]{1,0:T(1,128)}', space=vmem, size = 0x12000, scoped, tag = 'internal scratch']
  #allocation2 [shape = 'f32[24,128]{1,0:T(8,128)}', space=vmem, size = 0x3000, scoped, tag = 'scratch operand']
  %s0 = inlined_call_operand.vmem [shape: bf16[24,1024], index: 0, kind: input, shape index: {}]
  %s1 = inlined_call_operand.vmem [shape: bf16[1024,128], index: 1, kind: input, shape index: {}]
  %s2 = inlined_call_operand.vmem [shape: f32[1,128], index: 2, kind: input, shape index: {}]
  %s3 = inlined_call_operand.vmem [shape: bf16[24,128], index: 3, kind: output, shape index: {}]
  %s4 = sld [smem:[#allocation0]]
  $region76: #{nlayer_discriminator_att_forward.22} parent=0
    _
  %s6 = ssub.s32 1, %s4
  %s7 = scalar_select 0, %s6, %s4
  $region1: #{nlayer_discriminator_att_forward.22} parent=0
    #allocation3 [shape = 'u8[49152]{0}', space=vmem, size = 0xc000, scoped, tag = 'input window, operand 0']
    loop: start=0, step=1, limit=4
    $region2: #{nlayer_discriminator_att_forward.22} parent=1 // loop_pre_header
      _
    $region3: #{nlayer_discriminator_att_forward.22} parent=1 // loop_header
      %s9 = sphi 0, %s13
      %p10 = scmp.ge.s32.totalorder %s9, 4
      %s16 = sphi 0, %s35
      %s17 = sphi 0, %s31
      %s18 = sphi 0, %s27
      %s19 = sphi 0, %s16
      %s20 = sphi 0, %s17
      %s21 = sphi 0, %s18
      %s22 = sphi 0, %s19
      %s23 = sphi 0, %s20
      %s24 = sphi 0, %s21
      %s40 = sphi 0, %s42
      %s43 = sphi 0, %s40
      %s44 = sphi 0, %s43
      %s60 = sphi 0, %s44
      %s68 = sphi 0, %s70
      %s71 = sphi 0, %s68
      %s72 = sphi 0, %s71
      %s88 = sphi 0, %s72
      %s94 = sphi 0, %s96
      %s97 = sphi 0, %s94
      %s98 = sphi 0, %s97
      %s114 = sphi 0, %s98
      %s122 = sphi 0, %s124
      %s125 = sphi 0, %s122
      %s126 = sphi 0, %s125
      %s142 = sphi 0, %s126
    $region4: #{nlayer_discriminator_att_forward.22} parent=1 // loop_header_branch
      %12 = sbr.rel (%p10) target = $region8
    $region5: #{nlayer_discriminator_att_forward.22} parent=1 // loop_body
      %s14 = ssub.s32 %s9, 1
      %s15 = ssub.s32 %s9, 2
      %s25 = sadd.s32 1, %s18
      %p26 = scmp.ge.s32.totalorder %s25, 2
      %s27 = scalar_select %p26, 0, %s25
      %s28 = sadd.s32 1, %s17
      %s29 = scalar_select %p26, %s28, %s17
      %p30 = scmp.ge.s32.totalorder %s29, 1
      %s31 = scalar_select %p30, 0, %s29
      %s32 = sadd.s32 1, %s16
      %s33 = scalar_select %p30, %s32, %s16
      %p34 = scmp.ge.s32.totalorder %s33, 1
      %s35 = scalar_select %p34, 0, %s33
      %s36 = ssub.s32 %s16, %s35
      %s37 = ssub.s32 %s18, %s27
      %s38 = sor.u32 %s36, %s37
      %p39 = scmp.eq.s32.totalorder %s38, 0
      %s41 = sadd.s32 %s40, 1
      %s42 = scalar_select %p39, %s40, %s41
      %p45 = pneg %p39
      %p46 = scmp.eq.s32.totalorder %s9, 1
      %p47 = por %p45, %p46
      %p48 = scmp.ne.s32.totalorder %s40, %s43
      %p49 = scmp.eq.s32.totalorder %s9, 0
      %p50 = por %p48, %p49
      %p51 = scmp.ne.s32.totalorder %s40, %s43
      %p52 = scmp.eq.s32.totalorder %s14, 1
      %p53 = por %p51, %p52
      %p54 = scmp.ne.s32.totalorder %s43, %s44
      %p55 = scmp.eq.s32.totalorder %s14, 0
      %p56 = por %p54, %p55
      %p57 = scmp.ne.s32.totalorder %s43, %s44
      %p58 = scmp.eq.s32.totalorder %s15, 1
      %p59 = por %p57, %p58
      %p61 = scmp.ne.s32.totalorder %s44, %s60
      %p62 = scmp.eq.s32.totalorder %s15, 0
      %p63 = por %p61, %p62
      %s64 = ssub.s32 %s18, %s27
      %s65 = ssub.s32 %s17, %s31
      %s66 = sor.u32 %s64, %s65
      %p67 = scmp.eq.s32.totalorder %s66, 0
      %s69 = sadd.s32 %s68, 1
      %s70 = scalar_select %p67, %s68, %s69
      %p73 = pneg %p67
      %p74 = scmp.eq.s32.totalorder %s9, 1
      %p75 = por %p73, %p74
      %p76 = scmp.ne.s32.totalorder %s68, %s71
      %p77 = scmp.eq.s32.totalorder %s9, 0
      %p78 = por %p76, %p77
      %p79 = scmp.ne.s32.totalorder %s68, %s71
      %p80 = scmp.eq.s32.totalorder %s14, 1
      %p81 = por %p79, %p80
      %p82 = scmp.ne.s32.totalorder %s71, %s72
      %p83 = scmp.eq.s32.totalorder %s14, 0
      %p84 = por %p82, %p83
      %p85 = scmp.ne.s32.totalorder %s71, %s72
      %p86 = scmp.eq.s32.totalorder %s15, 1
      %p87 = por %p85, %p86
      %p89 = scmp.ne.s32.totalorder %s72, %s88
      %p90 = scmp.eq.s32.totalorder %s15, 0
      %p91 = por %p89, %p90
      %s92 = ssub.s32 %s17, %s31
      %p93 = scmp.eq.s32.totalorder %s92, 0
      %s95 = sadd.s32 %s94, 1
      %s96 = scalar_select %p93, %s94, %s95
      %p99 = pneg %p93
      %p100 = scmp.eq.s32.totalorder %s9, 1
      %p101 = por %p99, %p100
      %p102 = scmp.ne.s32.totalorder %s94, %s97
      %p103 = scmp.eq.s32.totalorder %s9, 0
      %p104 = por %p102, %p103
      %p105 = scmp.ne.s32.totalorder %s94, %s97
      %p106 = scmp.eq.s32.totalorder %s14, 1
      %p107 = por %p105, %p106
      %p108 = scmp.ne.s32.totalorder %s97, %s98
      %p109 = scmp.eq.s32.totalorder %s14, 0
      %p110 = por %p108, %p109
      %p111 = scmp.ne.s32.totalorder %s97, %s98
      %p112 = scmp.eq.s32.totalorder %s15, 1
      %p113 = por %p111, %p112
      %p115 = scmp.ne.s32.totalorder %s98, %s114
      %p116 = scmp.eq.s32.totalorder %s15, 0
      %p117 = por %p115, %p116
      %s118 = ssub.s32 %s16, %s35
      %s119 = ssub.s32 %s17, %s31
      %s120 = sor.u32 %s118, %s119
      %p121 = scmp.eq.s32.totalorder %s120, 0
      %s123 = sadd.s32 %s122, 1
      %s124 = scalar_select %p121, %s122, %s123
      %p127 = pneg %p121
      %p128 = scmp.eq.s32.totalorder %s9, 1
      %p129 = por %p127, %p128
      %p130 = scmp.ne.s32.totalorder %s122, %s125
      %p131 = scmp.eq.s32.totalorder %s9, 0
      %p132 = por %p130, %p131
      %p133 = scmp.ne.s32.totalorder %s122, %s125
      %p134 = scmp.eq.s32.totalorder %s14, 1
      %p135 = por %p133, %p134
      %p136 = scmp.ne.s32.totalorder %s125, %s126
      %p137 = scmp.eq.s32.totalorder %s14, 0
      %p138 = por %p136, %p137
      %p139 = scmp.ne.s32.totalorder %s125, %s126
      %p140 = scmp.eq.s32.totalorder %s15, 1
      %p141 = por %p139, %p140
      %p143 = scmp.ne.s32.totalorder %s126, %s142
      %p144 = scmp.eq.s32.totalorder %s15, 0
      %p145 = por %p143, %p144
      %p146 = scmp.le.s32.totalorder 1, %s9
      %p147 = scmp.lt.s32.totalorder %s9, 3
      %p148 = pnand %p146, %p147
      %p149 = pneg %p148
      // Predicated region
      $region9: #{nlayer_discriminator_att_forward.22} parent=5 // pred_check
        _
      $region10: #{nlayer_discriminator_att_forward.22} parent=5 // pred_check_branch
        %151 = sbr.rel (%p148) target = $region12
      $region11: #{nlayer_discriminator_att_forward.22} parent=5 // pred_region
        %s152 = ssub.s32 %s9, 1
        // Predicated region
        $region13: #{nlayer_discriminator_att_forward.22} parent=11 // pred_check
          %p153 = pneg %p110
        $region14: #{nlayer_discriminator_att_forward.22} parent=11 // pred_check_branch
          %155 = sbr.rel (%p153) target = $region16
        $region15: #{nlayer_discriminator_att_forward.22} parent=11 // pred_region
          %p156 = scmp.lt.s32.totalorder %s20, 0
          %s157 = scalar_select %p156, %s20, 0
          %s158 = scalar_lea.vmem %s2, %s157
        $region16: #{nlayer_discriminator_att_forward.22} parent=11 // pred_fallthru
          _
      $region12: #{nlayer_discriminator_att_forward.22} parent=5 // pred_fallthru
        _
      %p159 = scmp.lt.s32.totalorder %s9, 2
      // Predicated region
      $region17: #{nlayer_discriminator_att_forward.22} parent=5 // pred_check
        %p160 = pneg %p159
      $region18: #{nlayer_discriminator_att_forward.22} parent=5 // pred_check_branch
        %162 = sbr.rel (%p160) target = $region20
      $region19: #{nlayer_discriminator_att_forward.22} parent=5 // pred_region
        // Predicated region
        $region21: #{nlayer_discriminator_att_forward.22} parent=19 // pred_check
          %p163 = pneg %p50
        $region22: #{nlayer_discriminator_att_forward.22} parent=19 // pred_check_branch
          %165 = sbr.rel (%p163) target = $region24
        $region23: #{nlayer_discriminator_att_forward.22} parent=19 // pred_region
          %s166 = sand.u32 %s40, 1
          %s167 = sand.u32 %s40, 1
          %s168 = smul.addr %s167, 48
          %s169 = scalar_lea.vmem [#allocation3], %s168
          %s170 = smul.u32 3, %s16
          %s171 = smul.u32 4, %s18
          %s172 = smul.addr %s170, 8
          %s173 = sadd.s32 %s171, %s172
          %s174 = smul.addr %s173, 4
          %s175 = scalar_lea.vmem %s0, %s174
          // Predicated region
          $region25: #{nlayer_discriminator_att_forward.22} parent=23 // pred_check
            _
          $region26: #{nlayer_discriminator_att_forward.22} parent=23 // pred_check_branch
            %177 = sbr.rel (0) target = $region28
          $region27: #{nlayer_discriminator_att_forward.22} parent=23 // pred_region
            // Predicated region
            $region29: #{nlayer_discriminator_att_forward.22} parent=27 // pred_check
              _
            $region30: #{nlayer_discriminator_att_forward.22} parent=27 // pred_check_branch
              %179 = sbr.rel (0) target = $region32
            $region31: #{nlayer_discriminator_att_forward.22} parent=27 // pred_region
              loop: start=0, step=1, limit=1
              $region33: #{nlayer_discriminator_att_forward.22} parent=31 // loop_pre_header
                _
              $region34: #{nlayer_discriminator_att_forward.22} parent=31 // loop_header
                %s181 = sphi 0, %s185
                %p182 = scmp.ge.s32.totalorder %s181, 1
                %s186 = sphi %s175, %s175
                %s187 = sphi %s169, %s169
              $region35: #{nlayer_discriminator_att_forward.22} parent=31 // loop_header_branch
                %184 = sbr.rel (%p182) target = $region39
              $region36: #{nlayer_discriminator_att_forward.22} parent=31 // loop_body
                %v188 = vld [vmem:[%s186] sm:$0xff]
                %189 = vst [vmem:[%s187] sm:$0xff] %v188
                %v190 = vld [vmem:[%s186 + $0x8] sm:$0xff]
                %191 = vst [vmem:[%s187 + $0x8] sm:$0xff] %v190
                %v192 = vld [vmem:[%s186 + $0x20] sm:$0xff]
                %193 = vst [vmem:[%s187 + $0x10] sm:$0xff] %v192
                %v194 = vld [vmem:[%s186 + $0x28] sm:$0xff]
                %195 = vst [vmem:[%s187 + $0x18] sm:$0xff] %v194
                %v196 = vld [vmem:[%s186 + $0x40] sm:$0xff]
                %197 = vst [vmem:[%s187 + $0x20] sm:$0xff] %v196
                %v198 = vld [vmem:[%s186 + $0x48] sm:$0xff]
                %199 = vst [vmem:[%s187 + $0x28] sm:$0xff] %v198
              $region37: #{nlayer_discriminator_att_forward.22} parent=31 // loop_footer
                %s185 = sadd.s32 1, %s181
              $region38: #{nlayer_discriminator_att_forward.22} parent=31 // loop_footer_branch
                %180 = sbr.rel target = $region34
              $region39: #{nlayer_discriminator_att_forward.22} parent=31 // loop_exit
                _
            $region32: #{nlayer_discriminator_att_forward.22} parent=27 // pred_fallthru
              _
            // Predicated region
            $region40: #{nlayer_discriminator_att_forward.22} parent=27 // pred_check
              _
            $region41: #{nlayer_discriminator_att_forward.22} parent=27 // pred_check_branch
              %201 = sbr.rel target = $region43
            $region42: #{nlayer_discriminator_att_forward.22} parent=27 // pred_region
              _
            $region43: #{nlayer_discriminator_att_forward.22} parent=27 // pred_fallthru
              _
          $region28: #{nlayer_discriminator_att_forward.22} parent=23 // pred_fallthru
            _
          %202 = vnop
        $region24: #{nlayer_discriminator_att_forward.22} parent=19 // pred_fallthru
          _
        // Predicated region
        $region44: #{nlayer_discriminator_att_forward.22} parent=19 // pred_check
          %p203 = pneg %p78
        $region45: #{nlayer_discriminator_att_forward.22} parent=19 // pred_check_branch
          %205 = sbr.rel (%p203) target = $region47
        $region46: #{nlayer_discriminator_att_forward.22} parent=19 // pred_region
          %s206 = smul.u32 64, %s18
          %p207 = scmp.lt.s32.totalorder %s206, 127
          %s208 = scalar_select %p207, %s206, 127
          %p209 = scmp.lt.s32.totalorder %s17, 0
          %s210 = scalar_select %p209, %s17, 0
          %s211 = sadd.s32 %s210, %s208
          %s212 = smul.addr %s211, 4
          %s213 = scalar_lea.vmem %s1, %s212
          %s214 = smul.u32 64, %s18
        $region47: #{nlayer_discriminator_att_forward.22} parent=19 // pred_fallthru
          _
      $region20: #{nlayer_discriminator_att_forward.22} parent=5 // pred_fallthru
        _
      %p215 = scmp.le.s32.totalorder 1, %s9
      %p216 = scmp.lt.s32.totalorder %s9, 3
      %p217 = pnand %p215, %p216
      %p218 = pneg %p217
      // Predicated region
      $region48: #{nlayer_discriminator_att_forward.22} parent=5 // pred_check
        _
      $region49: #{nlayer_discriminator_att_forward.22} parent=5 // pred_check_branch
        %220 = sbr.rel (%p217) target = $region51
      $region50: #{nlayer_discriminator_att_forward.22} parent=5 // pred_region
        %s221 = ssub.s32 %s9, 1
        %s222 = sand.u32 %s43, 1
        %s223 = sand.u32 %s43, 1
        %s224 = smul.addr %s223, 48
        %s225 = scalar_lea.vmem [#allocation3], %s224
        // Predicated region
        $region52: #{nlayer_discriminator_att_forward.22} parent=50 // pred_check
          %p226 = pneg %p56
        $region53: #{nlayer_discriminator_att_forward.22} parent=50 // pred_check_branch
          %228 = sbr.rel (%p226) target = $region55
        $region54: #{nlayer_discriminator_att_forward.22} parent=50 // pred_region
          _
        $region55: #{nlayer_discriminator_att_forward.22} parent=50 // pred_fallthru
          _
        %s229 = sand.u32 %s43, 1
        %s230 = sand.u32 %s43, 1
        %s231 = smul.addr %s230, 48
        %s232 = scalar_lea.vmem [#allocation3], %s231
        %p233 = pneg %p56
        %p234 = pneg %p53
        %s235 = smul.u32 64, %s21
        %p236 = scmp.lt.s32.totalorder %s235, 127
        %s237 = scalar_select %p236, %s235, 127
        %p238 = scmp.lt.s32.totalorder %s20, 0
        %s239 = scalar_select %p238, %s20, 0
        %s240 = sadd.s32 %s239, %s237
        %s241 = smul.addr %s240, 4
        %s242 = scalar_lea.vmem %s1, %s241
        %p243 = pneg %p84
        %p244 = pneg %p81
        %p245 = scmp.lt.s32.totalorder %s20, 0
        %s246 = scalar_select %p245, %s20, 0
        %s247 = scalar_lea.vmem %s2, %s246
        %p248 = pneg %p110
        %p249 = pneg %p107
        %p250 = pneg %p138
        %p251 = pneg %p135
        %s252 = smul.u32 3, %s19
        %p253 = scmp.lt.s32.totalorder %s252, 2
        %s254 = scalar_select %p253, %s252, 2
        %p255 = scmp.lt.s32.totalorder %s20, 0
        %s256 = scalar_select %p255, %s20, 0
        %s257 = sadd.s32 %s256, %s254
        %s258 = smul.addr %s257, 4
        %s259 = scalar_lea.vmem %s3, %s258
        %s260 = smul.u32 3, %s19
        %s261 = smul.u32 4, %s21
        %s262 = smul.u32 64, %s21
        %p263 = scmp.lt.s32.totalorder %s262, 127
        %s264 = scalar_select %p263, %s262, 127
        %p265 = scmp.lt.s32.totalorder %s20, 0
        %s266 = scalar_select %p265, %s20, 0
        %s267 = sadd.s32 %s266, %s264
        %s268 = smul.addr %s267, 4
        %s269 = scalar_lea.vmem %s1, %s268
        %s270 = smul.u32 64, %s21
        %p271 = scmp.lt.s32.totalorder %s20, 0
        %s272 = scalar_select %p271, %s20, 0
        %s273 = scalar_lea.vmem %s2, %s272
        %s274 = smul.u32 3, %s19
        %p275 = scmp.lt.s32.totalorder %s274, 2
        %s276 = scalar_select %p275, %s274, 2
        %p277 = scmp.lt.s32.totalorder %s20, 0
        %s278 = scalar_select %p277, %s20, 0
        %s279 = sadd.s32 %s278, %s276
        %s280 = smul.addr %s279, 4
        %s281 = scalar_lea.vmem %s3, %s280
        %s282 = smul.u32 3, %s19
        %p284 = scmp.eq.s32.totalorder %s21, 0
        // Predicated region
        $region56: #{nlayer_discriminator_att_forward.22} parent=50 // pred_check
          %p285 = pneg %p284
        $region57: #{nlayer_discriminator_att_forward.22} parent=50 // pred_check_branch
          %287 = sbr.rel (%p285) target = $region59
        $region58: #{nlayer_discriminator_att_forward.22} parent=50 // pred_region
          %288 = vst [vmem:[#allocation2] sm:$0xff] 0.0
          %289 = vst [vmem:[#allocation2 + $0x8] sm:$0xff] 0.0
          %290 = vst [vmem:[#allocation2 + $0x10] sm:$0xff] 0.0
        $region59: #{nlayer_discriminator_att_forward.22} parent=50 // pred_fallthru
          _
        %v291 = vld [vmem:[#allocation2] sm:$0xff]
        %v292 = vld [vmem:[#allocation2 + $0x8] sm:$0xff]
        %v293 = vld [vmem:[#allocation2 + $0x10] sm:$0xff]
        %v294 = vld [vmem:[%s225] sm:$0xff]
        %v295 = vld [vmem:[%s225 + $0x8] sm:$0xff]
        %v296 = vld [vmem:[%s225 + $0x10] sm:$0xff]
        %v297 = vld [vmem:[%s225 + $0x18] sm:$0xff]
        %v298 = vld [vmem:[%s225 + $0x20] sm:$0xff]
        %v299 = vld [vmem:[%s225 + $0x28] sm:$0xff]
        %v300 = vld [vmem:[%s269] sm:$0xf]
        %v301 = vld [vmem:[%s269 + $0x4] sm:$0xf]
        %v302 = vld [vmem:[%s269 + $0x8] sm:$0xf]
        %v303 = vld [vmem:[%s269 + $0xc] sm:$0xf]
        %v304 = vld [vmem:[%s269 + $0x10] sm:$0xf]
        %v305 = vld [vmem:[%s269 + $0x14] sm:$0xf]
        %v306 = vld [vmem:[%s269 + $0x18] sm:$0xf]
        %v307 = vld [vmem:[%s269 + $0x1c] sm:$0xf]
        %v308 = vld [vmem:[%s269 + $0x20] sm:$0xf]
        %v309 = vld [vmem:[%s269 + $0x24] sm:$0xf]
        %v310 = vld [vmem:[%s269 + $0x28] sm:$0xf]
        %v311 = vld [vmem:[%s269 + $0x2c] sm:$0xf]
        %v312 = vld [vmem:[%s269 + $0x30] sm:$0xf]
        %v313 = vld [vmem:[%s269 + $0x34] sm:$0xf]
        %v314 = vld [vmem:[%s269 + $0x38] sm:$0xf]
        %v315 = vld [vmem:[%s269 + $0x3c] sm:$0xf]
        %v316 = vld [vmem:[%s269 + $0x40] sm:$0xf]
        %v317 = vld [vmem:[%s269 + $0x44] sm:$0xf]
        %v318 = vld [vmem:[%s269 + $0x48] sm:$0xf]
        %v319 = vld [vmem:[%s269 + $0x4c] sm:$0xf]
        %v320 = vld [vmem:[%s269 + $0x50] sm:$0xf]
        %v321 = vld [vmem:[%s269 + $0x54] sm:$0xf]
        %v322 = vld [vmem:[%s269 + $0x58] sm:$0xf]
        %v323 = vld [vmem:[%s269 + $0x5c] sm:$0xf]
        %v324 = vld [vmem:[%s269 + $0x60] sm:$0xf]
        %v325 = vld [vmem:[%s269 + $0x64] sm:$0xf]
        %v326 = vld [vmem:[%s269 + $0x68] sm:$0xf]
        %v327 = vld [vmem:[%s269 + $0x6c] sm:$0xf]
        %v328 = vld [vmem:[%s269 + $0x70] sm:$0xf]
        %v329 = vld [vmem:[%s269 + $0x74] sm:$0xf]
        %v330 = vld [vmem:[%s269 + $0x78] sm:$0xf]
        %v331 = vld [vmem:[%s269 + $0x7c] sm:$0xf]
        %v332 = vld [vmem:[%s269 + $0x80] sm:$0xf]
        %v333 = vld [vmem:[%s269 + $0x84] sm:$0xf]
        %v334 = vld [vmem:[%s269 + $0x88] sm:$0xf]
        %v335 = vld [vmem:[%s269 + $0x8c] sm:$0xf]
        %v336 = vld [vmem:[%s269 + $0x90] sm:$0xf]
        %v337 = vld [vmem:[%s269 + $0x94] sm:$0xf]
        %v338 = vld [vmem:[%s269 + $0x98] sm:$0xf]
        %v339 = vld [vmem:[%s269 + $0x9c] sm:$0xf]
        %v340 = vld [vmem:[%s269 + $0xa0] sm:$0xf]
        %v341 = vld [vmem:[%s269 + $0xa4] sm:$0xf]
        %v342 = vld [vmem:[%s269 + $0xa8] sm:$0xf]
        %v343 = vld [vmem:[%s269 + $0xac] sm:$0xf]
        %v344 = vld [vmem:[%s269 + $0xb0] sm:$0xf]
        %v345 = vld [vmem:[%s269 + $0xb4] sm:$0xf]
        %v346 = vld [vmem:[%s269 + $0xb8] sm:$0xf]
        %v347 = vld [vmem:[%s269 + $0xbc] sm:$0xf]
        %v348 = vld [vmem:[%s269 + $0xc0] sm:$0xf]
        %v349 = vld [vmem:[%s269 + $0xc4] sm:$0xf]
        %v350 = vld [vmem:[%s269 + $0xc8] sm:$0xf]
        %v351 = vld [vmem:[%s269 + $0xcc] sm:$0xf]
        %v352 = vld [vmem:[%s269 + $0xd0] sm:$0xf]
        %v353 = vld [vmem:[%s269 + $0xd4] sm:$0xf]
        %v354 = vld [vmem:[%s269 + $0xd8] sm:$0xf]
        %v355 = vld [vmem:[%s269 + $0xdc] sm:$0xf]
        %v356 = vld [vmem:[%s269 + $0xe0] sm:$0xf]
        %v357 = vld [vmem:[%s269 + $0xe4] sm:$0xf]
        %v358 = vld [vmem:[%s269 + $0xe8] sm:$0xf]
        %v359 = vld [vmem:[%s269 + $0xec] sm:$0xf]
        %v360 = vld [vmem:[%s269 + $0xf0] sm:$0xf]
        %v361 = vld [vmem:[%s269 + $0xf4] sm:$0xf]
        %v362 = vld [vmem:[%s269 + $0xf8] sm:$0xf]
        %v363 = vld [vmem:[%s269 + $0xfc] sm:$0xf]
        %v370 = vunpack.c.l.b16 %v294
        %v371 = vunpack.c.h.b16 %v294
        %v372 = vunpack.c.l.b16 %v295
        %v373 = vunpack.c.h.b16 %v295
        %v374 = vunpack.c.l.b16 %v296
        %v375 = vunpack.c.h.b16 %v296
        %v376 = vunpack.c.l.b16 %v297
        %v377 = vunpack.c.h.b16 %v297
        %v378 = vunpack.c.l.b16 %v298
        %v379 = vunpack.c.h.b16 %v298
        %v380 = vunpack.c.l.b16 %v299
        %v381 = vunpack.c.h.b16 %v299
        %v382 = vpack.c.b16 %v374, %v370
        %v383 = vpack.c.b16 %v375, %v371
        %v384 = vpack.c.b16 %v376, %v372
        %v385 = vpack.c.b16 %v377, %v373
        %v386 = vpack.c.b16 %v378, %v378
        %v387 = vpack.c.b16 %v379, %v379
        %v388 = vpack.c.b16 %v380, %v380
        %v389 = vpack.c.b16 %v381, %v381
        %v462 = vunpack.c.l.b16 %v300
        %v463 = vunpack.c.l.b16 %v301
        %v464 = vunpack.c.l.b16 %v302
        %v465 = vunpack.c.l.b16 %v303
        %v466 = vunpack.c.l.b16 %v304
        %v467 = vunpack.c.l.b16 %v305
        %v468 = vunpack.c.l.b16 %v306
        %v469 = vunpack.c.l.b16 %v307
        %v470 = vunpack.c.l.b16 %v308
        %v471 = vunpack.c.l.b16 %v309
        %v472 = vunpack.c.l.b16 %v310
        %v473 = vunpack.c.l.b16 %v311
        %v474 = vunpack.c.l.b16 %v312
        %v475 = vunpack.c.l.b16 %v313
        %v476 = vunpack.c.l.b16 %v314
        %v477 = vunpack.c.l.b16 %v315
        %v478 = vunpack.c.l.b16 %v316
        %v479 = vunpack.c.l.b16 %v317
        %v480 = vunpack.c.l.b16 %v318
        %v481 = vunpack.c.l.b16 %v319
        %v482 = vunpack.c.l.b16 %v320
        %v483 = vunpack.c.l.b16 %v321
        %v484 = vunpack.c.l.b16 %v322
        %v485 = vunpack.c.l.b16 %v323
        %v486 = vunpack.c.l.b16 %v324
        %v487 = vunpack.c.l.b16 %v325
        %v488 = vunpack.c.l.b16 %v326
        %v489 = vunpack.c.l.b16 %v327
        %v490 = vunpack.c.l.b16 %v328
        %v491 = vunpack.c.l.b16 %v329
        %v492 = vunpack.c.l.b16 %v330
        %v493 = vunpack.c.l.b16 %v331
        %v494 = vunpack.c.l.b16 %v332
        %v495 = vunpack.c.l.b16 %v333
        %v496 = vunpack.c.l.b16 %v334
        %v497 = vunpack.c.l.b16 %v335
        %v498 = vunpack.c.l.b16 %v336
        %v499 = vunpack.c.l.b16 %v337
        %v500 = vunpack.c.l.b16 %v338
        %v501 = vunpack.c.l.b16 %v339
        %v502 = vunpack.c.l.b16 %v340
        %v503 = vunpack.c.l.b16 %v341
        %v504 = vunpack.c.l.b16 %v342
        %v505 = vunpack.c.l.b16 %v343
        %v506 = vunpack.c.l.b16 %v344
        %v507 = vunpack.c.l.b16 %v345
        %v508 = vunpack.c.l.b16 %v346
        %v509 = vunpack.c.l.b16 %v347
        %v510 = vunpack.c.l.b16 %v348
        %v511 = vunpack.c.l.b16 %v349
        %v512 = vunpack.c.l.b16 %v350
        %v513 = vunpack.c.l.b16 %v351
        %v514 = vunpack.c.l.b16 %v352
        %v515 = vunpack.c.l.b16 %v353
        %v516 = vunpack.c.l.b16 %v354
        %v517 = vunpack.c.l.b16 %v355
        %v518 = vunpack.c.l.b16 %v356
        %v519 = vunpack.c.l.b16 %v357
        %v520 = vunpack.c.l.b16 %v358
        %v521 = vunpack.c.l.b16 %v359
        %v522 = vunpack.c.l.b16 %v360
        %v523 = vunpack.c.l.b16 %v361
        %v524 = vunpack.c.l.b16 %v362
        %v525 = vunpack.c.l.b16 %v363
        %v526 = vpack.c.b16 %v463, %v462
        %v527 = vpack.c.b16 %v465, %v464
        %v528 = vpack.c.b16 %v467, %v466
        %v529 = vpack.c.b16 %v469, %v468
        %v530 = vpack.c.b16 %v471, %v470
        %v531 = vpack.c.b16 %v473, %v472
        %v532 = vpack.c.b16 %v475, %v474
        %v533 = vpack.c.b16 %v477, %v476
        %v534 = vpack.c.b16 %v479, %v478
        %v535 = vpack.c.b16 %v481, %v480
        %v536 = vpack.c.b16 %v483, %v482
        %v537 = vpack.c.b16 %v485, %v484
        %v538 = vpack.c.b16 %v487, %v486
        %v539 = vpack.c.b16 %v489, %v488
        %v540 = vpack.c.b16 %v491, %v490
        %v541 = vpack.c.b16 %v493, %v492
        %v542 = vpack.c.b16 %v495, %v494
        %v543 = vpack.c.b16 %v497, %v496
        %v544 = vpack.c.b16 %v499, %v498
        %v545 = vpack.c.b16 %v501, %v500
        %v546 = vpack.c.b16 %v503, %v502
        %v547 = vpack.c.b16 %v505, %v504
        %v548 = vpack.c.b16 %v507, %v506
        %v549 = vpack.c.b16 %v509, %v508
        %v550 = vpack.c.b16 %v511, %v510
        %v551 = vpack.c.b16 %v513, %v512
        %v552 = vpack.c.b16 %v515, %v514
        %v553 = vpack.c.b16 %v517, %v516
        %v554 = vpack.c.b16 %v519, %v518
        %v555 = vpack.c.b16 %v521, %v520
        %v556 = vpack.c.b16 %v523, %v522
        %v557 = vpack.c.b16 %v525, %v524
        %590 = vmatprep.subr.bf16.mxu0 0
        %591 = vmatpush1.bf16.msra.mxu0 %v526
        %592 = vmatprep.subr.bf16.mxu0 0
        %593 = vmatpush1.bf16.msra.mxu0 %v527
        %594 = vmatprep.subr.bf16.mxu0 0
        %595 = vmatpush1.bf16.msra.mxu0 %v528
        %596 = vmatprep.subr.bf16.mxu0 0
        %597 = vmatpush1.bf16.msra.mxu0 %v529
        %598 = vmatprep.subr.bf16.mxu0 0
        %599 = vmatpush1.bf16.msra.mxu0 %v530
        %600 = vmatprep.subr.bf16.mxu0 0
        %601 = vmatpush1.bf16.msra.mxu0 %v531
        %602 = vmatprep.subr.bf16.mxu0 0
        %603 = vmatpush1.bf16.msra.mxu0 %v532
        %604 = vmatprep.subr.bf16.mxu0 0
        %605 = vmatpush1.bf16.msra.mxu0 %v533
        %606 = vmatprep.subr.bf16.mxu0 0
        %607 = vmatpush1.bf16.msra.mxu0 %v534
        %608 = vmatprep.subr.bf16.mxu0 0
        %609 = vmatpush1.bf16.msra.mxu0 %v535
        %610 = vmatprep.subr.bf16.mxu0 0
        %611 = vmatpush1.bf16.msra.mxu0 %v536
        %612 = vmatprep.subr.bf16.mxu0 0
        %613 = vmatpush1.bf16.msra.mxu0 %v537
        %614 = vmatprep.subr.bf16.mxu0 0
        %615 = vmatpush1.bf16.msra.mxu0 %v538
        %616 = vmatprep.subr.bf16.mxu0 0
        %617 = vmatpush1.bf16.msra.mxu0 %v539
        %618 = vmatprep.subr.bf16.mxu0 0
        %619 = vmatpush1.bf16.msra.mxu0 %v540
        %620 = vmatprep.subr.bf16.mxu0 0
        %621 = vmatpush1.bf16.msra.mxu0 %v541
        %622 = vmatprep.mubr.bf16.mxu0 %v383
        %623 = vmatmul.mubr.bf16.gmra.mrb[0].mxu0 %v382
        %v624 = vpop.f32.mrb[0].mxu0
        %v625 = vadd.f32 0.0, %v624
        %v626 = vpop.f32.mrb[0].mxu0
        %v627 = vpop.f32.mrb[0].mxu0
        %v628 = vadd.f32 0.0, %v627
        %v629 = vpop.f32.mrb[0].mxu0
        %630 = vmatprep.mubr.bf16.mxu0 %v387
        %631 = vmatmul.mubr.bf16.gmra.mrb[0].mxu0 %v386
        %v632 = vpop.f32.mrb[0].mxu0
        %v633 = vadd.f32 0.0, %v632
        %v634 = vpop.f32.mrb[0].mxu0
        %v635 = vpop.f32.mrb[0].mxu0
        %v636 = vpop.f32.mrb[0].mxu0
        %637 = vdwg.mxu0
        %638 = vmatprep.subr.bf16.mxu0 0
        %639 = vmatpush1.bf16.msra.mxu0 %v542
        %640 = vmatprep.subr.bf16.mxu0 0
        %641 = vmatpush1.bf16.msra.mxu0 %v543
        %642 = vmatprep.subr.bf16.mxu0 0
        %643 = vmatpush1.bf16.msra.mxu0 %v544
        %644 = vmatprep.subr.bf16.mxu0 0
        %645 = vmatpush1.bf16.msra.mxu0 %v545
        %646 = vmatprep.subr.bf16.mxu0 0
        %647 = vmatpush1.bf16.msra.mxu0 %v546
        %648 = vmatprep.subr.bf16.mxu0 0
        %649 = vmatpush1.bf16.msra.mxu0 %v547
        %650 = vmatprep.subr.bf16.mxu0 0
        %651 = vmatpush1.bf16.msra.mxu0 %v548
        %652 = vmatprep.subr.bf16.mxu0 0
        %653 = vmatpush1.bf16.msra.mxu0 %v549
        %654 = vmatprep.subr.bf16.mxu0 0
        %655 = vmatpush1.bf16.msra.mxu0 %v550
        %656 = vmatprep.subr.bf16.mxu0 0
        %657 = vmatpush1.bf16.msra.mxu0 %v551
        %658 = vmatprep.subr.bf16.mxu0 0
        %659 = vmatpush1.bf16.msra.mxu0 %v552
        %660 = vmatprep.subr.bf16.mxu0 0
        %661 = vmatpush1.bf16.msra.mxu0 %v553
        %662 = vmatprep.subr.bf16.mxu0 0
        %663 = vmatpush1.bf16.msra.mxu0 %v554
        %664 = vmatprep.subr.bf16.mxu0 0
        %665 = vmatpush1.bf16.msra.mxu0 %v555
        %666 = vmatprep.subr.bf16.mxu0 0
        %667 = vmatpush1.bf16.msra.mxu0 %v556
        %668 = vmatprep.subr.bf16.mxu0 0
        %669 = vmatpush1.bf16.msra.mxu0 %v557
        %670 = vmatprep.mubr.bf16.mxu0 %v385
        %671 = vmatmul.mubr.bf16.gmra.mrb[0].mxu0 %v384
        %v672 = vpop.f32.mrb[0].mxu0
        %v673 = vadd.f32 %v625, %v672
        %v674 = vpop.f32.mrb[0].mxu0
        %v675 = vpop.f32.mrb[0].mxu0
        %v676 = vadd.f32 %v628, %v675
        %v677 = vpop.f32.mrb[0].mxu0
        %678 = vmatprep.mubr.bf16.mxu0 %v389
        %679 = vmatmul.mubr.bf16.gmra.mrb[0].mxu0 %v388
        %v680 = vpop.f32.mrb[0].mxu0
        %v681 = vadd.f32 %v633, %v680
        %v682 = vpop.f32.mrb[0].mxu0
        %v683 = vpop.f32.mrb[0].mxu0
        %v684 = vpop.f32.mrb[0].mxu0
        %685 = vdwg.mxu0
        %v686 = vadd.f32 %v291, %v673
        %v687 = vadd.f32 %v292, %v676
        %v688 = vadd.f32 %v293, %v681
        %689 = vst [vmem:[#allocation2] sm:$0xff] %v686
        %690 = vst [vmem:[#allocation2 + $0x8] sm:$0xff] %v687
        %691 = vst [vmem:[#allocation2 + $0x10] sm:$0xff] %v688
        %p692 = scmp.eq.s32.totalorder %s21, 1
        // Predicated region
        $region60: #{nlayer_discriminator_att_forward.22} parent=50 // pred_check
          %p693 = pneg %p692
        $region61: #{nlayer_discriminator_att_forward.22} parent=50 // pred_check_branch
          %695 = sbr.rel (%p693) target = $region63
        $region62: #{nlayer_discriminator_att_forward.22} parent=50 // pred_region
          %v696 = vld [vmem:[#allocation2] sm:$0xff]
          %v697 = vld [vmem:[#allocation2 + $0x8] sm:$0xff]
          %v698 = vld [vmem:[#allocation2 + $0x10] sm:$0xff]
          %v699 = vld [vmem:[%s273] sm:$0x1]
          %v701 = vlaneseq
          %v702 = vshrl.u32 %v701, 7
          %v703 = vsub.s32 0, %v702
          %v704 = vrot.slane %v699, %v703
          %v706 = vadd.f32 %v696, %v704
          %v707 = vadd.f32 %v697, %v704
          %v708 = vadd.f32 %v698, %v704
          %v709 = vpack.c.bf16 %v707, %v706
          %v710 = vpack.c.bf16 %v708, %v708
          %v713 = vunpack.c.l.b16 %v709
          %v714 = vunpack.c.h.b16 %v709
          %v715 = vunpack.c.l.b16 %v710
          %v716 = vpack.c.b16 %v713, %v713
          %v717 = vpack.c.b16 %v714, %v714
          %v718 = vpack.c.b16 %v715, %v715
          %722 = vst [vmem:[%s281] sm:$0xf] %v716
          %723 = vst [vmem:[%s281 + $0x4] sm:$0xf] %v717
          %724 = vst [vmem:[%s281 + $0x8] sm:$0xf] %v718
        $region63: #{nlayer_discriminator_att_forward.22} parent=50 // pred_fallthru
          _
        %s725 = smul.u32 3, %s19
        %p726 = scmp.lt.s32.totalorder %s725, 2
        %s727 = scalar_select %p726, %s725, 2
        %p728 = scmp.lt.s32.totalorder %s20, 0
        %s729 = scalar_select %p728, %s20, 0
        %s730 = sadd.s32 %s729, %s727
        %s731 = smul.addr %s730, 4
        %s732 = scalar_lea.vmem %s3, %s731
        // Predicated region
        $region64: #{nlayer_discriminator_att_forward.22} parent=50 // pred_check
          %p733 = pneg %p135
        $region65: #{nlayer_discriminator_att_forward.22} parent=50 // pred_check_branch
          %735 = sbr.rel (%p733) target = $region67
        $region66: #{nlayer_discriminator_att_forward.22} parent=50 // pred_region
          %s736 = smul.u32 3, %s19
        $region67: #{nlayer_discriminator_att_forward.22} parent=50 // pred_fallthru
          _
        // Predicated region
        $region68: #{nlayer_discriminator_att_forward.22} parent=50 // pred_check
          %p737 = pneg %p135
        $region69: #{nlayer_discriminator_att_forward.22} parent=50 // pred_check_branch
          %739 = sbr.rel (%p737) target = $region71
        $region70: #{nlayer_discriminator_att_forward.22} parent=50 // pred_region
          %s740 = smul.u32 3, %s19
          %p741 = scmp.lt.s32.totalorder %s740, 2
          %s742 = scalar_select %p741, %s740, 2
          %p743 = scmp.lt.s32.totalorder %s20, 0
          %s744 = scalar_select %p743, %s20, 0
          %s745 = sadd.s32 %s744, %s742
          %s746 = smul.addr %s745, 4
          %s747 = scalar_lea.vmem %s3, %s746
        $region71: #{nlayer_discriminator_att_forward.22} parent=50 // pred_fallthru
          _
      $region51: #{nlayer_discriminator_att_forward.22} parent=5 // pred_fallthru
        _
      %p748 = scmp.le.s32.totalorder 2, %s9
      // Predicated region
      $region72: #{nlayer_discriminator_att_forward.22} parent=5 // pred_check
        %p749 = pneg %p748
      $region73: #{nlayer_discriminator_att_forward.22} parent=5 // pred_check_branch
        %751 = sbr.rel (%p749) target = $region75
      $region74: #{nlayer_discriminator_att_forward.22} parent=5 // pred_region
        %s752 = ssub.s32 %s9, 2
      $region75: #{nlayer_discriminator_att_forward.22} parent=5 // pred_fallthru
        _
    $region6: #{nlayer_discriminator_att_forward.22} parent=1 // loop_footer
      %s13 = sadd.s32 1, %s9
    $region7: #{nlayer_discriminator_att_forward.22} parent=1 // loop_footer_branch
      %8 = sbr.rel target = $region3
    $region8: #{nlayer_discriminator_att_forward.22} parent=1 // loop_exit
      _

// kernel: nlayer_discriminator_att_forward.24
$region0: #{nlayer_discriminator_att_forward.24}
  #allocation0 [shape = 'u32[]', space=smem, size = 0x4, offset = 0x4, fixed_abs, tag = 'smem constant byte address 0x4 - core index']
  #allocation1 [shape = 'u32[144,128]{1,0:T(1,128)}', space=vmem, size = 0x12000, scoped, tag = 'internal scratch']
  %s0 = inlined_call_operand.vmem [shape: bf16[24,128], index: 0, kind: input, shape index: {}]
  %s1 = inlined_call_operand.vmem [shape: f32[1,128], index: 1, kind: input, shape index: {}]
  %s2 = inlined_call_operand.vmem [shape: f32[1,128], index: 2, kind: input, shape index: {}]
  %s3 = inlined_call_operand.vmem [shape: bf16[24,128], index: 3, kind: output, shape index: {}]
  %s4 = sld [smem:[#allocation0]]
  $region22: #{nlayer_discriminator_att_forward.24} parent=0
    _
  %s6 = ssub.s32 1, %s4
  %s7 = scalar_select 0, %s6, %s4
  // Predicated region
  $region2: #{nlayer_discriminator_att_forward.24} parent=0 // pred_check
    _
  $region3: #{nlayer_discriminator_att_forward.24} parent=0 // pred_check_branch
    %9 = sbr.rel (0) target = $region5
  $region4: #{nlayer_discriminator_att_forward.24} parent=0 // pred_region
    _
  $region5: #{nlayer_discriminator_att_forward.24} parent=0 // pred_fallthru
    _
  // Predicated region
  $region6: #{nlayer_discriminator_att_forward.24} parent=0 // pred_check
    _
  $region7: #{nlayer_discriminator_att_forward.24} parent=0 // pred_check_branch
    %11 = sbr.rel (0) target = $region9
  $region8: #{nlayer_discriminator_att_forward.24} parent=0 // pred_region
    _
  $region9: #{nlayer_discriminator_att_forward.24} parent=0 // pred_fallthru
    _
  // Predicated region
  $region10: #{nlayer_discriminator_att_forward.24} parent=0 // pred_check
    _
  $region11: #{nlayer_discriminator_att_forward.24} parent=0 // pred_check_branch
    %13 = sbr.rel (0) target = $region13
  $region12: #{nlayer_discriminator_att_forward.24} parent=0 // pred_region
    _
  $region13: #{nlayer_discriminator_att_forward.24} parent=0 // pred_fallthru
    _
  %v14 = vld [vmem:[%s0] sm:$0xf]
  %v15 = vld [vmem:[%s0 + $0x4] sm:$0xf]
  %v16 = vld [vmem:[%s0 + $0x8] sm:$0xf]
  %v17 = vunpack.c.l.bf16 %v14
  %v18 = vunpack.c.l.bf16 %v15
  %v19 = vunpack.c.l.bf16 %v16
  %v20 = vld [vmem:[%s1] sm:$0x1]
  %v22 = vlaneseq
  %v23 = vshrl.u32 %v22, 7
  %v24 = vsub.s32 0, %v23
  %v25 = vrot.slane %v20, %v24
  %v27 = vmul.f32 %v17, %v25
  %v28 = vmul.f32 %v18, %v25
  %v29 = vmul.f32 %v19, %v25
  %v30 = vld [vmem:[%s2] sm:$0x1]
  %v32 = vlaneseq
  %v33 = vshrl.u32 %v32, 7
  %v34 = vsub.s32 0, %v33
  %v35 = vrot.slane %v30, %v34
  %v37 = vadd.f32 %v27, %v35
  %v38 = vadd.f32 %v28, %v35
  %v39 = vadd.f32 %v29, %v35
  %vm40 = vcmp.ge.f32.partialorder %v37, 0.0
  %vm41 = vcmp.ge.f32.partialorder %v38, 0.0
  %vm42 = vcmp.ge.f32.partialorder %v39, 0.0
  %v43 = vmul.f32 %v37, 0.2
  %v44 = vmul.f32 %v38, 0.2
  %v45 = vmul.f32 %v39, 0.2
  %v46 = vsel %vm40, %v37, %v43
  %v47 = vsel %vm41, %v38, %v44
  %v48 = vsel %vm42, %v39, %v45
  %v49 = vpack.c.bf16 %v47, %v46
  %v50 = vpack.c.bf16 %v48, %v48
  %v53 = vunpack.c.l.b16 %v49
  %v54 = vunpack.c.h.b16 %v49
  %v55 = vunpack.c.l.b16 %v50
  %v56 = vpack.c.b16 %v53, %v53
  %v57 = vpack.c.b16 %v54, %v54
  %v58 = vpack.c.b16 %v55, %v55
  %62 = vst [vmem:[%s3] sm:$0xf] %v56
  %63 = vst [vmem:[%s3 + $0x4] sm:$0xf] %v57
  %64 = vst [vmem:[%s3 + $0x8] sm:$0xf] %v58
  // Predicated region
  $region14: #{nlayer_discriminator_att_forward.24} parent=0 // pred_check
    _
  $region15: #{nlayer_discriminator_att_forward.24} parent=0 // pred_check_branch
    %66 = sbr.rel (0) target = $region17
  $region16: #{nlayer_discriminator_att_forward.24} parent=0 // pred_region
    _
  $region17: #{nlayer_discriminator_att_forward.24} parent=0 // pred_fallthru
    _
  // Predicated region
  $region18: #{nlayer_discriminator_att_forward.24} parent=0 // pred_check
    _
  $region19: #{nlayer_discriminator_att_forward.24} parent=0 // pred_check_branch
    %68 = sbr.rel (0) target = $region21
  $region20: #{nlayer_discriminator_att_forward.24} parent=0 // pred_region
    _
  $region21: #{nlayer_discriminator_att_forward.24} parent=0 // pred_fallthru
    _

// kernel: nlayer_discriminator_att_forward.25
$region0: #{nlayer_discriminator_att_forward.25}
  #allocation0 [shape = 'u32[]', space=smem, size = 0x4, offset = 0x4, fixed_abs, tag = 'smem constant byte address 0x4 - core index']
  #allocation1 [shape = 'u32[144,128]{1,0:T(1,128)}', space=vmem, size = 0x12000, scoped, tag = 'internal scratch']
  #allocation2 [shape = 'f32[8,128]{1,0:T(8,128)}', space=vmem, size = 0x1000, scoped, tag = 'scratch operand']
  %s0 = inlined_call_operand.vmem [shape: bf16[8,2048], index: 0, kind: input, shape index: {}]
  %s1 = inlined_call_operand.vmem [shape: bf16[2048,128], index: 1, kind: input, shape index: {}]
  %s2 = inlined_call_operand.vmem [shape: f32[1,128], index: 2, kind: input, shape index: {}]
  %s3 = inlined_call_operand.vmem [shape: bf16[8,128], index: 3, kind: output, shape index: {}]
  %s4 = sld [smem:[#allocation0]]
  $region53: #{nlayer_discriminator_att_forward.25} parent=0
    _
  %s6 = ssub.s32 1, %s4
  %s7 = scalar_select 0, %s6, %s4
  loop: start=0, step=1, limit=6
  $region2: #{nlayer_discriminator_att_forward.25} parent=0 // loop_pre_header
    _
  $region3: #{nlayer_discriminator_att_forward.25} parent=0 // loop_header
    %s9 = sphi 0, %s13
    %p10 = scmp.ge.s32.totalorder %s9, 6
    %s16 = sphi 0, %s35
    %s17 = sphi 0, %s31
    %s18 = sphi 0, %s27
    %s19 = sphi 0, %s16
    %s20 = sphi 0, %s17
    %s21 = sphi 0, %s18
    %s22 = sphi 0, %s19
    %s23 = sphi 0, %s20
    %s24 = sphi 0, %s21
    %s40 = sphi 0, %s42
    %s43 = sphi 0, %s40
    %s44 = sphi 0, %s43
    %s60 = sphi 0, %s44
    %s68 = sphi 0, %s70
    %s71 = sphi 0, %s68
    %s72 = sphi 0, %s71
    %s88 = sphi 0, %s72
    %s94 = sphi 0, %s96
    %s97 = sphi 0, %s94
    %s98 = sphi 0, %s97
    %s114 = sphi 0, %s98
    %s122 = sphi 0, %s124
    %s125 = sphi 0, %s122
    %s126 = sphi 0, %s125
    %s142 = sphi 0, %s126
  $region4: #{nlayer_discriminator_att_forward.25} parent=0 // loop_header_branch
    %12 = sbr.rel (%p10) target = $region8
  $region5: #{nlayer_discriminator_att_forward.25} parent=0 // loop_body
    %s14 = ssub.s32 %s9, 1
    %s15 = ssub.s32 %s9, 2
    %s25 = sadd.s32 1, %s18
    %p26 = scmp.ge.s32.totalorder %s25, 4
    %s27 = scalar_select %p26, 0, %s25
    %s28 = sadd.s32 1, %s17
    %s29 = scalar_select %p26, %s28, %s17
    %p30 = scmp.ge.s32.totalorder %s29, 1
    %s31 = scalar_select %p30, 0, %s29
    %s32 = sadd.s32 1, %s16
    %s33 = scalar_select %p30, %s32, %s16
    %p34 = scmp.ge.s32.totalorder %s33, 1
    %s35 = scalar_select %p34, 0, %s33
    %s36 = ssub.s32 %s16, %s35
    %s37 = ssub.s32 %s18, %s27
    %s38 = sor.u32 %s36, %s37
    %p39 = scmp.eq.s32.totalorder %s38, 0
    %s41 = sadd.s32 %s40, 1
    %s42 = scalar_select %p39, %s40, %s41
    %p45 = pneg %p39
    %p46 = scmp.eq.s32.totalorder %s9, 3
    %p47 = por %p45, %p46
    %p48 = scmp.ne.s32.totalorder %s40, %s43
    %p49 = scmp.eq.s32.totalorder %s9, 0
    %p50 = por %p48, %p49
    %p51 = scmp.ne.s32.totalorder %s40, %s43
    %p52 = scmp.eq.s32.totalorder %s14, 3
    %p53 = por %p51, %p52
    %p54 = scmp.ne.s32.totalorder %s43, %s44
    %p55 = scmp.eq.s32.totalorder %s14, 0
    %p56 = por %p54, %p55
    %p57 = scmp.ne.s32.totalorder %s43, %s44
    %p58 = scmp.eq.s32.totalorder %s15, 3
    %p59 = por %p57, %p58
    %p61 = scmp.ne.s32.totalorder %s44, %s60
    %p62 = scmp.eq.s32.totalorder %s15, 0
    %p63 = por %p61, %p62
    %s64 = ssub.s32 %s18, %s27
    %s65 = ssub.s32 %s17, %s31
    %s66 = sor.u32 %s64, %s65
    %p67 = scmp.eq.s32.totalorder %s66, 0
    %s69 = sadd.s32 %s68, 1
    %s70 = scalar_select %p67, %s68, %s69
    %p73 = pneg %p67
    %p74 = scmp.eq.s32.totalorder %s9, 3
    %p75 = por %p73, %p74
    %p76 = scmp.ne.s32.totalorder %s68, %s71
    %p77 = scmp.eq.s32.totalorder %s9, 0
    %p78 = por %p76, %p77
    %p79 = scmp.ne.s32.totalorder %s68, %s71
    %p80 = scmp.eq.s32.totalorder %s14, 3
    %p81 = por %p79, %p80
    %p82 = scmp.ne.s32.totalorder %s71, %s72
    %p83 = scmp.eq.s32.totalorder %s14, 0
    %p84 = por %p82, %p83
    %p85 = scmp.ne.s32.totalorder %s71, %s72
    %p86 = scmp.eq.s32.totalorder %s15, 3
    %p87 = por %p85, %p86
    %p89 = scmp.ne.s32.totalorder %s72, %s88
    %p90 = scmp.eq.s32.totalorder %s15, 0
    %p91 = por %p89, %p90
    %s92 = ssub.s32 %s17, %s31
    %p93 = scmp.eq.s32.totalorder %s92, 0
    %s95 = sadd.s32 %s94, 1
    %s96 = scalar_select %p93, %s94, %s95
    %p99 = pneg %p93
    %p100 = scmp.eq.s32.totalorder %s9, 3
    %p101 = por %p99, %p100
    %p102 = scmp.ne.s32.totalorder %s94, %s97
    %p103 = scmp.eq.s32.totalorder %s9, 0
    %p104 = por %p102, %p103
    %p105 = scmp.ne.s32.totalorder %s94, %s97
    %p106 = scmp.eq.s32.totalorder %s14, 3
    %p107 = por %p105, %p106
    %p108 = scmp.ne.s32.totalorder %s97, %s98
    %p109 = scmp.eq.s32.totalorder %s14, 0
    %p110 = por %p108, %p109
    %p111 = scmp.ne.s32.totalorder %s97, %s98
    %p112 = scmp.eq.s32.totalorder %s15, 3
    %p113 = por %p111, %p112
    %p115 = scmp.ne.s32.totalorder %s98, %s114
    %p116 = scmp.eq.s32.totalorder %s15, 0
    %p117 = por %p115, %p116
    %s118 = ssub.s32 %s16, %s35
    %s119 = ssub.s32 %s17, %s31
    %s120 = sor.u32 %s118, %s119
    %p121 = scmp.eq.s32.totalorder %s120, 0
    %s123 = sadd.s32 %s122, 1
    %s124 = scalar_select %p121, %s122, %s123
    %p127 = pneg %p121
    %p128 = scmp.eq.s32.totalorder %s9, 3
    %p129 = por %p127, %p128
    %p130 = scmp.ne.s32.totalorder %s122, %s125
    %p131 = scmp.eq.s32.totalorder %s9, 0
    %p132 = por %p130, %p131
    %p133 = scmp.ne.s32.totalorder %s122, %s125
    %p134 = scmp.eq.s32.totalorder %s14, 3
    %p135 = por %p133, %p134
    %p136 = scmp.ne.s32.totalorder %s125, %s126
    %p137 = scmp.eq.s32.totalorder %s14, 0
    %p138 = por %p136, %p137
    %p139 = scmp.ne.s32.totalorder %s125, %s126
    %p140 = scmp.eq.s32.totalorder %s15, 3
    %p141 = por %p139, %p140
    %p143 = scmp.ne.s32.totalorder %s126, %s142
    %p144 = scmp.eq.s32.totalorder %s15, 0
    %p145 = por %p143, %p144
    %p146 = scmp.le.s32.totalorder 1, %s9
    %p147 = scmp.lt.s32.totalorder %s9, 5
    %p148 = pnand %p146, %p147
    %p149 = pneg %p148
    // Predicated region
    $region9: #{nlayer_discriminator_att_forward.25} parent=5 // pred_check
      _
    $region10: #{nlayer_discriminator_att_forward.25} parent=5 // pred_check_branch
      %151 = sbr.rel (%p148) target = $region12
    $region11: #{nlayer_discriminator_att_forward.25} parent=5 // pred_region
      %s152 = ssub.s32 %s9, 1
      // Predicated region
      $region13: #{nlayer_discriminator_att_forward.25} parent=11 // pred_check
        %p153 = pneg %p110
      $region14: #{nlayer_discriminator_att_forward.25} parent=11 // pred_check_branch
        %155 = sbr.rel (%p153) target = $region16
      $region15: #{nlayer_discriminator_att_forward.25} parent=11 // pred_region
        %p156 = scmp.lt.s32.totalorder %s20, 0
        %s157 = scalar_select %p156, %s20, 0
        %s158 = scalar_lea.vmem %s2, %s157
      $region16: #{nlayer_discriminator_att_forward.25} parent=11 // pred_fallthru
        _
    $region12: #{nlayer_discriminator_att_forward.25} parent=5 // pred_fallthru
      _
    %p159 = scmp.lt.s32.totalorder %s9, 4
    // Predicated region
    $region17: #{nlayer_discriminator_att_forward.25} parent=5 // pred_check
      %p160 = pneg %p159
    $region18: #{nlayer_discriminator_att_forward.25} parent=5 // pred_check_branch
      %162 = sbr.rel (%p160) target = $region20
    $region19: #{nlayer_discriminator_att_forward.25} parent=5 // pred_region
      // Predicated region
      $region21: #{nlayer_discriminator_att_forward.25} parent=19 // pred_check
        %p163 = pneg %p50
      $region22: #{nlayer_discriminator_att_forward.25} parent=19 // pred_check_branch
        %165 = sbr.rel (%p163) target = $region24
      $region23: #{nlayer_discriminator_att_forward.25} parent=19 // pred_region
        %s166 = smul.u32 4, %s18
        %p167 = scmp.lt.s32.totalorder %s16, 0
        %s168 = scalar_select %p167, %s16, 0
        %p169 = scmp.lt.s32.totalorder %s166, 15
        %s170 = scalar_select %p169, %s166, 15
        %s171 = smul.addr %s168, 16
        %s172 = sadd.s32 %s170, %s171
        %s173 = smul.addr %s172, 4
        %s174 = scalar_lea.vmem %s0, %s173
        %s175 = smul.u32 4, %s18
      $region24: #{nlayer_discriminator_att_forward.25} parent=19 // pred_fallthru
        _
      // Predicated region
      $region25: #{nlayer_discriminator_att_forward.25} parent=19 // pred_check
        %p176 = pneg %p78
      $region26: #{nlayer_discriminator_att_forward.25} parent=19 // pred_check_branch
        %178 = sbr.rel (%p176) target = $region28
      $region27: #{nlayer_discriminator_att_forward.25} parent=19 // pred_region
        %s179 = smul.u32 64, %s18
        %p180 = scmp.lt.s32.totalorder %s179, 255
        %s181 = scalar_select %p180, %s179, 255
        %p182 = scmp.lt.s32.totalorder %s17, 0
        %s183 = scalar_select %p182, %s17, 0
        %s184 = sadd.s32 %s183, %s181
        %s185 = smul.addr %s184, 4
        %s186 = scalar_lea.vmem %s1, %s185
        %s187 = smul.u32 64, %s18
      $region28: #{nlayer_discriminator_att_forward.25} parent=19 // pred_fallthru
        _
    $region20: #{nlayer_discriminator_att_forward.25} parent=5 // pred_fallthru
      _
    %p188 = scmp.le.s32.totalorder 1, %s9
    %p189 = scmp.lt.s32.totalorder %s9, 5
    %p190 = pnand %p188, %p189
    %p191 = pneg %p190
    // Predicated region
    $region29: #{nlayer_discriminator_att_forward.25} parent=5 // pred_check
      _
    $region30: #{nlayer_discriminator_att_forward.25} parent=5 // pred_check_branch
      %193 = sbr.rel (%p190) target = $region32
    $region31: #{nlayer_discriminator_att_forward.25} parent=5 // pred_region
      %s194 = ssub.s32 %s9, 1
      %s195 = smul.u32 4, %s21
      %p196 = scmp.lt.s32.totalorder %s19, 0
      %s197 = scalar_select %p196, %s19, 0
      %p198 = scmp.lt.s32.totalorder %s195, 15
      %s199 = scalar_select %p198, %s195, 15
      %s200 = smul.addr %s197, 16
      %s201 = sadd.s32 %s199, %s200
      %s202 = smul.addr %s201, 4
      %s203 = scalar_lea.vmem %s0, %s202
      %p204 = pneg %p56
      %p205 = pneg %p53
      %s206 = smul.u32 64, %s21
      %p207 = scmp.lt.s32.totalorder %s206, 255
      %s208 = scalar_select %p207, %s206, 255
      %p209 = scmp.lt.s32.totalorder %s20, 0
      %s210 = scalar_select %p209, %s20, 0
      %s211 = sadd.s32 %s210, %s208
      %s212 = smul.addr %s211, 4
      %s213 = scalar_lea.vmem %s1, %s212
      %p214 = pneg %p84
      %p215 = pneg %p81
      %p216 = scmp.lt.s32.totalorder %s20, 0
      %s217 = scalar_select %p216, %s20, 0
      %s218 = scalar_lea.vmem %s2, %s217
      %p219 = pneg %p110
      %p220 = pneg %p107
      %p221 = pneg %p138
      %p222 = pneg %p135
      %p223 = scmp.lt.s32.totalorder %s19, 0
      %s224 = scalar_select %p223, %s19, 0
      %p225 = scmp.lt.s32.totalorder %s20, 0
      %s226 = scalar_select %p225, %s20, 0
      %s227 = sadd.s32 %s226, %s224
      %s228 = smul.addr %s227, 4
      %s229 = scalar_lea.vmem %s3, %s228
      %s230 = smul.u32 4, %s21
      %p231 = scmp.lt.s32.totalorder %s19, 0
      %s232 = scalar_select %p231, %s19, 0
      %p233 = scmp.lt.s32.totalorder %s230, 15
      %s234 = scalar_select %p233, %s230, 15
      %s235 = smul.addr %s232, 16
      %s236 = sadd.s32 %s234, %s235
      %s237 = smul.addr %s236, 4
      %s238 = scalar_lea.vmem %s0, %s237
      %s239 = smul.u32 4, %s21
      %s240 = smul.u32 64, %s21
      %p241 = scmp.lt.s32.totalorder %s240, 255
      %s242 = scalar_select %p241, %s240, 255
      %p243 = scmp.lt.s32.totalorder %s20, 0
      %s244 = scalar_select %p243, %s20, 0
      %s245 = sadd.s32 %s244, %s242
      %s246 = smul.addr %s245, 4
      %s247 = scalar_lea.vmem %s1, %s246
      %s248 = smul.u32 64, %s21
      %p249 = scmp.lt.s32.totalorder %s20, 0
      %s250 = scalar_select %p249, %s20, 0
      %s251 = scalar_lea.vmem %s2, %s250
      %p252 = scmp.lt.s32.totalorder %s19, 0
      %s253 = scalar_select %p252, %s19, 0
      %p254 = scmp.lt.s32.totalorder %s20, 0
      %s255 = scalar_select %p254, %s20, 0
      %s256 = sadd.s32 %s255, %s253
      %s257 = smul.addr %s256, 4
      %s258 = scalar_lea.vmem %s3, %s257
      %p260 = scmp.eq.s32.totalorder %s21, 0
      // Predicated region
      $region33: #{nlayer_discriminator_att_forward.25} parent=31 // pred_check
        %p261 = pneg %p260
      $region34: #{nlayer_discriminator_att_forward.25} parent=31 // pred_check_branch
        %263 = sbr.rel (%p261) target = $region36
      $region35: #{nlayer_discriminator_att_forward.25} parent=31 // pred_region
        %264 = vst [vmem:[#allocation2] sm:$0xff] 0.0
      $region36: #{nlayer_discriminator_att_forward.25} parent=31 // pred_fallthru
        _
      %v265 = vld [vmem:[#allocation2] sm:$0xff]
      %v266 = vld [vmem:[%s238] sm:$0xff]
      %v267 = vld [vmem:[%s238 + $0x8] sm:$0xff]
      %v268 = vld [vmem:[%s247] sm:$0xf]
      %v269 = vld [vmem:[%s247 + $0x4] sm:$0xf]
      %v270 = vld [vmem:[%s247 + $0x8] sm:$0xf]
      %v271 = vld [vmem:[%s247 + $0xc] sm:$0xf]
      %v272 = vld [vmem:[%s247 + $0x10] sm:$0xf]
      %v273 = vld [vmem:[%s247 + $0x14] sm:$0xf]
      %v274 = vld [vmem:[%s247 + $0x18] sm:$0xf]
      %v275 = vld [vmem:[%s247 + $0x1c] sm:$0xf]
      %v276 = vld [vmem:[%s247 + $0x20] sm:$0xf]
      %v277 = vld [vmem:[%s247 + $0x24] sm:$0xf]
      %v278 = vld [vmem:[%s247 + $0x28] sm:$0xf]
      %v279 = vld [vmem:[%s247 + $0x2c] sm:$0xf]
      %v280 = vld [vmem:[%s247 + $0x30] sm:$0xf]
      %v281 = vld [vmem:[%s247 + $0x34] sm:$0xf]
      %v282 = vld [vmem:[%s247 + $0x38] sm:$0xf]
      %v283 = vld [vmem:[%s247 + $0x3c] sm:$0xf]
      %v284 = vld [vmem:[%s247 + $0x40] sm:$0xf]
      %v285 = vld [vmem:[%s247 + $0x44] sm:$0xf]
      %v286 = vld [vmem:[%s247 + $0x48] sm:$0xf]
      %v287 = vld [vmem:[%s247 + $0x4c] sm:$0xf]
      %v288 = vld [vmem:[%s247 + $0x50] sm:$0xf]
      %v289 = vld [vmem:[%s247 + $0x54] sm:$0xf]
      %v290 = vld [vmem:[%s247 + $0x58] sm:$0xf]
      %v291 = vld [vmem:[%s247 + $0x5c] sm:$0xf]
      %v292 = vld [vmem:[%s247 + $0x60] sm:$0xf]
      %v293 = vld [vmem:[%s247 + $0x64] sm:$0xf]
      %v294 = vld [vmem:[%s247 + $0x68] sm:$0xf]
      %v295 = vld [vmem:[%s247 + $0x6c] sm:$0xf]
      %v296 = vld [vmem:[%s247 + $0x70] sm:$0xf]
      %v297 = vld [vmem:[%s247 + $0x74] sm:$0xf]
      %v298 = vld [vmem:[%s247 + $0x78] sm:$0xf]
      %v299 = vld [vmem:[%s247 + $0x7c] sm:$0xf]
      %v300 = vld [vmem:[%s247 + $0x80] sm:$0xf]
      %v301 = vld [vmem:[%s247 + $0x84] sm:$0xf]
      %v302 = vld [vmem:[%s247 + $0x88] sm:$0xf]
      %v303 = vld [vmem:[%s247 + $0x8c] sm:$0xf]
      %v304 = vld [vmem:[%s247 + $0x90] sm:$0xf]
      %v305 = vld [vmem:[%s247 + $0x94] sm:$0xf]
      %v306 = vld [vmem:[%s247 + $0x98] sm:$0xf]
      %v307 = vld [vmem:[%s247 + $0x9c] sm:$0xf]
      %v308 = vld [vmem:[%s247 + $0xa0] sm:$0xf]
      %v309 = vld [vmem:[%s247 + $0xa4] sm:$0xf]
      %v310 = vld [vmem:[%s247 + $0xa8] sm:$0xf]
      %v311 = vld [vmem:[%s247 + $0xac] sm:$0xf]
      %v312 = vld [vmem:[%s247 + $0xb0] sm:$0xf]
      %v313 = vld [vmem:[%s247 + $0xb4] sm:$0xf]
      %v314 = vld [vmem:[%s247 + $0xb8] sm:$0xf]
      %v315 = vld [vmem:[%s247 + $0xbc] sm:$0xf]
      %v316 = vld [vmem:[%s247 + $0xc0] sm:$0xf]
      %v317 = vld [vmem:[%s247 + $0xc4] sm:$0xf]
      %v318 = vld [vmem:[%s247 + $0xc8] sm:$0xf]
      %v319 = vld [vmem:[%s247 + $0xcc] sm:$0xf]
      %v320 = vld [vmem:[%s247 + $0xd0] sm:$0xf]
      %v321 = vld [vmem:[%s247 + $0xd4] sm:$0xf]
      %v322 = vld [vmem:[%s247 + $0xd8] sm:$0xf]
      %v323 = vld [vmem:[%s247 + $0xdc] sm:$0xf]
      %v324 = vld [vmem:[%s247 + $0xe0] sm:$0xf]
      %v325 = vld [vmem:[%s247 + $0xe4] sm:$0xf]
      %v326 = vld [vmem:[%s247 + $0xe8] sm:$0xf]
      %v327 = vld [vmem:[%s247 + $0xec] sm:$0xf]
      %v328 = vld [vmem:[%s247 + $0xf0] sm:$0xf]
      %v329 = vld [vmem:[%s247 + $0xf4] sm:$0xf]
      %v330 = vld [vmem:[%s247 + $0xf8] sm:$0xf]
      %v331 = vld [vmem:[%s247 + $0xfc] sm:$0xf]
      %v334 = vunpack.c.l.b16 %v266
      %v335 = vunpack.c.h.b16 %v266
      %v336 = vunpack.c.l.b16 %v267
      %v337 = vunpack.c.h.b16 %v267
      %v338 = vpack.c.b16 %v334, %v334
      %v339 = vpack.c.b16 %v335, %v335
      %v340 = vpack.c.b16 %v336, %v336
      %v341 = vpack.c.b16 %v337, %v337
      %v410 = vunpack.c.l.b16 %v268
      %v411 = vunpack.c.l.b16 %v269
      %v412 = vunpack.c.l.b16 %v270
      %v413 = vunpack.c.l.b16 %v271
      %v414 = vunpack.c.l.b16 %v272
      %v415 = vunpack.c.l.b16 %v273
      %v416 = vunpack.c.l.b16 %v274
      %v417 = vunpack.c.l.b16 %v275
      %v418 = vunpack.c.l.b16 %v276
      %v419 = vunpack.c.l.b16 %v277
      %v420 = vunpack.c.l.b16 %v278
      %v421 = vunpack.c.l.b16 %v279
      %v422 = vunpack.c.l.b16 %v280
      %v423 = vunpack.c.l.b16 %v281
      %v424 = vunpack.c.l.b16 %v282
      %v425 = vunpack.c.l.b16 %v283
      %v426 = vunpack.c.l.b16 %v284
      %v427 = vunpack.c.l.b16 %v285
      %v428 = vunpack.c.l.b16 %v286
      %v429 = vunpack.c.l.b16 %v287
      %v430 = vunpack.c.l.b16 %v288
      %v431 = vunpack.c.l.b16 %v289
      %v432 = vunpack.c.l.b16 %v290
      %v433 = vunpack.c.l.b16 %v291
      %v434 = vunpack.c.l.b16 %v292
      %v435 = vunpack.c.l.b16 %v293
      %v436 = vunpack.c.l.b16 %v294
      %v437 = vunpack.c.l.b16 %v295
      %v438 = vunpack.c.l.b16 %v296
      %v439 = vunpack.c.l.b16 %v297
      %v440 = vunpack.c.l.b16 %v298
      %v441 = vunpack.c.l.b16 %v299
      %v442 = vunpack.c.l.b16 %v300
      %v443 = vunpack.c.l.b16 %v301
      %v444 = vunpack.c.l.b16 %v302
      %v445 = vunpack.c.l.b16 %v303
      %v446 = vunpack.c.l.b16 %v304
      %v447 = vunpack.c.l.b16 %v305
      %v448 = vunpack.c.l.b16 %v306
      %v449 = vunpack.c.l.b16 %v307
      %v450 = vunpack.c.l.b16 %v308
      %v451 = vunpack.c.l.b16 %v309
      %v452 = vunpack.c.l.b16 %v310
      %v453 = vunpack.c.l.b16 %v311
      %v454 = vunpack.c.l.b16 %v312
      %v455 = vunpack.c.l.b16 %v313
      %v456 = vunpack.c.l.b16 %v314
      %v457 = vunpack.c.l.b16 %v315
      %v458 = vunpack.c.l.b16 %v316
      %v459 = vunpack.c.l.b16 %v317
      %v460 = vunpack.c.l.b16 %v318
      %v461 = vunpack.c.l.b16 %v319
      %v462 = vunpack.c.l.b16 %v320
      %v463 = vunpack.c.l.b16 %v321
      %v464 = vunpack.c.l.b16 %v322
      %v465 = vunpack.c.l.b16 %v323
      %v466 = vunpack.c.l.b16 %v324
      %v467 = vunpack.c.l.b16 %v325
      %v468 = vunpack.c.l.b16 %v326
      %v469 = vunpack.c.l.b16 %v327
      %v470 = vunpack.c.l.b16 %v328
      %v471 = vunpack.c.l.b16 %v329
      %v472 = vunpack.c.l.b16 %v330
      %v473 = vunpack.c.l.b16 %v331
      %v474 = vpack.c.b16 %v411, %v410
      %v475 = vpack.c.b16 %v413, %v412
      %v476 = vpack.c.b16 %v415, %v414
      %v477 = vpack.c.b16 %v417, %v416
      %v478 = vpack.c.b16 %v419, %v418
      %v479 = vpack.c.b16 %v421, %v420
      %v480 = vpack.c.b16 %v423, %v422
      %v481 = vpack.c.b16 %v425, %v424
      %v482 = vpack.c.b16 %v427, %v426
      %v483 = vpack.c.b16 %v429, %v428
      %v484 = vpack.c.b16 %v431, %v430
      %v485 = vpack.c.b16 %v433, %v432
      %v486 = vpack.c.b16 %v435, %v434
      %v487 = vpack.c.b16 %v437, %v436
      %v488 = vpack.c.b16 %v439, %v438
      %v489 = vpack.c.b16 %v441, %v440
      %v490 = vpack.c.b16 %v443, %v442
      %v491 = vpack.c.b16 %v445, %v444
      %v492 = vpack.c.b16 %v447, %v446
      %v493 = vpack.c.b16 %v449, %v448
      %v494 = vpack.c.b16 %v451, %v450
      %v495 = vpack.c.b16 %v453, %v452
      %v496 = vpack.c.b16 %v455, %v454
      %v497 = vpack.c.b16 %v457, %v456
      %v498 = vpack.c.b16 %v459, %v458
      %v499 = vpack.c.b16 %v461, %v460
      %v500 = vpack.c.b16 %v463, %v462
      %v501 = vpack.c.b16 %v465, %v464
      %v502 = vpack.c.b16 %v467, %v466
      %v503 = vpack.c.b16 %v469, %v468
      %v504 = vpack.c.b16 %v471, %v470
      %v505 = vpack.c.b16 %v473, %v472
      %538 = vmatprep.subr.bf16.mxu0 0
      %539 = vmatpush1.bf16.msra.mxu0 %v474
      %540 = vmatprep.subr.bf16.mxu0 0
      %541 = vmatpush1.bf16.msra.mxu0 %v475
      %542 = vmatprep.subr.bf16.mxu0 0
      %543 = vmatpush1.bf16.msra.mxu0 %v476
      %544 = vmatprep.subr.bf16.mxu0 0
      %545 = vmatpush1.bf16.msra.mxu0 %v477
      %546 = vmatprep.subr.bf16.mxu0 0
      %547 = vmatpush1.bf16.msra.mxu0 %v478
      %548 = vmatprep.subr.bf16.mxu0 0
      %549 = vmatpush1.bf16.msra.mxu0 %v479
      %550 = vmatprep.subr.bf16.mxu0 0
      %551 = vmatpush1.bf16.msra.mxu0 %v480
      %552 = vmatprep.subr.bf16.mxu0 0
      %553 = vmatpush1.bf16.msra.mxu0 %v481
      %554 = vmatprep.subr.bf16.mxu0 0
      %555 = vmatpush1.bf16.msra.mxu0 %v482
      %556 = vmatprep.subr.bf16.mxu0 0
      %557 = vmatpush1.bf16.msra.mxu0 %v483
      %558 = vmatprep.subr.bf16.mxu0 0
      %559 = vmatpush1.bf16.msra.mxu0 %v484
      %560 = vmatprep.subr.bf16.mxu0 0
      %561 = vmatpush1.bf16.msra.mxu0 %v485
      %562 = vmatprep.subr.bf16.mxu0 0
      %563 = vmatpush1.bf16.msra.mxu0 %v486
      %564 = vmatprep.subr.bf16.mxu0 0
      %565 = vmatpush1.bf16.msra.mxu0 %v487
      %566 = vmatprep.subr.bf16.mxu0 0
      %567 = vmatpush1.bf16.msra.mxu0 %v488
      %568 = vmatprep.subr.bf16.mxu0 0
      %569 = vmatpush1.bf16.msra.mxu0 %v489
      %570 = vmatprep.mubr.bf16.mxu0 %v339
      %571 = vmatmul.mubr.bf16.gmra.mrb[0].mxu0 %v338
      %v572 = vpop.f32.mrb[0].mxu0
      %v573 = vadd.f32 0.0, %v572
      %v574 = vpop.f32.mrb[0].mxu0
      %v575 = vpop.f32.mrb[0].mxu0
      %v576 = vpop.f32.mrb[0].mxu0
      %577 = vdwg.mxu0
      %578 = vmatprep.subr.bf16.mxu0 0
      %579 = vmatpush1.bf16.msra.mxu0 %v490
      %580 = vmatprep.subr.bf16.mxu0 0
      %581 = vmatpush1.bf16.msra.mxu0 %v491
      %582 = vmatprep.subr.bf16.mxu0 0
      %583 = vmatpush1.bf16.msra.mxu0 %v492
      %584 = vmatprep.subr.bf16.mxu0 0
      %585 = vmatpush1.bf16.msra.mxu0 %v493
      %586 = vmatprep.subr.bf16.mxu0 0
      %587 = vmatpush1.bf16.msra.mxu0 %v494
      %588 = vmatprep.subr.bf16.mxu0 0
      %589 = vmatpush1.bf16.msra.mxu0 %v495
      %590 = vmatprep.subr.bf16.mxu0 0
      %591 = vmatpush1.bf16.msra.mxu0 %v496
      %592 = vmatprep.subr.bf16.mxu0 0
      %593 = vmatpush1.bf16.msra.mxu0 %v497
      %594 = vmatprep.subr.bf16.mxu0 0
      %595 = vmatpush1.bf16.msra.mxu0 %v498
      %596 = vmatprep.subr.bf16.mxu0 0
      %597 = vmatpush1.bf16.msra.mxu0 %v499
      %598 = vmatprep.subr.bf16.mxu0 0
      %599 = vmatpush1.bf16.msra.mxu0 %v500
      %600 = vmatprep.subr.bf16.mxu0 0
      %601 = vmatpush1.bf16.msra.mxu0 %v501
      %602 = vmatprep.subr.bf16.mxu0 0
      %603 = vmatpush1.bf16.msra.mxu0 %v502
      %604 = vmatprep.subr.bf16.mxu0 0
      %605 = vmatpush1.bf16.msra.mxu0 %v503
      %606 = vmatprep.subr.bf16.mxu0 0
      %607 = vmatpush1.bf16.msra.mxu0 %v504
      %608 = vmatprep.subr.bf16.mxu0 0
      %609 = vmatpush1.bf16.msra.mxu0 %v505
      %610 = vmatprep.mubr.bf16.mxu0 %v341
      %611 = vmatmul.mubr.bf16.gmra.mrb[0].mxu0 %v340
      %v612 = vpop.f32.mrb[0].mxu0
      %v613 = vadd.f32 %v573, %v612
      %v614 = vpop.f32.mrb[0].mxu0
      %v615 = vpop.f32.mrb[0].mxu0
      %v616 = vpop.f32.mrb[0].mxu0
      %617 = vdwg.mxu0
      %v618 = vadd.f32 %v265, %v613
      %619 = vst [vmem:[#allocation2] sm:$0xff] %v618
      %p620 = scmp.eq.s32.totalorder %s21, 3
      // Predicated region
      $region37: #{nlayer_discriminator_att_forward.25} parent=31 // pred_check
        %p621 = pneg %p620
      $region38: #{nlayer_discriminator_att_forward.25} parent=31 // pred_check_branch
        %623 = sbr.rel (%p621) target = $region40
      $region39: #{nlayer_discriminator_att_forward.25} parent=31 // pred_region
        %v624 = vld [vmem:[#allocation2] sm:$0xff]
        %v625 = vld [vmem:[%s251] sm:$0x1]
        %v627 = vlaneseq
        %v628 = vshrl.u32 %v627, 7
        %v629 = vsub.s32 0, %v628
        %v630 = vrot.slane %v625, %v629
        %v632 = vadd.f32 %v624, %v630
        %v633 = vpack.c.bf16 %v632, %v632
        %634 = vst [vmem:[%s258] sm:$0xf] %v633
      $region40: #{nlayer_discriminator_att_forward.25} parent=31 // pred_fallthru
        _
      %p635 = scmp.lt.s32.totalorder %s19, 0
      %s636 = scalar_select %p635, %s19, 0
      %p637 = scmp.lt.s32.totalorder %s20, 0
      %s638 = scalar_select %p637, %s20, 0
      %s639 = sadd.s32 %s638, %s636
      %s640 = smul.addr %s639, 4
      %s641 = scalar_lea.vmem %s3, %s640
      // Predicated region
      $region41: #{nlayer_discriminator_att_forward.25} parent=31 // pred_check
        %p642 = pneg %p135
      $region42: #{nlayer_discriminator_att_forward.25} parent=31 // pred_check_branch
        %644 = sbr.rel (%p642) target = $region44
      $region43: #{nlayer_discriminator_att_forward.25} parent=31 // pred_region
        _
      $region44: #{nlayer_discriminator_att_forward.25} parent=31 // pred_fallthru
        _
      // Predicated region
      $region45: #{nlayer_discriminator_att_forward.25} parent=31 // pred_check
        %p645 = pneg %p135
      $region46: #{nlayer_discriminator_att_forward.25} parent=31 // pred_check_branch
        %647 = sbr.rel (%p645) target = $region48
      $region47: #{nlayer_discriminator_att_forward.25} parent=31 // pred_region
        %p648 = scmp.lt.s32.totalorder %s19, 0
        %s649 = scalar_select %p648, %s19, 0
        %p650 = scmp.lt.s32.totalorder %s20, 0
        %s651 = scalar_select %p650, %s20, 0
        %s652 = sadd.s32 %s651, %s649
        %s653 = smul.addr %s652, 4
        %s654 = scalar_lea.vmem %s3, %s653
      $region48: #{nlayer_discriminator_att_forward.25} parent=31 // pred_fallthru
        _
    $region32: #{nlayer_discriminator_att_forward.25} parent=5 // pred_fallthru
      _
    %p655 = scmp.le.s32.totalorder 2, %s9
    // Predicated region
    $region49: #{nlayer_discriminator_att_forward.25} parent=5 // pred_check
      %p656 = pneg %p655
    $region50: #{nlayer_discriminator_att_forward.25} parent=5 // pred_check_branch
      %658 = sbr.rel (%p656) target = $region52
    $region51: #{nlayer_discriminator_att_forward.25} parent=5 // pred_region
      %s659 = ssub.s32 %s9, 2
    $region52: #{nlayer_discriminator_att_forward.25} parent=5 // pred_fallthru
      _
  $region6: #{nlayer_discriminator_att_forward.25} parent=0 // loop_footer
    %s13 = sadd.s32 1, %s9
  $region7: #{nlayer_discriminator_att_forward.25} parent=0 // loop_footer_branch
    %8 = sbr.rel target = $region3
  $region8: #{nlayer_discriminator_att_forward.25} parent=0 // loop_exit
    _

</llo_original>
